<compile_context>
chip_gen: v5e
topology: v5e:2x2
jax: 0.10.0
libtpu: 0.0.40
codegen_flags: <defaults>
</compile_context>

<pallas_src>
import functools

import jax
import jax.numpy as jnp
from jax import lax
from jax.experimental import pallas as pl
from jax.experimental.pallas import tpu as pltpu

EPS = 1e-5


def _ceil_to(v, m):
    return ((v + m - 1) // m) * m


# ---------------------------------------------------------------------------
# Fused encoder kernel (all stages in one invocation, VMEM-resident).
#
# refs layout:
#   refs[0]                  a0       (Fp0*2*Cin, B*128) f32   stage-0 activation
#   refs[1+3s .. 3+3s]       w,g,bt   per stage s (packed weight / gamma / beta)
#   refs[1+3n]               alphas   (n,) f32 in SMEM          PReLU slopes
#   refs[2+3n]               o_ref    (Fo_n*2*C_n, B*128) f32   final output
#   refs[3+3n ..]            act[0..n-2]  intermediate activation scratch (VMEM)
#   refs[-1]                 x_ref    (Kmax, B*128) f32         im2col patch scratch
# ---------------------------------------------------------------------------
def _fused_encoder_kernel(*refs, batch, cfgs):
    n = len(cfgs)
    a0_ref = refs[0]
    alpha_ref = refs[1 + 3 * n]
    o_ref = refs[2 + 3 * n]
    act = list(refs[3 + 3 * n: 3 + 3 * n + (n - 1)])
    x_ref = refs[3 + 3 * n + (n - 1)]

    # Zero scratch once: the F-padding rows / unused t-lanes of intermediate
    # activations and the zero-padded contraction rows of the patch buffer
    # must be exactly zero (the gamma/beta lane padding then keeps every
    # dead lane at zero through BN -- keep that invariant).
    for a in act:
        a[...] = jnp.zeros_like(a)
    x_ref[...] = jnp.zeros_like(x_ref)

    srcs = [a0_ref] + act
    dsts = act + [o_ref]
    lanes = batch * 128

    for s, cfg in enumerate(cfgs):
        cin, cout, kf, kt, fo_n, to_n, t_in, kpad, out_off = cfg
        w = refs[1 + 3 * s][...].astype(jnp.bfloat16)      # (2*cout, kpad)
        g_ref = refs[2 + 3 * s]
        bt_ref = refs[3 + 3 * s]
        alpha = alpha_ref[s]
        src, dst = srcs[s], dsts[s]

        rcin = 2 * cin            # rows per f-block in the source activation
        rcout = 2 * cout          # rows per f-block in the destination
        rj = kf * rcin            # rows per t-tap block of the patch matrix

        for fo in range(fo_n):
            # stride-2 conv over F: output fo reads kf consecutive padded
            # f rows starting at 2*fo -> ONE contiguous row slab of src.
            r0 = (2 * fo) * rcin
            blk = src[r0:r0 + rj, :]
            # t-tap j=0: the slab as-is; j=1: shifted one lane left.  The
            # value crossing a batch-slab boundary lands in a dead lane
            # (>= to_n) and is zeroed by the gamma/beta lane padding in BN.
            x_ref[0:rj, :] = blk
            x_ref[rj:2 * rj, 0:lanes - 1] = blk[:, 1:]
            xv = x_ref[0:kpad, :].astype(jnp.bfloat16)

            # packed-complex conv for every (batch, to) lane at this fo
            y = jnp.dot(w, xv, preferred_element_type=jnp.float32)

            # TODO(synk): exact ComplexBatchNormal source is unavailable;
            # per-(re/im, C, F, T)-feature batch-norm reducing over the batch
            # axis only is used (real/imag normalized independently).
            slabs = [y[:, b * 128:(b + 1) * 128] for b in range(batch)]
            mean = sum(slabs) / float(batch)
            var = sum((sl - mean) ** 2 for sl in slabs) / float(batch)
            inv = lax.rsqrt(var + EPS)
            grow = g_ref[fo * rcout:(fo + 1) * rcout, :]
            brow = bt_ref[fo * rcout:(fo + 1) * rcout, :]
            scale = inv * grow                      # == 0 on dead lanes
            shift = brow - mean * scale             # hoisted affine
            scale_w = jnp.concatenate([scale] * batch, axis=1)
            shift_w = jnp.concatenate([shift] * batch, axis=1)
            z = y * scale_w + shift_w
            z = jnp.where(z >= 0.0, z, alpha * z)   # PReLU
            # single full-width, tile-aligned store per fo
            dst[(fo + out_off) * rcout:(fo + out_off + 1) * rcout, :] = z


# ---------------------------------------------------------------------------
# Wrapper: host-side packing + one pallas_call for the whole encoder stack.
# ---------------------------------------------------------------------------
def dccrn_encoder_forward(x, params):
    """x: (B, C_in, F, T, 2) -> (B, C_out, F_out, T_out, 2)."""
    B, Cin, F, T, _ = x.shape
    encs = params["encoders"]
    n = len(encs)
    LANES = B * 128

    cfgs, ops, act_shapes = [], [], []
    f_in, t_in, c_in = F, T, Cin
    kmax = 0
    for s, p in enumerate(encs):
        w_re, w_im = p["w_re"], p["w_im"]
        cout, cin, kf, kt = w_re.shape
        sf, st = p["stride"]
        pf, pt = p["padding"]
        assert cin == c_in and kt == 2 and (sf, st) == (2, 1) and (pf, pt) == (2, 0)
        fo = (f_in + 2 * pf - kf) // sf + 1
        to = (t_in + 2 * pt - kt) // st + 1
        K = 2 * cin * kf * kt
        kpad = _ceil_to(K, 16)          # bf16 sublane-tile discipline
        kmax = max(kmax, kpad)
        out_off = encs[s + 1]["padding"][0] if s < n - 1 else 0

        # packed complex weight, columns ordered (j, i, re/im, ci);
        # conv bias intentionally dropped (cancelled by train-mode BN).
        cols = []
        for j in range(kt):
            for i in range(kf):
                wr, wi = w_re[:, :, i, j], w_im[:, :, i, j]
                cols.append(jnp.concatenate(
                    [jnp.concatenate([wr, -wi], axis=1),
                     jnp.concatenate([wi, wr], axis=1)], axis=0))
        w2 = jnp.concatenate(cols, axis=1)                    # (2*cout, K)
        w2 = jnp.pad(w2, ((0, 0), (0, kpad - K))).astype(jnp.float32)

        def feat(vr, vi, cout=cout, fo=fo, to=to):
            v = jnp.stack([vr, vi], axis=0)                   # (2, cout, fo, to)
            v = jnp.transpose(v, (2, 0, 1, 3)).reshape(fo * 2 * cout, to)
            # lanes >= to stay ZERO: this keeps dead lanes zero through BN.
            return jnp.pad(v, ((0, 0), (0, 128 - to))).astype(jnp.float32)

        ops += [w2, feat(p["gamma_r"], p["gamma_i"]),
                feat(p["beta_r"], p["beta_i"])]
        cfgs.append((cin, cout, kf, kt, fo, to, t_in, kpad, out_off))
        if s < n - 1:
            fp_next = fo + 2 * encs[s + 1]["padding"][0]
            act_shapes.append((fp_next * 2 * cout, LANES))
        f_in, t_in, c_in = fo, to, cout

    Fo_last, To_last, C_last = f_in, t_in, c_in

    # stage-0 activation: rows (f_padded, re/im, c), lanes (b*128 + t)
    pf0 = encs[0]["padding"][0]
    xpad = jnp.pad(x, ((0, 0), (0, 0), (pf0, pf0), (0, 128 - T), (0, 0)))
    a0 = jnp.transpose(xpad, (2, 4, 1, 0, 3))
    a0 = a0.reshape((F + 2 * pf0) * 2 * Cin, LANES).astype(jnp.float32)

    alphas = jnp.stack([jnp.asarray(p["alpha"], jnp.float32) for p in encs])

    out_rows = Fo_last * 2 * C_last
    kernel = functools.partial(_fused_encoder_kernel, batch=B, cfgs=tuple(cfgs))

    def full_spec(arr):
        nd = arr.ndim
        return pl.BlockSpec(arr.shape, lambda i, _nd=nd: (0,) * _nd)

    in_specs = ([full_spec(a0)] + [full_spec(o) for o in ops]
                + [pl.BlockSpec(memory_space=pltpu.MemorySpace.SMEM)])
    scratch = ([pltpu.VMEM(sh, jnp.float32) for sh in act_shapes]
               + [pltpu.VMEM((kmax, LANES), jnp.float32)])

    flops = sum(cf[4] * 2 * (2 * cf[1]) * cf[7] * LANES for cf in cfgs)
    transc = sum(cf[4] * 2 * cf[1] * 128 for cf in cfgs)
    bytes_acc = (sum(int(v.size) * 4 for v in [a0] + ops) + 4 * n
                 + out_rows * LANES * 4)

    yT = pl.pallas_call(
        kernel,
        out_shape=jax.ShapeDtypeStruct((out_rows, LANES), jnp.float32),
        grid_spec=pltpu.PrefetchScalarGridSpec(
            num_scalar_prefetch=0,
            grid=(1,),
            in_specs=in_specs,
            out_specs=pl.BlockSpec((out_rows, LANES), lambda i: (0, 0)),
            scratch_shapes=scratch),
        compiler_params=pltpu.CompilerParams(
            dimension_semantics=("arbitrary",)),
        cost_estimate=pl.CostEstimate(flops=flops, transcendentals=transc,
                                      bytes_accessed=bytes_acc),
    )(a0, *ops, alphas)

    # back to the module-level (B, C_out, F_out, T_out, 2) layout
    y = yT.reshape(Fo_last, 2, C_last, B, 128)[..., :To_last]
    return jnp.transpose(y, (3, 2, 0, 4, 1))


# ---------------------------------------------------------------------------
# DCCRN forward (the live part of the reference forward)
# ---------------------------------------------------------------------------
def dccrn_forward(x, params):
    x = dccrn_encoder_forward(x, params)
    B, C, F, T, D = x.shape
    lstm_ = x.reshape(B, C * F, T, D)
    # TODO(synk): reference forward calls exit() immediately after this
    # reshape, so LSTM / ComplexDense / decoders / tanh mask are dead code.
    return lstm_


def init_params(key, channels, ksize, stride, padding, F, T):
    encs = []
    f, t = F, T
    kf, kt = ksize
    for idx in range(len(channels) - 1):
        cin, cout = channels[idx], channels[idx + 1]
        key, k1, k2, k3, k4 = jax.random.split(key, 5)
        fo = (f + 2 * padding[0] - kf) // stride[0] + 1
        to = (t + 2 * padding[1] - kt) // stride[1] + 1
        encs.append(dict(
            w_re=0.1 * jax.random.normal(k1, (cout, cin, kf, kt), jnp.float32),
            w_im=0.1 * jax.random.normal(k2, (cout, cin, kf, kt), jnp.float32),
            # biases kept for interface fidelity; they are NOT fed to the
            # kernel: train-mode BN's mean subtraction cancels them exactly.
            b_re=0.1 * jax.random.normal(k3, (cout,), jnp.float32),
            b_im=0.1 * jax.random.normal(k4, (cout,), jnp.float32),
            stride=stride, padding=padding,
            gamma_r=jnp.ones((cout, fo, to), jnp.float32),
            beta_r=jnp.zeros((cout, fo, to), jnp.float32),
            gamma_i=jnp.ones((cout, fo, to), jnp.float32),
            beta_i=jnp.zeros((cout, fo, to), jnp.float32),
            alpha=jnp.float32(0.25),    # nn.PReLU() default init
        ))
        f, t = fo, to
    return dict(encoders=encs)


if __name__ == "__main__":
    key = jax.random.PRNGKey(0)
    kx, kp = jax.random.split(key)

    # Small, DCCRN-consistent shapes: (B, C_in, F, T, 2), kernel (5,2),
    # stride (2,1), padding (2,0), 3 encoder stages with channels 1->4->8->16.
    B, Cin, F, T = 2, 1, 33, 8
    x = jax.random.normal(kx, (B, Cin, F, T, 2), jnp.float32)
    channels = [1, 4, 8, 16]
    params = init_params(kp, channels, (5, 2), (2, 1), (2, 0), F, T)

    fwd = jax.jit(functools.partial(dccrn_forward, params=params))
    out = fwd(x)
    jax.block_until_ready(out)
    assert out.shape == (B, channels[-1] * 5, 5, 2)
    print("KERNEL_OK")
</pallas_src>

<mosaic_0001>
module attributes {stable_mosaic.version = 11 : i64} {
  func.func @_fused_encoder_kernel(%arg0: i32, %arg1: memref<74x256xf32, #tpu.memory_space<vmem>>, %arg2: memref<8x32xf32, #tpu.memory_space<vmem>>, %arg3: memref<136x128xf32, #tpu.memory_space<vmem>>, %arg4: memref<136x128xf32, #tpu.memory_space<vmem>>, %arg5: memref<16x80xf32, #tpu.memory_space<vmem>>, %arg6: memref<144x128xf32, #tpu.memory_space<vmem>>, %arg7: memref<144x128xf32, #tpu.memory_space<vmem>>, %arg8: memref<32x160xf32, #tpu.memory_space<vmem>>, %arg9: memref<160x128xf32, #tpu.memory_space<vmem>>, %arg10: memref<160x128xf32, #tpu.memory_space<vmem>>, %arg11: memref<3xf32, #tpu.memory_space<smem>>, %arg12: memref<160x256xf32, #tpu.memory_space<vmem>>, %arg13: memref<168x256xf32, #tpu.memory_space<vmem>>, %arg14: memref<208x256xf32, #tpu.memory_space<vmem>>, %arg15: memref<160x256xf32, #tpu.memory_space<vmem>>) attributes {dimension_semantics = [#tpu.dimension_semantics<arbitrary>], iteration_bounds = array<i64: 1>, scalar_prefetch = 0 : i64, scratch_operands = 3 : i64, tpu.core_type = #tpu.core_type<tc>, window_params = [{pipeline_mode = #tpu.pipeline_mode<synchronous>, transform_indices = @transform_0, window_bounds = array<i64: 74, 256>}, {pipeline_mode = #tpu.pipeline_mode<synchronous>, transform_indices = @transform_1, window_bounds = array<i64: 8, 32>}, {pipeline_mode = #tpu.pipeline_mode<synchronous>, transform_indices = @transform_2, window_bounds = array<i64: 136, 128>}, {pipeline_mode = #tpu.pipeline_mode<synchronous>, transform_indices = @transform_3, window_bounds = array<i64: 136, 128>}, {pipeline_mode = #tpu.pipeline_mode<synchronous>, transform_indices = @transform_4, window_bounds = array<i64: 16, 80>}, {pipeline_mode = #tpu.pipeline_mode<synchronous>, transform_indices = @transform_5, window_bounds = array<i64: 144, 128>}, {pipeline_mode = #tpu.pipeline_mode<synchronous>, transform_indices = @transform_6, window_bounds = array<i64: 144, 128>}, {pipeline_mode = #tpu.pipeline_mode<synchronous>, transform_indices = @transform_7, window_bounds = array<i64: 32, 160>}, {pipeline_mode = #tpu.pipeline_mode<synchronous>, transform_indices = @transform_8, window_bounds = array<i64: 160, 128>}, {pipeline_mode = #tpu.pipeline_mode<synchronous>, transform_indices = @transform_9, window_bounds = array<i64: 160, 128>}, {transform_indices = @transform_10, window_bounds = array<i64: 3>}, {pipeline_mode = #tpu.pipeline_mode<synchronous>, transform_indices = @transform_11, window_bounds = array<i64: 160, 256>}]} {
    %cst = arith.constant 0.000000e+00 : f32
    %0 = vector.broadcast %cst : f32 to vector<168x256xf32>
    %c0 = arith.constant 0 : index
    %c0_0 = arith.constant 0 : index
    %1 = vector.load %arg13[%c0, %c0_0] : memref<168x256xf32, #tpu.memory_space<vmem>>, vector<168x256xf32>
    tpu.vector_store %arg13[%c0, %c0_0], %0 {strides = array<i32>} : memref<168x256xf32, #tpu.memory_space<vmem>>, vector<168x256xf32>,
    %cst_1 = arith.constant 0.000000e+00 : f32
    %2 = vector.broadcast %cst_1 : f32 to vector<208x256xf32>
    %c0_2 = arith.constant 0 : index
    %c0_3 = arith.constant 0 : index
    %3 = vector.load %arg14[%c0_2, %c0_3] : memref<208x256xf32, #tpu.memory_space<vmem>>, vector<208x256xf32>
    tpu.vector_store %arg14[%c0_2, %c0_3], %2 {strides = array<i32>} : memref<208x256xf32, #tpu.memory_space<vmem>>, vector<208x256xf32>,
    %cst_4 = arith.constant 0.000000e+00 : f32
    %4 = vector.broadcast %cst_4 : f32 to vector<160x256xf32>
    %c0_5 = arith.constant 0 : index
    %c0_6 = arith.constant 0 : index
    %5 = vector.load %arg15[%c0_5, %c0_6] : memref<160x256xf32, #tpu.memory_space<vmem>>, vector<160x256xf32>
    tpu.vector_store %arg15[%c0_5, %c0_6], %4 {strides = array<i32>} : memref<160x256xf32, #tpu.memory_space<vmem>>, vector<160x256xf32>,
    %c0_7 = arith.constant 0 : index
    %c0_8 = arith.constant 0 : index
    %6 = vector.load %arg2[%c0_7, %c0_8] : memref<8x32xf32, #tpu.memory_space<vmem>>, vector<8x32xf32>
    %7 = arith.truncf %6 : vector<8x32xf32> to vector<8x32xbf16>
    %c0_9 = arith.constant 0 : index
    %8 = memref.load %arg11[%c0_9] : memref<3xf32, #tpu.memory_space<smem>>
    %c0_10 = arith.constant 0 : index
    %c0_11 = arith.constant 0 : index
    %9 = vector.load %arg1[%c0_10, %c0_11] : memref<74x256xf32, #tpu.memory_space<vmem>>, vector<10x256xf32>
    %c0_12 = arith.constant 0 : index
    %c0_13 = arith.constant 0 : index
    %10 = vector.load %arg15[%c0_12, %c0_13] : memref<160x256xf32, #tpu.memory_space<vmem>>, vector<10x256xf32>
    tpu.vector_store %arg15[%c0_12, %c0_13], %9 {strides = array<i32>} : memref<160x256xf32, #tpu.memory_space<vmem>>, vector<10x256xf32>,
    %11 = vector.extract_strided_slice %9 {offsets = [0, 1], sizes = [10, 255], strides = [1, 1]} : vector<10x256xf32> to vector<10x255xf32>
    %c10 = arith.constant 10 : index
    %c0_14 = arith.constant 0 : index
    %12 = vector.load %arg15[%c10, %c0_14] : memref<160x256xf32, #tpu.memory_space<vmem>>, vector<10x255xf32>
    tpu.vector_store %arg15[%c10, %c0_14], %11 {strides = array<i32>} : memref<160x256xf32, #tpu.memory_space<vmem>>, vector<10x255xf32>,
    %c0_15 = arith.constant 0 : index
    %c0_16 = arith.constant 0 : index
    %13 = vector.load %arg15[%c0_15, %c0_16] : memref<160x256xf32, #tpu.memory_space<vmem>>, vector<32x256xf32>
    %14 = arith.truncf %13 : vector<32x256xf32> to vector<32x256xbf16>
    %cst_17 = arith.constant dense<0.000000e+00> : vector<8x256xf32>
    %15 = tpu.matmul %7, %14, %cst_17 {dimension_numbers = #tpu.dot_dimension_numbers<[1], [0], [0], [1], [0, 0, 1, 1], [], []>} : vector<8x32xbf16>, vector<32x256xbf16>, vector<8x256xf32> -> vector<8x256xf32>
    %16 = vector.extract_strided_slice %15 {offsets = [0, 0], sizes = [8, 128], strides = [1, 1]} : vector<8x256xf32> to vector<8x128xf32>
    %17 = vector.extract_strided_slice %15 {offsets = [0, 128], sizes = [8, 128], strides = [1, 1]} : vector<8x256xf32> to vector<8x128xf32>
    %cst_18 = arith.constant 0.000000e+00 : f32
    %18 = vector.broadcast %cst_18 : f32 to vector<8x128xf32>
    %19 = arith.addf %18, %16 : vector<8x128xf32>
    %20 = arith.addf %19, %17 : vector<8x128xf32>
    %cst_19 = arith.constant 2.000000e+00 : f32
    %21 = vector.broadcast %cst_19 : f32 to vector<8x128xf32>
    %22 = arith.divf %20, %21 : vector<8x128xf32>
    %23 = arith.subf %16, %22 : vector<8x128xf32>
    %24 = arith.mulf %23, %23 : vector<8x128xf32>
    %cst_20 = arith.constant 0.000000e+00 : f32
    %25 = vector.broadcast %cst_20 : f32 to vector<8x128xf32>
    %26 = arith.addf %25, %24 : vector<8x128xf32>
    %27 = arith.subf %17, %22 : vector<8x128xf32>
    %28 = arith.mulf %27, %27 : vector<8x128xf32>
    %29 = arith.addf %26, %28 : vector<8x128xf32>
    %cst_21 = arith.constant 2.000000e+00 : f32
    %30 = vector.broadcast %cst_21 : f32 to vector<8x128xf32>
    %31 = arith.divf %29, %30 : vector<8x128xf32>
    %cst_22 = arith.constant 9.99999974E-6 : f32
    %32 = vector.broadcast %cst_22 : f32 to vector<8x128xf32>
    %33 = arith.addf %31, %32 : vector<8x128xf32>
    %34 = math.rsqrt %33 : vector<8x128xf32>
    %c0_23 = arith.constant 0 : index
    %c0_24 = arith.constant 0 : index
    %35 = vector.load %arg3[%c0_23, %c0_24] : memref<136x128xf32, #tpu.memory_space<vmem>>, vector<8x128xf32>
    %c0_25 = arith.constant 0 : index
    %c0_26 = arith.constant 0 : index
    %36 = vector.load %arg4[%c0_25, %c0_26] : memref<136x128xf32, #tpu.memory_space<vmem>>, vector<8x128xf32>
    %37 = arith.mulf %34, %35 : vector<8x128xf32>
    %38 = arith.mulf %22, %37 : vector<8x128xf32>
    %39 = arith.subf %36, %38 : vector<8x128xf32>
    %40 = tpu.concatenate %37, %37 in 1 : vector<8x128xf32>, vector<8x128xf32> -> vector<8x256xf32>
    %41 = tpu.concatenate %39, %39 in 1 : vector<8x128xf32>, vector<8x128xf32> -> vector<8x256xf32>
    %42 = arith.mulf %15, %40 : vector<8x256xf32>
    %43 = arith.addf %42, %41 : vector<8x256xf32>
    %cst_27 = arith.constant 0.000000e+00 : f32
    %44 = vector.broadcast %cst_27 : f32 to vector<8x256xf32>
    %45 = arith.cmpf oge, %43, %44 : vector<8x256xf32>
    %46 = vector.broadcast %8 : f32 to vector<8x256xf32>
    %47 = arith.mulf %46, %43 : vector<8x256xf32>
    %48 = arith.select %45, %43, %47 : vector<8x256xi1>, vector<8x256xf32>
    %c16 = arith.constant 16 : index
    %c0_28 = arith.constant 0 : index
    %49 = vector.load %arg13[%c16, %c0_28] : memref<168x256xf32, #tpu.memory_space<vmem>>, vector<8x256xf32>
    tpu.vector_store %arg13[%c16, %c0_28], %48 {strides = array<i32>} : memref<168x256xf32, #tpu.memory_space<vmem>>, vector<8x256xf32>,
    %c4 = arith.constant 4 : index
    %c0_29 = arith.constant 0 : index
    %50 = vector.load %arg1[%c4, %c0_29] : memref<74x256xf32, #tpu.memory_space<vmem>>, vector<10x256xf32>
    %c0_30 = arith.constant 0 : index
    %c0_31 = arith.constant 0 : index
    %51 = vector.load %arg15[%c0_30, %c0_31] : memref<160x256xf32, #tpu.memory_space<vmem>>, vector<10x256xf32>
    tpu.vector_store %arg15[%c0_30, %c0_31], %50 {strides = array<i32>} : memref<160x256xf32, #tpu.memory_space<vmem>>, vector<10x256xf32>,
    %52 = vector.extract_strided_slice %50 {offsets = [0, 1], sizes = [10, 255], strides = [1, 1]} : vector<10x256xf32> to vector<10x255xf32>
    %c10_32 = arith.constant 10 : index
    %c0_33 = arith.constant 0 : index
    %53 = vector.load %arg15[%c10_32, %c0_33] : memref<160x256xf32, #tpu.memory_space<vmem>>, vector<10x255xf32>
    tpu.vector_store %arg15[%c10_32, %c0_33], %52 {strides = array<i32>} : memref<160x256xf32, #tpu.memory_space<vmem>>, vector<10x255xf32>,
    %c0_34 = arith.constant 0 : index
    %c0_35 = arith.constant 0 : index
    %54 = vector.load %arg15[%c0_34, %c0_35] : memref<160x256xf32, #tpu.memory_space<vmem>>, vector<32x256xf32>
    %55 = arith.truncf %54 : vector<32x256xf32> to vector<32x256xbf16>
    %cst_36 = arith.constant dense<0.000000e+00> : vector<8x256xf32>
    %56 = tpu.matmul %7, %55, %cst_36 {dimension_numbers = #tpu.dot_dimension_numbers<[1], [0], [0], [1], [0, 0, 1, 1], [], []>} : vector<8x32xbf16>, vector<32x256xbf16>, vector<8x256xf32> -> vector<8x256xf32>
    %57 = vector.extract_strided_slice %56 {offsets = [0, 0], sizes = [8, 128], strides = [1, 1]} : vector<8x256xf32> to vector<8x128xf32>
    %58 = vector.extract_strided_slice %56 {offsets = [0, 128], sizes = [8, 128], strides = [1, 1]} : vector<8x256xf32> to vector<8x128xf32>
    %cst_37 = arith.constant 0.000000e+00 : f32
    %59 = vector.broadcast %cst_37 : f32 to vector<8x128xf32>
    %60 = arith.addf %59, %57 : vector<8x128xf32>
    %61 = arith.addf %60, %58 : vector<8x128xf32>
    %cst_38 = arith.constant 2.000000e+00 : f32
    %62 = vector.broadcast %cst_38 : f32 to vector<8x128xf32>
    %63 = arith.divf %61, %62 : vector<8x128xf32>
    %64 = arith.subf %57, %63 : vector<8x128xf32>
    %65 = arith.mulf %64, %64 : vector<8x128xf32>
    %cst_39 = arith.constant 0.000000e+00 : f32
    %66 = vector.broadcast %cst_39 : f32 to vector<8x128xf32>
    %67 = arith.addf %66, %65 : vector<8x128xf32>
    %68 = arith.subf %58, %63 : vector<8x128xf32>
    %69 = arith.mulf %68, %68 : vector<8x128xf32>
    %70 = arith.addf %67, %69 : vector<8x128xf32>
    %cst_40 = arith.constant 2.000000e+00 : f32
    %71 = vector.broadcast %cst_40 : f32 to vector<8x128xf32>
    %72 = arith.divf %70, %71 : vector<8x128xf32>
    %cst_41 = arith.constant 9.99999974E-6 : f32
    %73 = vector.broadcast %cst_41 : f32 to vector<8x128xf32>
    %74 = arith.addf %72, %73 : vector<8x128xf32>
    %75 = math.rsqrt %74 : vector<8x128xf32>
    %c8 = arith.constant 8 : index
    %c0_42 = arith.constant 0 : index
    %76 = vector.load %arg3[%c8, %c0_42] : memref<136x128xf32, #tpu.memory_space<vmem>>, vector<8x128xf32>
    %c8_43 = arith.constant 8 : index
    %c0_44 = arith.constant 0 : index
    %77 = vector.load %arg4[%c8_43, %c0_44] : memref<136x128xf32, #tpu.memory_space<vmem>>, vector<8x128xf32>
    %78 = arith.mulf %75, %76 : vector<8x128xf32>
    %79 = arith.mulf %63, %78 : vector<8x128xf32>
    %80 = arith.subf %77, %79 : vector<8x128xf32>
    %81 = tpu.concatenate %78, %78 in 1 : vector<8x128xf32>, vector<8x128xf32> -> vector<8x256xf32>
    %82 = tpu.concatenate %80, %80 in 1 : vector<8x128xf32>, vector<8x128xf32> -> vector<8x256xf32>
    %83 = arith.mulf %56, %81 : vector<8x256xf32>
    %84 = arith.addf %83, %82 : vector<8x256xf32>
    %cst_45 = arith.constant 0.000000e+00 : f32
    %85 = vector.broadcast %cst_45 : f32 to vector<8x256xf32>
    %86 = arith.cmpf oge, %84, %85 : vector<8x256xf32>
    %87 = vector.broadcast %8 : f32 to vector<8x256xf32>
    %88 = arith.mulf %87, %84 : vector<8x256xf32>
    %89 = arith.select %86, %84, %88 : vector<8x256xi1>, vector<8x256xf32>
    %c24 = arith.constant 24 : index
    %c0_46 = arith.constant 0 : index
    %90 = vector.load %arg13[%c24, %c0_46] : memref<168x256xf32, #tpu.memory_space<vmem>>, vector<8x256xf32>
    tpu.vector_store %arg13[%c24, %c0_46], %89 {strides = array<i32>} : memref<168x256xf32, #tpu.memory_space<vmem>>, vector<8x256xf32>,
    %c8_47 = arith.constant 8 : index
    %c0_48 = arith.constant 0 : index
    %91 = vector.load %arg1[%c8_47, %c0_48] : memref<74x256xf32, #tpu.memory_space<vmem>>, vector<10x256xf32>
    %c0_49 = arith.constant 0 : index
    %c0_50 = arith.constant 0 : index
    %92 = vector.load %arg15[%c0_49, %c0_50] : memref<160x256xf32, #tpu.memory_space<vmem>>, vector<10x256xf32>
    tpu.vector_store %arg15[%c0_49, %c0_50], %91 {strides = array<i32>} : memref<160x256xf32, #tpu.memory_space<vmem>>, vector<10x256xf32>,
    %93 = vector.extract_strided_slice %91 {offsets = [0, 1], sizes = [10, 255], strides = [1, 1]} : vector<10x256xf32> to vector<10x255xf32>
    %c10_51 = arith.constant 10 : index
    %c0_52 = arith.constant 0 : index
    %94 = vector.load %arg15[%c10_51, %c0_52] : memref<160x256xf32, #tpu.memory_space<vmem>>, vector<10x255xf32>
    tpu.vector_store %arg15[%c10_51, %c0_52], %93 {strides = array<i32>} : memref<160x256xf32, #tpu.memory_space<vmem>>, vector<10x255xf32>,
    %c0_53 = arith.constant 0 : index
    %c0_54 = arith.constant 0 : index
    %95 = vector.load %arg15[%c0_53, %c0_54] : memref<160x256xf32, #tpu.memory_space<vmem>>, vector<32x256xf32>
    %96 = arith.truncf %95 : vector<32x256xf32> to vector<32x256xbf16>
    %cst_55 = arith.constant dense<0.000000e+00> : vector<8x256xf32>
    %97 = tpu.matmul %7, %96, %cst_55 {dimension_numbers = #tpu.dot_dimension_numbers<[1], [0], [0], [1], [0, 0, 1, 1], [], []>} : vector<8x32xbf16>, vector<32x256xbf16>, vector<8x256xf32> -> vector<8x256xf32>
    %98 = vector.extract_strided_slice %97 {offsets = [0, 0], sizes = [8, 128], strides = [1, 1]} : vector<8x256xf32> to vector<8x128xf32>
    %99 = vector.extract_strided_slice %97 {offsets = [0, 128], sizes = [8, 128], strides = [1, 1]} : vector<8x256xf32> to vector<8x128xf32>
    %cst_56 = arith.constant 0.000000e+00 : f32
    %100 = vector.broadcast %cst_56 : f32 to vector<8x128xf32>
    %101 = arith.addf %100, %98 : vector<8x128xf32>
    %102 = arith.addf %101, %99 : vector<8x128xf32>
    %cst_57 = arith.constant 2.000000e+00 : f32
    %103 = vector.broadcast %cst_57 : f32 to vector<8x128xf32>
    %104 = arith.divf %102, %103 : vector<8x128xf32>
    %105 = arith.subf %98, %104 : vector<8x128xf32>
    %106 = arith.mulf %105, %105 : vector<8x128xf32>
    %cst_58 = arith.constant 0.000000e+00 : f32
    %107 = vector.broadcast %cst_58 : f32 to vector<8x128xf32>
    %108 = arith.addf %107, %106 : vector<8x128xf32>
    %109 = arith.subf %99, %104 : vector<8x128xf32>
    %110 = arith.mulf %109, %109 : vector<8x128xf32>
    %111 = arith.addf %108, %110 : vector<8x128xf32>
    %cst_59 = arith.constant 2.000000e+00 : f32
    %112 = vector.broadcast %cst_59 : f32 to vector<8x128xf32>
    %113 = arith.divf %111, %112 : vector<8x128xf32>
    %cst_60 = arith.constant 9.99999974E-6 : f32
    %114 = vector.broadcast %cst_60 : f32 to vector<8x128xf32>
    %115 = arith.addf %113, %114 : vector<8x128xf32>
    %116 = math.rsqrt %115 : vector<8x128xf32>
    %c16_61 = arith.constant 16 : index
    %c0_62 = arith.constant 0 : index
    %117 = vector.load %arg3[%c16_61, %c0_62] : memref<136x128xf32, #tpu.memory_space<vmem>>, vector<8x128xf32>
    %c16_63 = arith.constant 16 : index
    %c0_64 = arith.constant 0 : index
    %118 = vector.load %arg4[%c16_63, %c0_64] : memref<136x128xf32, #tpu.memory_space<vmem>>, vector<8x128xf32>
    %119 = arith.mulf %116, %117 : vector<8x128xf32>
    %120 = arith.mulf %104, %119 : vector<8x128xf32>
    %121 = arith.subf %118, %120 : vector<8x128xf32>
    %122 = tpu.concatenate %119, %119 in 1 : vector<8x128xf32>, vector<8x128xf32> -> vector<8x256xf32>
    %123 = tpu.concatenate %121, %121 in 1 : vector<8x128xf32>, vector<8x128xf32> -> vector<8x256xf32>
    %124 = arith.mulf %97, %122 : vector<8x256xf32>
    %125 = arith.addf %124, %123 : vector<8x256xf32>
    %cst_65 = arith.constant 0.000000e+00 : f32
    %126 = vector.broadcast %cst_65 : f32 to vector<8x256xf32>
    %127 = arith.cmpf oge, %125, %126 : vector<8x256xf32>
    %128 = vector.broadcast %8 : f32 to vector<8x256xf32>
    %129 = arith.mulf %128, %125 : vector<8x256xf32>
    %130 = arith.select %127, %125, %129 : vector<8x256xi1>, vector<8x256xf32>
    %c32 = arith.constant 32 : index
    %c0_66 = arith.constant 0 : index
    %131 = vector.load %arg13[%c32, %c0_66] : memref<168x256xf32, #tpu.memory_space<vmem>>, vector<8x256xf32>
    tpu.vector_store %arg13[%c32, %c0_66], %130 {strides = array<i32>} : memref<168x256xf32, #tpu.memory_space<vmem>>, vector<8x256xf32>,
    %c12 = arith.constant 12 : index
    %c0_67 = arith.constant 0 : index
    %132 = vector.load %arg1[%c12, %c0_67] : memref<74x256xf32, #tpu.memory_space<vmem>>, vector<10x256xf32>
    %c0_68 = arith.constant 0 : index
    %c0_69 = arith.constant 0 : index
    %133 = vector.load %arg15[%c0_68, %c0_69] : memref<160x256xf32, #tpu.memory_space<vmem>>, vector<10x256xf32>
    tpu.vector_store %arg15[%c0_68, %c0_69], %132 {strides = array<i32>} : memref<160x256xf32, #tpu.memory_space<vmem>>, vector<10x256xf32>,
    %134 = vector.extract_strided_slice %132 {offsets = [0, 1], sizes = [10, 255], strides = [1, 1]} : vector<10x256xf32> to vector<10x255xf32>
    %c10_70 = arith.constant 10 : index
    %c0_71 = arith.constant 0 : index
    %135 = vector.load %arg15[%c10_70, %c0_71] : memref<160x256xf32, #tpu.memory_space<vmem>>, vector<10x255xf32>
    tpu.vector_store %arg15[%c10_70, %c0_71], %134 {strides = array<i32>} : memref<160x256xf32, #tpu.memory_space<vmem>>, vector<10x255xf32>,
    %c0_72 = arith.constant 0 : index
    %c0_73 = arith.constant 0 : index
    %136 = vector.load %arg15[%c0_72, %c0_73] : memref<160x256xf32, #tpu.memory_space<vmem>>, vector<32x256xf32>
    %137 = arith.truncf %136 : vector<32x256xf32> to vector<32x256xbf16>
    %cst_74 = arith.constant dense<0.000000e+00> : vector<8x256xf32>
    %138 = tpu.matmul %7, %137, %cst_74 {dimension_numbers = #tpu.dot_dimension_numbers<[1], [0], [0], [1], [0, 0, 1, 1], [], []>} : vector<8x32xbf16>, vector<32x256xbf16>, vector<8x256xf32> -> vector<8x256xf32>
    %139 = vector.extract_strided_slice %138 {offsets = [0, 0], sizes = [8, 128], strides = [1, 1]} : vector<8x256xf32> to vector<8x128xf32>
    %140 = vector.extract_strided_slice %138 {offsets = [0, 128], sizes = [8, 128], strides = [1, 1]} : vector<8x256xf32> to vector<8x128xf32>
    %cst_75 = arith.constant 0.000000e+00 : f32
    %141 = vector.broadcast %cst_75 : f32 to vector<8x128xf32>
    %142 = arith.addf %141, %139 : vector<8x128xf32>
    %143 = arith.addf %142, %140 : vector<8x128xf32>
    %cst_76 = arith.constant 2.000000e+00 : f32
    %144 = vector.broadcast %cst_76 : f32 to vector<8x128xf32>
    %145 = arith.divf %143, %144 : vector<8x128xf32>
    %146 = arith.subf %139, %145 : vector<8x128xf32>
    %147 = arith.mulf %146, %146 : vector<8x128xf32>
    %cst_77 = arith.constant 0.000000e+00 : f32
    %148 = vector.broadcast %cst_77 : f32 to vector<8x128xf32>
    %149 = arith.addf %148, %147 : vector<8x128xf32>
    %150 = arith.subf %140, %145 : vector<8x128xf32>
    %151 = arith.mulf %150, %150 : vector<8x128xf32>
    %152 = arith.addf %149, %151 : vector<8x128xf32>
    %cst_78 = arith.constant 2.000000e+00 : f32
    %153 = vector.broadcast %cst_78 : f32 to vector<8x128xf32>
    %154 = arith.divf %152, %153 : vector<8x128xf32>
    %cst_79 = arith.constant 9.99999974E-6 : f32
    %155 = vector.broadcast %cst_79 : f32 to vector<8x128xf32>
    %156 = arith.addf %154, %155 : vector<8x128xf32>
    %157 = math.rsqrt %156 : vector<8x128xf32>
    %c24_80 = arith.constant 24 : index
    %c0_81 = arith.constant 0 : index
    %158 = vector.load %arg3[%c24_80, %c0_81] : memref<136x128xf32, #tpu.memory_space<vmem>>, vector<8x128xf32>
    %c24_82 = arith.constant 24 : index
    %c0_83 = arith.constant 0 : index
    %159 = vector.load %arg4[%c24_82, %c0_83] : memref<136x128xf32, #tpu.memory_space<vmem>>, vector<8x128xf32>
    %160 = arith.mulf %157, %158 : vector<8x128xf32>
    %161 = arith.mulf %145, %160 : vector<8x128xf32>
    %162 = arith.subf %159, %161 : vector<8x128xf32>
    %163 = tpu.concatenate %160, %160 in 1 : vector<8x128xf32>, vector<8x128xf32> -> vector<8x256xf32>
    %164 = tpu.concatenate %162, %162 in 1 : vector<8x128xf32>, vector<8x128xf32> -> vector<8x256xf32>
    %165 = arith.mulf %138, %163 : vector<8x256xf32>
    %166 = arith.addf %165, %164 : vector<8x256xf32>
    %cst_84 = arith.constant 0.000000e+00 : f32
    %167 = vector.broadcast %cst_84 : f32 to vector<8x256xf32>
    %168 = arith.cmpf oge, %166, %167 : vector<8x256xf32>
    %169 = vector.broadcast %8 : f32 to vector<8x256xf32>
    %170 = arith.mulf %169, %166 : vector<8x256xf32>
    %171 = arith.select %168, %166, %170 : vector<8x256xi1>, vector<8x256xf32>
    %c40 = arith.constant 40 : index
    %c0_85 = arith.constant 0 : index
    %172 = vector.load %arg13[%c40, %c0_85] : memref<168x256xf32, #tpu.memory_space<vmem>>, vector<8x256xf32>
    tpu.vector_store %arg13[%c40, %c0_85], %171 {strides = array<i32>} : memref<168x256xf32, #tpu.memory_space<vmem>>, vector<8x256xf32>,
    %c16_86 = arith.constant 16 : index
    %c0_87 = arith.constant 0 : index
    %173 = vector.load %arg1[%c16_86, %c0_87] : memref<74x256xf32, #tpu.memory_space<vmem>>, vector<10x256xf32>
    %c0_88 = arith.constant 0 : index
    %c0_89 = arith.constant 0 : index
    %174 = vector.load %arg15[%c0_88, %c0_89] : memref<160x256xf32, #tpu.memory_space<vmem>>, vector<10x256xf32>
    tpu.vector_store %arg15[%c0_88, %c0_89], %173 {strides = array<i32>} : memref<160x256xf32, #tpu.memory_space<vmem>>, vector<10x256xf32>,
    %175 = vector.extract_strided_slice %173 {offsets = [0, 1], sizes = [10, 255], strides = [1, 1]} : vector<10x256xf32> to vector<10x255xf32>
    %c10_90 = arith.constant 10 : index
    %c0_91 = arith.constant 0 : index
    %176 = vector.load %arg15[%c10_90, %c0_91] : memref<160x256xf32, #tpu.memory_space<vmem>>, vector<10x255xf32>
    tpu.vector_store %arg15[%c10_90, %c0_91], %175 {strides = array<i32>} : memref<160x256xf32, #tpu.memory_space<vmem>>, vector<10x255xf32>,
    %c0_92 = arith.constant 0 : index
    %c0_93 = arith.constant 0 : index
    %177 = vector.load %arg15[%c0_92, %c0_93] : memref<160x256xf32, #tpu.memory_space<vmem>>, vector<32x256xf32>
    %178 = arith.truncf %177 : vector<32x256xf32> to vector<32x256xbf16>
    %cst_94 = arith.constant dense<0.000000e+00> : vector<8x256xf32>
    %179 = tpu.matmul %7, %178, %cst_94 {dimension_numbers = #tpu.dot_dimension_numbers<[1], [0], [0], [1], [0, 0, 1, 1], [], []>} : vector<8x32xbf16>, vector<32x256xbf16>, vector<8x256xf32> -> vector<8x256xf32>
    %180 = vector.extract_strided_slice %179 {offsets = [0, 0], sizes = [8, 128], strides = [1, 1]} : vector<8x256xf32> to vector<8x128xf32>
    %181 = vector.extract_strided_slice %179 {offsets = [0, 128], sizes = [8, 128], strides = [1, 1]} : vector<8x256xf32> to vector<8x128xf32>
    %cst_95 = arith.constant 0.000000e+00 : f32
    %182 = vector.broadcast %cst_95 : f32 to vector<8x128xf32>
    %183 = arith.addf %182, %180 : vector<8x128xf32>
    %184 = arith.addf %183, %181 : vector<8x128xf32>
    %cst_96 = arith.constant 2.000000e+00 : f32
    %185 = vector.broadcast %cst_96 : f32 to vector<8x128xf32>
    %186 = arith.divf %184, %185 : vector<8x128xf32>
    %187 = arith.subf %180, %186 : vector<8x128xf32>
    %188 = arith.mulf %187, %187 : vector<8x128xf32>
    %cst_97 = arith.constant 0.000000e+00 : f32
    %189 = vector.broadcast %cst_97 : f32 to vector<8x128xf32>
    %190 = arith.addf %189, %188 : vector<8x128xf32>
    %191 = arith.subf %181, %186 : vector<8x128xf32>
    %192 = arith.mulf %191, %191 : vector<8x128xf32>
    %193 = arith.addf %190, %192 : vector<8x128xf32>
    %cst_98 = arith.constant 2.000000e+00 : f32
    %194 = vector.broadcast %cst_98 : f32 to vector<8x128xf32>
    %195 = arith.divf %193, %194 : vector<8x128xf32>
    %cst_99 = arith.constant 9.99999974E-6 : f32
    %196 = vector.broadcast %cst_99 : f32 to vector<8x128xf32>
    %197 = arith.addf %195, %196 : vector<8x128xf32>
    %198 = math.rsqrt %197 : vector<8x128xf32>
    %c32_100 = arith.constant 32 : index
    %c0_101 = arith.constant 0 : index
    %199 = vector.load %arg3[%c32_100, %c0_101] : memref<136x128xf32, #tpu.memory_space<vmem>>, vector<8x128xf32>
    %c32_102 = arith.constant 32 : index
    %c0_103 = arith.constant 0 : index
    %200 = vector.load %arg4[%c32_102, %c0_103] : memref<136x128xf32, #tpu.memory_space<vmem>>, vector<8x128xf32>
    %201 = arith.mulf %198, %199 : vector<8x128xf32>
    %202 = arith.mulf %186, %201 : vector<8x128xf32>
    %203 = arith.subf %200, %202 : vector<8x128xf32>
    %204 = tpu.concatenate %201, %201 in 1 : vector<8x128xf32>, vector<8x128xf32> -> vector<8x256xf32>
    %205 = tpu.concatenate %203, %203 in 1 : vector<8x128xf32>, vector<8x128xf32> -> vector<8x256xf32>
    %206 = arith.mulf %179, %204 : vector<8x256xf32>
    %207 = arith.addf %206, %205 : vector<8x256xf32>
    %cst_104 = arith.constant 0.000000e+00 : f32
    %208 = vector.broadcast %cst_104 : f32 to vector<8x256xf32>
    %209 = arith.cmpf oge, %207, %208 : vector<8x256xf32>
    %210 = vector.broadcast %8 : f32 to vector<8x256xf32>
    %211 = arith.mulf %210, %207 : vector<8x256xf32>
    %212 = arith.select %209, %207, %211 : vector<8x256xi1>, vector<8x256xf32>
    %c48 = arith.constant 48 : index
    %c0_105 = arith.constant 0 : index
    %213 = vector.load %arg13[%c48, %c0_105] : memref<168x256xf32, #tpu.memory_space<vmem>>, vector<8x256xf32>
    tpu.vector_store %arg13[%c48, %c0_105], %212 {strides = array<i32>} : memref<168x256xf32, #tpu.memory_space<vmem>>, vector<8x256xf32>,
    %c20 = arith.constant 20 : index
    %c0_106 = arith.constant 0 : index
    %214 = vector.load %arg1[%c20, %c0_106] : memref<74x256xf32, #tpu.memory_space<vmem>>, vector<10x256xf32>
    %c0_107 = arith.constant 0 : index
    %c0_108 = arith.constant 0 : index
    %215 = vector.load %arg15[%c0_107, %c0_108] : memref<160x256xf32, #tpu.memory_space<vmem>>, vector<10x256xf32>
    tpu.vector_store %arg15[%c0_107, %c0_108], %214 {strides = array<i32>} : memref<160x256xf32, #tpu.memory_space<vmem>>, vector<10x256xf32>,
    %216 = vector.extract_strided_slice %214 {offsets = [0, 1], sizes = [10, 255], strides = [1, 1]} : vector<10x256xf32> to vector<10x255xf32>
    %c10_109 = arith.constant 10 : index
    %c0_110 = arith.constant 0 : index
    %217 = vector.load %arg15[%c10_109, %c0_110] : memref<160x256xf32, #tpu.memory_space<vmem>>, vector<10x255xf32>
    tpu.vector_store %arg15[%c10_109, %c0_110], %216 {strides = array<i32>} : memref<160x256xf32, #tpu.memory_space<vmem>>, vector<10x255xf32>,
    %c0_111 = arith.constant 0 : index
    %c0_112 = arith.constant 0 : index
    %218 = vector.load %arg15[%c0_111, %c0_112] : memref<160x256xf32, #tpu.memory_space<vmem>>, vector<32x256xf32>
    %219 = arith.truncf %218 : vector<32x256xf32> to vector<32x256xbf16>
    %cst_113 = arith.constant dense<0.000000e+00> : vector<8x256xf32>
    %220 = tpu.matmul %7, %219, %cst_113 {dimension_numbers = #tpu.dot_dimension_numbers<[1], [0], [0], [1], [0, 0, 1, 1], [], []>} : vector<8x32xbf16>, vector<32x256xbf16>, vector<8x256xf32> -> vector<8x256xf32>
    %221 = vector.extract_strided_slice %220 {offsets = [0, 0], sizes = [8, 128], strides = [1, 1]} : vector<8x256xf32> to vector<8x128xf32>
    %222 = vector.extract_strided_slice %220 {offsets = [0, 128], sizes = [8, 128], strides = [1, 1]} : vector<8x256xf32> to vector<8x128xf32>
    %cst_114 = arith.constant 0.000000e+00 : f32
    %223 = vector.broadcast %cst_114 : f32 to vector<8x128xf32>
    %224 = arith.addf %223, %221 : vector<8x128xf32>
    %225 = arith.addf %224, %222 : vector<8x128xf32>
    %cst_115 = arith.constant 2.000000e+00 : f32
    %226 = vector.broadcast %cst_115 : f32 to vector<8x128xf32>
    %227 = arith.divf %225, %226 : vector<8x128xf32>
    %228 = arith.subf %221, %227 : vector<8x128xf32>
    %229 = arith.mulf %228, %228 : vector<8x128xf32>
    %cst_116 = arith.constant 0.000000e+00 : f32
    %230 = vector.broadcast %cst_116 : f32 to vector<8x128xf32>
    %231 = arith.addf %230, %229 : vector<8x128xf32>
    %232 = arith.subf %222, %227 : vector<8x128xf32>
    %233 = arith.mulf %232, %232 : vector<8x128xf32>
    %234 = arith.addf %231, %233 : vector<8x128xf32>
    %cst_117 = arith.constant 2.000000e+00 : f32
    %235 = vector.broadcast %cst_117 : f32 to vector<8x128xf32>
    %236 = arith.divf %234, %235 : vector<8x128xf32>
    %cst_118 = arith.constant 9.99999974E-6 : f32
    %237 = vector.broadcast %cst_118 : f32 to vector<8x128xf32>
    %238 = arith.addf %236, %237 : vector<8x128xf32>
    %239 = math.rsqrt %238 : vector<8x128xf32>
    %c40_119 = arith.constant 40 : index
    %c0_120 = arith.constant 0 : index
    %240 = vector.load %arg3[%c40_119, %c0_120] : memref<136x128xf32, #tpu.memory_space<vmem>>, vector<8x128xf32>
    %c40_121 = arith.constant 40 : index
    %c0_122 = arith.constant 0 : index
    %241 = vector.load %arg4[%c40_121, %c0_122] : memref<136x128xf32, #tpu.memory_space<vmem>>, vector<8x128xf32>
    %242 = arith.mulf %239, %240 : vector<8x128xf32>
    %243 = arith.mulf %227, %242 : vector<8x128xf32>
    %244 = arith.subf %241, %243 : vector<8x128xf32>
    %245 = tpu.concatenate %242, %242 in 1 : vector<8x128xf32>, vector<8x128xf32> -> vector<8x256xf32>
    %246 = tpu.concatenate %244, %244 in 1 : vector<8x128xf32>, vector<8x128xf32> -> vector<8x256xf32>
    %247 = arith.mulf %220, %245 : vector<8x256xf32>
    %248 = arith.addf %247, %246 : vector<8x256xf32>
    %cst_123 = arith.constant 0.000000e+00 : f32
    %249 = vector.broadcast %cst_123 : f32 to vector<8x256xf32>
    %250 = arith.cmpf oge, %248, %249 : vector<8x256xf32>
    %251 = vector.broadcast %8 : f32 to vector<8x256xf32>
    %252 = arith.mulf %251, %248 : vector<8x256xf32>
    %253 = arith.select %250, %248, %252 : vector<8x256xi1>, vector<8x256xf32>
    %c56 = arith.constant 56 : index
    %c0_124 = arith.constant 0 : index
    %254 = vector.load %arg13[%c56, %c0_124] : memref<168x256xf32, #tpu.memory_space<vmem>>, vector<8x256xf32>
    tpu.vector_store %arg13[%c56, %c0_124], %253 {strides = array<i32>} : memref<168x256xf32, #tpu.memory_space<vmem>>, vector<8x256xf32>,
    %c24_125 = arith.constant 24 : index
    %c0_126 = arith.constant 0 : index
    %255 = vector.load %arg1[%c24_125, %c0_126] : memref<74x256xf32, #tpu.memory_space<vmem>>, vector<10x256xf32>
    %c0_127 = arith.constant 0 : index
    %c0_128 = arith.constant 0 : index
    %256 = vector.load %arg15[%c0_127, %c0_128] : memref<160x256xf32, #tpu.memory_space<vmem>>, vector<10x256xf32>
    tpu.vector_store %arg15[%c0_127, %c0_128], %255 {strides = array<i32>} : memref<160x256xf32, #tpu.memory_space<vmem>>, vector<10x256xf32>,
    %257 = vector.extract_strided_slice %255 {offsets = [0, 1], sizes = [10, 255], strides = [1, 1]} : vector<10x256xf32> to vector<10x255xf32>
    %c10_129 = arith.constant 10 : index
    %c0_130 = arith.constant 0 : index
    %258 = vector.load %arg15[%c10_129, %c0_130] : memref<160x256xf32, #tpu.memory_space<vmem>>, vector<10x255xf32>
    tpu.vector_store %arg15[%c10_129, %c0_130], %257 {strides = array<i32>} : memref<160x256xf32, #tpu.memory_space<vmem>>, vector<10x255xf32>,
    %c0_131 = arith.constant 0 : index
    %c0_132 = arith.constant 0 : index
    %259 = vector.load %arg15[%c0_131, %c0_132] : memref<160x256xf32, #tpu.memory_space<vmem>>, vector<32x256xf32>
    %260 = arith.truncf %259 : vector<32x256xf32> to vector<32x256xbf16>
    %cst_133 = arith.constant dense<0.000000e+00> : vector<8x256xf32>
    %261 = tpu.matmul %7, %260, %cst_133 {dimension_numbers = #tpu.dot_dimension_numbers<[1], [0], [0], [1], [0, 0, 1, 1], [], []>} : vector<8x32xbf16>, vector<32x256xbf16>, vector<8x256xf32> -> vector<8x256xf32>
    %262 = vector.extract_strided_slice %261 {offsets = [0, 0], sizes = [8, 128], strides = [1, 1]} : vector<8x256xf32> to vector<8x128xf32>
    %263 = vector.extract_strided_slice %261 {offsets = [0, 128], sizes = [8, 128], strides = [1, 1]} : vector<8x256xf32> to vector<8x128xf32>
    %cst_134 = arith.constant 0.000000e+00 : f32
    %264 = vector.broadcast %cst_134 : f32 to vector<8x128xf32>
    %265 = arith.addf %264, %262 : vector<8x128xf32>
    %266 = arith.addf %265, %263 : vector<8x128xf32>
    %cst_135 = arith.constant 2.000000e+00 : f32
    %267 = vector.broadcast %cst_135 : f32 to vector<8x128xf32>
    %268 = arith.divf %266, %267 : vector<8x128xf32>
    %269 = arith.subf %262, %268 : vector<8x128xf32>
    %270 = arith.mulf %269, %269 : vector<8x128xf32>
    %cst_136 = arith.constant 0.000000e+00 : f32
    %271 = vector.broadcast %cst_136 : f32 to vector<8x128xf32>
    %272 = arith.addf %271, %270 : vector<8x128xf32>
    %273 = arith.subf %263, %268 : vector<8x128xf32>
    %274 = arith.mulf %273, %273 : vector<8x128xf32>
    %275 = arith.addf %272, %274 : vector<8x128xf32>
    %cst_137 = arith.constant 2.000000e+00 : f32
    %276 = vector.broadcast %cst_137 : f32 to vector<8x128xf32>
    %277 = arith.divf %275, %276 : vector<8x128xf32>
    %cst_138 = arith.constant 9.99999974E-6 : f32
    %278 = vector.broadcast %cst_138 : f32 to vector<8x128xf32>
    %279 = arith.addf %277, %278 : vector<8x128xf32>
    %280 = math.rsqrt %279 : vector<8x128xf32>
    %c48_139 = arith.constant 48 : index
    %c0_140 = arith.constant 0 : index
    %281 = vector.load %arg3[%c48_139, %c0_140] : memref<136x128xf32, #tpu.memory_space<vmem>>, vector<8x128xf32>
    %c48_141 = arith.constant 48 : index
    %c0_142 = arith.constant 0 : index
    %282 = vector.load %arg4[%c48_141, %c0_142] : memref<136x128xf32, #tpu.memory_space<vmem>>, vector<8x128xf32>
    %283 = arith.mulf %280, %281 : vector<8x128xf32>
    %284 = arith.mulf %268, %283 : vector<8x128xf32>
    %285 = arith.subf %282, %284 : vector<8x128xf32>
    %286 = tpu.concatenate %283, %283 in 1 : vector<8x128xf32>, vector<8x128xf32> -> vector<8x256xf32>
    %287 = tpu.concatenate %285, %285 in 1 : vector<8x128xf32>, vector<8x128xf32> -> vector<8x256xf32>
    %288 = arith.mulf %261, %286 : vector<8x256xf32>
    %289 = arith.addf %288, %287 : vector<8x256xf32>
    %cst_143 = arith.constant 0.000000e+00 : f32
    %290 = vector.broadcast %cst_143 : f32 to vector<8x256xf32>
    %291 = arith.cmpf oge, %289, %290 : vector<8x256xf32>
    %292 = vector.broadcast %8 : f32 to vector<8x256xf32>
    %293 = arith.mulf %292, %289 : vector<8x256xf32>
    %294 = arith.select %291, %289, %293 : vector<8x256xi1>, vector<8x256xf32>
    %c64 = arith.constant 64 : index
    %c0_144 = arith.constant 0 : index
    %295 = vector.load %arg13[%c64, %c0_144] : memref<168x256xf32, #tpu.memory_space<vmem>>, vector<8x256xf32>
    tpu.vector_store %arg13[%c64, %c0_144], %294 {strides = array<i32>} : memref<168x256xf32, #tpu.memory_space<vmem>>, vector<8x256xf32>,
    %c28 = arith.constant 28 : index
    %c0_145 = arith.constant 0 : index
    %296 = vector.load %arg1[%c28, %c0_145] : memref<74x256xf32, #tpu.memory_space<vmem>>, vector<10x256xf32>
    %c0_146 = arith.constant 0 : index
    %c0_147 = arith.constant 0 : index
    %297 = vector.load %arg15[%c0_146, %c0_147] : memref<160x256xf32, #tpu.memory_space<vmem>>, vector<10x256xf32>
    tpu.vector_store %arg15[%c0_146, %c0_147], %296 {strides = array<i32>} : memref<160x256xf32, #tpu.memory_space<vmem>>, vector<10x256xf32>,
    %298 = vector.extract_strided_slice %296 {offsets = [0, 1], sizes = [10, 255], strides = [1, 1]} : vector<10x256xf32> to vector<10x255xf32>
    %c10_148 = arith.constant 10 : index
    %c0_149 = arith.constant 0 : index
    %299 = vector.load %arg15[%c10_148, %c0_149] : memref<160x256xf32, #tpu.memory_space<vmem>>, vector<10x255xf32>
    tpu.vector_store %arg15[%c10_148, %c0_149], %298 {strides = array<i32>} : memref<160x256xf32, #tpu.memory_space<vmem>>, vector<10x255xf32>,
    %c0_150 = arith.constant 0 : index
    %c0_151 = arith.constant 0 : index
    %300 = vector.load %arg15[%c0_150, %c0_151] : memref<160x256xf32, #tpu.memory_space<vmem>>, vector<32x256xf32>
    %301 = arith.truncf %300 : vector<32x256xf32> to vector<32x256xbf16>
    %cst_152 = arith.constant dense<0.000000e+00> : vector<8x256xf32>
    %302 = tpu.matmul %7, %301, %cst_152 {dimension_numbers = #tpu.dot_dimension_numbers<[1], [0], [0], [1], [0, 0, 1, 1], [], []>} : vector<8x32xbf16>, vector<32x256xbf16>, vector<8x256xf32> -> vector<8x256xf32>
    %303 = vector.extract_strided_slice %302 {offsets = [0, 0], sizes = [8, 128], strides = [1, 1]} : vector<8x256xf32> to vector<8x128xf32>
    %304 = vector.extract_strided_slice %302 {offsets = [0, 128], sizes = [8, 128], strides = [1, 1]} : vector<8x256xf32> to vector<8x128xf32>
    %cst_153 = arith.constant 0.000000e+00 : f32
    %305 = vector.broadcast %cst_153 : f32 to vector<8x128xf32>
    %306 = arith.addf %305, %303 : vector<8x128xf32>
    %307 = arith.addf %306, %304 : vector<8x128xf32>
    %cst_154 = arith.constant 2.000000e+00 : f32
    %308 = vector.broadcast %cst_154 : f32 to vector<8x128xf32>
    %309 = arith.divf %307, %308 : vector<8x128xf32>
    %310 = arith.subf %303, %309 : vector<8x128xf32>
    %311 = arith.mulf %310, %310 : vector<8x128xf32>
    %cst_155 = arith.constant 0.000000e+00 : f32
    %312 = vector.broadcast %cst_155 : f32 to vector<8x128xf32>
    %313 = arith.addf %312, %311 : vector<8x128xf32>
    %314 = arith.subf %304, %309 : vector<8x128xf32>
    %315 = arith.mulf %314, %314 : vector<8x128xf32>
    %316 = arith.addf %313, %315 : vector<8x128xf32>
    %cst_156 = arith.constant 2.000000e+00 : f32
    %317 = vector.broadcast %cst_156 : f32 to vector<8x128xf32>
    %318 = arith.divf %316, %317 : vector<8x128xf32>
    %cst_157 = arith.constant 9.99999974E-6 : f32
    %319 = vector.broadcast %cst_157 : f32 to vector<8x128xf32>
    %320 = arith.addf %318, %319 : vector<8x128xf32>
    %321 = math.rsqrt %320 : vector<8x128xf32>
    %c56_158 = arith.constant 56 : index
    %c0_159 = arith.constant 0 : index
    %322 = vector.load %arg3[%c56_158, %c0_159] : memref<136x128xf32, #tpu.memory_space<vmem>>, vector<8x128xf32>
    %c56_160 = arith.constant 56 : index
    %c0_161 = arith.constant 0 : index
    %323 = vector.load %arg4[%c56_160, %c0_161] : memref<136x128xf32, #tpu.memory_space<vmem>>, vector<8x128xf32>
    %324 = arith.mulf %321, %322 : vector<8x128xf32>
    %325 = arith.mulf %309, %324 : vector<8x128xf32>
    %326 = arith.subf %323, %325 : vector<8x128xf32>
    %327 = tpu.concatenate %324, %324 in 1 : vector<8x128xf32>, vector<8x128xf32> -> vector<8x256xf32>
    %328 = tpu.concatenate %326, %326 in 1 : vector<8x128xf32>, vector<8x128xf32> -> vector<8x256xf32>
    %329 = arith.mulf %302, %327 : vector<8x256xf32>
    %330 = arith.addf %329, %328 : vector<8x256xf32>
    %cst_162 = arith.constant 0.000000e+00 : f32
    %331 = vector.broadcast %cst_162 : f32 to vector<8x256xf32>
    %332 = arith.cmpf oge, %330, %331 : vector<8x256xf32>
    %333 = vector.broadcast %8 : f32 to vector<8x256xf32>
    %334 = arith.mulf %333, %330 : vector<8x256xf32>
    %335 = arith.select %332, %330, %334 : vector<8x256xi1>, vector<8x256xf32>
    %c72 = arith.constant 72 : index
    %c0_163 = arith.constant 0 : index
    %336 = vector.load %arg13[%c72, %c0_163] : memref<168x256xf32, #tpu.memory_space<vmem>>, vector<8x256xf32>
    tpu.vector_store %arg13[%c72, %c0_163], %335 {strides = array<i32>} : memref<168x256xf32, #tpu.memory_space<vmem>>, vector<8x256xf32>,
    %c32_164 = arith.constant 32 : index
    %c0_165 = arith.constant 0 : index
    %337 = vector.load %arg1[%c32_164, %c0_165] : memref<74x256xf32, #tpu.memory_space<vmem>>, vector<10x256xf32>
    %c0_166 = arith.constant 0 : index
    %c0_167 = arith.constant 0 : index
    %338 = vector.load %arg15[%c0_166, %c0_167] : memref<160x256xf32, #tpu.memory_space<vmem>>, vector<10x256xf32>
    tpu.vector_store %arg15[%c0_166, %c0_167], %337 {strides = array<i32>} : memref<160x256xf32, #tpu.memory_space<vmem>>, vector<10x256xf32>,
    %339 = vector.extract_strided_slice %337 {offsets = [0, 1], sizes = [10, 255], strides = [1, 1]} : vector<10x256xf32> to vector<10x255xf32>
    %c10_168 = arith.constant 10 : index
    %c0_169 = arith.constant 0 : index
    %340 = vector.load %arg15[%c10_168, %c0_169] : memref<160x256xf32, #tpu.memory_space<vmem>>, vector<10x255xf32>
    tpu.vector_store %arg15[%c10_168, %c0_169], %339 {strides = array<i32>} : memref<160x256xf32, #tpu.memory_space<vmem>>, vector<10x255xf32>,
    %c0_170 = arith.constant 0 : index
    %c0_171 = arith.constant 0 : index
    %341 = vector.load %arg15[%c0_170, %c0_171] : memref<160x256xf32, #tpu.memory_space<vmem>>, vector<32x256xf32>
    %342 = arith.truncf %341 : vector<32x256xf32> to vector<32x256xbf16>
    %cst_172 = arith.constant dense<0.000000e+00> : vector<8x256xf32>
    %343 = tpu.matmul %7, %342, %cst_172 {dimension_numbers = #tpu.dot_dimension_numbers<[1], [0], [0], [1], [0, 0, 1, 1], [], []>} : vector<8x32xbf16>, vector<32x256xbf16>, vector<8x256xf32> -> vector<8x256xf32>
    %344 = vector.extract_strided_slice %343 {offsets = [0, 0], sizes = [8, 128], strides = [1, 1]} : vector<8x256xf32> to vector<8x128xf32>
    %345 = vector.extract_strided_slice %343 {offsets = [0, 128], sizes = [8, 128], strides = [1, 1]} : vector<8x256xf32> to vector<8x128xf32>
    %cst_173 = arith.constant 0.000000e+00 : f32
    %346 = vector.broadcast %cst_173 : f32 to vector<8x128xf32>
    %347 = arith.addf %346, %344 : vector<8x128xf32>
    %348 = arith.addf %347, %345 : vector<8x128xf32>
    %cst_174 = arith.constant 2.000000e+00 : f32
    %349 = vector.broadcast %cst_174 : f32 to vector<8x128xf32>
    %350 = arith.divf %348, %349 : vector<8x128xf32>
    %351 = arith.subf %344, %350 : vector<8x128xf32>
    %352 = arith.mulf %351, %351 : vector<8x128xf32>
    %cst_175 = arith.constant 0.000000e+00 : f32
    %353 = vector.broadcast %cst_175 : f32 to vector<8x128xf32>
    %354 = arith.addf %353, %352 : vector<8x128xf32>
    %355 = arith.subf %345, %350 : vector<8x128xf32>
    %356 = arith.mulf %355, %355 : vector<8x128xf32>
    %357 = arith.addf %354, %356 : vector<8x128xf32>
    %cst_176 = arith.constant 2.000000e+00 : f32
    %358 = vector.broadcast %cst_176 : f32 to vector<8x128xf32>
    %359 = arith.divf %357, %358 : vector<8x128xf32>
    %cst_177 = arith.constant 9.99999974E-6 : f32
    %360 = vector.broadcast %cst_177 : f32 to vector<8x128xf32>
    %361 = arith.addf %359, %360 : vector<8x128xf32>
    %362 = math.rsqrt %361 : vector<8x128xf32>
    %c64_178 = arith.constant 64 : index
    %c0_179 = arith.constant 0 : index
    %363 = vector.load %arg3[%c64_178, %c0_179] : memref<136x128xf32, #tpu.memory_space<vmem>>, vector<8x128xf32>
    %c64_180 = arith.constant 64 : index
    %c0_181 = arith.constant 0 : index
    %364 = vector.load %arg4[%c64_180, %c0_181] : memref<136x128xf32, #tpu.memory_space<vmem>>, vector<8x128xf32>
    %365 = arith.mulf %362, %363 : vector<8x128xf32>
    %366 = arith.mulf %350, %365 : vector<8x128xf32>
    %367 = arith.subf %364, %366 : vector<8x128xf32>
    %368 = tpu.concatenate %365, %365 in 1 : vector<8x128xf32>, vector<8x128xf32> -> vector<8x256xf32>
    %369 = tpu.concatenate %367, %367 in 1 : vector<8x128xf32>, vector<8x128xf32> -> vector<8x256xf32>
    %370 = arith.mulf %343, %368 : vector<8x256xf32>
    %371 = arith.addf %370, %369 : vector<8x256xf32>
    %cst_182 = arith.constant 0.000000e+00 : f32
    %372 = vector.broadcast %cst_182 : f32 to vector<8x256xf32>
    %373 = arith.cmpf oge, %371, %372 : vector<8x256xf32>
    %374 = vector.broadcast %8 : f32 to vector<8x256xf32>
    %375 = arith.mulf %374, %371 : vector<8x256xf32>
    %376 = arith.select %373, %371, %375 : vector<8x256xi1>, vector<8x256xf32>
    %c80 = arith.constant 80 : index
    %c0_183 = arith.constant 0 : index
    %377 = vector.load %arg13[%c80, %c0_183] : memref<168x256xf32, #tpu.memory_space<vmem>>, vector<8x256xf32>
    tpu.vector_store %arg13[%c80, %c0_183], %376 {strides = array<i32>} : memref<168x256xf32, #tpu.memory_space<vmem>>, vector<8x256xf32>,
    %c36 = arith.constant 36 : index
    %c0_184 = arith.constant 0 : index
    %378 = vector.load %arg1[%c36, %c0_184] : memref<74x256xf32, #tpu.memory_space<vmem>>, vector<10x256xf32>
    %c0_185 = arith.constant 0 : index
    %c0_186 = arith.constant 0 : index
    %379 = vector.load %arg15[%c0_185, %c0_186] : memref<160x256xf32, #tpu.memory_space<vmem>>, vector<10x256xf32>
    tpu.vector_store %arg15[%c0_185, %c0_186], %378 {strides = array<i32>} : memref<160x256xf32, #tpu.memory_space<vmem>>, vector<10x256xf32>,
    %380 = vector.extract_strided_slice %378 {offsets = [0, 1], sizes = [10, 255], strides = [1, 1]} : vector<10x256xf32> to vector<10x255xf32>
    %c10_187 = arith.constant 10 : index
    %c0_188 = arith.constant 0 : index
    %381 = vector.load %arg15[%c10_187, %c0_188] : memref<160x256xf32, #tpu.memory_space<vmem>>, vector<10x255xf32>
    tpu.vector_store %arg15[%c10_187, %c0_188], %380 {strides = array<i32>} : memref<160x256xf32, #tpu.memory_space<vmem>>, vector<10x255xf32>,
    %c0_189 = arith.constant 0 : index
    %c0_190 = arith.constant 0 : index
    %382 = vector.load %arg15[%c0_189, %c0_190] : memref<160x256xf32, #tpu.memory_space<vmem>>, vector<32x256xf32>
    %383 = arith.truncf %382 : vector<32x256xf32> to vector<32x256xbf16>
    %cst_191 = arith.constant dense<0.000000e+00> : vector<8x256xf32>
    %384 = tpu.matmul %7, %383, %cst_191 {dimension_numbers = #tpu.dot_dimension_numbers<[1], [0], [0], [1], [0, 0, 1, 1], [], []>} : vector<8x32xbf16>, vector<32x256xbf16>, vector<8x256xf32> -> vector<8x256xf32>
    %385 = vector.extract_strided_slice %384 {offsets = [0, 0], sizes = [8, 128], strides = [1, 1]} : vector<8x256xf32> to vector<8x128xf32>
    %386 = vector.extract_strided_slice %384 {offsets = [0, 128], sizes = [8, 128], strides = [1, 1]} : vector<8x256xf32> to vector<8x128xf32>
    %cst_192 = arith.constant 0.000000e+00 : f32
    %387 = vector.broadcast %cst_192 : f32 to vector<8x128xf32>
    %388 = arith.addf %387, %385 : vector<8x128xf32>
    %389 = arith.addf %388, %386 : vector<8x128xf32>
    %cst_193 = arith.constant 2.000000e+00 : f32
    %390 = vector.broadcast %cst_193 : f32 to vector<8x128xf32>
    %391 = arith.divf %389, %390 : vector<8x128xf32>
    %392 = arith.subf %385, %391 : vector<8x128xf32>
    %393 = arith.mulf %392, %392 : vector<8x128xf32>
    %cst_194 = arith.constant 0.000000e+00 : f32
    %394 = vector.broadcast %cst_194 : f32 to vector<8x128xf32>
    %395 = arith.addf %394, %393 : vector<8x128xf32>
    %396 = arith.subf %386, %391 : vector<8x128xf32>
    %397 = arith.mulf %396, %396 : vector<8x128xf32>
    %398 = arith.addf %395, %397 : vector<8x128xf32>
    %cst_195 = arith.constant 2.000000e+00 : f32
    %399 = vector.broadcast %cst_195 : f32 to vector<8x128xf32>
    %400 = arith.divf %398, %399 : vector<8x128xf32>
    %cst_196 = arith.constant 9.99999974E-6 : f32
    %401 = vector.broadcast %cst_196 : f32 to vector<8x128xf32>
    %402 = arith.addf %400, %401 : vector<8x128xf32>
    %403 = math.rsqrt %402 : vector<8x128xf32>
    %c72_197 = arith.constant 72 : index
    %c0_198 = arith.constant 0 : index
    %404 = vector.load %arg3[%c72_197, %c0_198] : memref<136x128xf32, #tpu.memory_space<vmem>>, vector<8x128xf32>
    %c72_199 = arith.constant 72 : index
    %c0_200 = arith.constant 0 : index
    %405 = vector.load %arg4[%c72_199, %c0_200] : memref<136x128xf32, #tpu.memory_space<vmem>>, vector<8x128xf32>
    %406 = arith.mulf %403, %404 : vector<8x128xf32>
    %407 = arith.mulf %391, %406 : vector<8x128xf32>
    %408 = arith.subf %405, %407 : vector<8x128xf32>
    %409 = tpu.concatenate %406, %406 in 1 : vector<8x128xf32>, vector<8x128xf32> -> vector<8x256xf32>
    %410 = tpu.concatenate %408, %408 in 1 : vector<8x128xf32>, vector<8x128xf32> -> vector<8x256xf32>
    %411 = arith.mulf %384, %409 : vector<8x256xf32>
    %412 = arith.addf %411, %410 : vector<8x256xf32>
    %cst_201 = arith.constant 0.000000e+00 : f32
    %413 = vector.broadcast %cst_201 : f32 to vector<8x256xf32>
    %414 = arith.cmpf oge, %412, %413 : vector<8x256xf32>
    %415 = vector.broadcast %8 : f32 to vector<8x256xf32>
    %416 = arith.mulf %415, %412 : vector<8x256xf32>
    %417 = arith.select %414, %412, %416 : vector<8x256xi1>, vector<8x256xf32>
    %c88 = arith.constant 88 : index
    %c0_202 = arith.constant 0 : index
    %418 = vector.load %arg13[%c88, %c0_202] : memref<168x256xf32, #tpu.memory_space<vmem>>, vector<8x256xf32>
    tpu.vector_store %arg13[%c88, %c0_202], %417 {strides = array<i32>} : memref<168x256xf32, #tpu.memory_space<vmem>>, vector<8x256xf32>,
    %c40_203 = arith.constant 40 : index
    %c0_204 = arith.constant 0 : index
    %419 = vector.load %arg1[%c40_203, %c0_204] : memref<74x256xf32, #tpu.memory_space<vmem>>, vector<10x256xf32>
    %c0_205 = arith.constant 0 : index
    %c0_206 = arith.constant 0 : index
    %420 = vector.load %arg15[%c0_205, %c0_206] : memref<160x256xf32, #tpu.memory_space<vmem>>, vector<10x256xf32>
    tpu.vector_store %arg15[%c0_205, %c0_206], %419 {strides = array<i32>} : memref<160x256xf32, #tpu.memory_space<vmem>>, vector<10x256xf32>,
    %421 = vector.extract_strided_slice %419 {offsets = [0, 1], sizes = [10, 255], strides = [1, 1]} : vector<10x256xf32> to vector<10x255xf32>
    %c10_207 = arith.constant 10 : index
    %c0_208 = arith.constant 0 : index
    %422 = vector.load %arg15[%c10_207, %c0_208] : memref<160x256xf32, #tpu.memory_space<vmem>>, vector<10x255xf32>
    tpu.vector_store %arg15[%c10_207, %c0_208], %421 {strides = array<i32>} : memref<160x256xf32, #tpu.memory_space<vmem>>, vector<10x255xf32>,
    %c0_209 = arith.constant 0 : index
    %c0_210 = arith.constant 0 : index
    %423 = vector.load %arg15[%c0_209, %c0_210] : memref<160x256xf32, #tpu.memory_space<vmem>>, vector<32x256xf32>
    %424 = arith.truncf %423 : vector<32x256xf32> to vector<32x256xbf16>
    %cst_211 = arith.constant dense<0.000000e+00> : vector<8x256xf32>
    %425 = tpu.matmul %7, %424, %cst_211 {dimension_numbers = #tpu.dot_dimension_numbers<[1], [0], [0], [1], [0, 0, 1, 1], [], []>} : vector<8x32xbf16>, vector<32x256xbf16>, vector<8x256xf32> -> vector<8x256xf32>
    %426 = vector.extract_strided_slice %425 {offsets = [0, 0], sizes = [8, 128], strides = [1, 1]} : vector<8x256xf32> to vector<8x128xf32>
    %427 = vector.extract_strided_slice %425 {offsets = [0, 128], sizes = [8, 128], strides = [1, 1]} : vector<8x256xf32> to vector<8x128xf32>
    %cst_212 = arith.constant 0.000000e+00 : f32
    %428 = vector.broadcast %cst_212 : f32 to vector<8x128xf32>
    %429 = arith.addf %428, %426 : vector<8x128xf32>
    %430 = arith.addf %429, %427 : vector<8x128xf32>
    %cst_213 = arith.constant 2.000000e+00 : f32
    %431 = vector.broadcast %cst_213 : f32 to vector<8x128xf32>
    %432 = arith.divf %430, %431 : vector<8x128xf32>
    %433 = arith.subf %426, %432 : vector<8x128xf32>
    %434 = arith.mulf %433, %433 : vector<8x128xf32>
    %cst_214 = arith.constant 0.000000e+00 : f32
    %435 = vector.broadcast %cst_214 : f32 to vector<8x128xf32>
    %436 = arith.addf %435, %434 : vector<8x128xf32>
    %437 = arith.subf %427, %432 : vector<8x128xf32>
    %438 = arith.mulf %437, %437 : vector<8x128xf32>
    %439 = arith.addf %436, %438 : vector<8x128xf32>
    %cst_215 = arith.constant 2.000000e+00 : f32
    %440 = vector.broadcast %cst_215 : f32 to vector<8x128xf32>
    %441 = arith.divf %439, %440 : vector<8x128xf32>
    %cst_216 = arith.constant 9.99999974E-6 : f32
    %442 = vector.broadcast %cst_216 : f32 to vector<8x128xf32>
    %443 = arith.addf %441, %442 : vector<8x128xf32>
    %444 = math.rsqrt %443 : vector<8x128xf32>
    %c80_217 = arith.constant 80 : index
    %c0_218 = arith.constant 0 : index
    %445 = vector.load %arg3[%c80_217, %c0_218] : memref<136x128xf32, #tpu.memory_space<vmem>>, vector<8x128xf32>
    %c80_219 = arith.constant 80 : index
    %c0_220 = arith.constant 0 : index
    %446 = vector.load %arg4[%c80_219, %c0_220] : memref<136x128xf32, #tpu.memory_space<vmem>>, vector<8x128xf32>
    %447 = arith.mulf %444, %445 : vector<8x128xf32>
    %448 = arith.mulf %432, %447 : vector<8x128xf32>
    %449 = arith.subf %446, %448 : vector<8x128xf32>
    %450 = tpu.concatenate %447, %447 in 1 : vector<8x128xf32>, vector<8x128xf32> -> vector<8x256xf32>
    %451 = tpu.concatenate %449, %449 in 1 : vector<8x128xf32>, vector<8x128xf32> -> vector<8x256xf32>
    %452 = arith.mulf %425, %450 : vector<8x256xf32>
    %453 = arith.addf %452, %451 : vector<8x256xf32>
    %cst_221 = arith.constant 0.000000e+00 : f32
    %454 = vector.broadcast %cst_221 : f32 to vector<8x256xf32>
    %455 = arith.cmpf oge, %453, %454 : vector<8x256xf32>
    %456 = vector.broadcast %8 : f32 to vector<8x256xf32>
    %457 = arith.mulf %456, %453 : vector<8x256xf32>
    %458 = arith.select %455, %453, %457 : vector<8x256xi1>, vector<8x256xf32>
    %c96 = arith.constant 96 : index
    %c0_222 = arith.constant 0 : index
    %459 = vector.load %arg13[%c96, %c0_222] : memref<168x256xf32, #tpu.memory_space<vmem>>, vector<8x256xf32>
    tpu.vector_store %arg13[%c96, %c0_222], %458 {strides = array<i32>} : memref<168x256xf32, #tpu.memory_space<vmem>>, vector<8x256xf32>,
    %c44 = arith.constant 44 : index
    %c0_223 = arith.constant 0 : index
    %460 = vector.load %arg1[%c44, %c0_223] : memref<74x256xf32, #tpu.memory_space<vmem>>, vector<10x256xf32>
    %c0_224 = arith.constant 0 : index
    %c0_225 = arith.constant 0 : index
    %461 = vector.load %arg15[%c0_224, %c0_225] : memref<160x256xf32, #tpu.memory_space<vmem>>, vector<10x256xf32>
    tpu.vector_store %arg15[%c0_224, %c0_225], %460 {strides = array<i32>} : memref<160x256xf32, #tpu.memory_space<vmem>>, vector<10x256xf32>,
    %462 = vector.extract_strided_slice %460 {offsets = [0, 1], sizes = [10, 255], strides = [1, 1]} : vector<10x256xf32> to vector<10x255xf32>
    %c10_226 = arith.constant 10 : index
    %c0_227 = arith.constant 0 : index
    %463 = vector.load %arg15[%c10_226, %c0_227] : memref<160x256xf32, #tpu.memory_space<vmem>>, vector<10x255xf32>
    tpu.vector_store %arg15[%c10_226, %c0_227], %462 {strides = array<i32>} : memref<160x256xf32, #tpu.memory_space<vmem>>, vector<10x255xf32>,
    %c0_228 = arith.constant 0 : index
    %c0_229 = arith.constant 0 : index
    %464 = vector.load %arg15[%c0_228, %c0_229] : memref<160x256xf32, #tpu.memory_space<vmem>>, vector<32x256xf32>
    %465 = arith.truncf %464 : vector<32x256xf32> to vector<32x256xbf16>
    %cst_230 = arith.constant dense<0.000000e+00> : vector<8x256xf32>
    %466 = tpu.matmul %7, %465, %cst_230 {dimension_numbers = #tpu.dot_dimension_numbers<[1], [0], [0], [1], [0, 0, 1, 1], [], []>} : vector<8x32xbf16>, vector<32x256xbf16>, vector<8x256xf32> -> vector<8x256xf32>
    %467 = vector.extract_strided_slice %466 {offsets = [0, 0], sizes = [8, 128], strides = [1, 1]} : vector<8x256xf32> to vector<8x128xf32>
    %468 = vector.extract_strided_slice %466 {offsets = [0, 128], sizes = [8, 128], strides = [1, 1]} : vector<8x256xf32> to vector<8x128xf32>
    %cst_231 = arith.constant 0.000000e+00 : f32
    %469 = vector.broadcast %cst_231 : f32 to vector<8x128xf32>
    %470 = arith.addf %469, %467 : vector<8x128xf32>
    %471 = arith.addf %470, %468 : vector<8x128xf32>
    %cst_232 = arith.constant 2.000000e+00 : f32
    %472 = vector.broadcast %cst_232 : f32 to vector<8x128xf32>
    %473 = arith.divf %471, %472 : vector<8x128xf32>
    %474 = arith.subf %467, %473 : vector<8x128xf32>
    %475 = arith.mulf %474, %474 : vector<8x128xf32>
    %cst_233 = arith.constant 0.000000e+00 : f32
    %476 = vector.broadcast %cst_233 : f32 to vector<8x128xf32>
    %477 = arith.addf %476, %475 : vector<8x128xf32>
    %478 = arith.subf %468, %473 : vector<8x128xf32>
    %479 = arith.mulf %478, %478 : vector<8x128xf32>
    %480 = arith.addf %477, %479 : vector<8x128xf32>
    %cst_234 = arith.constant 2.000000e+00 : f32
    %481 = vector.broadcast %cst_234 : f32 to vector<8x128xf32>
    %482 = arith.divf %480, %481 : vector<8x128xf32>
    %cst_235 = arith.constant 9.99999974E-6 : f32
    %483 = vector.broadcast %cst_235 : f32 to vector<8x128xf32>
    %484 = arith.addf %482, %483 : vector<8x128xf32>
    %485 = math.rsqrt %484 : vector<8x128xf32>
    %c88_236 = arith.constant 88 : index
    %c0_237 = arith.constant 0 : index
    %486 = vector.load %arg3[%c88_236, %c0_237] : memref<136x128xf32, #tpu.memory_space<vmem>>, vector<8x128xf32>
    %c88_238 = arith.constant 88 : index
    %c0_239 = arith.constant 0 : index
    %487 = vector.load %arg4[%c88_238, %c0_239] : memref<136x128xf32, #tpu.memory_space<vmem>>, vector<8x128xf32>
    %488 = arith.mulf %485, %486 : vector<8x128xf32>
    %489 = arith.mulf %473, %488 : vector<8x128xf32>
    %490 = arith.subf %487, %489 : vector<8x128xf32>
    %491 = tpu.concatenate %488, %488 in 1 : vector<8x128xf32>, vector<8x128xf32> -> vector<8x256xf32>
    %492 = tpu.concatenate %490, %490 in 1 : vector<8x128xf32>, vector<8x128xf32> -> vector<8x256xf32>
    %493 = arith.mulf %466, %491 : vector<8x256xf32>
    %494 = arith.addf %493, %492 : vector<8x256xf32>
    %cst_240 = arith.constant 0.000000e+00 : f32
    %495 = vector.broadcast %cst_240 : f32 to vector<8x256xf32>
    %496 = arith.cmpf oge, %494, %495 : vector<8x256xf32>
    %497 = vector.broadcast %8 : f32 to vector<8x256xf32>
    %498 = arith.mulf %497, %494 : vector<8x256xf32>
    %499 = arith.select %496, %494, %498 : vector<8x256xi1>, vector<8x256xf32>
    %c104 = arith.constant 104 : index
    %c0_241 = arith.constant 0 : index
    %500 = vector.load %arg13[%c104, %c0_241] : memref<168x256xf32, #tpu.memory_space<vmem>>, vector<8x256xf32>
    tpu.vector_store %arg13[%c104, %c0_241], %499 {strides = array<i32>} : memref<168x256xf32, #tpu.memory_space<vmem>>, vector<8x256xf32>,
    %c48_242 = arith.constant 48 : index
    %c0_243 = arith.constant 0 : index
    %501 = vector.load %arg1[%c48_242, %c0_243] : memref<74x256xf32, #tpu.memory_space<vmem>>, vector<10x256xf32>
    %c0_244 = arith.constant 0 : index
    %c0_245 = arith.constant 0 : index
    %502 = vector.load %arg15[%c0_244, %c0_245] : memref<160x256xf32, #tpu.memory_space<vmem>>, vector<10x256xf32>
    tpu.vector_store %arg15[%c0_244, %c0_245], %501 {strides = array<i32>} : memref<160x256xf32, #tpu.memory_space<vmem>>, vector<10x256xf32>,
    %503 = vector.extract_strided_slice %501 {offsets = [0, 1], sizes = [10, 255], strides = [1, 1]} : vector<10x256xf32> to vector<10x255xf32>
    %c10_246 = arith.constant 10 : index
    %c0_247 = arith.constant 0 : index
    %504 = vector.load %arg15[%c10_246, %c0_247] : memref<160x256xf32, #tpu.memory_space<vmem>>, vector<10x255xf32>
    tpu.vector_store %arg15[%c10_246, %c0_247], %503 {strides = array<i32>} : memref<160x256xf32, #tpu.memory_space<vmem>>, vector<10x255xf32>,
    %c0_248 = arith.constant 0 : index
    %c0_249 = arith.constant 0 : index
    %505 = vector.load %arg15[%c0_248, %c0_249] : memref<160x256xf32, #tpu.memory_space<vmem>>, vector<32x256xf32>
    %506 = arith.truncf %505 : vector<32x256xf32> to vector<32x256xbf16>
    %cst_250 = arith.constant dense<0.000000e+00> : vector<8x256xf32>
    %507 = tpu.matmul %7, %506, %cst_250 {dimension_numbers = #tpu.dot_dimension_numbers<[1], [0], [0], [1], [0, 0, 1, 1], [], []>} : vector<8x32xbf16>, vector<32x256xbf16>, vector<8x256xf32> -> vector<8x256xf32>
    %508 = vector.extract_strided_slice %507 {offsets = [0, 0], sizes = [8, 128], strides = [1, 1]} : vector<8x256xf32> to vector<8x128xf32>
    %509 = vector.extract_strided_slice %507 {offsets = [0, 128], sizes = [8, 128], strides = [1, 1]} : vector<8x256xf32> to vector<8x128xf32>
    %cst_251 = arith.constant 0.000000e+00 : f32
    %510 = vector.broadcast %cst_251 : f32 to vector<8x128xf32>
    %511 = arith.addf %510, %508 : vector<8x128xf32>
    %512 = arith.addf %511, %509 : vector<8x128xf32>
    %cst_252 = arith.constant 2.000000e+00 : f32
    %513 = vector.broadcast %cst_252 : f32 to vector<8x128xf32>
    %514 = arith.divf %512, %513 : vector<8x128xf32>
    %515 = arith.subf %508, %514 : vector<8x128xf32>
    %516 = arith.mulf %515, %515 : vector<8x128xf32>
    %cst_253 = arith.constant 0.000000e+00 : f32
    %517 = vector.broadcast %cst_253 : f32 to vector<8x128xf32>
    %518 = arith.addf %517, %516 : vector<8x128xf32>
    %519 = arith.subf %509, %514 : vector<8x128xf32>
    %520 = arith.mulf %519, %519 : vector<8x128xf32>
    %521 = arith.addf %518, %520 : vector<8x128xf32>
    %cst_254 = arith.constant 2.000000e+00 : f32
    %522 = vector.broadcast %cst_254 : f32 to vector<8x128xf32>
    %523 = arith.divf %521, %522 : vector<8x128xf32>
    %cst_255 = arith.constant 9.99999974E-6 : f32
    %524 = vector.broadcast %cst_255 : f32 to vector<8x128xf32>
    %525 = arith.addf %523, %524 : vector<8x128xf32>
    %526 = math.rsqrt %525 : vector<8x128xf32>
    %c96_256 = arith.constant 96 : index
    %c0_257 = arith.constant 0 : index
    %527 = vector.load %arg3[%c96_256, %c0_257] : memref<136x128xf32, #tpu.memory_space<vmem>>, vector<8x128xf32>
    %c96_258 = arith.constant 96 : index
    %c0_259 = arith.constant 0 : index
    %528 = vector.load %arg4[%c96_258, %c0_259] : memref<136x128xf32, #tpu.memory_space<vmem>>, vector<8x128xf32>
    %529 = arith.mulf %526, %527 : vector<8x128xf32>
    %530 = arith.mulf %514, %529 : vector<8x128xf32>
    %531 = arith.subf %528, %530 : vector<8x128xf32>
    %532 = tpu.concatenate %529, %529 in 1 : vector<8x128xf32>, vector<8x128xf32> -> vector<8x256xf32>
    %533 = tpu.concatenate %531, %531 in 1 : vector<8x128xf32>, vector<8x128xf32> -> vector<8x256xf32>
    %534 = arith.mulf %507, %532 : vector<8x256xf32>
    %535 = arith.addf %534, %533 : vector<8x256xf32>
    %cst_260 = arith.constant 0.000000e+00 : f32
    %536 = vector.broadcast %cst_260 : f32 to vector<8x256xf32>
    %537 = arith.cmpf oge, %535, %536 : vector<8x256xf32>
    %538 = vector.broadcast %8 : f32 to vector<8x256xf32>
    %539 = arith.mulf %538, %535 : vector<8x256xf32>
    %540 = arith.select %537, %535, %539 : vector<8x256xi1>, vector<8x256xf32>
    %c112 = arith.constant 112 : index
    %c0_261 = arith.constant 0 : index
    %541 = vector.load %arg13[%c112, %c0_261] : memref<168x256xf32, #tpu.memory_space<vmem>>, vector<8x256xf32>
    tpu.vector_store %arg13[%c112, %c0_261], %540 {strides = array<i32>} : memref<168x256xf32, #tpu.memory_space<vmem>>, vector<8x256xf32>,
    %c52 = arith.constant 52 : index
    %c0_262 = arith.constant 0 : index
    %542 = vector.load %arg1[%c52, %c0_262] : memref<74x256xf32, #tpu.memory_space<vmem>>, vector<10x256xf32>
    %c0_263 = arith.constant 0 : index
    %c0_264 = arith.constant 0 : index
    %543 = vector.load %arg15[%c0_263, %c0_264] : memref<160x256xf32, #tpu.memory_space<vmem>>, vector<10x256xf32>
    tpu.vector_store %arg15[%c0_263, %c0_264], %542 {strides = array<i32>} : memref<160x256xf32, #tpu.memory_space<vmem>>, vector<10x256xf32>,
    %544 = vector.extract_strided_slice %542 {offsets = [0, 1], sizes = [10, 255], strides = [1, 1]} : vector<10x256xf32> to vector<10x255xf32>
    %c10_265 = arith.constant 10 : index
    %c0_266 = arith.constant 0 : index
    %545 = vector.load %arg15[%c10_265, %c0_266] : memref<160x256xf32, #tpu.memory_space<vmem>>, vector<10x255xf32>
    tpu.vector_store %arg15[%c10_265, %c0_266], %544 {strides = array<i32>} : memref<160x256xf32, #tpu.memory_space<vmem>>, vector<10x255xf32>,
    %c0_267 = arith.constant 0 : index
    %c0_268 = arith.constant 0 : index
    %546 = vector.load %arg15[%c0_267, %c0_268] : memref<160x256xf32, #tpu.memory_space<vmem>>, vector<32x256xf32>
    %547 = arith.truncf %546 : vector<32x256xf32> to vector<32x256xbf16>
    %cst_269 = arith.constant dense<0.000000e+00> : vector<8x256xf32>
    %548 = tpu.matmul %7, %547, %cst_269 {dimension_numbers = #tpu.dot_dimension_numbers<[1], [0], [0], [1], [0, 0, 1, 1], [], []>} : vector<8x32xbf16>, vector<32x256xbf16>, vector<8x256xf32> -> vector<8x256xf32>
    %549 = vector.extract_strided_slice %548 {offsets = [0, 0], sizes = [8, 128], strides = [1, 1]} : vector<8x256xf32> to vector<8x128xf32>
    %550 = vector.extract_strided_slice %548 {offsets = [0, 128], sizes = [8, 128], strides = [1, 1]} : vector<8x256xf32> to vector<8x128xf32>
    %cst_270 = arith.constant 0.000000e+00 : f32
    %551 = vector.broadcast %cst_270 : f32 to vector<8x128xf32>
    %552 = arith.addf %551, %549 : vector<8x128xf32>
    %553 = arith.addf %552, %550 : vector<8x128xf32>
    %cst_271 = arith.constant 2.000000e+00 : f32
    %554 = vector.broadcast %cst_271 : f32 to vector<8x128xf32>
    %555 = arith.divf %553, %554 : vector<8x128xf32>
    %556 = arith.subf %549, %555 : vector<8x128xf32>
    %557 = arith.mulf %556, %556 : vector<8x128xf32>
    %cst_272 = arith.constant 0.000000e+00 : f32
    %558 = vector.broadcast %cst_272 : f32 to vector<8x128xf32>
    %559 = arith.addf %558, %557 : vector<8x128xf32>
    %560 = arith.subf %550, %555 : vector<8x128xf32>
    %561 = arith.mulf %560, %560 : vector<8x128xf32>
    %562 = arith.addf %559, %561 : vector<8x128xf32>
    %cst_273 = arith.constant 2.000000e+00 : f32
    %563 = vector.broadcast %cst_273 : f32 to vector<8x128xf32>
    %564 = arith.divf %562, %563 : vector<8x128xf32>
    %cst_274 = arith.constant 9.99999974E-6 : f32
    %565 = vector.broadcast %cst_274 : f32 to vector<8x128xf32>
    %566 = arith.addf %564, %565 : vector<8x128xf32>
    %567 = math.rsqrt %566 : vector<8x128xf32>
    %c104_275 = arith.constant 104 : index
    %c0_276 = arith.constant 0 : index
    %568 = vector.load %arg3[%c104_275, %c0_276] : memref<136x128xf32, #tpu.memory_space<vmem>>, vector<8x128xf32>
    %c104_277 = arith.constant 104 : index
    %c0_278 = arith.constant 0 : index
    %569 = vector.load %arg4[%c104_277, %c0_278] : memref<136x128xf32, #tpu.memory_space<vmem>>, vector<8x128xf32>
    %570 = arith.mulf %567, %568 : vector<8x128xf32>
    %571 = arith.mulf %555, %570 : vector<8x128xf32>
    %572 = arith.subf %569, %571 : vector<8x128xf32>
    %573 = tpu.concatenate %570, %570 in 1 : vector<8x128xf32>, vector<8x128xf32> -> vector<8x256xf32>
    %574 = tpu.concatenate %572, %572 in 1 : vector<8x128xf32>, vector<8x128xf32> -> vector<8x256xf32>
    %575 = arith.mulf %548, %573 : vector<8x256xf32>
    %576 = arith.addf %575, %574 : vector<8x256xf32>
    %cst_279 = arith.constant 0.000000e+00 : f32
    %577 = vector.broadcast %cst_279 : f32 to vector<8x256xf32>
    %578 = arith.cmpf oge, %576, %577 : vector<8x256xf32>
    %579 = vector.broadcast %8 : f32 to vector<8x256xf32>
    %580 = arith.mulf %579, %576 : vector<8x256xf32>
    %581 = arith.select %578, %576, %580 : vector<8x256xi1>, vector<8x256xf32>
    %c120 = arith.constant 120 : index
    %c0_280 = arith.constant 0 : index
    %582 = vector.load %arg13[%c120, %c0_280] : memref<168x256xf32, #tpu.memory_space<vmem>>, vector<8x256xf32>
    tpu.vector_store %arg13[%c120, %c0_280], %581 {strides = array<i32>} : memref<168x256xf32, #tpu.memory_space<vmem>>, vector<8x256xf32>,
    %c56_281 = arith.constant 56 : index
    %c0_282 = arith.constant 0 : index
    %583 = vector.load %arg1[%c56_281, %c0_282] : memref<74x256xf32, #tpu.memory_space<vmem>>, vector<10x256xf32>
    %c0_283 = arith.constant 0 : index
    %c0_284 = arith.constant 0 : index
    %584 = vector.load %arg15[%c0_283, %c0_284] : memref<160x256xf32, #tpu.memory_space<vmem>>, vector<10x256xf32>
    tpu.vector_store %arg15[%c0_283, %c0_284], %583 {strides = array<i32>} : memref<160x256xf32, #tpu.memory_space<vmem>>, vector<10x256xf32>,
    %585 = vector.extract_strided_slice %583 {offsets = [0, 1], sizes = [10, 255], strides = [1, 1]} : vector<10x256xf32> to vector<10x255xf32>
    %c10_285 = arith.constant 10 : index
    %c0_286 = arith.constant 0 : index
    %586 = vector.load %arg15[%c10_285, %c0_286] : memref<160x256xf32, #tpu.memory_space<vmem>>, vector<10x255xf32>
    tpu.vector_store %arg15[%c10_285, %c0_286], %585 {strides = array<i32>} : memref<160x256xf32, #tpu.memory_space<vmem>>, vector<10x255xf32>,
    %c0_287 = arith.constant 0 : index
    %c0_288 = arith.constant 0 : index
    %587 = vector.load %arg15[%c0_287, %c0_288] : memref<160x256xf32, #tpu.memory_space<vmem>>, vector<32x256xf32>
    %588 = arith.truncf %587 : vector<32x256xf32> to vector<32x256xbf16>
    %cst_289 = arith.constant dense<0.000000e+00> : vector<8x256xf32>
    %589 = tpu.matmul %7, %588, %cst_289 {dimension_numbers = #tpu.dot_dimension_numbers<[1], [0], [0], [1], [0, 0, 1, 1], [], []>} : vector<8x32xbf16>, vector<32x256xbf16>, vector<8x256xf32> -> vector<8x256xf32>
    %590 = vector.extract_strided_slice %589 {offsets = [0, 0], sizes = [8, 128], strides = [1, 1]} : vector<8x256xf32> to vector<8x128xf32>
    %591 = vector.extract_strided_slice %589 {offsets = [0, 128], sizes = [8, 128], strides = [1, 1]} : vector<8x256xf32> to vector<8x128xf32>
    %cst_290 = arith.constant 0.000000e+00 : f32
    %592 = vector.broadcast %cst_290 : f32 to vector<8x128xf32>
    %593 = arith.addf %592, %590 : vector<8x128xf32>
    %594 = arith.addf %593, %591 : vector<8x128xf32>
    %cst_291 = arith.constant 2.000000e+00 : f32
    %595 = vector.broadcast %cst_291 : f32 to vector<8x128xf32>
    %596 = arith.divf %594, %595 : vector<8x128xf32>
    %597 = arith.subf %590, %596 : vector<8x128xf32>
    %598 = arith.mulf %597, %597 : vector<8x128xf32>
    %cst_292 = arith.constant 0.000000e+00 : f32
    %599 = vector.broadcast %cst_292 : f32 to vector<8x128xf32>
    %600 = arith.addf %599, %598 : vector<8x128xf32>
    %601 = arith.subf %591, %596 : vector<8x128xf32>
    %602 = arith.mulf %601, %601 : vector<8x128xf32>
    %603 = arith.addf %600, %602 : vector<8x128xf32>
    %cst_293 = arith.constant 2.000000e+00 : f32
    %604 = vector.broadcast %cst_293 : f32 to vector<8x128xf32>
    %605 = arith.divf %603, %604 : vector<8x128xf32>
    %cst_294 = arith.constant 9.99999974E-6 : f32
    %606 = vector.broadcast %cst_294 : f32 to vector<8x128xf32>
    %607 = arith.addf %605, %606 : vector<8x128xf32>
    %608 = math.rsqrt %607 : vector<8x128xf32>
    %c112_295 = arith.constant 112 : index
    %c0_296 = arith.constant 0 : index
    %609 = vector.load %arg3[%c112_295, %c0_296] : memref<136x128xf32, #tpu.memory_space<vmem>>, vector<8x128xf32>
    %c112_297 = arith.constant 112 : index
    %c0_298 = arith.constant 0 : index
    %610 = vector.load %arg4[%c112_297, %c0_298] : memref<136x128xf32, #tpu.memory_space<vmem>>, vector<8x128xf32>
    %611 = arith.mulf %608, %609 : vector<8x128xf32>
    %612 = arith.mulf %596, %611 : vector<8x128xf32>
    %613 = arith.subf %610, %612 : vector<8x128xf32>
    %614 = tpu.concatenate %611, %611 in 1 : vector<8x128xf32>, vector<8x128xf32> -> vector<8x256xf32>
    %615 = tpu.concatenate %613, %613 in 1 : vector<8x128xf32>, vector<8x128xf32> -> vector<8x256xf32>
    %616 = arith.mulf %589, %614 : vector<8x256xf32>
    %617 = arith.addf %616, %615 : vector<8x256xf32>
    %cst_299 = arith.constant 0.000000e+00 : f32
    %618 = vector.broadcast %cst_299 : f32 to vector<8x256xf32>
    %619 = arith.cmpf oge, %617, %618 : vector<8x256xf32>
    %620 = vector.broadcast %8 : f32 to vector<8x256xf32>
    %621 = arith.mulf %620, %617 : vector<8x256xf32>
    %622 = arith.select %619, %617, %621 : vector<8x256xi1>, vector<8x256xf32>
    %c128 = arith.constant 128 : index
    %c0_300 = arith.constant 0 : index
    %623 = vector.load %arg13[%c128, %c0_300] : memref<168x256xf32, #tpu.memory_space<vmem>>, vector<8x256xf32>
    tpu.vector_store %arg13[%c128, %c0_300], %622 {strides = array<i32>} : memref<168x256xf32, #tpu.memory_space<vmem>>, vector<8x256xf32>,
    %c60 = arith.constant 60 : index
    %c0_301 = arith.constant 0 : index
    %624 = vector.load %arg1[%c60, %c0_301] : memref<74x256xf32, #tpu.memory_space<vmem>>, vector<10x256xf32>
    %c0_302 = arith.constant 0 : index
    %c0_303 = arith.constant 0 : index
    %625 = vector.load %arg15[%c0_302, %c0_303] : memref<160x256xf32, #tpu.memory_space<vmem>>, vector<10x256xf32>
    tpu.vector_store %arg15[%c0_302, %c0_303], %624 {strides = array<i32>} : memref<160x256xf32, #tpu.memory_space<vmem>>, vector<10x256xf32>,
    %626 = vector.extract_strided_slice %624 {offsets = [0, 1], sizes = [10, 255], strides = [1, 1]} : vector<10x256xf32> to vector<10x255xf32>
    %c10_304 = arith.constant 10 : index
    %c0_305 = arith.constant 0 : index
    %627 = vector.load %arg15[%c10_304, %c0_305] : memref<160x256xf32, #tpu.memory_space<vmem>>, vector<10x255xf32>
    tpu.vector_store %arg15[%c10_304, %c0_305], %626 {strides = array<i32>} : memref<160x256xf32, #tpu.memory_space<vmem>>, vector<10x255xf32>,
    %c0_306 = arith.constant 0 : index
    %c0_307 = arith.constant 0 : index
    %628 = vector.load %arg15[%c0_306, %c0_307] : memref<160x256xf32, #tpu.memory_space<vmem>>, vector<32x256xf32>
    %629 = arith.truncf %628 : vector<32x256xf32> to vector<32x256xbf16>
    %cst_308 = arith.constant dense<0.000000e+00> : vector<8x256xf32>
    %630 = tpu.matmul %7, %629, %cst_308 {dimension_numbers = #tpu.dot_dimension_numbers<[1], [0], [0], [1], [0, 0, 1, 1], [], []>} : vector<8x32xbf16>, vector<32x256xbf16>, vector<8x256xf32> -> vector<8x256xf32>
    %631 = vector.extract_strided_slice %630 {offsets = [0, 0], sizes = [8, 128], strides = [1, 1]} : vector<8x256xf32> to vector<8x128xf32>
    %632 = vector.extract_strided_slice %630 {offsets = [0, 128], sizes = [8, 128], strides = [1, 1]} : vector<8x256xf32> to vector<8x128xf32>
    %cst_309 = arith.constant 0.000000e+00 : f32
    %633 = vector.broadcast %cst_309 : f32 to vector<8x128xf32>
    %634 = arith.addf %633, %631 : vector<8x128xf32>
    %635 = arith.addf %634, %632 : vector<8x128xf32>
    %cst_310 = arith.constant 2.000000e+00 : f32
    %636 = vector.broadcast %cst_310 : f32 to vector<8x128xf32>
    %637 = arith.divf %635, %636 : vector<8x128xf32>
    %638 = arith.subf %631, %637 : vector<8x128xf32>
    %639 = arith.mulf %638, %638 : vector<8x128xf32>
    %cst_311 = arith.constant 0.000000e+00 : f32
    %640 = vector.broadcast %cst_311 : f32 to vector<8x128xf32>
    %641 = arith.addf %640, %639 : vector<8x128xf32>
    %642 = arith.subf %632, %637 : vector<8x128xf32>
    %643 = arith.mulf %642, %642 : vector<8x128xf32>
    %644 = arith.addf %641, %643 : vector<8x128xf32>
    %cst_312 = arith.constant 2.000000e+00 : f32
    %645 = vector.broadcast %cst_312 : f32 to vector<8x128xf32>
    %646 = arith.divf %644, %645 : vector<8x128xf32>
    %cst_313 = arith.constant 9.99999974E-6 : f32
    %647 = vector.broadcast %cst_313 : f32 to vector<8x128xf32>
    %648 = arith.addf %646, %647 : vector<8x128xf32>
    %649 = math.rsqrt %648 : vector<8x128xf32>
    %c120_314 = arith.constant 120 : index
    %c0_315 = arith.constant 0 : index
    %650 = vector.load %arg3[%c120_314, %c0_315] : memref<136x128xf32, #tpu.memory_space<vmem>>, vector<8x128xf32>
    %c120_316 = arith.constant 120 : index
    %c0_317 = arith.constant 0 : index
    %651 = vector.load %arg4[%c120_316, %c0_317] : memref<136x128xf32, #tpu.memory_space<vmem>>, vector<8x128xf32>
    %652 = arith.mulf %649, %650 : vector<8x128xf32>
    %653 = arith.mulf %637, %652 : vector<8x128xf32>
    %654 = arith.subf %651, %653 : vector<8x128xf32>
    %655 = tpu.concatenate %652, %652 in 1 : vector<8x128xf32>, vector<8x128xf32> -> vector<8x256xf32>
    %656 = tpu.concatenate %654, %654 in 1 : vector<8x128xf32>, vector<8x128xf32> -> vector<8x256xf32>
    %657 = arith.mulf %630, %655 : vector<8x256xf32>
    %658 = arith.addf %657, %656 : vector<8x256xf32>
    %cst_318 = arith.constant 0.000000e+00 : f32
    %659 = vector.broadcast %cst_318 : f32 to vector<8x256xf32>
    %660 = arith.cmpf oge, %658, %659 : vector<8x256xf32>
    %661 = vector.broadcast %8 : f32 to vector<8x256xf32>
    %662 = arith.mulf %661, %658 : vector<8x256xf32>
    %663 = arith.select %660, %658, %662 : vector<8x256xi1>, vector<8x256xf32>
    %c136 = arith.constant 136 : index
    %c0_319 = arith.constant 0 : index
    %664 = vector.load %arg13[%c136, %c0_319] : memref<168x256xf32, #tpu.memory_space<vmem>>, vector<8x256xf32>
    tpu.vector_store %arg13[%c136, %c0_319], %663 {strides = array<i32>} : memref<168x256xf32, #tpu.memory_space<vmem>>, vector<8x256xf32>,
    %c64_320 = arith.constant 64 : index
    %c0_321 = arith.constant 0 : index
    %665 = vector.load %arg1[%c64_320, %c0_321] : memref<74x256xf32, #tpu.memory_space<vmem>>, vector<10x256xf32>
    %c0_322 = arith.constant 0 : index
    %c0_323 = arith.constant 0 : index
    %666 = vector.load %arg15[%c0_322, %c0_323] : memref<160x256xf32, #tpu.memory_space<vmem>>, vector<10x256xf32>
    tpu.vector_store %arg15[%c0_322, %c0_323], %665 {strides = array<i32>} : memref<160x256xf32, #tpu.memory_space<vmem>>, vector<10x256xf32>,
    %667 = vector.extract_strided_slice %665 {offsets = [0, 1], sizes = [10, 255], strides = [1, 1]} : vector<10x256xf32> to vector<10x255xf32>
    %c10_324 = arith.constant 10 : index
    %c0_325 = arith.constant 0 : index
    %668 = vector.load %arg15[%c10_324, %c0_325] : memref<160x256xf32, #tpu.memory_space<vmem>>, vector<10x255xf32>
    tpu.vector_store %arg15[%c10_324, %c0_325], %667 {strides = array<i32>} : memref<160x256xf32, #tpu.memory_space<vmem>>, vector<10x255xf32>,
    %c0_326 = arith.constant 0 : index
    %c0_327 = arith.constant 0 : index
    %669 = vector.load %arg15[%c0_326, %c0_327] : memref<160x256xf32, #tpu.memory_space<vmem>>, vector<32x256xf32>
    %670 = arith.truncf %669 : vector<32x256xf32> to vector<32x256xbf16>
    %cst_328 = arith.constant dense<0.000000e+00> : vector<8x256xf32>
    %671 = tpu.matmul %7, %670, %cst_328 {dimension_numbers = #tpu.dot_dimension_numbers<[1], [0], [0], [1], [0, 0, 1, 1], [], []>} : vector<8x32xbf16>, vector<32x256xbf16>, vector<8x256xf32> -> vector<8x256xf32>
    %672 = vector.extract_strided_slice %671 {offsets = [0, 0], sizes = [8, 128], strides = [1, 1]} : vector<8x256xf32> to vector<8x128xf32>
    %673 = vector.extract_strided_slice %671 {offsets = [0, 128], sizes = [8, 128], strides = [1, 1]} : vector<8x256xf32> to vector<8x128xf32>
    %cst_329 = arith.constant 0.000000e+00 : f32
    %674 = vector.broadcast %cst_329 : f32 to vector<8x128xf32>
    %675 = arith.addf %674, %672 : vector<8x128xf32>
    %676 = arith.addf %675, %673 : vector<8x128xf32>
    %cst_330 = arith.constant 2.000000e+00 : f32
    %677 = vector.broadcast %cst_330 : f32 to vector<8x128xf32>
    %678 = arith.divf %676, %677 : vector<8x128xf32>
    %679 = arith.subf %672, %678 : vector<8x128xf32>
    %680 = arith.mulf %679, %679 : vector<8x128xf32>
    %cst_331 = arith.constant 0.000000e+00 : f32
    %681 = vector.broadcast %cst_331 : f32 to vector<8x128xf32>
    %682 = arith.addf %681, %680 : vector<8x128xf32>
    %683 = arith.subf %673, %678 : vector<8x128xf32>
    %684 = arith.mulf %683, %683 : vector<8x128xf32>
    %685 = arith.addf %682, %684 : vector<8x128xf32>
    %cst_332 = arith.constant 2.000000e+00 : f32
    %686 = vector.broadcast %cst_332 : f32 to vector<8x128xf32>
    %687 = arith.divf %685, %686 : vector<8x128xf32>
    %cst_333 = arith.constant 9.99999974E-6 : f32
    %688 = vector.broadcast %cst_333 : f32 to vector<8x128xf32>
    %689 = arith.addf %687, %688 : vector<8x128xf32>
    %690 = math.rsqrt %689 : vector<8x128xf32>
    %c128_334 = arith.constant 128 : index
    %c0_335 = arith.constant 0 : index
    %691 = vector.load %arg3[%c128_334, %c0_335] : memref<136x128xf32, #tpu.memory_space<vmem>>, vector<8x128xf32>
    %c128_336 = arith.constant 128 : index
    %c0_337 = arith.constant 0 : index
    %692 = vector.load %arg4[%c128_336, %c0_337] : memref<136x128xf32, #tpu.memory_space<vmem>>, vector<8x128xf32>
    %693 = arith.mulf %690, %691 : vector<8x128xf32>
    %694 = arith.mulf %678, %693 : vector<8x128xf32>
    %695 = arith.subf %692, %694 : vector<8x128xf32>
    %696 = tpu.concatenate %693, %693 in 1 : vector<8x128xf32>, vector<8x128xf32> -> vector<8x256xf32>
    %697 = tpu.concatenate %695, %695 in 1 : vector<8x128xf32>, vector<8x128xf32> -> vector<8x256xf32>
    %698 = arith.mulf %671, %696 : vector<8x256xf32>
    %699 = arith.addf %698, %697 : vector<8x256xf32>
    %cst_338 = arith.constant 0.000000e+00 : f32
    %700 = vector.broadcast %cst_338 : f32 to vector<8x256xf32>
    %701 = arith.cmpf oge, %699, %700 : vector<8x256xf32>
    %702 = vector.broadcast %8 : f32 to vector<8x256xf32>
    %703 = arith.mulf %702, %699 : vector<8x256xf32>
    %704 = arith.select %701, %699, %703 : vector<8x256xi1>, vector<8x256xf32>
    %c144 = arith.constant 144 : index
    %c0_339 = arith.constant 0 : index
    %705 = vector.load %arg13[%c144, %c0_339] : memref<168x256xf32, #tpu.memory_space<vmem>>, vector<8x256xf32>
    tpu.vector_store %arg13[%c144, %c0_339], %704 {strides = array<i32>} : memref<168x256xf32, #tpu.memory_space<vmem>>, vector<8x256xf32>,
    %c0_340 = arith.constant 0 : index
    %c0_341 = arith.constant 0 : index
    %706 = vector.load %arg5[%c0_340, %c0_341] : memref<16x80xf32, #tpu.memory_space<vmem>>, vector<16x80xf32>
    %707 = arith.truncf %706 : vector<16x80xf32> to vector<16x80xbf16>
    %c1 = arith.constant 1 : index
    %708 = memref.load %arg11[%c1] : memref<3xf32, #tpu.memory_space<smem>>
    %c0_342 = arith.constant 0 : index
    %c0_343 = arith.constant 0 : index
    %709 = vector.load %arg13[%c0_342, %c0_343] : memref<168x256xf32, #tpu.memory_space<vmem>>, vector<40x256xf32>
    %c0_344 = arith.constant 0 : index
    %c0_345 = arith.constant 0 : index
    %710 = vector.load %arg15[%c0_344, %c0_345] : memref<160x256xf32, #tpu.memory_space<vmem>>, vector<40x256xf32>
    tpu.vector_store %arg15[%c0_344, %c0_345], %709 {strides = array<i32>} : memref<160x256xf32, #tpu.memory_space<vmem>>, vector<40x256xf32>,
    %711 = vector.extract_strided_slice %709 {offsets = [0, 1], sizes = [40, 255], strides = [1, 1]} : vector<40x256xf32> to vector<40x255xf32>
    %c40_346 = arith.constant 40 : index
    %c0_347 = arith.constant 0 : index
    %712 = vector.load %arg15[%c40_346, %c0_347] : memref<160x256xf32, #tpu.memory_space<vmem>>, vector<40x255xf32>
    tpu.vector_store %arg15[%c40_346, %c0_347], %711 {strides = array<i32>} : memref<160x256xf32, #tpu.memory_space<vmem>>, vector<40x255xf32>,
    %c0_348 = arith.constant 0 : index
    %c0_349 = arith.constant 0 : index
    %713 = vector.load %arg15[%c0_348, %c0_349] : memref<160x256xf32, #tpu.memory_space<vmem>>, vector<80x256xf32>
    %714 = arith.truncf %713 : vector<80x256xf32> to vector<80x256xbf16>
    %cst_350 = arith.constant dense<0.000000e+00> : vector<16x256xf32>
    %715 = tpu.matmul %707, %714, %cst_350 {dimension_numbers = #tpu.dot_dimension_numbers<[1], [0], [0], [1], [0, 0, 1, 1], [], []>} : vector<16x80xbf16>, vector<80x256xbf16>, vector<16x256xf32> -> vector<16x256xf32>
    %716 = vector.extract_strided_slice %715 {offsets = [0, 0], sizes = [16, 128], strides = [1, 1]} : vector<16x256xf32> to vector<16x128xf32>
    %717 = vector.extract_strided_slice %715 {offsets = [0, 128], sizes = [16, 128], strides = [1, 1]} : vector<16x256xf32> to vector<16x128xf32>
    %cst_351 = arith.constant 0.000000e+00 : f32
    %718 = vector.broadcast %cst_351 : f32 to vector<16x128xf32>
    %719 = arith.addf %718, %716 : vector<16x128xf32>
    %720 = arith.addf %719, %717 : vector<16x128xf32>
    %cst_352 = arith.constant 2.000000e+00 : f32
    %721 = vector.broadcast %cst_352 : f32 to vector<16x128xf32>
    %722 = arith.divf %720, %721 : vector<16x128xf32>
    %723 = arith.subf %716, %722 : vector<16x128xf32>
    %724 = arith.mulf %723, %723 : vector<16x128xf32>
    %cst_353 = arith.constant 0.000000e+00 : f32
    %725 = vector.broadcast %cst_353 : f32 to vector<16x128xf32>
    %726 = arith.addf %725, %724 : vector<16x128xf32>
    %727 = arith.subf %717, %722 : vector<16x128xf32>
    %728 = arith.mulf %727, %727 : vector<16x128xf32>
    %729 = arith.addf %726, %728 : vector<16x128xf32>
    %cst_354 = arith.constant 2.000000e+00 : f32
    %730 = vector.broadcast %cst_354 : f32 to vector<16x128xf32>
    %731 = arith.divf %729, %730 : vector<16x128xf32>
    %cst_355 = arith.constant 9.99999974E-6 : f32
    %732 = vector.broadcast %cst_355 : f32 to vector<16x128xf32>
    %733 = arith.addf %731, %732 : vector<16x128xf32>
    %734 = math.rsqrt %733 : vector<16x128xf32>
    %c0_356 = arith.constant 0 : index
    %c0_357 = arith.constant 0 : index
    %735 = vector.load %arg6[%c0_356, %c0_357] : memref<144x128xf32, #tpu.memory_space<vmem>>, vector<16x128xf32>
    %c0_358 = arith.constant 0 : index
    %c0_359 = arith.constant 0 : index
    %736 = vector.load %arg7[%c0_358, %c0_359] : memref<144x128xf32, #tpu.memory_space<vmem>>, vector<16x128xf32>
    %737 = arith.mulf %734, %735 : vector<16x128xf32>
    %738 = arith.mulf %722, %737 : vector<16x128xf32>
    %739 = arith.subf %736, %738 : vector<16x128xf32>
    %740 = tpu.concatenate %737, %737 in 1 : vector<16x128xf32>, vector<16x128xf32> -> vector<16x256xf32>
    %741 = tpu.concatenate %739, %739 in 1 : vector<16x128xf32>, vector<16x128xf32> -> vector<16x256xf32>
    %742 = arith.mulf %715, %740 : vector<16x256xf32>
    %743 = arith.addf %742, %741 : vector<16x256xf32>
    %cst_360 = arith.constant 0.000000e+00 : f32
    %744 = vector.broadcast %cst_360 : f32 to vector<16x256xf32>
    %745 = arith.cmpf oge, %743, %744 : vector<16x256xf32>
    %746 = vector.broadcast %708 : f32 to vector<16x256xf32>
    %747 = arith.mulf %746, %743 : vector<16x256xf32>
    %748 = arith.select %745, %743, %747 : vector<16x256xi1>, vector<16x256xf32>
    %c32_361 = arith.constant 32 : index
    %c0_362 = arith.constant 0 : index
    %749 = vector.load %arg14[%c32_361, %c0_362] : memref<208x256xf32, #tpu.memory_space<vmem>>, vector<16x256xf32>
    tpu.vector_store %arg14[%c32_361, %c0_362], %748 {strides = array<i32>} : memref<208x256xf32, #tpu.memory_space<vmem>>, vector<16x256xf32>,
    %c16_363 = arith.constant 16 : index
    %c0_364 = arith.constant 0 : index
    %750 = vector.load %arg13[%c16_363, %c0_364] : memref<168x256xf32, #tpu.memory_space<vmem>>, vector<40x256xf32>
    %c0_365 = arith.constant 0 : index
    %c0_366 = arith.constant 0 : index
    %751 = vector.load %arg15[%c0_365, %c0_366] : memref<160x256xf32, #tpu.memory_space<vmem>>, vector<40x256xf32>
    tpu.vector_store %arg15[%c0_365, %c0_366], %750 {strides = array<i32>} : memref<160x256xf32, #tpu.memory_space<vmem>>, vector<40x256xf32>,
    %752 = vector.extract_strided_slice %750 {offsets = [0, 1], sizes = [40, 255], strides = [1, 1]} : vector<40x256xf32> to vector<40x255xf32>
    %c40_367 = arith.constant 40 : index
    %c0_368 = arith.constant 0 : index
    %753 = vector.load %arg15[%c40_367, %c0_368] : memref<160x256xf32, #tpu.memory_space<vmem>>, vector<40x255xf32>
    tpu.vector_store %arg15[%c40_367, %c0_368], %752 {strides = array<i32>} : memref<160x256xf32, #tpu.memory_space<vmem>>, vector<40x255xf32>,
    %c0_369 = arith.constant 0 : index
    %c0_370 = arith.constant 0 : index
    %754 = vector.load %arg15[%c0_369, %c0_370] : memref<160x256xf32, #tpu.memory_space<vmem>>, vector<80x256xf32>
    %755 = arith.truncf %754 : vector<80x256xf32> to vector<80x256xbf16>
    %cst_371 = arith.constant dense<0.000000e+00> : vector<16x256xf32>
    %756 = tpu.matmul %707, %755, %cst_371 {dimension_numbers = #tpu.dot_dimension_numbers<[1], [0], [0], [1], [0, 0, 1, 1], [], []>} : vector<16x80xbf16>, vector<80x256xbf16>, vector<16x256xf32> -> vector<16x256xf32>
    %757 = vector.extract_strided_slice %756 {offsets = [0, 0], sizes = [16, 128], strides = [1, 1]} : vector<16x256xf32> to vector<16x128xf32>
    %758 = vector.extract_strided_slice %756 {offsets = [0, 128], sizes = [16, 128], strides = [1, 1]} : vector<16x256xf32> to vector<16x128xf32>
    %cst_372 = arith.constant 0.000000e+00 : f32
    %759 = vector.broadcast %cst_372 : f32 to vector<16x128xf32>
    %760 = arith.addf %759, %757 : vector<16x128xf32>
    %761 = arith.addf %760, %758 : vector<16x128xf32>
    %cst_373 = arith.constant 2.000000e+00 : f32
    %762 = vector.broadcast %cst_373 : f32 to vector<16x128xf32>
    %763 = arith.divf %761, %762 : vector<16x128xf32>
    %764 = arith.subf %757, %763 : vector<16x128xf32>
    %765 = arith.mulf %764, %764 : vector<16x128xf32>
    %cst_374 = arith.constant 0.000000e+00 : f32
    %766 = vector.broadcast %cst_374 : f32 to vector<16x128xf32>
    %767 = arith.addf %766, %765 : vector<16x128xf32>
    %768 = arith.subf %758, %763 : vector<16x128xf32>
    %769 = arith.mulf %768, %768 : vector<16x128xf32>
    %770 = arith.addf %767, %769 : vector<16x128xf32>
    %cst_375 = arith.constant 2.000000e+00 : f32
    %771 = vector.broadcast %cst_375 : f32 to vector<16x128xf32>
    %772 = arith.divf %770, %771 : vector<16x128xf32>
    %cst_376 = arith.constant 9.99999974E-6 : f32
    %773 = vector.broadcast %cst_376 : f32 to vector<16x128xf32>
    %774 = arith.addf %772, %773 : vector<16x128xf32>
    %775 = math.rsqrt %774 : vector<16x128xf32>
    %c16_377 = arith.constant 16 : index
    %c0_378 = arith.constant 0 : index
    %776 = vector.load %arg6[%c16_377, %c0_378] : memref<144x128xf32, #tpu.memory_space<vmem>>, vector<16x128xf32>
    %c16_379 = arith.constant 16 : index
    %c0_380 = arith.constant 0 : index
    %777 = vector.load %arg7[%c16_379, %c0_380] : memref<144x128xf32, #tpu.memory_space<vmem>>, vector<16x128xf32>
    %778 = arith.mulf %775, %776 : vector<16x128xf32>
    %779 = arith.mulf %763, %778 : vector<16x128xf32>
    %780 = arith.subf %777, %779 : vector<16x128xf32>
    %781 = tpu.concatenate %778, %778 in 1 : vector<16x128xf32>, vector<16x128xf32> -> vector<16x256xf32>
    %782 = tpu.concatenate %780, %780 in 1 : vector<16x128xf32>, vector<16x128xf32> -> vector<16x256xf32>
    %783 = arith.mulf %756, %781 : vector<16x256xf32>
    %784 = arith.addf %783, %782 : vector<16x256xf32>
    %cst_381 = arith.constant 0.000000e+00 : f32
    %785 = vector.broadcast %cst_381 : f32 to vector<16x256xf32>
    %786 = arith.cmpf oge, %784, %785 : vector<16x256xf32>
    %787 = vector.broadcast %708 : f32 to vector<16x256xf32>
    %788 = arith.mulf %787, %784 : vector<16x256xf32>
    %789 = arith.select %786, %784, %788 : vector<16x256xi1>, vector<16x256xf32>
    %c48_382 = arith.constant 48 : index
    %c0_383 = arith.constant 0 : index
    %790 = vector.load %arg14[%c48_382, %c0_383] : memref<208x256xf32, #tpu.memory_space<vmem>>, vector<16x256xf32>
    tpu.vector_store %arg14[%c48_382, %c0_383], %789 {strides = array<i32>} : memref<208x256xf32, #tpu.memory_space<vmem>>, vector<16x256xf32>,
    %c32_384 = arith.constant 32 : index
    %c0_385 = arith.constant 0 : index
    %791 = vector.load %arg13[%c32_384, %c0_385] : memref<168x256xf32, #tpu.memory_space<vmem>>, vector<40x256xf32>
    %c0_386 = arith.constant 0 : index
    %c0_387 = arith.constant 0 : index
    %792 = vector.load %arg15[%c0_386, %c0_387] : memref<160x256xf32, #tpu.memory_space<vmem>>, vector<40x256xf32>
    tpu.vector_store %arg15[%c0_386, %c0_387], %791 {strides = array<i32>} : memref<160x256xf32, #tpu.memory_space<vmem>>, vector<40x256xf32>,
    %793 = vector.extract_strided_slice %791 {offsets = [0, 1], sizes = [40, 255], strides = [1, 1]} : vector<40x256xf32> to vector<40x255xf32>
    %c40_388 = arith.constant 40 : index
    %c0_389 = arith.constant 0 : index
    %794 = vector.load %arg15[%c40_388, %c0_389] : memref<160x256xf32, #tpu.memory_space<vmem>>, vector<40x255xf32>
    tpu.vector_store %arg15[%c40_388, %c0_389], %793 {strides = array<i32>} : memref<160x256xf32, #tpu.memory_space<vmem>>, vector<40x255xf32>,
    %c0_390 = arith.constant 0 : index
    %c0_391 = arith.constant 0 : index
    %795 = vector.load %arg15[%c0_390, %c0_391] : memref<160x256xf32, #tpu.memory_space<vmem>>, vector<80x256xf32>
    %796 = arith.truncf %795 : vector<80x256xf32> to vector<80x256xbf16>
    %cst_392 = arith.constant dense<0.000000e+00> : vector<16x256xf32>
    %797 = tpu.matmul %707, %796, %cst_392 {dimension_numbers = #tpu.dot_dimension_numbers<[1], [0], [0], [1], [0, 0, 1, 1], [], []>} : vector<16x80xbf16>, vector<80x256xbf16>, vector<16x256xf32> -> vector<16x256xf32>
    %798 = vector.extract_strided_slice %797 {offsets = [0, 0], sizes = [16, 128], strides = [1, 1]} : vector<16x256xf32> to vector<16x128xf32>
    %799 = vector.extract_strided_slice %797 {offsets = [0, 128], sizes = [16, 128], strides = [1, 1]} : vector<16x256xf32> to vector<16x128xf32>
    %cst_393 = arith.constant 0.000000e+00 : f32
    %800 = vector.broadcast %cst_393 : f32 to vector<16x128xf32>
    %801 = arith.addf %800, %798 : vector<16x128xf32>
    %802 = arith.addf %801, %799 : vector<16x128xf32>
    %cst_394 = arith.constant 2.000000e+00 : f32
    %803 = vector.broadcast %cst_394 : f32 to vector<16x128xf32>
    %804 = arith.divf %802, %803 : vector<16x128xf32>
    %805 = arith.subf %798, %804 : vector<16x128xf32>
    %806 = arith.mulf %805, %805 : vector<16x128xf32>
    %cst_395 = arith.constant 0.000000e+00 : f32
    %807 = vector.broadcast %cst_395 : f32 to vector<16x128xf32>
    %808 = arith.addf %807, %806 : vector<16x128xf32>
    %809 = arith.subf %799, %804 : vector<16x128xf32>
    %810 = arith.mulf %809, %809 : vector<16x128xf32>
    %811 = arith.addf %808, %810 : vector<16x128xf32>
    %cst_396 = arith.constant 2.000000e+00 : f32
    %812 = vector.broadcast %cst_396 : f32 to vector<16x128xf32>
    %813 = arith.divf %811, %812 : vector<16x128xf32>
    %cst_397 = arith.constant 9.99999974E-6 : f32
    %814 = vector.broadcast %cst_397 : f32 to vector<16x128xf32>
    %815 = arith.addf %813, %814 : vector<16x128xf32>
    %816 = math.rsqrt %815 : vector<16x128xf32>
    %c32_398 = arith.constant 32 : index
    %c0_399 = arith.constant 0 : index
    %817 = vector.load %arg6[%c32_398, %c0_399] : memref<144x128xf32, #tpu.memory_space<vmem>>, vector<16x128xf32>
    %c32_400 = arith.constant 32 : index
    %c0_401 = arith.constant 0 : index
    %818 = vector.load %arg7[%c32_400, %c0_401] : memref<144x128xf32, #tpu.memory_space<vmem>>, vector<16x128xf32>
    %819 = arith.mulf %816, %817 : vector<16x128xf32>
    %820 = arith.mulf %804, %819 : vector<16x128xf32>
    %821 = arith.subf %818, %820 : vector<16x128xf32>
    %822 = tpu.concatenate %819, %819 in 1 : vector<16x128xf32>, vector<16x128xf32> -> vector<16x256xf32>
    %823 = tpu.concatenate %821, %821 in 1 : vector<16x128xf32>, vector<16x128xf32> -> vector<16x256xf32>
    %824 = arith.mulf %797, %822 : vector<16x256xf32>
    %825 = arith.addf %824, %823 : vector<16x256xf32>
    %cst_402 = arith.constant 0.000000e+00 : f32
    %826 = vector.broadcast %cst_402 : f32 to vector<16x256xf32>
    %827 = arith.cmpf oge, %825, %826 : vector<16x256xf32>
    %828 = vector.broadcast %708 : f32 to vector<16x256xf32>
    %829 = arith.mulf %828, %825 : vector<16x256xf32>
    %830 = arith.select %827, %825, %829 : vector<16x256xi1>, vector<16x256xf32>
    %c64_403 = arith.constant 64 : index
    %c0_404 = arith.constant 0 : index
    %831 = vector.load %arg14[%c64_403, %c0_404] : memref<208x256xf32, #tpu.memory_space<vmem>>, vector<16x256xf32>
    tpu.vector_store %arg14[%c64_403, %c0_404], %830 {strides = array<i32>} : memref<208x256xf32, #tpu.memory_space<vmem>>, vector<16x256xf32>,
    %c48_405 = arith.constant 48 : index
    %c0_406 = arith.constant 0 : index
    %832 = vector.load %arg13[%c48_405, %c0_406] : memref<168x256xf32, #tpu.memory_space<vmem>>, vector<40x256xf32>
    %c0_407 = arith.constant 0 : index
    %c0_408 = arith.constant 0 : index
    %833 = vector.load %arg15[%c0_407, %c0_408] : memref<160x256xf32, #tpu.memory_space<vmem>>, vector<40x256xf32>
    tpu.vector_store %arg15[%c0_407, %c0_408], %832 {strides = array<i32>} : memref<160x256xf32, #tpu.memory_space<vmem>>, vector<40x256xf32>,
    %834 = vector.extract_strided_slice %832 {offsets = [0, 1], sizes = [40, 255], strides = [1, 1]} : vector<40x256xf32> to vector<40x255xf32>
    %c40_409 = arith.constant 40 : index
    %c0_410 = arith.constant 0 : index
    %835 = vector.load %arg15[%c40_409, %c0_410] : memref<160x256xf32, #tpu.memory_space<vmem>>, vector<40x255xf32>
    tpu.vector_store %arg15[%c40_409, %c0_410], %834 {strides = array<i32>} : memref<160x256xf32, #tpu.memory_space<vmem>>, vector<40x255xf32>,
    %c0_411 = arith.constant 0 : index
    %c0_412 = arith.constant 0 : index
    %836 = vector.load %arg15[%c0_411, %c0_412] : memref<160x256xf32, #tpu.memory_space<vmem>>, vector<80x256xf32>
    %837 = arith.truncf %836 : vector<80x256xf32> to vector<80x256xbf16>
    %cst_413 = arith.constant dense<0.000000e+00> : vector<16x256xf32>
    %838 = tpu.matmul %707, %837, %cst_413 {dimension_numbers = #tpu.dot_dimension_numbers<[1], [0], [0], [1], [0, 0, 1, 1], [], []>} : vector<16x80xbf16>, vector<80x256xbf16>, vector<16x256xf32> -> vector<16x256xf32>
    %839 = vector.extract_strided_slice %838 {offsets = [0, 0], sizes = [16, 128], strides = [1, 1]} : vector<16x256xf32> to vector<16x128xf32>
    %840 = vector.extract_strided_slice %838 {offsets = [0, 128], sizes = [16, 128], strides = [1, 1]} : vector<16x256xf32> to vector<16x128xf32>
    %cst_414 = arith.constant 0.000000e+00 : f32
    %841 = vector.broadcast %cst_414 : f32 to vector<16x128xf32>
    %842 = arith.addf %841, %839 : vector<16x128xf32>
    %843 = arith.addf %842, %840 : vector<16x128xf32>
    %cst_415 = arith.constant 2.000000e+00 : f32
    %844 = vector.broadcast %cst_415 : f32 to vector<16x128xf32>
    %845 = arith.divf %843, %844 : vector<16x128xf32>
    %846 = arith.subf %839, %845 : vector<16x128xf32>
    %847 = arith.mulf %846, %846 : vector<16x128xf32>
    %cst_416 = arith.constant 0.000000e+00 : f32
    %848 = vector.broadcast %cst_416 : f32 to vector<16x128xf32>
    %849 = arith.addf %848, %847 : vector<16x128xf32>
    %850 = arith.subf %840, %845 : vector<16x128xf32>
    %851 = arith.mulf %850, %850 : vector<16x128xf32>
    %852 = arith.addf %849, %851 : vector<16x128xf32>
    %cst_417 = arith.constant 2.000000e+00 : f32
    %853 = vector.broadcast %cst_417 : f32 to vector<16x128xf32>
    %854 = arith.divf %852, %853 : vector<16x128xf32>
    %cst_418 = arith.constant 9.99999974E-6 : f32
    %855 = vector.broadcast %cst_418 : f32 to vector<16x128xf32>
    %856 = arith.addf %854, %855 : vector<16x128xf32>
    %857 = math.rsqrt %856 : vector<16x128xf32>
    %c48_419 = arith.constant 48 : index
    %c0_420 = arith.constant 0 : index
    %858 = vector.load %arg6[%c48_419, %c0_420] : memref<144x128xf32, #tpu.memory_space<vmem>>, vector<16x128xf32>
    %c48_421 = arith.constant 48 : index
    %c0_422 = arith.constant 0 : index
    %859 = vector.load %arg7[%c48_421, %c0_422] : memref<144x128xf32, #tpu.memory_space<vmem>>, vector<16x128xf32>
    %860 = arith.mulf %857, %858 : vector<16x128xf32>
    %861 = arith.mulf %845, %860 : vector<16x128xf32>
    %862 = arith.subf %859, %861 : vector<16x128xf32>
    %863 = tpu.concatenate %860, %860 in 1 : vector<16x128xf32>, vector<16x128xf32> -> vector<16x256xf32>
    %864 = tpu.concatenate %862, %862 in 1 : vector<16x128xf32>, vector<16x128xf32> -> vector<16x256xf32>
    %865 = arith.mulf %838, %863 : vector<16x256xf32>
    %866 = arith.addf %865, %864 : vector<16x256xf32>
    %cst_423 = arith.constant 0.000000e+00 : f32
    %867 = vector.broadcast %cst_423 : f32 to vector<16x256xf32>
    %868 = arith.cmpf oge, %866, %867 : vector<16x256xf32>
    %869 = vector.broadcast %708 : f32 to vector<16x256xf32>
    %870 = arith.mulf %869, %866 : vector<16x256xf32>
    %871 = arith.select %868, %866, %870 : vector<16x256xi1>, vector<16x256xf32>
    %c80_424 = arith.constant 80 : index
    %c0_425 = arith.constant 0 : index
    %872 = vector.load %arg14[%c80_424, %c0_425] : memref<208x256xf32, #tpu.memory_space<vmem>>, vector<16x256xf32>
    tpu.vector_store %arg14[%c80_424, %c0_425], %871 {strides = array<i32>} : memref<208x256xf32, #tpu.memory_space<vmem>>, vector<16x256xf32>,
    %c64_426 = arith.constant 64 : index
    %c0_427 = arith.constant 0 : index
    %873 = vector.load %arg13[%c64_426, %c0_427] : memref<168x256xf32, #tpu.memory_space<vmem>>, vector<40x256xf32>
    %c0_428 = arith.constant 0 : index
    %c0_429 = arith.constant 0 : index
    %874 = vector.load %arg15[%c0_428, %c0_429] : memref<160x256xf32, #tpu.memory_space<vmem>>, vector<40x256xf32>
    tpu.vector_store %arg15[%c0_428, %c0_429], %873 {strides = array<i32>} : memref<160x256xf32, #tpu.memory_space<vmem>>, vector<40x256xf32>,
    %875 = vector.extract_strided_slice %873 {offsets = [0, 1], sizes = [40, 255], strides = [1, 1]} : vector<40x256xf32> to vector<40x255xf32>
    %c40_430 = arith.constant 40 : index
    %c0_431 = arith.constant 0 : index
    %876 = vector.load %arg15[%c40_430, %c0_431] : memref<160x256xf32, #tpu.memory_space<vmem>>, vector<40x255xf32>
    tpu.vector_store %arg15[%c40_430, %c0_431], %875 {strides = array<i32>} : memref<160x256xf32, #tpu.memory_space<vmem>>, vector<40x255xf32>,
    %c0_432 = arith.constant 0 : index
    %c0_433 = arith.constant 0 : index
    %877 = vector.load %arg15[%c0_432, %c0_433] : memref<160x256xf32, #tpu.memory_space<vmem>>, vector<80x256xf32>
    %878 = arith.truncf %877 : vector<80x256xf32> to vector<80x256xbf16>
    %cst_434 = arith.constant dense<0.000000e+00> : vector<16x256xf32>
    %879 = tpu.matmul %707, %878, %cst_434 {dimension_numbers = #tpu.dot_dimension_numbers<[1], [0], [0], [1], [0, 0, 1, 1], [], []>} : vector<16x80xbf16>, vector<80x256xbf16>, vector<16x256xf32> -> vector<16x256xf32>
    %880 = vector.extract_strided_slice %879 {offsets = [0, 0], sizes = [16, 128], strides = [1, 1]} : vector<16x256xf32> to vector<16x128xf32>
    %881 = vector.extract_strided_slice %879 {offsets = [0, 128], sizes = [16, 128], strides = [1, 1]} : vector<16x256xf32> to vector<16x128xf32>
    %cst_435 = arith.constant 0.000000e+00 : f32
    %882 = vector.broadcast %cst_435 : f32 to vector<16x128xf32>
    %883 = arith.addf %882, %880 : vector<16x128xf32>
    %884 = arith.addf %883, %881 : vector<16x128xf32>
    %cst_436 = arith.constant 2.000000e+00 : f32
    %885 = vector.broadcast %cst_436 : f32 to vector<16x128xf32>
    %886 = arith.divf %884, %885 : vector<16x128xf32>
    %887 = arith.subf %880, %886 : vector<16x128xf32>
    %888 = arith.mulf %887, %887 : vector<16x128xf32>
    %cst_437 = arith.constant 0.000000e+00 : f32
    %889 = vector.broadcast %cst_437 : f32 to vector<16x128xf32>
    %890 = arith.addf %889, %888 : vector<16x128xf32>
    %891 = arith.subf %881, %886 : vector<16x128xf32>
    %892 = arith.mulf %891, %891 : vector<16x128xf32>
    %893 = arith.addf %890, %892 : vector<16x128xf32>
    %cst_438 = arith.constant 2.000000e+00 : f32
    %894 = vector.broadcast %cst_438 : f32 to vector<16x128xf32>
    %895 = arith.divf %893, %894 : vector<16x128xf32>
    %cst_439 = arith.constant 9.99999974E-6 : f32
    %896 = vector.broadcast %cst_439 : f32 to vector<16x128xf32>
    %897 = arith.addf %895, %896 : vector<16x128xf32>
    %898 = math.rsqrt %897 : vector<16x128xf32>
    %c64_440 = arith.constant 64 : index
    %c0_441 = arith.constant 0 : index
    %899 = vector.load %arg6[%c64_440, %c0_441] : memref<144x128xf32, #tpu.memory_space<vmem>>, vector<16x128xf32>
    %c64_442 = arith.constant 64 : index
    %c0_443 = arith.constant 0 : index
    %900 = vector.load %arg7[%c64_442, %c0_443] : memref<144x128xf32, #tpu.memory_space<vmem>>, vector<16x128xf32>
    %901 = arith.mulf %898, %899 : vector<16x128xf32>
    %902 = arith.mulf %886, %901 : vector<16x128xf32>
    %903 = arith.subf %900, %902 : vector<16x128xf32>
    %904 = tpu.concatenate %901, %901 in 1 : vector<16x128xf32>, vector<16x128xf32> -> vector<16x256xf32>
    %905 = tpu.concatenate %903, %903 in 1 : vector<16x128xf32>, vector<16x128xf32> -> vector<16x256xf32>
    %906 = arith.mulf %879, %904 : vector<16x256xf32>
    %907 = arith.addf %906, %905 : vector<16x256xf32>
    %cst_444 = arith.constant 0.000000e+00 : f32
    %908 = vector.broadcast %cst_444 : f32 to vector<16x256xf32>
    %909 = arith.cmpf oge, %907, %908 : vector<16x256xf32>
    %910 = vector.broadcast %708 : f32 to vector<16x256xf32>
    %911 = arith.mulf %910, %907 : vector<16x256xf32>
    %912 = arith.select %909, %907, %911 : vector<16x256xi1>, vector<16x256xf32>
    %c96_445 = arith.constant 96 : index
    %c0_446 = arith.constant 0 : index
    %913 = vector.load %arg14[%c96_445, %c0_446] : memref<208x256xf32, #tpu.memory_space<vmem>>, vector<16x256xf32>
    tpu.vector_store %arg14[%c96_445, %c0_446], %912 {strides = array<i32>} : memref<208x256xf32, #tpu.memory_space<vmem>>, vector<16x256xf32>,
    %c80_447 = arith.constant 80 : index
    %c0_448 = arith.constant 0 : index
    %914 = vector.load %arg13[%c80_447, %c0_448] : memref<168x256xf32, #tpu.memory_space<vmem>>, vector<40x256xf32>
    %c0_449 = arith.constant 0 : index
    %c0_450 = arith.constant 0 : index
    %915 = vector.load %arg15[%c0_449, %c0_450] : memref<160x256xf32, #tpu.memory_space<vmem>>, vector<40x256xf32>
    tpu.vector_store %arg15[%c0_449, %c0_450], %914 {strides = array<i32>} : memref<160x256xf32, #tpu.memory_space<vmem>>, vector<40x256xf32>,
    %916 = vector.extract_strided_slice %914 {offsets = [0, 1], sizes = [40, 255], strides = [1, 1]} : vector<40x256xf32> to vector<40x255xf32>
    %c40_451 = arith.constant 40 : index
    %c0_452 = arith.constant 0 : index
    %917 = vector.load %arg15[%c40_451, %c0_452] : memref<160x256xf32, #tpu.memory_space<vmem>>, vector<40x255xf32>
    tpu.vector_store %arg15[%c40_451, %c0_452], %916 {strides = array<i32>} : memref<160x256xf32, #tpu.memory_space<vmem>>, vector<40x255xf32>,
    %c0_453 = arith.constant 0 : index
    %c0_454 = arith.constant 0 : index
    %918 = vector.load %arg15[%c0_453, %c0_454] : memref<160x256xf32, #tpu.memory_space<vmem>>, vector<80x256xf32>
    %919 = arith.truncf %918 : vector<80x256xf32> to vector<80x256xbf16>
    %cst_455 = arith.constant dense<0.000000e+00> : vector<16x256xf32>
    %920 = tpu.matmul %707, %919, %cst_455 {dimension_numbers = #tpu.dot_dimension_numbers<[1], [0], [0], [1], [0, 0, 1, 1], [], []>} : vector<16x80xbf16>, vector<80x256xbf16>, vector<16x256xf32> -> vector<16x256xf32>
    %921 = vector.extract_strided_slice %920 {offsets = [0, 0], sizes = [16, 128], strides = [1, 1]} : vector<16x256xf32> to vector<16x128xf32>
    %922 = vector.extract_strided_slice %920 {offsets = [0, 128], sizes = [16, 128], strides = [1, 1]} : vector<16x256xf32> to vector<16x128xf32>
    %cst_456 = arith.constant 0.000000e+00 : f32
    %923 = vector.broadcast %cst_456 : f32 to vector<16x128xf32>
    %924 = arith.addf %923, %921 : vector<16x128xf32>
    %925 = arith.addf %924, %922 : vector<16x128xf32>
    %cst_457 = arith.constant 2.000000e+00 : f32
    %926 = vector.broadcast %cst_457 : f32 to vector<16x128xf32>
    %927 = arith.divf %925, %926 : vector<16x128xf32>
    %928 = arith.subf %921, %927 : vector<16x128xf32>
    %929 = arith.mulf %928, %928 : vector<16x128xf32>
    %cst_458 = arith.constant 0.000000e+00 : f32
    %930 = vector.broadcast %cst_458 : f32 to vector<16x128xf32>
    %931 = arith.addf %930, %929 : vector<16x128xf32>
    %932 = arith.subf %922, %927 : vector<16x128xf32>
    %933 = arith.mulf %932, %932 : vector<16x128xf32>
    %934 = arith.addf %931, %933 : vector<16x128xf32>
    %cst_459 = arith.constant 2.000000e+00 : f32
    %935 = vector.broadcast %cst_459 : f32 to vector<16x128xf32>
    %936 = arith.divf %934, %935 : vector<16x128xf32>
    %cst_460 = arith.constant 9.99999974E-6 : f32
    %937 = vector.broadcast %cst_460 : f32 to vector<16x128xf32>
    %938 = arith.addf %936, %937 : vector<16x128xf32>
    %939 = math.rsqrt %938 : vector<16x128xf32>
    %c80_461 = arith.constant 80 : index
    %c0_462 = arith.constant 0 : index
    %940 = vector.load %arg6[%c80_461, %c0_462] : memref<144x128xf32, #tpu.memory_space<vmem>>, vector<16x128xf32>
    %c80_463 = arith.constant 80 : index
    %c0_464 = arith.constant 0 : index
    %941 = vector.load %arg7[%c80_463, %c0_464] : memref<144x128xf32, #tpu.memory_space<vmem>>, vector<16x128xf32>
    %942 = arith.mulf %939, %940 : vector<16x128xf32>
    %943 = arith.mulf %927, %942 : vector<16x128xf32>
    %944 = arith.subf %941, %943 : vector<16x128xf32>
    %945 = tpu.concatenate %942, %942 in 1 : vector<16x128xf32>, vector<16x128xf32> -> vector<16x256xf32>
    %946 = tpu.concatenate %944, %944 in 1 : vector<16x128xf32>, vector<16x128xf32> -> vector<16x256xf32>
    %947 = arith.mulf %920, %945 : vector<16x256xf32>
    %948 = arith.addf %947, %946 : vector<16x256xf32>
    %cst_465 = arith.constant 0.000000e+00 : f32
    %949 = vector.broadcast %cst_465 : f32 to vector<16x256xf32>
    %950 = arith.cmpf oge, %948, %949 : vector<16x256xf32>
    %951 = vector.broadcast %708 : f32 to vector<16x256xf32>
    %952 = arith.mulf %951, %948 : vector<16x256xf32>
    %953 = arith.select %950, %948, %952 : vector<16x256xi1>, vector<16x256xf32>
    %c112_466 = arith.constant 112 : index
    %c0_467 = arith.constant 0 : index
    %954 = vector.load %arg14[%c112_466, %c0_467] : memref<208x256xf32, #tpu.memory_space<vmem>>, vector<16x256xf32>
    tpu.vector_store %arg14[%c112_466, %c0_467], %953 {strides = array<i32>} : memref<208x256xf32, #tpu.memory_space<vmem>>, vector<16x256xf32>,
    %c96_468 = arith.constant 96 : index
    %c0_469 = arith.constant 0 : index
    %955 = vector.load %arg13[%c96_468, %c0_469] : memref<168x256xf32, #tpu.memory_space<vmem>>, vector<40x256xf32>
    %c0_470 = arith.constant 0 : index
    %c0_471 = arith.constant 0 : index
    %956 = vector.load %arg15[%c0_470, %c0_471] : memref<160x256xf32, #tpu.memory_space<vmem>>, vector<40x256xf32>
    tpu.vector_store %arg15[%c0_470, %c0_471], %955 {strides = array<i32>} : memref<160x256xf32, #tpu.memory_space<vmem>>, vector<40x256xf32>,
    %957 = vector.extract_strided_slice %955 {offsets = [0, 1], sizes = [40, 255], strides = [1, 1]} : vector<40x256xf32> to vector<40x255xf32>
    %c40_472 = arith.constant 40 : index
    %c0_473 = arith.constant 0 : index
    %958 = vector.load %arg15[%c40_472, %c0_473] : memref<160x256xf32, #tpu.memory_space<vmem>>, vector<40x255xf32>
    tpu.vector_store %arg15[%c40_472, %c0_473], %957 {strides = array<i32>} : memref<160x256xf32, #tpu.memory_space<vmem>>, vector<40x255xf32>,
    %c0_474 = arith.constant 0 : index
    %c0_475 = arith.constant 0 : index
    %959 = vector.load %arg15[%c0_474, %c0_475] : memref<160x256xf32, #tpu.memory_space<vmem>>, vector<80x256xf32>
    %960 = arith.truncf %959 : vector<80x256xf32> to vector<80x256xbf16>
    %cst_476 = arith.constant dense<0.000000e+00> : vector<16x256xf32>
    %961 = tpu.matmul %707, %960, %cst_476 {dimension_numbers = #tpu.dot_dimension_numbers<[1], [0], [0], [1], [0, 0, 1, 1], [], []>} : vector<16x80xbf16>, vector<80x256xbf16>, vector<16x256xf32> -> vector<16x256xf32>
    %962 = vector.extract_strided_slice %961 {offsets = [0, 0], sizes = [16, 128], strides = [1, 1]} : vector<16x256xf32> to vector<16x128xf32>
    %963 = vector.extract_strided_slice %961 {offsets = [0, 128], sizes = [16, 128], strides = [1, 1]} : vector<16x256xf32> to vector<16x128xf32>
    %cst_477 = arith.constant 0.000000e+00 : f32
    %964 = vector.broadcast %cst_477 : f32 to vector<16x128xf32>
    %965 = arith.addf %964, %962 : vector<16x128xf32>
    %966 = arith.addf %965, %963 : vector<16x128xf32>
    %cst_478 = arith.constant 2.000000e+00 : f32
    %967 = vector.broadcast %cst_478 : f32 to vector<16x128xf32>
    %968 = arith.divf %966, %967 : vector<16x128xf32>
    %969 = arith.subf %962, %968 : vector<16x128xf32>
    %970 = arith.mulf %969, %969 : vector<16x128xf32>
    %cst_479 = arith.constant 0.000000e+00 : f32
    %971 = vector.broadcast %cst_479 : f32 to vector<16x128xf32>
    %972 = arith.addf %971, %970 : vector<16x128xf32>
    %973 = arith.subf %963, %968 : vector<16x128xf32>
    %974 = arith.mulf %973, %973 : vector<16x128xf32>
    %975 = arith.addf %972, %974 : vector<16x128xf32>
    %cst_480 = arith.constant 2.000000e+00 : f32
    %976 = vector.broadcast %cst_480 : f32 to vector<16x128xf32>
    %977 = arith.divf %975, %976 : vector<16x128xf32>
    %cst_481 = arith.constant 9.99999974E-6 : f32
    %978 = vector.broadcast %cst_481 : f32 to vector<16x128xf32>
    %979 = arith.addf %977, %978 : vector<16x128xf32>
    %980 = math.rsqrt %979 : vector<16x128xf32>
    %c96_482 = arith.constant 96 : index
    %c0_483 = arith.constant 0 : index
    %981 = vector.load %arg6[%c96_482, %c0_483] : memref<144x128xf32, #tpu.memory_space<vmem>>, vector<16x128xf32>
    %c96_484 = arith.constant 96 : index
    %c0_485 = arith.constant 0 : index
    %982 = vector.load %arg7[%c96_484, %c0_485] : memref<144x128xf32, #tpu.memory_space<vmem>>, vector<16x128xf32>
    %983 = arith.mulf %980, %981 : vector<16x128xf32>
    %984 = arith.mulf %968, %983 : vector<16x128xf32>
    %985 = arith.subf %982, %984 : vector<16x128xf32>
    %986 = tpu.concatenate %983, %983 in 1 : vector<16x128xf32>, vector<16x128xf32> -> vector<16x256xf32>
    %987 = tpu.concatenate %985, %985 in 1 : vector<16x128xf32>, vector<16x128xf32> -> vector<16x256xf32>
    %988 = arith.mulf %961, %986 : vector<16x256xf32>
    %989 = arith.addf %988, %987 : vector<16x256xf32>
    %cst_486 = arith.constant 0.000000e+00 : f32
    %990 = vector.broadcast %cst_486 : f32 to vector<16x256xf32>
    %991 = arith.cmpf oge, %989, %990 : vector<16x256xf32>
    %992 = vector.broadcast %708 : f32 to vector<16x256xf32>
    %993 = arith.mulf %992, %989 : vector<16x256xf32>
    %994 = arith.select %991, %989, %993 : vector<16x256xi1>, vector<16x256xf32>
    %c128_487 = arith.constant 128 : index
    %c0_488 = arith.constant 0 : index
    %995 = vector.load %arg14[%c128_487, %c0_488] : memref<208x256xf32, #tpu.memory_space<vmem>>, vector<16x256xf32>
    tpu.vector_store %arg14[%c128_487, %c0_488], %994 {strides = array<i32>} : memref<208x256xf32, #tpu.memory_space<vmem>>, vector<16x256xf32>,
    %c112_489 = arith.constant 112 : index
    %c0_490 = arith.constant 0 : index
    %996 = vector.load %arg13[%c112_489, %c0_490] : memref<168x256xf32, #tpu.memory_space<vmem>>, vector<40x256xf32>
    %c0_491 = arith.constant 0 : index
    %c0_492 = arith.constant 0 : index
    %997 = vector.load %arg15[%c0_491, %c0_492] : memref<160x256xf32, #tpu.memory_space<vmem>>, vector<40x256xf32>
    tpu.vector_store %arg15[%c0_491, %c0_492], %996 {strides = array<i32>} : memref<160x256xf32, #tpu.memory_space<vmem>>, vector<40x256xf32>,
    %998 = vector.extract_strided_slice %996 {offsets = [0, 1], sizes = [40, 255], strides = [1, 1]} : vector<40x256xf32> to vector<40x255xf32>
    %c40_493 = arith.constant 40 : index
    %c0_494 = arith.constant 0 : index
    %999 = vector.load %arg15[%c40_493, %c0_494] : memref<160x256xf32, #tpu.memory_space<vmem>>, vector<40x255xf32>
    tpu.vector_store %arg15[%c40_493, %c0_494], %998 {strides = array<i32>} : memref<160x256xf32, #tpu.memory_space<vmem>>, vector<40x255xf32>,
    %c0_495 = arith.constant 0 : index
    %c0_496 = arith.constant 0 : index
    %1000 = vector.load %arg15[%c0_495, %c0_496] : memref<160x256xf32, #tpu.memory_space<vmem>>, vector<80x256xf32>
    %1001 = arith.truncf %1000 : vector<80x256xf32> to vector<80x256xbf16>
    %cst_497 = arith.constant dense<0.000000e+00> : vector<16x256xf32>
    %1002 = tpu.matmul %707, %1001, %cst_497 {dimension_numbers = #tpu.dot_dimension_numbers<[1], [0], [0], [1], [0, 0, 1, 1], [], []>} : vector<16x80xbf16>, vector<80x256xbf16>, vector<16x256xf32> -> vector<16x256xf32>
    %1003 = vector.extract_strided_slice %1002 {offsets = [0, 0], sizes = [16, 128], strides = [1, 1]} : vector<16x256xf32> to vector<16x128xf32>
    %1004 = vector.extract_strided_slice %1002 {offsets = [0, 128], sizes = [16, 128], strides = [1, 1]} : vector<16x256xf32> to vector<16x128xf32>
    %cst_498 = arith.constant 0.000000e+00 : f32
    %1005 = vector.broadcast %cst_498 : f32 to vector<16x128xf32>
    %1006 = arith.addf %1005, %1003 : vector<16x128xf32>
    %1007 = arith.addf %1006, %1004 : vector<16x128xf32>
    %cst_499 = arith.constant 2.000000e+00 : f32
    %1008 = vector.broadcast %cst_499 : f32 to vector<16x128xf32>
    %1009 = arith.divf %1007, %1008 : vector<16x128xf32>
    %1010 = arith.subf %1003, %1009 : vector<16x128xf32>
    %1011 = arith.mulf %1010, %1010 : vector<16x128xf32>
    %cst_500 = arith.constant 0.000000e+00 : f32
    %1012 = vector.broadcast %cst_500 : f32 to vector<16x128xf32>
    %1013 = arith.addf %1012, %1011 : vector<16x128xf32>
    %1014 = arith.subf %1004, %1009 : vector<16x128xf32>
    %1015 = arith.mulf %1014, %1014 : vector<16x128xf32>
    %1016 = arith.addf %1013, %1015 : vector<16x128xf32>
    %cst_501 = arith.constant 2.000000e+00 : f32
    %1017 = vector.broadcast %cst_501 : f32 to vector<16x128xf32>
    %1018 = arith.divf %1016, %1017 : vector<16x128xf32>
    %cst_502 = arith.constant 9.99999974E-6 : f32
    %1019 = vector.broadcast %cst_502 : f32 to vector<16x128xf32>
    %1020 = arith.addf %1018, %1019 : vector<16x128xf32>
    %1021 = math.rsqrt %1020 : vector<16x128xf32>
    %c112_503 = arith.constant 112 : index
    %c0_504 = arith.constant 0 : index
    %1022 = vector.load %arg6[%c112_503, %c0_504] : memref<144x128xf32, #tpu.memory_space<vmem>>, vector<16x128xf32>
    %c112_505 = arith.constant 112 : index
    %c0_506 = arith.constant 0 : index
    %1023 = vector.load %arg7[%c112_505, %c0_506] : memref<144x128xf32, #tpu.memory_space<vmem>>, vector<16x128xf32>
    %1024 = arith.mulf %1021, %1022 : vector<16x128xf32>
    %1025 = arith.mulf %1009, %1024 : vector<16x128xf32>
    %1026 = arith.subf %1023, %1025 : vector<16x128xf32>
    %1027 = tpu.concatenate %1024, %1024 in 1 : vector<16x128xf32>, vector<16x128xf32> -> vector<16x256xf32>
    %1028 = tpu.concatenate %1026, %1026 in 1 : vector<16x128xf32>, vector<16x128xf32> -> vector<16x256xf32>
    %1029 = arith.mulf %1002, %1027 : vector<16x256xf32>
    %1030 = arith.addf %1029, %1028 : vector<16x256xf32>
    %cst_507 = arith.constant 0.000000e+00 : f32
    %1031 = vector.broadcast %cst_507 : f32 to vector<16x256xf32>
    %1032 = arith.cmpf oge, %1030, %1031 : vector<16x256xf32>
    %1033 = vector.broadcast %708 : f32 to vector<16x256xf32>
    %1034 = arith.mulf %1033, %1030 : vector<16x256xf32>
    %1035 = arith.select %1032, %1030, %1034 : vector<16x256xi1>, vector<16x256xf32>
    %c144_508 = arith.constant 144 : index
    %c0_509 = arith.constant 0 : index
    %1036 = vector.load %arg14[%c144_508, %c0_509] : memref<208x256xf32, #tpu.memory_space<vmem>>, vector<16x256xf32>
    tpu.vector_store %arg14[%c144_508, %c0_509], %1035 {strides = array<i32>} : memref<208x256xf32, #tpu.memory_space<vmem>>, vector<16x256xf32>,
    %c128_510 = arith.constant 128 : index
    %c0_511 = arith.constant 0 : index
    %1037 = vector.load %arg13[%c128_510, %c0_511] : memref<168x256xf32, #tpu.memory_space<vmem>>, vector<40x256xf32>
    %c0_512 = arith.constant 0 : index
    %c0_513 = arith.constant 0 : index
    %1038 = vector.load %arg15[%c0_512, %c0_513] : memref<160x256xf32, #tpu.memory_space<vmem>>, vector<40x256xf32>
    tpu.vector_store %arg15[%c0_512, %c0_513], %1037 {strides = array<i32>} : memref<160x256xf32, #tpu.memory_space<vmem>>, vector<40x256xf32>,
    %1039 = vector.extract_strided_slice %1037 {offsets = [0, 1], sizes = [40, 255], strides = [1, 1]} : vector<40x256xf32> to vector<40x255xf32>
    %c40_514 = arith.constant 40 : index
    %c0_515 = arith.constant 0 : index
    %1040 = vector.load %arg15[%c40_514, %c0_515] : memref<160x256xf32, #tpu.memory_space<vmem>>, vector<40x255xf32>
    tpu.vector_store %arg15[%c40_514, %c0_515], %1039 {strides = array<i32>} : memref<160x256xf32, #tpu.memory_space<vmem>>, vector<40x255xf32>,
    %c0_516 = arith.constant 0 : index
    %c0_517 = arith.constant 0 : index
    %1041 = vector.load %arg15[%c0_516, %c0_517] : memref<160x256xf32, #tpu.memory_space<vmem>>, vector<80x256xf32>
    %1042 = arith.truncf %1041 : vector<80x256xf32> to vector<80x256xbf16>
    %cst_518 = arith.constant dense<0.000000e+00> : vector<16x256xf32>
    %1043 = tpu.matmul %707, %1042, %cst_518 {dimension_numbers = #tpu.dot_dimension_numbers<[1], [0], [0], [1], [0, 0, 1, 1], [], []>} : vector<16x80xbf16>, vector<80x256xbf16>, vector<16x256xf32> -> vector<16x256xf32>
    %1044 = vector.extract_strided_slice %1043 {offsets = [0, 0], sizes = [16, 128], strides = [1, 1]} : vector<16x256xf32> to vector<16x128xf32>
    %1045 = vector.extract_strided_slice %1043 {offsets = [0, 128], sizes = [16, 128], strides = [1, 1]} : vector<16x256xf32> to vector<16x128xf32>
    %cst_519 = arith.constant 0.000000e+00 : f32
    %1046 = vector.broadcast %cst_519 : f32 to vector<16x128xf32>
    %1047 = arith.addf %1046, %1044 : vector<16x128xf32>
    %1048 = arith.addf %1047, %1045 : vector<16x128xf32>
    %cst_520 = arith.constant 2.000000e+00 : f32
    %1049 = vector.broadcast %cst_520 : f32 to vector<16x128xf32>
    %1050 = arith.divf %1048, %1049 : vector<16x128xf32>
    %1051 = arith.subf %1044, %1050 : vector<16x128xf32>
    %1052 = arith.mulf %1051, %1051 : vector<16x128xf32>
    %cst_521 = arith.constant 0.000000e+00 : f32
    %1053 = vector.broadcast %cst_521 : f32 to vector<16x128xf32>
    %1054 = arith.addf %1053, %1052 : vector<16x128xf32>
    %1055 = arith.subf %1045, %1050 : vector<16x128xf32>
    %1056 = arith.mulf %1055, %1055 : vector<16x128xf32>
    %1057 = arith.addf %1054, %1056 : vector<16x128xf32>
    %cst_522 = arith.constant 2.000000e+00 : f32
    %1058 = vector.broadcast %cst_522 : f32 to vector<16x128xf32>
    %1059 = arith.divf %1057, %1058 : vector<16x128xf32>
    %cst_523 = arith.constant 9.99999974E-6 : f32
    %1060 = vector.broadcast %cst_523 : f32 to vector<16x128xf32>
    %1061 = arith.addf %1059, %1060 : vector<16x128xf32>
    %1062 = math.rsqrt %1061 : vector<16x128xf32>
    %c128_524 = arith.constant 128 : index
    %c0_525 = arith.constant 0 : index
    %1063 = vector.load %arg6[%c128_524, %c0_525] : memref<144x128xf32, #tpu.memory_space<vmem>>, vector<16x128xf32>
    %c128_526 = arith.constant 128 : index
    %c0_527 = arith.constant 0 : index
    %1064 = vector.load %arg7[%c128_526, %c0_527] : memref<144x128xf32, #tpu.memory_space<vmem>>, vector<16x128xf32>
    %1065 = arith.mulf %1062, %1063 : vector<16x128xf32>
    %1066 = arith.mulf %1050, %1065 : vector<16x128xf32>
    %1067 = arith.subf %1064, %1066 : vector<16x128xf32>
    %1068 = tpu.concatenate %1065, %1065 in 1 : vector<16x128xf32>, vector<16x128xf32> -> vector<16x256xf32>
    %1069 = tpu.concatenate %1067, %1067 in 1 : vector<16x128xf32>, vector<16x128xf32> -> vector<16x256xf32>
    %1070 = arith.mulf %1043, %1068 : vector<16x256xf32>
    %1071 = arith.addf %1070, %1069 : vector<16x256xf32>
    %cst_528 = arith.constant 0.000000e+00 : f32
    %1072 = vector.broadcast %cst_528 : f32 to vector<16x256xf32>
    %1073 = arith.cmpf oge, %1071, %1072 : vector<16x256xf32>
    %1074 = vector.broadcast %708 : f32 to vector<16x256xf32>
    %1075 = arith.mulf %1074, %1071 : vector<16x256xf32>
    %1076 = arith.select %1073, %1071, %1075 : vector<16x256xi1>, vector<16x256xf32>
    %c160 = arith.constant 160 : index
    %c0_529 = arith.constant 0 : index
    %1077 = vector.load %arg14[%c160, %c0_529] : memref<208x256xf32, #tpu.memory_space<vmem>>, vector<16x256xf32>
    tpu.vector_store %arg14[%c160, %c0_529], %1076 {strides = array<i32>} : memref<208x256xf32, #tpu.memory_space<vmem>>, vector<16x256xf32>,
    %c0_530 = arith.constant 0 : index
    %c0_531 = arith.constant 0 : index
    %1078 = vector.load %arg8[%c0_530, %c0_531] : memref<32x160xf32, #tpu.memory_space<vmem>>, vector<32x160xf32>
    %1079 = arith.truncf %1078 : vector<32x160xf32> to vector<32x160xbf16>
    %c2 = arith.constant 2 : index
    %1080 = memref.load %arg11[%c2] : memref<3xf32, #tpu.memory_space<smem>>
    %c0_532 = arith.constant 0 : index
    %c0_533 = arith.constant 0 : index
    %1081 = vector.load %arg14[%c0_532, %c0_533] : memref<208x256xf32, #tpu.memory_space<vmem>>, vector<80x256xf32>
    %c0_534 = arith.constant 0 : index
    %c0_535 = arith.constant 0 : index
    %1082 = vector.load %arg15[%c0_534, %c0_535] : memref<160x256xf32, #tpu.memory_space<vmem>>, vector<80x256xf32>
    tpu.vector_store %arg15[%c0_534, %c0_535], %1081 {strides = array<i32>} : memref<160x256xf32, #tpu.memory_space<vmem>>, vector<80x256xf32>,
    %1083 = vector.extract_strided_slice %1081 {offsets = [0, 1], sizes = [80, 255], strides = [1, 1]} : vector<80x256xf32> to vector<80x255xf32>
    %c80_536 = arith.constant 80 : index
    %c0_537 = arith.constant 0 : index
    %1084 = vector.load %arg15[%c80_536, %c0_537] : memref<160x256xf32, #tpu.memory_space<vmem>>, vector<80x255xf32>
    tpu.vector_store %arg15[%c80_536, %c0_537], %1083 {strides = array<i32>} : memref<160x256xf32, #tpu.memory_space<vmem>>, vector<80x255xf32>,
    %c0_538 = arith.constant 0 : index
    %c0_539 = arith.constant 0 : index
    %1085 = vector.load %arg15[%c0_538, %c0_539] : memref<160x256xf32, #tpu.memory_space<vmem>>, vector<160x256xf32>
    %1086 = arith.truncf %1085 : vector<160x256xf32> to vector<160x256xbf16>
    %cst_540 = arith.constant dense<0.000000e+00> : vector<32x256xf32>
    %1087 = tpu.matmul %1079, %1086, %cst_540 {dimension_numbers = #tpu.dot_dimension_numbers<[1], [0], [0], [1], [0, 0, 1, 1], [], []>} : vector<32x160xbf16>, vector<160x256xbf16>, vector<32x256xf32> -> vector<32x256xf32>
    %1088 = vector.extract_strided_slice %1087 {offsets = [0, 0], sizes = [32, 128], strides = [1, 1]} : vector<32x256xf32> to vector<32x128xf32>
    %1089 = vector.extract_strided_slice %1087 {offsets = [0, 128], sizes = [32, 128], strides = [1, 1]} : vector<32x256xf32> to vector<32x128xf32>
    %cst_541 = arith.constant 0.000000e+00 : f32
    %1090 = vector.broadcast %cst_541 : f32 to vector<32x128xf32>
    %1091 = arith.addf %1090, %1088 : vector<32x128xf32>
    %1092 = arith.addf %1091, %1089 : vector<32x128xf32>
    %cst_542 = arith.constant 2.000000e+00 : f32
    %1093 = vector.broadcast %cst_542 : f32 to vector<32x128xf32>
    %1094 = arith.divf %1092, %1093 : vector<32x128xf32>
    %1095 = arith.subf %1088, %1094 : vector<32x128xf32>
    %1096 = arith.mulf %1095, %1095 : vector<32x128xf32>
    %cst_543 = arith.constant 0.000000e+00 : f32
    %1097 = vector.broadcast %cst_543 : f32 to vector<32x128xf32>
    %1098 = arith.addf %1097, %1096 : vector<32x128xf32>
    %1099 = arith.subf %1089, %1094 : vector<32x128xf32>
    %1100 = arith.mulf %1099, %1099 : vector<32x128xf32>
    %1101 = arith.addf %1098, %1100 : vector<32x128xf32>
    %cst_544 = arith.constant 2.000000e+00 : f32
    %1102 = vector.broadcast %cst_544 : f32 to vector<32x128xf32>
    %1103 = arith.divf %1101, %1102 : vector<32x128xf32>
    %cst_545 = arith.constant 9.99999974E-6 : f32
    %1104 = vector.broadcast %cst_545 : f32 to vector<32x128xf32>
    %1105 = arith.addf %1103, %1104 : vector<32x128xf32>
    %1106 = math.rsqrt %1105 : vector<32x128xf32>
    %c0_546 = arith.constant 0 : index
    %c0_547 = arith.constant 0 : index
    %1107 = vector.load %arg9[%c0_546, %c0_547] : memref<160x128xf32, #tpu.memory_space<vmem>>, vector<32x128xf32>
    %c0_548 = arith.constant 0 : index
    %c0_549 = arith.constant 0 : index
    %1108 = vector.load %arg10[%c0_548, %c0_549] : memref<160x128xf32, #tpu.memory_space<vmem>>, vector<32x128xf32>
    %1109 = arith.mulf %1106, %1107 : vector<32x128xf32>
    %1110 = arith.mulf %1094, %1109 : vector<32x128xf32>
    %1111 = arith.subf %1108, %1110 : vector<32x128xf32>
    %1112 = tpu.concatenate %1109, %1109 in 1 : vector<32x128xf32>, vector<32x128xf32> -> vector<32x256xf32>
    %1113 = tpu.concatenate %1111, %1111 in 1 : vector<32x128xf32>, vector<32x128xf32> -> vector<32x256xf32>
    %1114 = arith.mulf %1087, %1112 : vector<32x256xf32>
    %1115 = arith.addf %1114, %1113 : vector<32x256xf32>
    %cst_550 = arith.constant 0.000000e+00 : f32
    %1116 = vector.broadcast %cst_550 : f32 to vector<32x256xf32>
    %1117 = arith.cmpf oge, %1115, %1116 : vector<32x256xf32>
    %1118 = vector.broadcast %1080 : f32 to vector<32x256xf32>
    %1119 = arith.mulf %1118, %1115 : vector<32x256xf32>
    %1120 = arith.select %1117, %1115, %1119 : vector<32x256xi1>, vector<32x256xf32>
    %c0_551 = arith.constant 0 : index
    %c0_552 = arith.constant 0 : index
    %1121 = vector.load %arg12[%c0_551, %c0_552] : memref<160x256xf32, #tpu.memory_space<vmem>>, vector<32x256xf32>
    tpu.vector_store %arg12[%c0_551, %c0_552], %1120 {strides = array<i32>} : memref<160x256xf32, #tpu.memory_space<vmem>>, vector<32x256xf32>,
    %c32_553 = arith.constant 32 : index
    %c0_554 = arith.constant 0 : index
    %1122 = vector.load %arg14[%c32_553, %c0_554] : memref<208x256xf32, #tpu.memory_space<vmem>>, vector<80x256xf32>
    %c0_555 = arith.constant 0 : index
    %c0_556 = arith.constant 0 : index
    %1123 = vector.load %arg15[%c0_555, %c0_556] : memref<160x256xf32, #tpu.memory_space<vmem>>, vector<80x256xf32>
    tpu.vector_store %arg15[%c0_555, %c0_556], %1122 {strides = array<i32>} : memref<160x256xf32, #tpu.memory_space<vmem>>, vector<80x256xf32>,
    %1124 = vector.extract_strided_slice %1122 {offsets = [0, 1], sizes = [80, 255], strides = [1, 1]} : vector<80x256xf32> to vector<80x255xf32>
    %c80_557 = arith.constant 80 : index
    %c0_558 = arith.constant 0 : index
    %1125 = vector.load %arg15[%c80_557, %c0_558] : memref<160x256xf32, #tpu.memory_space<vmem>>, vector<80x255xf32>
    tpu.vector_store %arg15[%c80_557, %c0_558], %1124 {strides = array<i32>} : memref<160x256xf32, #tpu.memory_space<vmem>>, vector<80x255xf32>,
    %c0_559 = arith.constant 0 : index
    %c0_560 = arith.constant 0 : index
    %1126 = vector.load %arg15[%c0_559, %c0_560] : memref<160x256xf32, #tpu.memory_space<vmem>>, vector<160x256xf32>
    %1127 = arith.truncf %1126 : vector<160x256xf32> to vector<160x256xbf16>
    %cst_561 = arith.constant dense<0.000000e+00> : vector<32x256xf32>
    %1128 = tpu.matmul %1079, %1127, %cst_561 {dimension_numbers = #tpu.dot_dimension_numbers<[1], [0], [0], [1], [0, 0, 1, 1], [], []>} : vector<32x160xbf16>, vector<160x256xbf16>, vector<32x256xf32> -> vector<32x256xf32>
    %1129 = vector.extract_strided_slice %1128 {offsets = [0, 0], sizes = [32, 128], strides = [1, 1]} : vector<32x256xf32> to vector<32x128xf32>
    %1130 = vector.extract_strided_slice %1128 {offsets = [0, 128], sizes = [32, 128], strides = [1, 1]} : vector<32x256xf32> to vector<32x128xf32>
    %cst_562 = arith.constant 0.000000e+00 : f32
    %1131 = vector.broadcast %cst_562 : f32 to vector<32x128xf32>
    %1132 = arith.addf %1131, %1129 : vector<32x128xf32>
    %1133 = arith.addf %1132, %1130 : vector<32x128xf32>
    %cst_563 = arith.constant 2.000000e+00 : f32
    %1134 = vector.broadcast %cst_563 : f32 to vector<32x128xf32>
    %1135 = arith.divf %1133, %1134 : vector<32x128xf32>
    %1136 = arith.subf %1129, %1135 : vector<32x128xf32>
    %1137 = arith.mulf %1136, %1136 : vector<32x128xf32>
    %cst_564 = arith.constant 0.000000e+00 : f32
    %1138 = vector.broadcast %cst_564 : f32 to vector<32x128xf32>
    %1139 = arith.addf %1138, %1137 : vector<32x128xf32>
    %1140 = arith.subf %1130, %1135 : vector<32x128xf32>
    %1141 = arith.mulf %1140, %1140 : vector<32x128xf32>
    %1142 = arith.addf %1139, %1141 : vector<32x128xf32>
    %cst_565 = arith.constant 2.000000e+00 : f32
    %1143 = vector.broadcast %cst_565 : f32 to vector<32x128xf32>
    %1144 = arith.divf %1142, %1143 : vector<32x128xf32>
    %cst_566 = arith.constant 9.99999974E-6 : f32
    %1145 = vector.broadcast %cst_566 : f32 to vector<32x128xf32>
    %1146 = arith.addf %1144, %1145 : vector<32x128xf32>
    %1147 = math.rsqrt %1146 : vector<32x128xf32>
    %c32_567 = arith.constant 32 : index
    %c0_568 = arith.constant 0 : index
    %1148 = vector.load %arg9[%c32_567, %c0_568] : memref<160x128xf32, #tpu.memory_space<vmem>>, vector<32x128xf32>
    %c32_569 = arith.constant 32 : index
    %c0_570 = arith.constant 0 : index
    %1149 = vector.load %arg10[%c32_569, %c0_570] : memref<160x128xf32, #tpu.memory_space<vmem>>, vector<32x128xf32>
    %1150 = arith.mulf %1147, %1148 : vector<32x128xf32>
    %1151 = arith.mulf %1135, %1150 : vector<32x128xf32>
    %1152 = arith.subf %1149, %1151 : vector<32x128xf32>
    %1153 = tpu.concatenate %1150, %1150 in 1 : vector<32x128xf32>, vector<32x128xf32> -> vector<32x256xf32>
    %1154 = tpu.concatenate %1152, %1152 in 1 : vector<32x128xf32>, vector<32x128xf32> -> vector<32x256xf32>
    %1155 = arith.mulf %1128, %1153 : vector<32x256xf32>
    %1156 = arith.addf %1155, %1154 : vector<32x256xf32>
    %cst_571 = arith.constant 0.000000e+00 : f32
    %1157 = vector.broadcast %cst_571 : f32 to vector<32x256xf32>
    %1158 = arith.cmpf oge, %1156, %1157 : vector<32x256xf32>
    %1159 = vector.broadcast %1080 : f32 to vector<32x256xf32>
    %1160 = arith.mulf %1159, %1156 : vector<32x256xf32>
    %1161 = arith.select %1158, %1156, %1160 : vector<32x256xi1>, vector<32x256xf32>
    %c32_572 = arith.constant 32 : index
    %c0_573 = arith.constant 0 : index
    %1162 = vector.load %arg12[%c32_572, %c0_573] : memref<160x256xf32, #tpu.memory_space<vmem>>, vector<32x256xf32>
    tpu.vector_store %arg12[%c32_572, %c0_573], %1161 {strides = array<i32>} : memref<160x256xf32, #tpu.memory_space<vmem>>, vector<32x256xf32>,
    %c64_574 = arith.constant 64 : index
    %c0_575 = arith.constant 0 : index
    %1163 = vector.load %arg14[%c64_574, %c0_575] : memref<208x256xf32, #tpu.memory_space<vmem>>, vector<80x256xf32>
    %c0_576 = arith.constant 0 : index
    %c0_577 = arith.constant 0 : index
    %1164 = vector.load %arg15[%c0_576, %c0_577] : memref<160x256xf32, #tpu.memory_space<vmem>>, vector<80x256xf32>
    tpu.vector_store %arg15[%c0_576, %c0_577], %1163 {strides = array<i32>} : memref<160x256xf32, #tpu.memory_space<vmem>>, vector<80x256xf32>,
    %1165 = vector.extract_strided_slice %1163 {offsets = [0, 1], sizes = [80, 255], strides = [1, 1]} : vector<80x256xf32> to vector<80x255xf32>
    %c80_578 = arith.constant 80 : index
    %c0_579 = arith.constant 0 : index
    %1166 = vector.load %arg15[%c80_578, %c0_579] : memref<160x256xf32, #tpu.memory_space<vmem>>, vector<80x255xf32>
    tpu.vector_store %arg15[%c80_578, %c0_579], %1165 {strides = array<i32>} : memref<160x256xf32, #tpu.memory_space<vmem>>, vector<80x255xf32>,
    %c0_580 = arith.constant 0 : index
    %c0_581 = arith.constant 0 : index
    %1167 = vector.load %arg15[%c0_580, %c0_581] : memref<160x256xf32, #tpu.memory_space<vmem>>, vector<160x256xf32>
    %1168 = arith.truncf %1167 : vector<160x256xf32> to vector<160x256xbf16>
    %cst_582 = arith.constant dense<0.000000e+00> : vector<32x256xf32>
    %1169 = tpu.matmul %1079, %1168, %cst_582 {dimension_numbers = #tpu.dot_dimension_numbers<[1], [0], [0], [1], [0, 0, 1, 1], [], []>} : vector<32x160xbf16>, vector<160x256xbf16>, vector<32x256xf32> -> vector<32x256xf32>
    %1170 = vector.extract_strided_slice %1169 {offsets = [0, 0], sizes = [32, 128], strides = [1, 1]} : vector<32x256xf32> to vector<32x128xf32>
    %1171 = vector.extract_strided_slice %1169 {offsets = [0, 128], sizes = [32, 128], strides = [1, 1]} : vector<32x256xf32> to vector<32x128xf32>
    %cst_583 = arith.constant 0.000000e+00 : f32
    %1172 = vector.broadcast %cst_583 : f32 to vector<32x128xf32>
    %1173 = arith.addf %1172, %1170 : vector<32x128xf32>
    %1174 = arith.addf %1173, %1171 : vector<32x128xf32>
    %cst_584 = arith.constant 2.000000e+00 : f32
    %1175 = vector.broadcast %cst_584 : f32 to vector<32x128xf32>
    %1176 = arith.divf %1174, %1175 : vector<32x128xf32>
    %1177 = arith.subf %1170, %1176 : vector<32x128xf32>
    %1178 = arith.mulf %1177, %1177 : vector<32x128xf32>
    %cst_585 = arith.constant 0.000000e+00 : f32
    %1179 = vector.broadcast %cst_585 : f32 to vector<32x128xf32>
    %1180 = arith.addf %1179, %1178 : vector<32x128xf32>
    %1181 = arith.subf %1171, %1176 : vector<32x128xf32>
    %1182 = arith.mulf %1181, %1181 : vector<32x128xf32>
    %1183 = arith.addf %1180, %1182 : vector<32x128xf32>
    %cst_586 = arith.constant 2.000000e+00 : f32
    %1184 = vector.broadcast %cst_586 : f32 to vector<32x128xf32>
    %1185 = arith.divf %1183, %1184 : vector<32x128xf32>
    %cst_587 = arith.constant 9.99999974E-6 : f32
    %1186 = vector.broadcast %cst_587 : f32 to vector<32x128xf32>
    %1187 = arith.addf %1185, %1186 : vector<32x128xf32>
    %1188 = math.rsqrt %1187 : vector<32x128xf32>
    %c64_588 = arith.constant 64 : index
    %c0_589 = arith.constant 0 : index
    %1189 = vector.load %arg9[%c64_588, %c0_589] : memref<160x128xf32, #tpu.memory_space<vmem>>, vector<32x128xf32>
    %c64_590 = arith.constant 64 : index
    %c0_591 = arith.constant 0 : index
    %1190 = vector.load %arg10[%c64_590, %c0_591] : memref<160x128xf32, #tpu.memory_space<vmem>>, vector<32x128xf32>
    %1191 = arith.mulf %1188, %1189 : vector<32x128xf32>
    %1192 = arith.mulf %1176, %1191 : vector<32x128xf32>
    %1193 = arith.subf %1190, %1192 : vector<32x128xf32>
    %1194 = tpu.concatenate %1191, %1191 in 1 : vector<32x128xf32>, vector<32x128xf32> -> vector<32x256xf32>
    %1195 = tpu.concatenate %1193, %1193 in 1 : vector<32x128xf32>, vector<32x128xf32> -> vector<32x256xf32>
    %1196 = arith.mulf %1169, %1194 : vector<32x256xf32>
    %1197 = arith.addf %1196, %1195 : vector<32x256xf32>
    %cst_592 = arith.constant 0.000000e+00 : f32
    %1198 = vector.broadcast %cst_592 : f32 to vector<32x256xf32>
    %1199 = arith.cmpf oge, %1197, %1198 : vector<32x256xf32>
    %1200 = vector.broadcast %1080 : f32 to vector<32x256xf32>
    %1201 = arith.mulf %1200, %1197 : vector<32x256xf32>
    %1202 = arith.select %1199, %1197, %1201 : vector<32x256xi1>, vector<32x256xf32>
    %c64_593 = arith.constant 64 : index
    %c0_594 = arith.constant 0 : index
    %1203 = vector.load %arg12[%c64_593, %c0_594] : memref<160x256xf32, #tpu.memory_space<vmem>>, vector<32x256xf32>
    tpu.vector_store %arg12[%c64_593, %c0_594], %1202 {strides = array<i32>} : memref<160x256xf32, #tpu.memory_space<vmem>>, vector<32x256xf32>,
    %c96_595 = arith.constant 96 : index
    %c0_596 = arith.constant 0 : index
    %1204 = vector.load %arg14[%c96_595, %c0_596] : memref<208x256xf32, #tpu.memory_space<vmem>>, vector<80x256xf32>
    %c0_597 = arith.constant 0 : index
    %c0_598 = arith.constant 0 : index
    %1205 = vector.load %arg15[%c0_597, %c0_598] : memref<160x256xf32, #tpu.memory_space<vmem>>, vector<80x256xf32>
    tpu.vector_store %arg15[%c0_597, %c0_598], %1204 {strides = array<i32>} : memref<160x256xf32, #tpu.memory_space<vmem>>, vector<80x256xf32>,
    %1206 = vector.extract_strided_slice %1204 {offsets = [0, 1], sizes = [80, 255], strides = [1, 1]} : vector<80x256xf32> to vector<80x255xf32>
    %c80_599 = arith.constant 80 : index
    %c0_600 = arith.constant 0 : index
    %1207 = vector.load %arg15[%c80_599, %c0_600] : memref<160x256xf32, #tpu.memory_space<vmem>>, vector<80x255xf32>
    tpu.vector_store %arg15[%c80_599, %c0_600], %1206 {strides = array<i32>} : memref<160x256xf32, #tpu.memory_space<vmem>>, vector<80x255xf32>,
    %c0_601 = arith.constant 0 : index
    %c0_602 = arith.constant 0 : index
    %1208 = vector.load %arg15[%c0_601, %c0_602] : memref<160x256xf32, #tpu.memory_space<vmem>>, vector<160x256xf32>
    %1209 = arith.truncf %1208 : vector<160x256xf32> to vector<160x256xbf16>
    %cst_603 = arith.constant dense<0.000000e+00> : vector<32x256xf32>
    %1210 = tpu.matmul %1079, %1209, %cst_603 {dimension_numbers = #tpu.dot_dimension_numbers<[1], [0], [0], [1], [0, 0, 1, 1], [], []>} : vector<32x160xbf16>, vector<160x256xbf16>, vector<32x256xf32> -> vector<32x256xf32>
    %1211 = vector.extract_strided_slice %1210 {offsets = [0, 0], sizes = [32, 128], strides = [1, 1]} : vector<32x256xf32> to vector<32x128xf32>
    %1212 = vector.extract_strided_slice %1210 {offsets = [0, 128], sizes = [32, 128], strides = [1, 1]} : vector<32x256xf32> to vector<32x128xf32>
    %cst_604 = arith.constant 0.000000e+00 : f32
    %1213 = vector.broadcast %cst_604 : f32 to vector<32x128xf32>
    %1214 = arith.addf %1213, %1211 : vector<32x128xf32>
    %1215 = arith.addf %1214, %1212 : vector<32x128xf32>
    %cst_605 = arith.constant 2.000000e+00 : f32
    %1216 = vector.broadcast %cst_605 : f32 to vector<32x128xf32>
    %1217 = arith.divf %1215, %1216 : vector<32x128xf32>
    %1218 = arith.subf %1211, %1217 : vector<32x128xf32>
    %1219 = arith.mulf %1218, %1218 : vector<32x128xf32>
    %cst_606 = arith.constant 0.000000e+00 : f32
    %1220 = vector.broadcast %cst_606 : f32 to vector<32x128xf32>
    %1221 = arith.addf %1220, %1219 : vector<32x128xf32>
    %1222 = arith.subf %1212, %1217 : vector<32x128xf32>
    %1223 = arith.mulf %1222, %1222 : vector<32x128xf32>
    %1224 = arith.addf %1221, %1223 : vector<32x128xf32>
    %cst_607 = arith.constant 2.000000e+00 : f32
    %1225 = vector.broadcast %cst_607 : f32 to vector<32x128xf32>
    %1226 = arith.divf %1224, %1225 : vector<32x128xf32>
    %cst_608 = arith.constant 9.99999974E-6 : f32
    %1227 = vector.broadcast %cst_608 : f32 to vector<32x128xf32>
    %1228 = arith.addf %1226, %1227 : vector<32x128xf32>
    %1229 = math.rsqrt %1228 : vector<32x128xf32>
    %c96_609 = arith.constant 96 : index
    %c0_610 = arith.constant 0 : index
    %1230 = vector.load %arg9[%c96_609, %c0_610] : memref<160x128xf32, #tpu.memory_space<vmem>>, vector<32x128xf32>
    %c96_611 = arith.constant 96 : index
    %c0_612 = arith.constant 0 : index
    %1231 = vector.load %arg10[%c96_611, %c0_612] : memref<160x128xf32, #tpu.memory_space<vmem>>, vector<32x128xf32>
    %1232 = arith.mulf %1229, %1230 : vector<32x128xf32>
    %1233 = arith.mulf %1217, %1232 : vector<32x128xf32>
    %1234 = arith.subf %1231, %1233 : vector<32x128xf32>
    %1235 = tpu.concatenate %1232, %1232 in 1 : vector<32x128xf32>, vector<32x128xf32> -> vector<32x256xf32>
    %1236 = tpu.concatenate %1234, %1234 in 1 : vector<32x128xf32>, vector<32x128xf32> -> vector<32x256xf32>
    %1237 = arith.mulf %1210, %1235 : vector<32x256xf32>
    %1238 = arith.addf %1237, %1236 : vector<32x256xf32>
    %cst_613 = arith.constant 0.000000e+00 : f32
    %1239 = vector.broadcast %cst_613 : f32 to vector<32x256xf32>
    %1240 = arith.cmpf oge, %1238, %1239 : vector<32x256xf32>
    %1241 = vector.broadcast %1080 : f32 to vector<32x256xf32>
    %1242 = arith.mulf %1241, %1238 : vector<32x256xf32>
    %1243 = arith.select %1240, %1238, %1242 : vector<32x256xi1>, vector<32x256xf32>
    %c96_614 = arith.constant 96 : index
    %c0_615 = arith.constant 0 : index
    %1244 = vector.load %arg12[%c96_614, %c0_615] : memref<160x256xf32, #tpu.memory_space<vmem>>, vector<32x256xf32>
    tpu.vector_store %arg12[%c96_614, %c0_615], %1243 {strides = array<i32>} : memref<160x256xf32, #tpu.memory_space<vmem>>, vector<32x256xf32>,
    %c128_616 = arith.constant 128 : index
    %c0_617 = arith.constant 0 : index
    %1245 = vector.load %arg14[%c128_616, %c0_617] : memref<208x256xf32, #tpu.memory_space<vmem>>, vector<80x256xf32>
    %c0_618 = arith.constant 0 : index
    %c0_619 = arith.constant 0 : index
    %1246 = vector.load %arg15[%c0_618, %c0_619] : memref<160x256xf32, #tpu.memory_space<vmem>>, vector<80x256xf32>
    tpu.vector_store %arg15[%c0_618, %c0_619], %1245 {strides = array<i32>} : memref<160x256xf32, #tpu.memory_space<vmem>>, vector<80x256xf32>,
    %1247 = vector.extract_strided_slice %1245 {offsets = [0, 1], sizes = [80, 255], strides = [1, 1]} : vector<80x256xf32> to vector<80x255xf32>
    %c80_620 = arith.constant 80 : index
    %c0_621 = arith.constant 0 : index
    %1248 = vector.load %arg15[%c80_620, %c0_621] : memref<160x256xf32, #tpu.memory_space<vmem>>, vector<80x255xf32>
    tpu.vector_store %arg15[%c80_620, %c0_621], %1247 {strides = array<i32>} : memref<160x256xf32, #tpu.memory_space<vmem>>, vector<80x255xf32>,
    %c0_622 = arith.constant 0 : index
    %c0_623 = arith.constant 0 : index
    %1249 = vector.load %arg15[%c0_622, %c0_623] : memref<160x256xf32, #tpu.memory_space<vmem>>, vector<160x256xf32>
    %1250 = arith.truncf %1249 : vector<160x256xf32> to vector<160x256xbf16>
    %cst_624 = arith.constant dense<0.000000e+00> : vector<32x256xf32>
    %1251 = tpu.matmul %1079, %1250, %cst_624 {dimension_numbers = #tpu.dot_dimension_numbers<[1], [0], [0], [1], [0, 0, 1, 1], [], []>} : vector<32x160xbf16>, vector<160x256xbf16>, vector<32x256xf32> -> vector<32x256xf32>
    %1252 = vector.extract_strided_slice %1251 {offsets = [0, 0], sizes = [32, 128], strides = [1, 1]} : vector<32x256xf32> to vector<32x128xf32>
    %1253 = vector.extract_strided_slice %1251 {offsets = [0, 128], sizes = [32, 128], strides = [1, 1]} : vector<32x256xf32> to vector<32x128xf32>
    %cst_625 = arith.constant 0.000000e+00 : f32
    %1254 = vector.broadcast %cst_625 : f32 to vector<32x128xf32>
    %1255 = arith.addf %1254, %1252 : vector<32x128xf32>
    %1256 = arith.addf %1255, %1253 : vector<32x128xf32>
    %cst_626 = arith.constant 2.000000e+00 : f32
    %1257 = vector.broadcast %cst_626 : f32 to vector<32x128xf32>
    %1258 = arith.divf %1256, %1257 : vector<32x128xf32>
    %1259 = arith.subf %1252, %1258 : vector<32x128xf32>
    %1260 = arith.mulf %1259, %1259 : vector<32x128xf32>
    %cst_627 = arith.constant 0.000000e+00 : f32
    %1261 = vector.broadcast %cst_627 : f32 to vector<32x128xf32>
    %1262 = arith.addf %1261, %1260 : vector<32x128xf32>
    %1263 = arith.subf %1253, %1258 : vector<32x128xf32>
    %1264 = arith.mulf %1263, %1263 : vector<32x128xf32>
    %1265 = arith.addf %1262, %1264 : vector<32x128xf32>
    %cst_628 = arith.constant 2.000000e+00 : f32
    %1266 = vector.broadcast %cst_628 : f32 to vector<32x128xf32>
    %1267 = arith.divf %1265, %1266 : vector<32x128xf32>
    %cst_629 = arith.constant 9.99999974E-6 : f32
    %1268 = vector.broadcast %cst_629 : f32 to vector<32x128xf32>
    %1269 = arith.addf %1267, %1268 : vector<32x128xf32>
    %1270 = math.rsqrt %1269 : vector<32x128xf32>
    %c128_630 = arith.constant 128 : index
    %c0_631 = arith.constant 0 : index
    %1271 = vector.load %arg9[%c128_630, %c0_631] : memref<160x128xf32, #tpu.memory_space<vmem>>, vector<32x128xf32>
    %c128_632 = arith.constant 128 : index
    %c0_633 = arith.constant 0 : index
    %1272 = vector.load %arg10[%c128_632, %c0_633] : memref<160x128xf32, #tpu.memory_space<vmem>>, vector<32x128xf32>
    %1273 = arith.mulf %1270, %1271 : vector<32x128xf32>
    %1274 = arith.mulf %1258, %1273 : vector<32x128xf32>
    %1275 = arith.subf %1272, %1274 : vector<32x128xf32>
    %1276 = tpu.concatenate %1273, %1273 in 1 : vector<32x128xf32>, vector<32x128xf32> -> vector<32x256xf32>
    %1277 = tpu.concatenate %1275, %1275 in 1 : vector<32x128xf32>, vector<32x128xf32> -> vector<32x256xf32>
    %1278 = arith.mulf %1251, %1276 : vector<32x256xf32>
    %1279 = arith.addf %1278, %1277 : vector<32x256xf32>
    %cst_634 = arith.constant 0.000000e+00 : f32
    %1280 = vector.broadcast %cst_634 : f32 to vector<32x256xf32>
    %1281 = arith.cmpf oge, %1279, %1280 : vector<32x256xf32>
    %1282 = vector.broadcast %1080 : f32 to vector<32x256xf32>
    %1283 = arith.mulf %1282, %1279 : vector<32x256xf32>
    %1284 = arith.select %1281, %1279, %1283 : vector<32x256xi1>, vector<32x256xf32>
    %c128_635 = arith.constant 128 : index
    %c0_636 = arith.constant 0 : index
    %1285 = vector.load %arg12[%c128_635, %c0_636] : memref<160x256xf32, #tpu.memory_space<vmem>>, vector<32x256xf32>
    tpu.vector_store %arg12[%c128_635, %c0_636], %1284 {strides = array<i32>} : memref<160x256xf32, #tpu.memory_space<vmem>>, vector<32x256xf32>,
    return
  }
  func.func @transform_0(%arg0: i32) -> (i32, i32) {
    %c0_i32 = arith.constant 0 : i32
    %c0_i32_0 = arith.constant 0 : i32
    %c0_i32_1 = arith.constant 0 : i32
    return %c0_i32, %c0_i32_0 : i32, i32
  }
  func.func @transform_1(%arg0: i32) -> (i32, i32) {
    %c0_i32 = arith.constant 0 : i32
    %c0_i32_0 = arith.constant 0 : i32
    %c0_i32_1 = arith.constant 0 : i32
    return %c0_i32, %c0_i32_0 : i32, i32
  }
  func.func @transform_2(%arg0: i32) -> (i32, i32) {
    %c0_i32 = arith.constant 0 : i32
    %c0_i32_0 = arith.constant 0 : i32
    %c0_i32_1 = arith.constant 0 : i32
    return %c0_i32, %c0_i32_0 : i32, i32
  }
  func.func @transform_3(%arg0: i32) -> (i32, i32) {
    %c0_i32 = arith.constant 0 : i32
    %c0_i32_0 = arith.constant 0 : i32
    %c0_i32_1 = arith.constant 0 : i32
    return %c0_i32, %c0_i32_0 : i32, i32
  }
  func.func @transform_4(%arg0: i32) -> (i32, i32) {
    %c0_i32 = arith.constant 0 : i32
    %c0_i32_0 = arith.constant 0 : i32
    %c0_i32_1 = arith.constant 0 : i32
    return %c0_i32, %c0_i32_0 : i32, i32
  }
  func.func @transform_5(%arg0: i32) -> (i32, i32) {
    %c0_i32 = arith.constant 0 : i32
    %c0_i32_0 = arith.constant 0 : i32
    %c0_i32_1 = arith.constant 0 : i32
    return %c0_i32, %c0_i32_0 : i32, i32
  }
  func.func @transform_6(%arg0: i32) -> (i32, i32) {
    %c0_i32 = arith.constant 0 : i32
    %c0_i32_0 = arith.constant 0 : i32
    %c0_i32_1 = arith.constant 0 : i32
    return %c0_i32, %c0_i32_0 : i32, i32
  }
  func.func @transform_7(%arg0: i32) -> (i32, i32) {
    %c0_i32 = arith.constant 0 : i32
    %c0_i32_0 = arith.constant 0 : i32
    %c0_i32_1 = arith.constant 0 : i32
    return %c0_i32, %c0_i32_0 : i32, i32
  }
  func.func @transform_8(%arg0: i32) -> (i32, i32) {
    %c0_i32 = arith.constant 0 : i32
    %c0_i32_0 = arith.constant 0 : i32
    %c0_i32_1 = arith.constant 0 : i32
    return %c0_i32, %c0_i32_0 : i32, i32
  }
  func.func @transform_9(%arg0: i32) -> (i32, i32) {
    %c0_i32 = arith.constant 0 : i32
    %c0_i32_0 = arith.constant 0 : i32
    %c0_i32_1 = arith.constant 0 : i32
    return %c0_i32, %c0_i32_0 : i32, i32
  }
  func.func @transform_10(%arg0: i32) -> i32 {
    %c0_i32 = arith.constant 0 : i32
    %c0_i32_0 = arith.constant 0 : i32
    return %c0_i32 : i32
  }
  func.func @transform_11(%arg0: i32) -> (i32, i32) {
    %c0_i32 = arith.constant 0 : i32
    %c0_i32_0 = arith.constant 0 : i32
    %c0_i32_1 = arith.constant 0 : i32
    return %c0_i32, %c0_i32_0 : i32, i32
  }
}

</mosaic_0001>

<llo_original>
// kernel: dccrn_forward.1
$region0: #{dccrn_forward.1}
  #allocation0 [shape = 'u32[]', space=smem, size = 0x4, offset = 0x4, fixed_abs, tag = 'smem constant byte address 0x4 - core index']
  #allocation1 [shape = 'u32[72,128]{1,0:T(1,128)}', space=vmem, size = 0x9000, scoped, tag = 'internal scratch']
  #allocation2 [shape = 'f32[168,256]{1,0:T(8,128)}', space=vmem, size = 0x2a000, scoped, tag = 'scratch operand']
  #allocation3 [shape = 'f32[208,256]{1,0:T(8,128)}', space=vmem, size = 0x34000, scoped, tag = 'scratch operand']
  #allocation4 [shape = 'f32[160,256]{1,0:T(8,128)}', space=vmem, size = 0x28000, scoped, tag = 'scratch operand']
  %s0 = inlined_call_operand.vmem [shape: f32[74,256], index: 0, kind: input, shape index: {}]
  %s1 = inlined_call_operand.vmem [shape: f32[8,32], index: 1, kind: input, shape index: {}]
  %s2 = inlined_call_operand.vmem [shape: f32[136,128], index: 2, kind: input, shape index: {}]
  %s3 = inlined_call_operand.vmem [shape: f32[136,128], index: 3, kind: input, shape index: {}]
  %s4 = inlined_call_operand.vmem [shape: f32[16,80], index: 4, kind: input, shape index: {}]
  %s5 = inlined_call_operand.vmem [shape: f32[144,128], index: 5, kind: input, shape index: {}]
  %s6 = inlined_call_operand.vmem [shape: f32[144,128], index: 6, kind: input, shape index: {}]
  %s7 = inlined_call_operand.vmem [shape: f32[32,160], index: 7, kind: input, shape index: {}]
  %s8 = inlined_call_operand.vmem [shape: f32[160,128], index: 8, kind: input, shape index: {}]
  %s9 = inlined_call_operand.vmem [shape: f32[160,128], index: 9, kind: input, shape index: {}]
  %s10 = inlined_call_operand.vmem [shape: f32[3], index: 10, kind: input, shape index: {}]
  %s11 = inlined_call_operand.vmem [shape: f32[160,256], index: 11, kind: output, shape index: {}]
  %s12 = sld [smem:[#allocation0]]
  $region58: #{dccrn_forward.1} parent=0
    _
  %s14 = ssub.s32 1, %s12
  %s15 = scalar_select 0, %s14, %s12
  $region1: #{dccrn_forward.1} parent=0
    #allocation5 [shape = 'u8[512]{0}', space=smem, size = 0x200, scoped, tag = 'input window, operand 10, single buffered']
    #allocation6 [shape = 's32[1]{0}', space=sflag, size = 0x4, scoped, tag = 'scoped memory for dccrn_forward.1']
    %16 = vsyncpa [#allocation6], 0
    // Predicated region
    $region2: #{dccrn_forward.1} parent=1 // pred_check
      _
    $region3: #{dccrn_forward.1} parent=1 // pred_check_branch
      %18 = sbr.rel (0) target = $region5
    $region4: #{dccrn_forward.1} parent=1 // pred_region
      _
    $region5: #{dccrn_forward.1} parent=1 // pred_fallthru
      _
    // Predicated region
    $region6: #{dccrn_forward.1} parent=1 // pred_check
      _
    $region7: #{dccrn_forward.1} parent=1 // pred_check_branch
      %20 = sbr.rel (0) target = $region9
    $region8: #{dccrn_forward.1} parent=1 // pred_region
      _
    $region9: #{dccrn_forward.1} parent=1 // pred_fallthru
      _
    // Predicated region
    $region10: #{dccrn_forward.1} parent=1 // pred_check
      _
    $region11: #{dccrn_forward.1} parent=1 // pred_check_branch
      %22 = sbr.rel (0) target = $region13
    $region12: #{dccrn_forward.1} parent=1 // pred_region
      _
    $region13: #{dccrn_forward.1} parent=1 // pred_fallthru
      _
    // Predicated region
    $region14: #{dccrn_forward.1} parent=1 // pred_check
      _
    $region15: #{dccrn_forward.1} parent=1 // pred_check_branch
      %24 = sbr.rel (0) target = $region17
    $region16: #{dccrn_forward.1} parent=1 // pred_region
      _
    $region17: #{dccrn_forward.1} parent=1 // pred_fallthru
      _
    // Predicated region
    $region18: #{dccrn_forward.1} parent=1 // pred_check
      _
    $region19: #{dccrn_forward.1} parent=1 // pred_check_branch
      %26 = sbr.rel (0) target = $region21
    $region20: #{dccrn_forward.1} parent=1 // pred_region
      _
    $region21: #{dccrn_forward.1} parent=1 // pred_fallthru
      _
    // Predicated region
    $region22: #{dccrn_forward.1} parent=1 // pred_check
      _
    $region23: #{dccrn_forward.1} parent=1 // pred_check_branch
      %28 = sbr.rel (0) target = $region25
    $region24: #{dccrn_forward.1} parent=1 // pred_region
      _
    $region25: #{dccrn_forward.1} parent=1 // pred_fallthru
      _
    // Predicated region
    $region26: #{dccrn_forward.1} parent=1 // pred_check
      _
    $region27: #{dccrn_forward.1} parent=1 // pred_check_branch
      %30 = sbr.rel (0) target = $region29
    $region28: #{dccrn_forward.1} parent=1 // pred_region
      _
    $region29: #{dccrn_forward.1} parent=1 // pred_fallthru
      _
    // Predicated region
    $region30: #{dccrn_forward.1} parent=1 // pred_check
      _
    $region31: #{dccrn_forward.1} parent=1 // pred_check_branch
      %32 = sbr.rel (0) target = $region33
    $region32: #{dccrn_forward.1} parent=1 // pred_region
      _
    $region33: #{dccrn_forward.1} parent=1 // pred_fallthru
      _
    // Predicated region
    $region34: #{dccrn_forward.1} parent=1 // pred_check
      _
    $region35: #{dccrn_forward.1} parent=1 // pred_check_branch
      %34 = sbr.rel (0) target = $region37
    $region36: #{dccrn_forward.1} parent=1 // pred_region
      _
    $region37: #{dccrn_forward.1} parent=1 // pred_fallthru
      _
    // Predicated region
    $region38: #{dccrn_forward.1} parent=1 // pred_check
      _
    $region39: #{dccrn_forward.1} parent=1 // pred_check_branch
      %36 = sbr.rel (0) target = $region41
    $region40: #{dccrn_forward.1} parent=1 // pred_region
      _
    $region41: #{dccrn_forward.1} parent=1 // pred_fallthru
      _
    // Predicated region
    $region42: #{dccrn_forward.1} parent=1 // pred_check
      _
    $region43: #{dccrn_forward.1} parent=1 // pred_check_branch
      %38 = sbr.rel (0) target = $region45
    $region44: #{dccrn_forward.1} parent=1 // pred_region
      %40 = vsyncadd [#allocation6], 0
      %s42 = sshll.u32 %s10, 4
      %s43 = int_to_ptr.vmem [resolvable:$true] %s42
      %45 = dma.vmem_to_smem %s43, 16, [#allocation5], [#allocation6]
    $region45: #{dccrn_forward.1} parent=1 // pred_fallthru
      _
    // Predicated region
    $region46: #{dccrn_forward.1} parent=1 // pred_check
      _
    $region47: #{dccrn_forward.1} parent=1 // pred_check_branch
      %47 = sbr.rel (0) target = $region49
    $region48: #{dccrn_forward.1} parent=1 // pred_region
      %49 = dma.done [#allocation6], 16
    $region49: #{dccrn_forward.1} parent=1 // pred_fallthru
      _
    %50 = sfence
    %52 = vst [vmem:[#allocation2] sm:$0xff] 0.0
    %53 = vst [vmem:[#allocation2 + $0x8] sm:$0xff] 0.0
    %54 = vst [vmem:[#allocation2 + $0x10] sm:$0xff] 0.0
    %55 = vst [vmem:[#allocation2 + $0x18] sm:$0xff] 0.0
    %56 = vst [vmem:[#allocation2 + $0x20] sm:$0xff] 0.0
    %57 = vst [vmem:[#allocation2 + $0x28] sm:$0xff] 0.0
    %58 = vst [vmem:[#allocation2 + $0x30] sm:$0xff] 0.0
    %59 = vst [vmem:[#allocation2 + $0x38] sm:$0xff] 0.0
    %60 = vst [vmem:[#allocation2 + $0x40] sm:$0xff] 0.0
    %61 = vst [vmem:[#allocation2 + $0x48] sm:$0xff] 0.0
    %62 = vst [vmem:[#allocation2 + $0x50] sm:$0xff] 0.0
    %63 = vst [vmem:[#allocation2 + $0x58] sm:$0xff] 0.0
    %64 = vst [vmem:[#allocation2 + $0x60] sm:$0xff] 0.0
    %65 = vst [vmem:[#allocation2 + $0x68] sm:$0xff] 0.0
    %66 = vst [vmem:[#allocation2 + $0x70] sm:$0xff] 0.0
    %67 = vst [vmem:[#allocation2 + $0x78] sm:$0xff] 0.0
    %68 = vst [vmem:[#allocation2 + $0x80] sm:$0xff] 0.0
    %69 = vst [vmem:[#allocation2 + $0x88] sm:$0xff] 0.0
    %70 = vst [vmem:[#allocation2 + $0x90] sm:$0xff] 0.0
    %71 = vst [vmem:[#allocation2 + $0x98] sm:$0xff] 0.0
    %72 = vst [vmem:[#allocation2 + $0xa0] sm:$0xff] 0.0
    %73 = vst [vmem:[#allocation2 + $0xa8] sm:$0xff] 0.0
    %74 = vst [vmem:[#allocation2 + $0xb0] sm:$0xff] 0.0
    %75 = vst [vmem:[#allocation2 + $0xb8] sm:$0xff] 0.0
    %76 = vst [vmem:[#allocation2 + $0xc0] sm:$0xff] 0.0
    %77 = vst [vmem:[#allocation2 + $0xc8] sm:$0xff] 0.0
    %78 = vst [vmem:[#allocation2 + $0xd0] sm:$0xff] 0.0
    %79 = vst [vmem:[#allocation2 + $0xd8] sm:$0xff] 0.0
    %80 = vst [vmem:[#allocation2 + $0xe0] sm:$0xff] 0.0
    %81 = vst [vmem:[#allocation2 + $0xe8] sm:$0xff] 0.0
    %82 = vst [vmem:[#allocation2 + $0xf0] sm:$0xff] 0.0
    %83 = vst [vmem:[#allocation2 + $0xf8] sm:$0xff] 0.0
    %84 = vst [vmem:[#allocation2 + $0x100] sm:$0xff] 0.0
    %85 = vst [vmem:[#allocation2 + $0x108] sm:$0xff] 0.0
    %86 = vst [vmem:[#allocation2 + $0x110] sm:$0xff] 0.0
    %87 = vst [vmem:[#allocation2 + $0x118] sm:$0xff] 0.0
    %88 = vst [vmem:[#allocation2 + $0x120] sm:$0xff] 0.0
    %89 = vst [vmem:[#allocation2 + $0x128] sm:$0xff] 0.0
    %90 = vst [vmem:[#allocation2 + $0x130] sm:$0xff] 0.0
    %91 = vst [vmem:[#allocation2 + $0x138] sm:$0xff] 0.0
    %92 = vst [vmem:[#allocation2 + $0x140] sm:$0xff] 0.0
    %93 = vst [vmem:[#allocation2 + $0x148] sm:$0xff] 0.0
    %94 = vst [vmem:[#allocation3] sm:$0xff] 0.0
    %95 = vst [vmem:[#allocation3 + $0x8] sm:$0xff] 0.0
    %96 = vst [vmem:[#allocation3 + $0x10] sm:$0xff] 0.0
    %97 = vst [vmem:[#allocation3 + $0x18] sm:$0xff] 0.0
    %98 = vst [vmem:[#allocation3 + $0x20] sm:$0xff] 0.0
    %99 = vst [vmem:[#allocation3 + $0x28] sm:$0xff] 0.0
    %100 = vst [vmem:[#allocation3 + $0x30] sm:$0xff] 0.0
    %101 = vst [vmem:[#allocation3 + $0x38] sm:$0xff] 0.0
    %102 = vst [vmem:[#allocation3 + $0x40] sm:$0xff] 0.0
    %103 = vst [vmem:[#allocation3 + $0x48] sm:$0xff] 0.0
    %104 = vst [vmem:[#allocation3 + $0x50] sm:$0xff] 0.0
    %105 = vst [vmem:[#allocation3 + $0x58] sm:$0xff] 0.0
    %106 = vst [vmem:[#allocation3 + $0x60] sm:$0xff] 0.0
    %107 = vst [vmem:[#allocation3 + $0x68] sm:$0xff] 0.0
    %108 = vst [vmem:[#allocation3 + $0x70] sm:$0xff] 0.0
    %109 = vst [vmem:[#allocation3 + $0x78] sm:$0xff] 0.0
    %110 = vst [vmem:[#allocation3 + $0x80] sm:$0xff] 0.0
    %111 = vst [vmem:[#allocation3 + $0x88] sm:$0xff] 0.0
    %112 = vst [vmem:[#allocation3 + $0x90] sm:$0xff] 0.0
    %113 = vst [vmem:[#allocation3 + $0x98] sm:$0xff] 0.0
    %114 = vst [vmem:[#allocation3 + $0xa0] sm:$0xff] 0.0
    %115 = vst [vmem:[#allocation3 + $0xa8] sm:$0xff] 0.0
    %116 = vst [vmem:[#allocation3 + $0xb0] sm:$0xff] 0.0
    %117 = vst [vmem:[#allocation3 + $0xb8] sm:$0xff] 0.0
    %118 = vst [vmem:[#allocation3 + $0xc0] sm:$0xff] 0.0
    %119 = vst [vmem:[#allocation3 + $0xc8] sm:$0xff] 0.0
    %120 = vst [vmem:[#allocation3 + $0xd0] sm:$0xff] 0.0
    %121 = vst [vmem:[#allocation3 + $0xd8] sm:$0xff] 0.0
    %122 = vst [vmem:[#allocation3 + $0xe0] sm:$0xff] 0.0
    %123 = vst [vmem:[#allocation3 + $0xe8] sm:$0xff] 0.0
    %124 = vst [vmem:[#allocation3 + $0xf0] sm:$0xff] 0.0
    %125 = vst [vmem:[#allocation3 + $0xf8] sm:$0xff] 0.0
    %126 = vst [vmem:[#allocation3 + $0x100] sm:$0xff] 0.0
    %127 = vst [vmem:[#allocation3 + $0x108] sm:$0xff] 0.0
    %128 = vst [vmem:[#allocation3 + $0x110] sm:$0xff] 0.0
    %129 = vst [vmem:[#allocation3 + $0x118] sm:$0xff] 0.0
    %130 = vst [vmem:[#allocation3 + $0x120] sm:$0xff] 0.0
    %131 = vst [vmem:[#allocation3 + $0x128] sm:$0xff] 0.0
    %132 = vst [vmem:[#allocation3 + $0x130] sm:$0xff] 0.0
    %133 = vst [vmem:[#allocation3 + $0x138] sm:$0xff] 0.0
    %134 = vst [vmem:[#allocation3 + $0x140] sm:$0xff] 0.0
    %135 = vst [vmem:[#allocation3 + $0x148] sm:$0xff] 0.0
    %136 = vst [vmem:[#allocation3 + $0x150] sm:$0xff] 0.0
    %137 = vst [vmem:[#allocation3 + $0x158] sm:$0xff] 0.0
    %138 = vst [vmem:[#allocation3 + $0x160] sm:$0xff] 0.0
    %139 = vst [vmem:[#allocation3 + $0x168] sm:$0xff] 0.0
    %140 = vst [vmem:[#allocation3 + $0x170] sm:$0xff] 0.0
    %141 = vst [vmem:[#allocation3 + $0x178] sm:$0xff] 0.0
    %142 = vst [vmem:[#allocation3 + $0x180] sm:$0xff] 0.0
    %143 = vst [vmem:[#allocation3 + $0x188] sm:$0xff] 0.0
    %144 = vst [vmem:[#allocation3 + $0x190] sm:$0xff] 0.0
    %145 = vst [vmem:[#allocation3 + $0x198] sm:$0xff] 0.0
    %146 = vst [vmem:[#allocation4] sm:$0xff] 0.0
    %147 = vst [vmem:[#allocation4 + $0x8] sm:$0xff] 0.0
    %148 = vst [vmem:[#allocation4 + $0x10] sm:$0xff] 0.0
    %149 = vst [vmem:[#allocation4 + $0x18] sm:$0xff] 0.0
    %150 = vst [vmem:[#allocation4 + $0x20] sm:$0xff] 0.0
    %151 = vst [vmem:[#allocation4 + $0x28] sm:$0xff] 0.0
    %152 = vst [vmem:[#allocation4 + $0x30] sm:$0xff] 0.0
    %153 = vst [vmem:[#allocation4 + $0x38] sm:$0xff] 0.0
    %154 = vst [vmem:[#allocation4 + $0x40] sm:$0xff] 0.0
    %155 = vst [vmem:[#allocation4 + $0x48] sm:$0xff] 0.0
    %156 = vst [vmem:[#allocation4 + $0x50] sm:$0xff] 0.0
    %157 = vst [vmem:[#allocation4 + $0x58] sm:$0xff] 0.0
    %158 = vst [vmem:[#allocation4 + $0x60] sm:$0xff] 0.0
    %159 = vst [vmem:[#allocation4 + $0x68] sm:$0xff] 0.0
    %160 = vst [vmem:[#allocation4 + $0x70] sm:$0xff] 0.0
    %161 = vst [vmem:[#allocation4 + $0x78] sm:$0xff] 0.0
    %162 = vst [vmem:[#allocation4 + $0x80] sm:$0xff] 0.0
    %163 = vst [vmem:[#allocation4 + $0x88] sm:$0xff] 0.0
    %164 = vst [vmem:[#allocation4 + $0x90] sm:$0xff] 0.0
    %165 = vst [vmem:[#allocation4 + $0x98] sm:$0xff] 0.0
    %166 = vst [vmem:[#allocation4 + $0xa0] sm:$0xff] 0.0
    %167 = vst [vmem:[#allocation4 + $0xa8] sm:$0xff] 0.0
    %168 = vst [vmem:[#allocation4 + $0xb0] sm:$0xff] 0.0
    %169 = vst [vmem:[#allocation4 + $0xb8] sm:$0xff] 0.0
    %170 = vst [vmem:[#allocation4 + $0xc0] sm:$0xff] 0.0
    %171 = vst [vmem:[#allocation4 + $0xc8] sm:$0xff] 0.0
    %172 = vst [vmem:[#allocation4 + $0xd0] sm:$0xff] 0.0
    %173 = vst [vmem:[#allocation4 + $0xd8] sm:$0xff] 0.0
    %174 = vst [vmem:[#allocation4 + $0xe0] sm:$0xff] 0.0
    %175 = vst [vmem:[#allocation4 + $0xe8] sm:$0xff] 0.0
    %176 = vst [vmem:[#allocation4 + $0xf0] sm:$0xff] 0.0
    %177 = vst [vmem:[#allocation4 + $0xf8] sm:$0xff] 0.0
    %178 = vst [vmem:[#allocation4 + $0x100] sm:$0xff] 0.0
    %179 = vst [vmem:[#allocation4 + $0x108] sm:$0xff] 0.0
    %180 = vst [vmem:[#allocation4 + $0x110] sm:$0xff] 0.0
    %181 = vst [vmem:[#allocation4 + $0x118] sm:$0xff] 0.0
    %182 = vst [vmem:[#allocation4 + $0x120] sm:$0xff] 0.0
    %183 = vst [vmem:[#allocation4 + $0x128] sm:$0xff] 0.0
    %184 = vst [vmem:[#allocation4 + $0x130] sm:$0xff] 0.0
    %185 = vst [vmem:[#allocation4 + $0x138] sm:$0xff] 0.0
    %v186 = vld [vmem:[%s1] sm:$0xff]
    %v187 = vpack.c.bf16 %v186, %v186
    %s188 = sld [smem:[#allocation5]]
    %v189 = vld [vmem:[%s0] sm:$0xff]
    %v190 = vld [vmem:[%s0 + $0x8] sm:$0xff]
    %v191 = vld [vmem:[%s0 + $0x10] sm:$0x3]
    %v192 = vld [vmem:[%s0 + $0x18] sm:$0x3]
    %193 = vst [vmem:[#allocation4] sm:$0xff] %v189
    %194 = vst [vmem:[#allocation4 + $0x8] sm:$0xff] %v190
    %195 = vst [vmem:[#allocation4 + $0x10] sm:$0x3] %v191
    %196 = vst [vmem:[#allocation4 + $0x18] sm:$0x3] %v192
    %vm201 = vcmask 1041408
    %v202 = vrot.slane %v189, 6
    %v203 = vrot.slane %v190, 6
    %v204 = vrot.slane %v191, 6
    %v205 = vsel %vm201, %v202, %v204
    %v206 = vrot.slane %v192, 6
    %v207 = vsel %vm201, %v203, %v206
    %208 = vrot.lane.b32.xlu0 %v202, 127
    %v209 = vpop.permute.xlu0 %208
    %210 = vrot.lane.b32.xlu0 %v203, 127
    %v211 = vpop.permute.xlu0 %210
    %212 = vrot.lane.b32.xlu0 %v205, 127
    %v213 = vpop.permute.xlu0 %212
    %214 = vrot.lane.b32.xlu0 %v207, 127
    %v215 = vpop.permute.xlu0 %214
    %vm216 = vcmask 1039360
    %v217 = vsel %vm216, %v209, %v211
    %v218 = vsel %vm216, %v213, %v215
    %223 = vst [vmem:[#allocation4 + $0x10] sm:$0xfc] %v217
    %vm224 = vcmask 1039362
    %225 = vst.msk [vmem:[#allocation4 + $0x18] sm:$0xfc] %vm224, %v211
    %226 = vst [vmem:[#allocation4 + $0x20] sm:$0xf] %v218
    %vm227 = vcmask 1035264
    %228 = vst.msk [vmem:[#allocation4 + $0x28] sm:$0xf] %vm227, %v215
    %v229 = vld [vmem:[#allocation4] sm:$0xff]
    %v230 = vld [vmem:[#allocation4 + $0x8] sm:$0xff]
    %v231 = vld [vmem:[#allocation4 + $0x10] sm:$0xff]
    %v232 = vld [vmem:[#allocation4 + $0x18] sm:$0xff]
    %v233 = vld [vmem:[#allocation4 + $0x20] sm:$0xff]
    %v234 = vld [vmem:[#allocation4 + $0x28] sm:$0xff]
    %v235 = vld [vmem:[#allocation4 + $0x30] sm:$0xff]
    %v236 = vld [vmem:[#allocation4 + $0x38] sm:$0xff]
    %v237 = vpack.c.bf16 %v231, %v229
    %v238 = vpack.c.bf16 %v232, %v230
    %v239 = vpack.c.bf16 %v235, %v233
    %v240 = vpack.c.bf16 %v236, %v234
    %vm241 = vcmask 261120
    %v243 = vsel %vm241, %v187, 0
    %245 = vmatpush.bf16.msra.mxu0 0
    %246 = vmatpush.bf16.msra.mxu0 0
    %247 = vmatpush.bf16.msra.mxu0 0
    %248 = vmatpush.bf16.msra.mxu0 0
    %249 = vmatpush.bf16.msra.mxu0 0
    %250 = vmatpush.bf16.msra.mxu0 0
    %251 = vmatpush.bf16.msra.mxu0 %v239
    %252 = vmatpush.bf16.msra.mxu0 %v237
    %253 = vmatmul.bf16.gmra.mxu0 %v243
    %v254 = vpop.f32.mrf.mxu0
    %v255 = vadd.f32 0.0, %v254
    %v256 = vpop.f32.mrf.mxu0
    %257 = vdwg.mxu0
    %258 = vmatpush.bf16.msra.mxu0 0
    %259 = vmatpush.bf16.msra.mxu0 0
    %260 = vmatpush.bf16.msra.mxu0 0
    %261 = vmatpush.bf16.msra.mxu0 0
    %262 = vmatpush.bf16.msra.mxu0 0
    %263 = vmatpush.bf16.msra.mxu0 0
    %264 = vmatpush.bf16.msra.mxu0 %v240
    %265 = vmatpush.bf16.msra.mxu0 %v238
    %266 = vmatmul.bf16.gmra.mxu0 %v243
    %v267 = vpop.f32.mrf.mxu0
    %v268 = vadd.f32 0.0, %v267
    %v269 = vpop.f32.mrf.mxu0
    %270 = vdwg.mxu0
    %v271 = vadd.f32 %v255, 0.0
    %v272 = vadd.f32 %v271, %v268
    %v273 = vrcp.pop 2.0
    %v274 = vmul.f32 2.0, %v273
    %v275 = vsub.f32 1.0, %v274
    %v276 = vmul.f32 %v273, %v275
    %v277 = vadd.f32 %v273, %v276
    %vm278 = vweird.f32 %v273
    %v279 = vsel %vm278, %v273, %v277
    %v280 = vmul.f32 %v272, %v279
    %v281 = vsub.f32 %v255, %v280
    %v282 = vmul.f32 %v281, %v281
    %v283 = vadd.f32 %v282, 0.0
    %v284 = vsub.f32 %v268, %v280
    %v285 = vmul.f32 %v284, %v284
    %v286 = vadd.f32 %v283, %v285
    %v287 = vmul.f32 %v286, %v279
    %v288 = vadd.f32 %v287, 1e-05
    %v289 = vrsqrt.pop %v288
    %v290 = vmul.f32 %v289, %v288
    %v291 = vmul.f32 %v290, %v289
    %v292 = vmul.f32 0.5, %v291
    %v293 = vsub.f32 1.5, %v292
    %v294 = vmul.f32 %v289, %v293
    %vm295 = vweird.f32 %v288
    %vm296 = vweird.f32 %v289
    %vm297 = vmor %vm295, %vm296
    %v298 = vsel %vm297, %v289, %v294
    %v299 = vld [vmem:[%s2] sm:$0xff]
    %v300 = vld [vmem:[%s3] sm:$0xff]
    %v301 = vmul.f32 %v298, %v299
    %v302 = vmul.f32 %v280, %v301
    %v303 = vsub.f32 %v300, %v302
    %v304 = vmul.f32 %v255, %v301
    %v305 = vmul.f32 %v268, %v301
    %v306 = vadd.f32 %v304, %v303
    %v307 = vadd.f32 %v305, %v303
    %vm308 = vcmp.ge.f32.partialorder %v306, 0.0
    %vm309 = vcmp.ge.f32.partialorder %v307, 0.0
    %v310 = vstv %s188
    %v311 = vmul.f32 %v310, %v306
    %v312 = vmul.f32 %v310, %v307
    %v313 = vsel %vm308, %v306, %v311
    %v314 = vsel %vm309, %v307, %v312
    %315 = vst [vmem:[#allocation2 + $0x20] sm:$0xff] %v313
    %316 = vst [vmem:[#allocation2 + $0x28] sm:$0xff] %v314
    %v317 = vld [vmem:[%s0] sm:$0xf0]
    %v318 = vld [vmem:[%s0 + $0x8] sm:$0xf0]
    %v319 = vld [vmem:[%s0 + $0x10] sm:$0x3f]
    %v320 = vld [vmem:[%s0 + $0x18] sm:$0x3f]
    %vm325 = vcmask 1043456
    %v326 = vrot.slane %v317, 4
    %v327 = vrot.slane %v319, 4
    %v328 = vsel %vm325, %v326, %v327
    %v329 = vrot.slane %v318, 4
    %v330 = vrot.slane %v320, 4
    %v331 = vsel %vm325, %v329, %v330
    %336 = vst [vmem:[#allocation4] sm:$0xff] %v328
    %337 = vst [vmem:[#allocation4 + $0x8] sm:$0xff] %v331
    %338 = vst [vmem:[#allocation4 + $0x10] sm:$0x3] %v327
    %339 = vst [vmem:[#allocation4 + $0x18] sm:$0x3] %v330
    %vm340 = vcmask 1045504
    %v341 = vrot.slane %v317, 2
    %v342 = vrot.slane %v319, 2
    %v343 = vsel %vm340, %v341, %v342
    %v344 = vrot.slane %v318, 2
    %v345 = vrot.slane %v320, 2
    %v346 = vsel %vm340, %v344, %v345
    %347 = vrot.lane.b32.xlu0 %v343, 127
    %v348 = vpop.permute.xlu0 %347
    %349 = vrot.lane.b32.xlu0 %v346, 127
    %v350 = vpop.permute.xlu0 %349
    %351 = vrot.lane.b32.xlu0 %v342, 127
    %v352 = vpop.permute.xlu0 %351
    %353 = vrot.lane.b32.xlu0 %v345, 127
    %v354 = vpop.permute.xlu0 %353
    %v355 = vsel %vm216, %v348, %v350
    %v356 = vsel %vm216, %v352, %v354
    %361 = vst [vmem:[#allocation4 + $0x10] sm:$0xfc] %v355
    %362 = vst.msk [vmem:[#allocation4 + $0x18] sm:$0xfc] %vm224, %v350
    %363 = vst [vmem:[#allocation4 + $0x20] sm:$0xf] %v356
    %364 = vst.msk [vmem:[#allocation4 + $0x28] sm:$0xf] %vm227, %v354
    %v365 = vld [vmem:[#allocation4] sm:$0xff]
    %v366 = vld [vmem:[#allocation4 + $0x8] sm:$0xff]
    %v367 = vld [vmem:[#allocation4 + $0x10] sm:$0xff]
    %v368 = vld [vmem:[#allocation4 + $0x18] sm:$0xff]
    %v369 = vld [vmem:[#allocation4 + $0x20] sm:$0xff]
    %v370 = vld [vmem:[#allocation4 + $0x28] sm:$0xff]
    %v371 = vld [vmem:[#allocation4 + $0x30] sm:$0xff]
    %v372 = vld [vmem:[#allocation4 + $0x38] sm:$0xff]
    %v373 = vpack.c.bf16 %v367, %v365
    %v374 = vpack.c.bf16 %v368, %v366
    %v375 = vpack.c.bf16 %v371, %v369
    %v376 = vpack.c.bf16 %v372, %v370
    %377 = vmatpush.bf16.msra.mxu0 0
    %378 = vmatpush.bf16.msra.mxu0 0
    %379 = vmatpush.bf16.msra.mxu0 0
    %380 = vmatpush.bf16.msra.mxu0 0
    %381 = vmatpush.bf16.msra.mxu0 0
    %382 = vmatpush.bf16.msra.mxu0 0
    %383 = vmatpush.bf16.msra.mxu0 %v375
    %384 = vmatpush.bf16.msra.mxu0 %v373
    %385 = vmatmul.bf16.gmra.mxu0 %v243
    %v386 = vpop.f32.mrf.mxu0
    %v387 = vadd.f32 0.0, %v386
    %v388 = vpop.f32.mrf.mxu0
    %389 = vdwg.mxu0
    %390 = vmatpush.bf16.msra.mxu0 0
    %391 = vmatpush.bf16.msra.mxu0 0
    %392 = vmatpush.bf16.msra.mxu0 0
    %393 = vmatpush.bf16.msra.mxu0 0
    %394 = vmatpush.bf16.msra.mxu0 0
    %395 = vmatpush.bf16.msra.mxu0 0
    %396 = vmatpush.bf16.msra.mxu0 %v376
    %397 = vmatpush.bf16.msra.mxu0 %v374
    %398 = vmatmul.bf16.gmra.mxu0 %v243
    %v399 = vpop.f32.mrf.mxu0
    %v400 = vadd.f32 0.0, %v399
    %v401 = vpop.f32.mrf.mxu0
    %402 = vdwg.mxu0
    %v403 = vadd.f32 %v387, 0.0
    %v404 = vadd.f32 %v403, %v400
    %v405 = vmul.f32 %v404, %v279
    %v406 = vsub.f32 %v387, %v405
    %v407 = vmul.f32 %v406, %v406
    %v408 = vadd.f32 %v407, 0.0
    %v409 = vsub.f32 %v400, %v405
    %v410 = vmul.f32 %v409, %v409
    %v411 = vadd.f32 %v408, %v410
    %v412 = vmul.f32 %v411, %v279
    %v413 = vadd.f32 %v412, 1e-05
    %v414 = vrsqrt.pop %v413
    %v415 = vmul.f32 %v414, %v413
    %v416 = vmul.f32 %v415, %v414
    %v417 = vmul.f32 0.5, %v416
    %v418 = vsub.f32 1.5, %v417
    %v419 = vmul.f32 %v414, %v418
    %vm420 = vweird.f32 %v413
    %vm421 = vweird.f32 %v414
    %vm422 = vmor %vm420, %vm421
    %v423 = vsel %vm422, %v414, %v419
    %v424 = vld [vmem:[%s2 + $0x8] sm:$0xff]
    %v425 = vld [vmem:[%s3 + $0x8] sm:$0xff]
    %v426 = vmul.f32 %v423, %v424
    %v427 = vmul.f32 %v405, %v426
    %v428 = vsub.f32 %v425, %v427
    %v429 = vmul.f32 %v387, %v426
    %v430 = vmul.f32 %v400, %v426
    %v431 = vadd.f32 %v429, %v428
    %v432 = vadd.f32 %v430, %v428
    %vm433 = vcmp.ge.f32.partialorder %v431, 0.0
    %vm434 = vcmp.ge.f32.partialorder %v432, 0.0
    %v435 = vmul.f32 %v310, %v431
    %v436 = vmul.f32 %v310, %v432
    %v437 = vsel %vm433, %v431, %v435
    %v438 = vsel %vm434, %v432, %v436
    %439 = vst [vmem:[#allocation2 + $0x30] sm:$0xff] %v437
    %440 = vst [vmem:[#allocation2 + $0x38] sm:$0xff] %v438
    %v441 = vld [vmem:[%s0 + $0x10] sm:$0xff]
    %v442 = vld [vmem:[%s0 + $0x18] sm:$0xff]
    %v443 = vld [vmem:[%s0 + $0x20] sm:$0x3]
    %v444 = vld [vmem:[%s0 + $0x28] sm:$0x3]
    %445 = vst [vmem:[#allocation4] sm:$0xff] %v441
    %446 = vst [vmem:[#allocation4 + $0x8] sm:$0xff] %v442
    %447 = vst [vmem:[#allocation4 + $0x10] sm:$0x3] %v443
    %448 = vst [vmem:[#allocation4 + $0x18] sm:$0x3] %v444
    %v453 = vrot.slane %v441, 6
    %v454 = vrot.slane %v442, 6
    %v455 = vrot.slane %v443, 6
    %v456 = vsel %vm201, %v453, %v455
    %v457 = vrot.slane %v444, 6
    %v458 = vsel %vm201, %v454, %v457
    %459 = vrot.lane.b32.xlu0 %v453, 127
    %v460 = vpop.permute.xlu0 %459
    %461 = vrot.lane.b32.xlu0 %v454, 127
    %v462 = vpop.permute.xlu0 %461
    %463 = vrot.lane.b32.xlu0 %v456, 127
    %v464 = vpop.permute.xlu0 %463
    %465 = vrot.lane.b32.xlu0 %v458, 127
    %v466 = vpop.permute.xlu0 %465
    %v467 = vsel %vm216, %v460, %v462
    %v468 = vsel %vm216, %v464, %v466
    %473 = vst [vmem:[#allocation4 + $0x10] sm:$0xfc] %v467
    %474 = vst.msk [vmem:[#allocation4 + $0x18] sm:$0xfc] %vm224, %v462
    %475 = vst [vmem:[#allocation4 + $0x20] sm:$0xf] %v468
    %476 = vst.msk [vmem:[#allocation4 + $0x28] sm:$0xf] %vm227, %v466
    %v477 = vld [vmem:[#allocation4] sm:$0xff]
    %v478 = vld [vmem:[#allocation4 + $0x8] sm:$0xff]
    %v479 = vld [vmem:[#allocation4 + $0x10] sm:$0xff]
    %v480 = vld [vmem:[#allocation4 + $0x18] sm:$0xff]
    %v481 = vld [vmem:[#allocation4 + $0x20] sm:$0xff]
    %v482 = vld [vmem:[#allocation4 + $0x28] sm:$0xff]
    %v483 = vld [vmem:[#allocation4 + $0x30] sm:$0xff]
    %v484 = vld [vmem:[#allocation4 + $0x38] sm:$0xff]
    %v485 = vpack.c.bf16 %v479, %v477
    %v486 = vpack.c.bf16 %v480, %v478
    %v487 = vpack.c.bf16 %v483, %v481
    %v488 = vpack.c.bf16 %v484, %v482
    %489 = vmatpush.bf16.msra.mxu0 0
    %490 = vmatpush.bf16.msra.mxu0 0
    %491 = vmatpush.bf16.msra.mxu0 0
    %492 = vmatpush.bf16.msra.mxu0 0
    %493 = vmatpush.bf16.msra.mxu0 0
    %494 = vmatpush.bf16.msra.mxu0 0
    %495 = vmatpush.bf16.msra.mxu0 %v487
    %496 = vmatpush.bf16.msra.mxu0 %v485
    %497 = vmatmul.bf16.gmra.mxu0 %v243
    %v498 = vpop.f32.mrf.mxu0
    %v499 = vadd.f32 0.0, %v498
    %v500 = vpop.f32.mrf.mxu0
    %501 = vdwg.mxu0
    %502 = vmatpush.bf16.msra.mxu0 0
    %503 = vmatpush.bf16.msra.mxu0 0
    %504 = vmatpush.bf16.msra.mxu0 0
    %505 = vmatpush.bf16.msra.mxu0 0
    %506 = vmatpush.bf16.msra.mxu0 0
    %507 = vmatpush.bf16.msra.mxu0 0
    %508 = vmatpush.bf16.msra.mxu0 %v488
    %509 = vmatpush.bf16.msra.mxu0 %v486
    %510 = vmatmul.bf16.gmra.mxu0 %v243
    %v511 = vpop.f32.mrf.mxu0
    %v512 = vadd.f32 0.0, %v511
    %v513 = vpop.f32.mrf.mxu0
    %514 = vdwg.mxu0
    %v515 = vadd.f32 %v499, 0.0
    %v516 = vadd.f32 %v515, %v512
    %v517 = vmul.f32 %v516, %v279
    %v518 = vsub.f32 %v499, %v517
    %v519 = vmul.f32 %v518, %v518
    %v520 = vadd.f32 %v519, 0.0
    %v521 = vsub.f32 %v512, %v517
    %v522 = vmul.f32 %v521, %v521
    %v523 = vadd.f32 %v520, %v522
    %v524 = vmul.f32 %v523, %v279
    %v525 = vadd.f32 %v524, 1e-05
    %v526 = vrsqrt.pop %v525
    %v527 = vmul.f32 %v526, %v525
    %v528 = vmul.f32 %v527, %v526
    %v529 = vmul.f32 0.5, %v528
    %v530 = vsub.f32 1.5, %v529
    %v531 = vmul.f32 %v526, %v530
    %vm532 = vweird.f32 %v525
    %vm533 = vweird.f32 %v526
    %vm534 = vmor %vm532, %vm533
    %v535 = vsel %vm534, %v526, %v531
    %v536 = vld [vmem:[%s2 + $0x10] sm:$0xff]
    %v537 = vld [vmem:[%s3 + $0x10] sm:$0xff]
    %v538 = vmul.f32 %v535, %v536
    %v539 = vmul.f32 %v517, %v538
    %v540 = vsub.f32 %v537, %v539
    %v541 = vmul.f32 %v499, %v538
    %v542 = vmul.f32 %v512, %v538
    %v543 = vadd.f32 %v541, %v540
    %v544 = vadd.f32 %v542, %v540
    %vm545 = vcmp.ge.f32.partialorder %v543, 0.0
    %vm546 = vcmp.ge.f32.partialorder %v544, 0.0
    %v547 = vmul.f32 %v310, %v543
    %v548 = vmul.f32 %v310, %v544
    %v549 = vsel %vm545, %v543, %v547
    %v550 = vsel %vm546, %v544, %v548
    %551 = vst [vmem:[#allocation2 + $0x40] sm:$0xff] %v549
    %552 = vst [vmem:[#allocation2 + $0x48] sm:$0xff] %v550
    %v553 = vld [vmem:[%s0 + $0x10] sm:$0xf0]
    %v554 = vld [vmem:[%s0 + $0x18] sm:$0xf0]
    %v555 = vld [vmem:[%s0 + $0x20] sm:$0x3f]
    %v556 = vld [vmem:[%s0 + $0x28] sm:$0x3f]
    %v561 = vrot.slane %v553, 4
    %v562 = vrot.slane %v555, 4
    %v563 = vsel %vm325, %v561, %v562
    %v564 = vrot.slane %v554, 4
    %v565 = vrot.slane %v556, 4
    %v566 = vsel %vm325, %v564, %v565
    %571 = vst [vmem:[#allocation4] sm:$0xff] %v563
    %572 = vst [vmem:[#allocation4 + $0x8] sm:$0xff] %v566
    %573 = vst [vmem:[#allocation4 + $0x10] sm:$0x3] %v562
    %574 = vst [vmem:[#allocation4 + $0x18] sm:$0x3] %v565
    %v575 = vrot.slane %v553, 2
    %v576 = vrot.slane %v555, 2
    %v577 = vsel %vm340, %v575, %v576
    %v578 = vrot.slane %v554, 2
    %v579 = vrot.slane %v556, 2
    %v580 = vsel %vm340, %v578, %v579
    %581 = vrot.lane.b32.xlu0 %v577, 127
    %v582 = vpop.permute.xlu0 %581
    %583 = vrot.lane.b32.xlu0 %v580, 127
    %v584 = vpop.permute.xlu0 %583
    %585 = vrot.lane.b32.xlu0 %v576, 127
    %v586 = vpop.permute.xlu0 %585
    %587 = vrot.lane.b32.xlu0 %v579, 127
    %v588 = vpop.permute.xlu0 %587
    %v589 = vsel %vm216, %v582, %v584
    %v590 = vsel %vm216, %v586, %v588
    %595 = vst [vmem:[#allocation4 + $0x10] sm:$0xfc] %v589
    %596 = vst.msk [vmem:[#allocation4 + $0x18] sm:$0xfc] %vm224, %v584
    %597 = vst [vmem:[#allocation4 + $0x20] sm:$0xf] %v590
    %598 = vst.msk [vmem:[#allocation4 + $0x28] sm:$0xf] %vm227, %v588
    %v599 = vld [vmem:[#allocation4] sm:$0xff]
    %v600 = vld [vmem:[#allocation4 + $0x8] sm:$0xff]
    %v601 = vld [vmem:[#allocation4 + $0x10] sm:$0xff]
    %v602 = vld [vmem:[#allocation4 + $0x18] sm:$0xff]
    %v603 = vld [vmem:[#allocation4 + $0x20] sm:$0xff]
    %v604 = vld [vmem:[#allocation4 + $0x28] sm:$0xff]
    %v605 = vld [vmem:[#allocation4 + $0x30] sm:$0xff]
    %v606 = vld [vmem:[#allocation4 + $0x38] sm:$0xff]
    %v607 = vpack.c.bf16 %v601, %v599
    %v608 = vpack.c.bf16 %v602, %v600
    %v609 = vpack.c.bf16 %v605, %v603
    %v610 = vpack.c.bf16 %v606, %v604
    %611 = vmatpush.bf16.msra.mxu0 0
    %612 = vmatpush.bf16.msra.mxu0 0
    %613 = vmatpush.bf16.msra.mxu0 0
    %614 = vmatpush.bf16.msra.mxu0 0
    %615 = vmatpush.bf16.msra.mxu0 0
    %616 = vmatpush.bf16.msra.mxu0 0
    %617 = vmatpush.bf16.msra.mxu0 %v609
    %618 = vmatpush.bf16.msra.mxu0 %v607
    %619 = vmatmul.bf16.gmra.mxu0 %v243
    %v620 = vpop.f32.mrf.mxu0
    %v621 = vadd.f32 0.0, %v620
    %v622 = vpop.f32.mrf.mxu0
    %623 = vdwg.mxu0
    %624 = vmatpush.bf16.msra.mxu0 0
    %625 = vmatpush.bf16.msra.mxu0 0
    %626 = vmatpush.bf16.msra.mxu0 0
    %627 = vmatpush.bf16.msra.mxu0 0
    %628 = vmatpush.bf16.msra.mxu0 0
    %629 = vmatpush.bf16.msra.mxu0 0
    %630 = vmatpush.bf16.msra.mxu0 %v610
    %631 = vmatpush.bf16.msra.mxu0 %v608
    %632 = vmatmul.bf16.gmra.mxu0 %v243
    %v633 = vpop.f32.mrf.mxu0
    %v634 = vadd.f32 0.0, %v633
    %v635 = vpop.f32.mrf.mxu0
    %636 = vdwg.mxu0
    %v637 = vadd.f32 %v621, 0.0
    %v638 = vadd.f32 %v637, %v634
    %v639 = vmul.f32 %v638, %v279
    %v640 = vsub.f32 %v621, %v639
    %v641 = vmul.f32 %v640, %v640
    %v642 = vadd.f32 %v641, 0.0
    %v643 = vsub.f32 %v634, %v639
    %v644 = vmul.f32 %v643, %v643
    %v645 = vadd.f32 %v642, %v644
    %v646 = vmul.f32 %v645, %v279
    %v647 = vadd.f32 %v646, 1e-05
    %v648 = vrsqrt.pop %v647
    %v649 = vmul.f32 %v648, %v647
    %v650 = vmul.f32 %v649, %v648
    %v651 = vmul.f32 0.5, %v650
    %v652 = vsub.f32 1.5, %v651
    %v653 = vmul.f32 %v648, %v652
    %vm654 = vweird.f32 %v647
    %vm655 = vweird.f32 %v648
    %vm656 = vmor %vm654, %vm655
    %v657 = vsel %vm656, %v648, %v653
    %v658 = vld [vmem:[%s2 + $0x18] sm:$0xff]
    %v659 = vld [vmem:[%s3 + $0x18] sm:$0xff]
    %v660 = vmul.f32 %v657, %v658
    %v661 = vmul.f32 %v639, %v660
    %v662 = vsub.f32 %v659, %v661
    %v663 = vmul.f32 %v621, %v660
    %v664 = vmul.f32 %v634, %v660
    %v665 = vadd.f32 %v663, %v662
    %v666 = vadd.f32 %v664, %v662
    %vm667 = vcmp.ge.f32.partialorder %v665, 0.0
    %vm668 = vcmp.ge.f32.partialorder %v666, 0.0
    %v669 = vmul.f32 %v310, %v665
    %v670 = vmul.f32 %v310, %v666
    %v671 = vsel %vm667, %v665, %v669
    %v672 = vsel %vm668, %v666, %v670
    %673 = vst [vmem:[#allocation2 + $0x50] sm:$0xff] %v671
    %674 = vst [vmem:[#allocation2 + $0x58] sm:$0xff] %v672
    %v675 = vld [vmem:[%s0 + $0x20] sm:$0xff]
    %v676 = vld [vmem:[%s0 + $0x28] sm:$0xff]
    %v677 = vld [vmem:[%s0 + $0x30] sm:$0x3]
    %v678 = vld [vmem:[%s0 + $0x38] sm:$0x3]
    %679 = vst [vmem:[#allocation4] sm:$0xff] %v675
    %680 = vst [vmem:[#allocation4 + $0x8] sm:$0xff] %v676
    %681 = vst [vmem:[#allocation4 + $0x10] sm:$0x3] %v677
    %682 = vst [vmem:[#allocation4 + $0x18] sm:$0x3] %v678
    %v687 = vrot.slane %v675, 6
    %v688 = vrot.slane %v676, 6
    %v689 = vrot.slane %v677, 6
    %v690 = vsel %vm201, %v687, %v689
    %v691 = vrot.slane %v678, 6
    %v692 = vsel %vm201, %v688, %v691
    %693 = vrot.lane.b32.xlu0 %v687, 127
    %v694 = vpop.permute.xlu0 %693
    %695 = vrot.lane.b32.xlu0 %v688, 127
    %v696 = vpop.permute.xlu0 %695
    %697 = vrot.lane.b32.xlu0 %v690, 127
    %v698 = vpop.permute.xlu0 %697
    %699 = vrot.lane.b32.xlu0 %v692, 127
    %v700 = vpop.permute.xlu0 %699
    %v701 = vsel %vm216, %v694, %v696
    %v702 = vsel %vm216, %v698, %v700
    %707 = vst [vmem:[#allocation4 + $0x10] sm:$0xfc] %v701
    %708 = vst.msk [vmem:[#allocation4 + $0x18] sm:$0xfc] %vm224, %v696
    %709 = vst [vmem:[#allocation4 + $0x20] sm:$0xf] %v702
    %710 = vst.msk [vmem:[#allocation4 + $0x28] sm:$0xf] %vm227, %v700
    %v711 = vld [vmem:[#allocation4] sm:$0xff]
    %v712 = vld [vmem:[#allocation4 + $0x8] sm:$0xff]
    %v713 = vld [vmem:[#allocation4 + $0x10] sm:$0xff]
    %v714 = vld [vmem:[#allocation4 + $0x18] sm:$0xff]
    %v715 = vld [vmem:[#allocation4 + $0x20] sm:$0xff]
    %v716 = vld [vmem:[#allocation4 + $0x28] sm:$0xff]
    %v717 = vld [vmem:[#allocation4 + $0x30] sm:$0xff]
    %v718 = vld [vmem:[#allocation4 + $0x38] sm:$0xff]
    %v719 = vpack.c.bf16 %v713, %v711
    %v720 = vpack.c.bf16 %v714, %v712
    %v721 = vpack.c.bf16 %v717, %v715
    %v722 = vpack.c.bf16 %v718, %v716
    %723 = vmatpush.bf16.msra.mxu0 0
    %724 = vmatpush.bf16.msra.mxu0 0
    %725 = vmatpush.bf16.msra.mxu0 0
    %726 = vmatpush.bf16.msra.mxu0 0
    %727 = vmatpush.bf16.msra.mxu0 0
    %728 = vmatpush.bf16.msra.mxu0 0
    %729 = vmatpush.bf16.msra.mxu0 %v721
    %730 = vmatpush.bf16.msra.mxu0 %v719
    %731 = vmatmul.bf16.gmra.mxu0 %v243
    %v732 = vpop.f32.mrf.mxu0
    %v733 = vadd.f32 0.0, %v732
    %v734 = vpop.f32.mrf.mxu0
    %735 = vdwg.mxu0
    %736 = vmatpush.bf16.msra.mxu0 0
    %737 = vmatpush.bf16.msra.mxu0 0
    %738 = vmatpush.bf16.msra.mxu0 0
    %739 = vmatpush.bf16.msra.mxu0 0
    %740 = vmatpush.bf16.msra.mxu0 0
    %741 = vmatpush.bf16.msra.mxu0 0
    %742 = vmatpush.bf16.msra.mxu0 %v722
    %743 = vmatpush.bf16.msra.mxu0 %v720
    %744 = vmatmul.bf16.gmra.mxu0 %v243
    %v745 = vpop.f32.mrf.mxu0
    %v746 = vadd.f32 0.0, %v745
    %v747 = vpop.f32.mrf.mxu0
    %748 = vdwg.mxu0
    %v749 = vadd.f32 %v733, 0.0
    %v750 = vadd.f32 %v749, %v746
    %v751 = vmul.f32 %v750, %v279
    %v752 = vsub.f32 %v733, %v751
    %v753 = vmul.f32 %v752, %v752
    %v754 = vadd.f32 %v753, 0.0
    %v755 = vsub.f32 %v746, %v751
    %v756 = vmul.f32 %v755, %v755
    %v757 = vadd.f32 %v754, %v756
    %v758 = vmul.f32 %v757, %v279
    %v759 = vadd.f32 %v758, 1e-05
    %v760 = vrsqrt.pop %v759
    %v761 = vmul.f32 %v760, %v759
    %v762 = vmul.f32 %v761, %v760
    %v763 = vmul.f32 0.5, %v762
    %v764 = vsub.f32 1.5, %v763
    %v765 = vmul.f32 %v760, %v764
    %vm766 = vweird.f32 %v759
    %vm767 = vweird.f32 %v760
    %vm768 = vmor %vm766, %vm767
    %v769 = vsel %vm768, %v760, %v765
    %v770 = vld [vmem:[%s2 + $0x20] sm:$0xff]
    %v771 = vld [vmem:[%s3 + $0x20] sm:$0xff]
    %v772 = vmul.f32 %v769, %v770
    %v773 = vmul.f32 %v751, %v772
    %v774 = vsub.f32 %v771, %v773
    %v775 = vmul.f32 %v733, %v772
    %v776 = vmul.f32 %v746, %v772
    %v777 = vadd.f32 %v775, %v774
    %v778 = vadd.f32 %v776, %v774
    %vm779 = vcmp.ge.f32.partialorder %v777, 0.0
    %vm780 = vcmp.ge.f32.partialorder %v778, 0.0
    %v781 = vmul.f32 %v310, %v777
    %v782 = vmul.f32 %v310, %v778
    %v783 = vsel %vm779, %v777, %v781
    %v784 = vsel %vm780, %v778, %v782
    %785 = vst [vmem:[#allocation2 + $0x60] sm:$0xff] %v783
    %786 = vst [vmem:[#allocation2 + $0x68] sm:$0xff] %v784
    %v787 = vld [vmem:[%s0 + $0x20] sm:$0xf0]
    %v788 = vld [vmem:[%s0 + $0x28] sm:$0xf0]
    %v789 = vld [vmem:[%s0 + $0x30] sm:$0x3f]
    %v790 = vld [vmem:[%s0 + $0x38] sm:$0x3f]
    %v795 = vrot.slane %v787, 4
    %v796 = vrot.slane %v789, 4
    %v797 = vsel %vm325, %v795, %v796
    %v798 = vrot.slane %v788, 4
    %v799 = vrot.slane %v790, 4
    %v800 = vsel %vm325, %v798, %v799
    %805 = vst [vmem:[#allocation4] sm:$0xff] %v797
    %806 = vst [vmem:[#allocation4 + $0x8] sm:$0xff] %v800
    %807 = vst [vmem:[#allocation4 + $0x10] sm:$0x3] %v796
    %808 = vst [vmem:[#allocation4 + $0x18] sm:$0x3] %v799
    %v809 = vrot.slane %v787, 2
    %v810 = vrot.slane %v789, 2
    %v811 = vsel %vm340, %v809, %v810
    %v812 = vrot.slane %v788, 2
    %v813 = vrot.slane %v790, 2
    %v814 = vsel %vm340, %v812, %v813
    %815 = vrot.lane.b32.xlu0 %v811, 127
    %v816 = vpop.permute.xlu0 %815
    %817 = vrot.lane.b32.xlu0 %v814, 127
    %v818 = vpop.permute.xlu0 %817
    %819 = vrot.lane.b32.xlu0 %v810, 127
    %v820 = vpop.permute.xlu0 %819
    %821 = vrot.lane.b32.xlu0 %v813, 127
    %v822 = vpop.permute.xlu0 %821
    %v823 = vsel %vm216, %v816, %v818
    %v824 = vsel %vm216, %v820, %v822
    %829 = vst [vmem:[#allocation4 + $0x10] sm:$0xfc] %v823
    %830 = vst.msk [vmem:[#allocation4 + $0x18] sm:$0xfc] %vm224, %v818
    %831 = vst [vmem:[#allocation4 + $0x20] sm:$0xf] %v824
    %832 = vst.msk [vmem:[#allocation4 + $0x28] sm:$0xf] %vm227, %v822
    %v833 = vld [vmem:[#allocation4] sm:$0xff]
    %v834 = vld [vmem:[#allocation4 + $0x8] sm:$0xff]
    %v835 = vld [vmem:[#allocation4 + $0x10] sm:$0xff]
    %v836 = vld [vmem:[#allocation4 + $0x18] sm:$0xff]
    %v837 = vld [vmem:[#allocation4 + $0x20] sm:$0xff]
    %v838 = vld [vmem:[#allocation4 + $0x28] sm:$0xff]
    %v839 = vld [vmem:[#allocation4 + $0x30] sm:$0xff]
    %v840 = vld [vmem:[#allocation4 + $0x38] sm:$0xff]
    %v841 = vpack.c.bf16 %v835, %v833
    %v842 = vpack.c.bf16 %v836, %v834
    %v843 = vpack.c.bf16 %v839, %v837
    %v844 = vpack.c.bf16 %v840, %v838
    %845 = vmatpush.bf16.msra.mxu0 0
    %846 = vmatpush.bf16.msra.mxu0 0
    %847 = vmatpush.bf16.msra.mxu0 0
    %848 = vmatpush.bf16.msra.mxu0 0
    %849 = vmatpush.bf16.msra.mxu0 0
    %850 = vmatpush.bf16.msra.mxu0 0
    %851 = vmatpush.bf16.msra.mxu0 %v843
    %852 = vmatpush.bf16.msra.mxu0 %v841
    %853 = vmatmul.bf16.gmra.mxu0 %v243
    %v854 = vpop.f32.mrf.mxu0
    %v855 = vadd.f32 0.0, %v854
    %v856 = vpop.f32.mrf.mxu0
    %857 = vdwg.mxu0
    %858 = vmatpush.bf16.msra.mxu0 0
    %859 = vmatpush.bf16.msra.mxu0 0
    %860 = vmatpush.bf16.msra.mxu0 0
    %861 = vmatpush.bf16.msra.mxu0 0
    %862 = vmatpush.bf16.msra.mxu0 0
    %863 = vmatpush.bf16.msra.mxu0 0
    %864 = vmatpush.bf16.msra.mxu0 %v844
    %865 = vmatpush.bf16.msra.mxu0 %v842
    %866 = vmatmul.bf16.gmra.mxu0 %v243
    %v867 = vpop.f32.mrf.mxu0
    %v868 = vadd.f32 0.0, %v867
    %v869 = vpop.f32.mrf.mxu0
    %870 = vdwg.mxu0
    %v871 = vadd.f32 %v855, 0.0
    %v872 = vadd.f32 %v871, %v868
    %v873 = vmul.f32 %v872, %v279
    %v874 = vsub.f32 %v855, %v873
    %v875 = vmul.f32 %v874, %v874
    %v876 = vadd.f32 %v875, 0.0
    %v877 = vsub.f32 %v868, %v873
    %v878 = vmul.f32 %v877, %v877
    %v879 = vadd.f32 %v876, %v878
    %v880 = vmul.f32 %v879, %v279
    %v881 = vadd.f32 %v880, 1e-05
    %v882 = vrsqrt.pop %v881
    %v883 = vmul.f32 %v882, %v881
    %v884 = vmul.f32 %v883, %v882
    %v885 = vmul.f32 0.5, %v884
    %v886 = vsub.f32 1.5, %v885
    %v887 = vmul.f32 %v882, %v886
    %vm888 = vweird.f32 %v881
    %vm889 = vweird.f32 %v882
    %vm890 = vmor %vm888, %vm889
    %v891 = vsel %vm890, %v882, %v887
    %v892 = vld [vmem:[%s2 + $0x28] sm:$0xff]
    %v893 = vld [vmem:[%s3 + $0x28] sm:$0xff]
    %v894 = vmul.f32 %v891, %v892
    %v895 = vmul.f32 %v873, %v894
    %v896 = vsub.f32 %v893, %v895
    %v897 = vmul.f32 %v855, %v894
    %v898 = vmul.f32 %v868, %v894
    %v899 = vadd.f32 %v897, %v896
    %v900 = vadd.f32 %v898, %v896
    %vm901 = vcmp.ge.f32.partialorder %v899, 0.0
    %vm902 = vcmp.ge.f32.partialorder %v900, 0.0
    %v903 = vmul.f32 %v310, %v899
    %v904 = vmul.f32 %v310, %v900
    %v905 = vsel %vm901, %v899, %v903
    %v906 = vsel %vm902, %v900, %v904
    %907 = vst [vmem:[#allocation2 + $0x70] sm:$0xff] %v905
    %908 = vst [vmem:[#allocation2 + $0x78] sm:$0xff] %v906
    %v909 = vld [vmem:[%s0 + $0x30] sm:$0xff]
    %v910 = vld [vmem:[%s0 + $0x38] sm:$0xff]
    %v911 = vld [vmem:[%s0 + $0x40] sm:$0x3]
    %v912 = vld [vmem:[%s0 + $0x48] sm:$0x3]
    %913 = vst [vmem:[#allocation4] sm:$0xff] %v909
    %914 = vst [vmem:[#allocation4 + $0x8] sm:$0xff] %v910
    %915 = vst [vmem:[#allocation4 + $0x10] sm:$0x3] %v911
    %916 = vst [vmem:[#allocation4 + $0x18] sm:$0x3] %v912
    %v921 = vrot.slane %v909, 6
    %v922 = vrot.slane %v910, 6
    %v923 = vrot.slane %v911, 6
    %v924 = vsel %vm201, %v921, %v923
    %v925 = vrot.slane %v912, 6
    %v926 = vsel %vm201, %v922, %v925
    %927 = vrot.lane.b32.xlu0 %v921, 127
    %v928 = vpop.permute.xlu0 %927
    %929 = vrot.lane.b32.xlu0 %v922, 127
    %v930 = vpop.permute.xlu0 %929
    %931 = vrot.lane.b32.xlu0 %v924, 127
    %v932 = vpop.permute.xlu0 %931
    %933 = vrot.lane.b32.xlu0 %v926, 127
    %v934 = vpop.permute.xlu0 %933
    %v935 = vsel %vm216, %v928, %v930
    %v936 = vsel %vm216, %v932, %v934
    %941 = vst [vmem:[#allocation4 + $0x10] sm:$0xfc] %v935
    %942 = vst.msk [vmem:[#allocation4 + $0x18] sm:$0xfc] %vm224, %v930
    %943 = vst [vmem:[#allocation4 + $0x20] sm:$0xf] %v936
    %944 = vst.msk [vmem:[#allocation4 + $0x28] sm:$0xf] %vm227, %v934
    %v945 = vld [vmem:[#allocation4] sm:$0xff]
    %v946 = vld [vmem:[#allocation4 + $0x8] sm:$0xff]
    %v947 = vld [vmem:[#allocation4 + $0x10] sm:$0xff]
    %v948 = vld [vmem:[#allocation4 + $0x18] sm:$0xff]
    %v949 = vld [vmem:[#allocation4 + $0x20] sm:$0xff]
    %v950 = vld [vmem:[#allocation4 + $0x28] sm:$0xff]
    %v951 = vld [vmem:[#allocation4 + $0x30] sm:$0xff]
    %v952 = vld [vmem:[#allocation4 + $0x38] sm:$0xff]
    %v953 = vpack.c.bf16 %v947, %v945
    %v954 = vpack.c.bf16 %v948, %v946
    %v955 = vpack.c.bf16 %v951, %v949
    %v956 = vpack.c.bf16 %v952, %v950
    %957 = vmatpush.bf16.msra.mxu0 0
    %958 = vmatpush.bf16.msra.mxu0 0
    %959 = vmatpush.bf16.msra.mxu0 0
    %960 = vmatpush.bf16.msra.mxu0 0
    %961 = vmatpush.bf16.msra.mxu0 0
    %962 = vmatpush.bf16.msra.mxu0 0
    %963 = vmatpush.bf16.msra.mxu0 %v955
    %964 = vmatpush.bf16.msra.mxu0 %v953
    %965 = vmatmul.bf16.gmra.mxu0 %v243
    %v966 = vpop.f32.mrf.mxu0
    %v967 = vadd.f32 0.0, %v966
    %v968 = vpop.f32.mrf.mxu0
    %969 = vdwg.mxu0
    %970 = vmatpush.bf16.msra.mxu0 0
    %971 = vmatpush.bf16.msra.mxu0 0
    %972 = vmatpush.bf16.msra.mxu0 0
    %973 = vmatpush.bf16.msra.mxu0 0
    %974 = vmatpush.bf16.msra.mxu0 0
    %975 = vmatpush.bf16.msra.mxu0 0
    %976 = vmatpush.bf16.msra.mxu0 %v956
    %977 = vmatpush.bf16.msra.mxu0 %v954
    %978 = vmatmul.bf16.gmra.mxu0 %v243
    %v979 = vpop.f32.mrf.mxu0
    %v980 = vadd.f32 0.0, %v979
    %v981 = vpop.f32.mrf.mxu0
    %982 = vdwg.mxu0
    %v983 = vadd.f32 %v967, 0.0
    %v984 = vadd.f32 %v983, %v980
    %v985 = vmul.f32 %v984, %v279
    %v986 = vsub.f32 %v967, %v985
    %v987 = vmul.f32 %v986, %v986
    %v988 = vadd.f32 %v987, 0.0
    %v989 = vsub.f32 %v980, %v985
    %v990 = vmul.f32 %v989, %v989
    %v991 = vadd.f32 %v988, %v990
    %v992 = vmul.f32 %v991, %v279
    %v993 = vadd.f32 %v992, 1e-05
    %v994 = vrsqrt.pop %v993
    %v995 = vmul.f32 %v994, %v993
    %v996 = vmul.f32 %v995, %v994
    %v997 = vmul.f32 0.5, %v996
    %v998 = vsub.f32 1.5, %v997
    %v999 = vmul.f32 %v994, %v998
    %vm1000 = vweird.f32 %v993
    %vm1001 = vweird.f32 %v994
    %vm1002 = vmor %vm1000, %vm1001
    %v1003 = vsel %vm1002, %v994, %v999
    %v1004 = vld [vmem:[%s2 + $0x30] sm:$0xff]
    %v1005 = vld [vmem:[%s3 + $0x30] sm:$0xff]
    %v1006 = vmul.f32 %v1003, %v1004
    %v1007 = vmul.f32 %v985, %v1006
    %v1008 = vsub.f32 %v1005, %v1007
    %v1009 = vmul.f32 %v967, %v1006
    %v1010 = vmul.f32 %v980, %v1006
    %v1011 = vadd.f32 %v1009, %v1008
    %v1012 = vadd.f32 %v1010, %v1008
    %vm1013 = vcmp.ge.f32.partialorder %v1011, 0.0
    %vm1014 = vcmp.ge.f32.partialorder %v1012, 0.0
    %v1015 = vmul.f32 %v310, %v1011
    %v1016 = vmul.f32 %v310, %v1012
    %v1017 = vsel %vm1013, %v1011, %v1015
    %v1018 = vsel %vm1014, %v1012, %v1016
    %1019 = vst [vmem:[#allocation2 + $0x80] sm:$0xff] %v1017
    %1020 = vst [vmem:[#allocation2 + $0x88] sm:$0xff] %v1018
    %v1021 = vld [vmem:[%s0 + $0x30] sm:$0xf0]
    %v1022 = vld [vmem:[%s0 + $0x38] sm:$0xf0]
    %v1023 = vld [vmem:[%s0 + $0x40] sm:$0x3f]
    %v1024 = vld [vmem:[%s0 + $0x48] sm:$0x3f]
    %v1029 = vrot.slane %v1021, 4
    %v1030 = vrot.slane %v1023, 4
    %v1031 = vsel %vm325, %v1029, %v1030
    %v1032 = vrot.slane %v1022, 4
    %v1033 = vrot.slane %v1024, 4
    %v1034 = vsel %vm325, %v1032, %v1033
    %1039 = vst [vmem:[#allocation4] sm:$0xff] %v1031
    %1040 = vst [vmem:[#allocation4 + $0x8] sm:$0xff] %v1034
    %1041 = vst [vmem:[#allocation4 + $0x10] sm:$0x3] %v1030
    %1042 = vst [vmem:[#allocation4 + $0x18] sm:$0x3] %v1033
    %v1043 = vrot.slane %v1021, 2
    %v1044 = vrot.slane %v1023, 2
    %v1045 = vsel %vm340, %v1043, %v1044
    %v1046 = vrot.slane %v1022, 2
    %v1047 = vrot.slane %v1024, 2
    %v1048 = vsel %vm340, %v1046, %v1047
    %1049 = vrot.lane.b32.xlu0 %v1045, 127
    %v1050 = vpop.permute.xlu0 %1049
    %1051 = vrot.lane.b32.xlu0 %v1048, 127
    %v1052 = vpop.permute.xlu0 %1051
    %1053 = vrot.lane.b32.xlu0 %v1044, 127
    %v1054 = vpop.permute.xlu0 %1053
    %1055 = vrot.lane.b32.xlu0 %v1047, 127
    %v1056 = vpop.permute.xlu0 %1055
    %v1057 = vsel %vm216, %v1050, %v1052
    %v1058 = vsel %vm216, %v1054, %v1056
    %1063 = vst [vmem:[#allocation4 + $0x10] sm:$0xfc] %v1057
    %1064 = vst.msk [vmem:[#allocation4 + $0x18] sm:$0xfc] %vm224, %v1052
    %1065 = vst [vmem:[#allocation4 + $0x20] sm:$0xf] %v1058
    %1066 = vst.msk [vmem:[#allocation4 + $0x28] sm:$0xf] %vm227, %v1056
    %v1067 = vld [vmem:[#allocation4] sm:$0xff]
    %v1068 = vld [vmem:[#allocation4 + $0x8] sm:$0xff]
    %v1069 = vld [vmem:[#allocation4 + $0x10] sm:$0xff]
    %v1070 = vld [vmem:[#allocation4 + $0x18] sm:$0xff]
    %v1071 = vld [vmem:[#allocation4 + $0x20] sm:$0xff]
    %v1072 = vld [vmem:[#allocation4 + $0x28] sm:$0xff]
    %v1073 = vld [vmem:[#allocation4 + $0x30] sm:$0xff]
    %v1074 = vld [vmem:[#allocation4 + $0x38] sm:$0xff]
    %v1075 = vpack.c.bf16 %v1069, %v1067
    %v1076 = vpack.c.bf16 %v1070, %v1068
    %v1077 = vpack.c.bf16 %v1073, %v1071
    %v1078 = vpack.c.bf16 %v1074, %v1072
    %1079 = vmatpush.bf16.msra.mxu0 0
    %1080 = vmatpush.bf16.msra.mxu0 0
    %1081 = vmatpush.bf16.msra.mxu0 0
    %1082 = vmatpush.bf16.msra.mxu0 0
    %1083 = vmatpush.bf16.msra.mxu0 0
    %1084 = vmatpush.bf16.msra.mxu0 0
    %1085 = vmatpush.bf16.msra.mxu0 %v1077
    %1086 = vmatpush.bf16.msra.mxu0 %v1075
    %1087 = vmatmul.bf16.gmra.mxu0 %v243
    %v1088 = vpop.f32.mrf.mxu0
    %v1089 = vadd.f32 0.0, %v1088
    %v1090 = vpop.f32.mrf.mxu0
    %1091 = vdwg.mxu0
    %1092 = vmatpush.bf16.msra.mxu0 0
    %1093 = vmatpush.bf16.msra.mxu0 0
    %1094 = vmatpush.bf16.msra.mxu0 0
    %1095 = vmatpush.bf16.msra.mxu0 0
    %1096 = vmatpush.bf16.msra.mxu0 0
    %1097 = vmatpush.bf16.msra.mxu0 0
    %1098 = vmatpush.bf16.msra.mxu0 %v1078
    %1099 = vmatpush.bf16.msra.mxu0 %v1076
    %1100 = vmatmul.bf16.gmra.mxu0 %v243
    %v1101 = vpop.f32.mrf.mxu0
    %v1102 = vadd.f32 0.0, %v1101
    %v1103 = vpop.f32.mrf.mxu0
    %1104 = vdwg.mxu0
    %v1105 = vadd.f32 %v1089, 0.0
    %v1106 = vadd.f32 %v1105, %v1102
    %v1107 = vmul.f32 %v1106, %v279
    %v1108 = vsub.f32 %v1089, %v1107
    %v1109 = vmul.f32 %v1108, %v1108
    %v1110 = vadd.f32 %v1109, 0.0
    %v1111 = vsub.f32 %v1102, %v1107
    %v1112 = vmul.f32 %v1111, %v1111
    %v1113 = vadd.f32 %v1110, %v1112
    %v1114 = vmul.f32 %v1113, %v279
    %v1115 = vadd.f32 %v1114, 1e-05
    %v1116 = vrsqrt.pop %v1115
    %v1117 = vmul.f32 %v1116, %v1115
    %v1118 = vmul.f32 %v1117, %v1116
    %v1119 = vmul.f32 0.5, %v1118
    %v1120 = vsub.f32 1.5, %v1119
    %v1121 = vmul.f32 %v1116, %v1120
    %vm1122 = vweird.f32 %v1115
    %vm1123 = vweird.f32 %v1116
    %vm1124 = vmor %vm1122, %vm1123
    %v1125 = vsel %vm1124, %v1116, %v1121
    %v1126 = vld [vmem:[%s2 + $0x38] sm:$0xff]
    %v1127 = vld [vmem:[%s3 + $0x38] sm:$0xff]
    %v1128 = vmul.f32 %v1125, %v1126
    %v1129 = vmul.f32 %v1107, %v1128
    %v1130 = vsub.f32 %v1127, %v1129
    %v1131 = vmul.f32 %v1089, %v1128
    %v1132 = vmul.f32 %v1102, %v1128
    %v1133 = vadd.f32 %v1131, %v1130
    %v1134 = vadd.f32 %v1132, %v1130
    %vm1135 = vcmp.ge.f32.partialorder %v1133, 0.0
    %vm1136 = vcmp.ge.f32.partialorder %v1134, 0.0
    %v1137 = vmul.f32 %v310, %v1133
    %v1138 = vmul.f32 %v310, %v1134
    %v1139 = vsel %vm1135, %v1133, %v1137
    %v1140 = vsel %vm1136, %v1134, %v1138
    %1141 = vst [vmem:[#allocation2 + $0x90] sm:$0xff] %v1139
    %1142 = vst [vmem:[#allocation2 + $0x98] sm:$0xff] %v1140
    %v1143 = vld [vmem:[%s0 + $0x40] sm:$0xff]
    %v1144 = vld [vmem:[%s0 + $0x48] sm:$0xff]
    %v1145 = vld [vmem:[%s0 + $0x50] sm:$0x3]
    %v1146 = vld [vmem:[%s0 + $0x58] sm:$0x3]
    %1147 = vst [vmem:[#allocation4] sm:$0xff] %v1143
    %1148 = vst [vmem:[#allocation4 + $0x8] sm:$0xff] %v1144
    %1149 = vst [vmem:[#allocation4 + $0x10] sm:$0x3] %v1145
    %1150 = vst [vmem:[#allocation4 + $0x18] sm:$0x3] %v1146
    %v1155 = vrot.slane %v1143, 6
    %v1156 = vrot.slane %v1144, 6
    %v1157 = vrot.slane %v1145, 6
    %v1158 = vsel %vm201, %v1155, %v1157
    %v1159 = vrot.slane %v1146, 6
    %v1160 = vsel %vm201, %v1156, %v1159
    %1161 = vrot.lane.b32.xlu0 %v1155, 127
    %v1162 = vpop.permute.xlu0 %1161
    %1163 = vrot.lane.b32.xlu0 %v1156, 127
    %v1164 = vpop.permute.xlu0 %1163
    %1165 = vrot.lane.b32.xlu0 %v1158, 127
    %v1166 = vpop.permute.xlu0 %1165
    %1167 = vrot.lane.b32.xlu0 %v1160, 127
    %v1168 = vpop.permute.xlu0 %1167
    %v1169 = vsel %vm216, %v1162, %v1164
    %v1170 = vsel %vm216, %v1166, %v1168
    %1175 = vst [vmem:[#allocation4 + $0x10] sm:$0xfc] %v1169
    %1176 = vst.msk [vmem:[#allocation4 + $0x18] sm:$0xfc] %vm224, %v1164
    %1177 = vst [vmem:[#allocation4 + $0x20] sm:$0xf] %v1170
    %1178 = vst.msk [vmem:[#allocation4 + $0x28] sm:$0xf] %vm227, %v1168
    %v1179 = vld [vmem:[#allocation4] sm:$0xff]
    %v1180 = vld [vmem:[#allocation4 + $0x8] sm:$0xff]
    %v1181 = vld [vmem:[#allocation4 + $0x10] sm:$0xff]
    %v1182 = vld [vmem:[#allocation4 + $0x18] sm:$0xff]
    %v1183 = vld [vmem:[#allocation4 + $0x20] sm:$0xff]
    %v1184 = vld [vmem:[#allocation4 + $0x28] sm:$0xff]
    %v1185 = vld [vmem:[#allocation4 + $0x30] sm:$0xff]
    %v1186 = vld [vmem:[#allocation4 + $0x38] sm:$0xff]
    %v1187 = vpack.c.bf16 %v1181, %v1179
    %v1188 = vpack.c.bf16 %v1182, %v1180
    %v1189 = vpack.c.bf16 %v1185, %v1183
    %v1190 = vpack.c.bf16 %v1186, %v1184
    %1191 = vmatpush.bf16.msra.mxu0 0
    %1192 = vmatpush.bf16.msra.mxu0 0
    %1193 = vmatpush.bf16.msra.mxu0 0
    %1194 = vmatpush.bf16.msra.mxu0 0
    %1195 = vmatpush.bf16.msra.mxu0 0
    %1196 = vmatpush.bf16.msra.mxu0 0
    %1197 = vmatpush.bf16.msra.mxu0 %v1189
    %1198 = vmatpush.bf16.msra.mxu0 %v1187
    %1199 = vmatmul.bf16.gmra.mxu0 %v243
    %v1200 = vpop.f32.mrf.mxu0
    %v1201 = vadd.f32 0.0, %v1200
    %v1202 = vpop.f32.mrf.mxu0
    %1203 = vdwg.mxu0
    %1204 = vmatpush.bf16.msra.mxu0 0
    %1205 = vmatpush.bf16.msra.mxu0 0
    %1206 = vmatpush.bf16.msra.mxu0 0
    %1207 = vmatpush.bf16.msra.mxu0 0
    %1208 = vmatpush.bf16.msra.mxu0 0
    %1209 = vmatpush.bf16.msra.mxu0 0
    %1210 = vmatpush.bf16.msra.mxu0 %v1190
    %1211 = vmatpush.bf16.msra.mxu0 %v1188
    %1212 = vmatmul.bf16.gmra.mxu0 %v243
    %v1213 = vpop.f32.mrf.mxu0
    %v1214 = vadd.f32 0.0, %v1213
    %v1215 = vpop.f32.mrf.mxu0
    %1216 = vdwg.mxu0
    %v1217 = vadd.f32 %v1201, 0.0
    %v1218 = vadd.f32 %v1217, %v1214
    %v1219 = vmul.f32 %v1218, %v279
    %v1220 = vsub.f32 %v1201, %v1219
    %v1221 = vmul.f32 %v1220, %v1220
    %v1222 = vadd.f32 %v1221, 0.0
    %v1223 = vsub.f32 %v1214, %v1219
    %v1224 = vmul.f32 %v1223, %v1223
    %v1225 = vadd.f32 %v1222, %v1224
    %v1226 = vmul.f32 %v1225, %v279
    %v1227 = vadd.f32 %v1226, 1e-05
    %v1228 = vrsqrt.pop %v1227
    %v1229 = vmul.f32 %v1228, %v1227
    %v1230 = vmul.f32 %v1229, %v1228
    %v1231 = vmul.f32 0.5, %v1230
    %v1232 = vsub.f32 1.5, %v1231
    %v1233 = vmul.f32 %v1228, %v1232
    %vm1234 = vweird.f32 %v1227
    %vm1235 = vweird.f32 %v1228
    %vm1236 = vmor %vm1234, %vm1235
    %v1237 = vsel %vm1236, %v1228, %v1233
    %v1238 = vld [vmem:[%s2 + $0x40] sm:$0xff]
    %v1239 = vld [vmem:[%s3 + $0x40] sm:$0xff]
    %v1240 = vmul.f32 %v1237, %v1238
    %v1241 = vmul.f32 %v1219, %v1240
    %v1242 = vsub.f32 %v1239, %v1241
    %v1243 = vmul.f32 %v1201, %v1240
    %v1244 = vmul.f32 %v1214, %v1240
    %v1245 = vadd.f32 %v1243, %v1242
    %v1246 = vadd.f32 %v1244, %v1242
    %vm1247 = vcmp.ge.f32.partialorder %v1245, 0.0
    %vm1248 = vcmp.ge.f32.partialorder %v1246, 0.0
    %v1249 = vmul.f32 %v310, %v1245
    %v1250 = vmul.f32 %v310, %v1246
    %v1251 = vsel %vm1247, %v1245, %v1249
    %v1252 = vsel %vm1248, %v1246, %v1250
    %1253 = vst [vmem:[#allocation2 + $0xa0] sm:$0xff] %v1251
    %1254 = vst [vmem:[#allocation2 + $0xa8] sm:$0xff] %v1252
    %v1255 = vld [vmem:[%s0 + $0x40] sm:$0xf0]
    %v1256 = vld [vmem:[%s0 + $0x48] sm:$0xf0]
    %v1257 = vld [vmem:[%s0 + $0x50] sm:$0x3f]
    %v1258 = vld [vmem:[%s0 + $0x58] sm:$0x3f]
    %v1263 = vrot.slane %v1255, 4
    %v1264 = vrot.slane %v1257, 4
    %v1265 = vsel %vm325, %v1263, %v1264
    %v1266 = vrot.slane %v1256, 4
    %v1267 = vrot.slane %v1258, 4
    %v1268 = vsel %vm325, %v1266, %v1267
    %1273 = vst [vmem:[#allocation4] sm:$0xff] %v1265
    %1274 = vst [vmem:[#allocation4 + $0x8] sm:$0xff] %v1268
    %1275 = vst [vmem:[#allocation4 + $0x10] sm:$0x3] %v1264
    %1276 = vst [vmem:[#allocation4 + $0x18] sm:$0x3] %v1267
    %v1277 = vrot.slane %v1255, 2
    %v1278 = vrot.slane %v1257, 2
    %v1279 = vsel %vm340, %v1277, %v1278
    %v1280 = vrot.slane %v1256, 2
    %v1281 = vrot.slane %v1258, 2
    %v1282 = vsel %vm340, %v1280, %v1281
    %1283 = vrot.lane.b32.xlu0 %v1279, 127
    %v1284 = vpop.permute.xlu0 %1283
    %1285 = vrot.lane.b32.xlu0 %v1282, 127
    %v1286 = vpop.permute.xlu0 %1285
    %1287 = vrot.lane.b32.xlu0 %v1278, 127
    %v1288 = vpop.permute.xlu0 %1287
    %1289 = vrot.lane.b32.xlu0 %v1281, 127
    %v1290 = vpop.permute.xlu0 %1289
    %v1291 = vsel %vm216, %v1284, %v1286
    %v1292 = vsel %vm216, %v1288, %v1290
    %1297 = vst [vmem:[#allocation4 + $0x10] sm:$0xfc] %v1291
    %1298 = vst.msk [vmem:[#allocation4 + $0x18] sm:$0xfc] %vm224, %v1286
    %1299 = vst [vmem:[#allocation4 + $0x20] sm:$0xf] %v1292
    %1300 = vst.msk [vmem:[#allocation4 + $0x28] sm:$0xf] %vm227, %v1290
    %v1301 = vld [vmem:[#allocation4] sm:$0xff]
    %v1302 = vld [vmem:[#allocation4 + $0x8] sm:$0xff]
    %v1303 = vld [vmem:[#allocation4 + $0x10] sm:$0xff]
    %v1304 = vld [vmem:[#allocation4 + $0x18] sm:$0xff]
    %v1305 = vld [vmem:[#allocation4 + $0x20] sm:$0xff]
    %v1306 = vld [vmem:[#allocation4 + $0x28] sm:$0xff]
    %v1307 = vld [vmem:[#allocation4 + $0x30] sm:$0xff]
    %v1308 = vld [vmem:[#allocation4 + $0x38] sm:$0xff]
    %v1309 = vpack.c.bf16 %v1303, %v1301
    %v1310 = vpack.c.bf16 %v1304, %v1302
    %v1311 = vpack.c.bf16 %v1307, %v1305
    %v1312 = vpack.c.bf16 %v1308, %v1306
    %1313 = vmatpush.bf16.msra.mxu0 0
    %1314 = vmatpush.bf16.msra.mxu0 0
    %1315 = vmatpush.bf16.msra.mxu0 0
    %1316 = vmatpush.bf16.msra.mxu0 0
    %1317 = vmatpush.bf16.msra.mxu0 0
    %1318 = vmatpush.bf16.msra.mxu0 0
    %1319 = vmatpush.bf16.msra.mxu0 %v1311
    %1320 = vmatpush.bf16.msra.mxu0 %v1309
    %1321 = vmatmul.bf16.gmra.mxu0 %v243
    %v1322 = vpop.f32.mrf.mxu0
    %v1323 = vadd.f32 0.0, %v1322
    %v1324 = vpop.f32.mrf.mxu0
    %1325 = vdwg.mxu0
    %1326 = vmatpush.bf16.msra.mxu0 0
    %1327 = vmatpush.bf16.msra.mxu0 0
    %1328 = vmatpush.bf16.msra.mxu0 0
    %1329 = vmatpush.bf16.msra.mxu0 0
    %1330 = vmatpush.bf16.msra.mxu0 0
    %1331 = vmatpush.bf16.msra.mxu0 0
    %1332 = vmatpush.bf16.msra.mxu0 %v1312
    %1333 = vmatpush.bf16.msra.mxu0 %v1310
    %1334 = vmatmul.bf16.gmra.mxu0 %v243
    %v1335 = vpop.f32.mrf.mxu0
    %v1336 = vadd.f32 0.0, %v1335
    %v1337 = vpop.f32.mrf.mxu0
    %1338 = vdwg.mxu0
    %v1339 = vadd.f32 %v1323, 0.0
    %v1340 = vadd.f32 %v1339, %v1336
    %v1341 = vmul.f32 %v1340, %v279
    %v1342 = vsub.f32 %v1323, %v1341
    %v1343 = vmul.f32 %v1342, %v1342
    %v1344 = vadd.f32 %v1343, 0.0
    %v1345 = vsub.f32 %v1336, %v1341
    %v1346 = vmul.f32 %v1345, %v1345
    %v1347 = vadd.f32 %v1344, %v1346
    %v1348 = vmul.f32 %v1347, %v279
    %v1349 = vadd.f32 %v1348, 1e-05
    %v1350 = vrsqrt.pop %v1349
    %v1351 = vmul.f32 %v1350, %v1349
    %v1352 = vmul.f32 %v1351, %v1350
    %v1353 = vmul.f32 0.5, %v1352
    %v1354 = vsub.f32 1.5, %v1353
    %v1355 = vmul.f32 %v1350, %v1354
    %vm1356 = vweird.f32 %v1349
    %vm1357 = vweird.f32 %v1350
    %vm1358 = vmor %vm1356, %vm1357
    %v1359 = vsel %vm1358, %v1350, %v1355
    %v1360 = vld [vmem:[%s2 + $0x48] sm:$0xff]
    %v1361 = vld [vmem:[%s3 + $0x48] sm:$0xff]
    %v1362 = vmul.f32 %v1359, %v1360
    %v1363 = vmul.f32 %v1341, %v1362
    %v1364 = vsub.f32 %v1361, %v1363
    %v1365 = vmul.f32 %v1323, %v1362
    %v1366 = vmul.f32 %v1336, %v1362
    %v1367 = vadd.f32 %v1365, %v1364
    %v1368 = vadd.f32 %v1366, %v1364
    %vm1369 = vcmp.ge.f32.partialorder %v1367, 0.0
    %vm1370 = vcmp.ge.f32.partialorder %v1368, 0.0
    %v1371 = vmul.f32 %v310, %v1367
    %v1372 = vmul.f32 %v310, %v1368
    %v1373 = vsel %vm1369, %v1367, %v1371
    %v1374 = vsel %vm1370, %v1368, %v1372
    %1375 = vst [vmem:[#allocation2 + $0xb0] sm:$0xff] %v1373
    %1376 = vst [vmem:[#allocation2 + $0xb8] sm:$0xff] %v1374
    %v1377 = vld [vmem:[%s0 + $0x50] sm:$0xff]
    %v1378 = vld [vmem:[%s0 + $0x58] sm:$0xff]
    %v1379 = vld [vmem:[%s0 + $0x60] sm:$0x3]
    %v1380 = vld [vmem:[%s0 + $0x68] sm:$0x3]
    %1381 = vst [vmem:[#allocation4] sm:$0xff] %v1377
    %1382 = vst [vmem:[#allocation4 + $0x8] sm:$0xff] %v1378
    %1383 = vst [vmem:[#allocation4 + $0x10] sm:$0x3] %v1379
    %1384 = vst [vmem:[#allocation4 + $0x18] sm:$0x3] %v1380
    %v1389 = vrot.slane %v1377, 6
    %v1390 = vrot.slane %v1378, 6
    %v1391 = vrot.slane %v1379, 6
    %v1392 = vsel %vm201, %v1389, %v1391
    %v1393 = vrot.slane %v1380, 6
    %v1394 = vsel %vm201, %v1390, %v1393
    %1395 = vrot.lane.b32.xlu0 %v1389, 127
    %v1396 = vpop.permute.xlu0 %1395
    %1397 = vrot.lane.b32.xlu0 %v1390, 127
    %v1398 = vpop.permute.xlu0 %1397
    %1399 = vrot.lane.b32.xlu0 %v1392, 127
    %v1400 = vpop.permute.xlu0 %1399
    %1401 = vrot.lane.b32.xlu0 %v1394, 127
    %v1402 = vpop.permute.xlu0 %1401
    %v1403 = vsel %vm216, %v1396, %v1398
    %v1404 = vsel %vm216, %v1400, %v1402
    %1409 = vst [vmem:[#allocation4 + $0x10] sm:$0xfc] %v1403
    %1410 = vst.msk [vmem:[#allocation4 + $0x18] sm:$0xfc] %vm224, %v1398
    %1411 = vst [vmem:[#allocation4 + $0x20] sm:$0xf] %v1404
    %1412 = vst.msk [vmem:[#allocation4 + $0x28] sm:$0xf] %vm227, %v1402
    %v1413 = vld [vmem:[#allocation4] sm:$0xff]
    %v1414 = vld [vmem:[#allocation4 + $0x8] sm:$0xff]
    %v1415 = vld [vmem:[#allocation4 + $0x10] sm:$0xff]
    %v1416 = vld [vmem:[#allocation4 + $0x18] sm:$0xff]
    %v1417 = vld [vmem:[#allocation4 + $0x20] sm:$0xff]
    %v1418 = vld [vmem:[#allocation4 + $0x28] sm:$0xff]
    %v1419 = vld [vmem:[#allocation4 + $0x30] sm:$0xff]
    %v1420 = vld [vmem:[#allocation4 + $0x38] sm:$0xff]
    %v1421 = vpack.c.bf16 %v1415, %v1413
    %v1422 = vpack.c.bf16 %v1416, %v1414
    %v1423 = vpack.c.bf16 %v1419, %v1417
    %v1424 = vpack.c.bf16 %v1420, %v1418
    %1425 = vmatpush.bf16.msra.mxu0 0
    %1426 = vmatpush.bf16.msra.mxu0 0
    %1427 = vmatpush.bf16.msra.mxu0 0
    %1428 = vmatpush.bf16.msra.mxu0 0
    %1429 = vmatpush.bf16.msra.mxu0 0
    %1430 = vmatpush.bf16.msra.mxu0 0
    %1431 = vmatpush.bf16.msra.mxu0 %v1423
    %1432 = vmatpush.bf16.msra.mxu0 %v1421
    %1433 = vmatmul.bf16.gmra.mxu0 %v243
    %v1434 = vpop.f32.mrf.mxu0
    %v1435 = vadd.f32 0.0, %v1434
    %v1436 = vpop.f32.mrf.mxu0
    %1437 = vdwg.mxu0
    %1438 = vmatpush.bf16.msra.mxu0 0
    %1439 = vmatpush.bf16.msra.mxu0 0
    %1440 = vmatpush.bf16.msra.mxu0 0
    %1441 = vmatpush.bf16.msra.mxu0 0
    %1442 = vmatpush.bf16.msra.mxu0 0
    %1443 = vmatpush.bf16.msra.mxu0 0
    %1444 = vmatpush.bf16.msra.mxu0 %v1424
    %1445 = vmatpush.bf16.msra.mxu0 %v1422
    %1446 = vmatmul.bf16.gmra.mxu0 %v243
    %v1447 = vpop.f32.mrf.mxu0
    %v1448 = vadd.f32 0.0, %v1447
    %v1449 = vpop.f32.mrf.mxu0
    %1450 = vdwg.mxu0
    %v1451 = vadd.f32 %v1435, 0.0
    %v1452 = vadd.f32 %v1451, %v1448
    %v1453 = vmul.f32 %v1452, %v279
    %v1454 = vsub.f32 %v1435, %v1453
    %v1455 = vmul.f32 %v1454, %v1454
    %v1456 = vadd.f32 %v1455, 0.0
    %v1457 = vsub.f32 %v1448, %v1453
    %v1458 = vmul.f32 %v1457, %v1457
    %v1459 = vadd.f32 %v1456, %v1458
    %v1460 = vmul.f32 %v1459, %v279
    %v1461 = vadd.f32 %v1460, 1e-05
    %v1462 = vrsqrt.pop %v1461
    %v1463 = vmul.f32 %v1462, %v1461
    %v1464 = vmul.f32 %v1463, %v1462
    %v1465 = vmul.f32 0.5, %v1464
    %v1466 = vsub.f32 1.5, %v1465
    %v1467 = vmul.f32 %v1462, %v1466
    %vm1468 = vweird.f32 %v1461
    %vm1469 = vweird.f32 %v1462
    %vm1470 = vmor %vm1468, %vm1469
    %v1471 = vsel %vm1470, %v1462, %v1467
    %v1472 = vld [vmem:[%s2 + $0x50] sm:$0xff]
    %v1473 = vld [vmem:[%s3 + $0x50] sm:$0xff]
    %v1474 = vmul.f32 %v1471, %v1472
    %v1475 = vmul.f32 %v1453, %v1474
    %v1476 = vsub.f32 %v1473, %v1475
    %v1477 = vmul.f32 %v1435, %v1474
    %v1478 = vmul.f32 %v1448, %v1474
    %v1479 = vadd.f32 %v1477, %v1476
    %v1480 = vadd.f32 %v1478, %v1476
    %vm1481 = vcmp.ge.f32.partialorder %v1479, 0.0
    %vm1482 = vcmp.ge.f32.partialorder %v1480, 0.0
    %v1483 = vmul.f32 %v310, %v1479
    %v1484 = vmul.f32 %v310, %v1480
    %v1485 = vsel %vm1481, %v1479, %v1483
    %v1486 = vsel %vm1482, %v1480, %v1484
    %1487 = vst [vmem:[#allocation2 + $0xc0] sm:$0xff] %v1485
    %1488 = vst [vmem:[#allocation2 + $0xc8] sm:$0xff] %v1486
    %v1489 = vld [vmem:[%s0 + $0x50] sm:$0xf0]
    %v1490 = vld [vmem:[%s0 + $0x58] sm:$0xf0]
    %v1491 = vld [vmem:[%s0 + $0x60] sm:$0x3f]
    %v1492 = vld [vmem:[%s0 + $0x68] sm:$0x3f]
    %v1497 = vrot.slane %v1489, 4
    %v1498 = vrot.slane %v1491, 4
    %v1499 = vsel %vm325, %v1497, %v1498
    %v1500 = vrot.slane %v1490, 4
    %v1501 = vrot.slane %v1492, 4
    %v1502 = vsel %vm325, %v1500, %v1501
    %1507 = vst [vmem:[#allocation4] sm:$0xff] %v1499
    %1508 = vst [vmem:[#allocation4 + $0x8] sm:$0xff] %v1502
    %1509 = vst [vmem:[#allocation4 + $0x10] sm:$0x3] %v1498
    %1510 = vst [vmem:[#allocation4 + $0x18] sm:$0x3] %v1501
    %v1511 = vrot.slane %v1489, 2
    %v1512 = vrot.slane %v1491, 2
    %v1513 = vsel %vm340, %v1511, %v1512
    %v1514 = vrot.slane %v1490, 2
    %v1515 = vrot.slane %v1492, 2
    %v1516 = vsel %vm340, %v1514, %v1515
    %1517 = vrot.lane.b32.xlu0 %v1513, 127
    %v1518 = vpop.permute.xlu0 %1517
    %1519 = vrot.lane.b32.xlu0 %v1516, 127
    %v1520 = vpop.permute.xlu0 %1519
    %1521 = vrot.lane.b32.xlu0 %v1512, 127
    %v1522 = vpop.permute.xlu0 %1521
    %1523 = vrot.lane.b32.xlu0 %v1515, 127
    %v1524 = vpop.permute.xlu0 %1523
    %v1525 = vsel %vm216, %v1518, %v1520
    %v1526 = vsel %vm216, %v1522, %v1524
    %1531 = vst [vmem:[#allocation4 + $0x10] sm:$0xfc] %v1525
    %1532 = vst.msk [vmem:[#allocation4 + $0x18] sm:$0xfc] %vm224, %v1520
    %1533 = vst [vmem:[#allocation4 + $0x20] sm:$0xf] %v1526
    %1534 = vst.msk [vmem:[#allocation4 + $0x28] sm:$0xf] %vm227, %v1524
    %v1535 = vld [vmem:[#allocation4] sm:$0xff]
    %v1536 = vld [vmem:[#allocation4 + $0x8] sm:$0xff]
    %v1537 = vld [vmem:[#allocation4 + $0x10] sm:$0xff]
    %v1538 = vld [vmem:[#allocation4 + $0x18] sm:$0xff]
    %v1539 = vld [vmem:[#allocation4 + $0x20] sm:$0xff]
    %v1540 = vld [vmem:[#allocation4 + $0x28] sm:$0xff]
    %v1541 = vld [vmem:[#allocation4 + $0x30] sm:$0xff]
    %v1542 = vld [vmem:[#allocation4 + $0x38] sm:$0xff]
    %v1543 = vpack.c.bf16 %v1537, %v1535
    %v1544 = vpack.c.bf16 %v1538, %v1536
    %v1545 = vpack.c.bf16 %v1541, %v1539
    %v1546 = vpack.c.bf16 %v1542, %v1540
    %1547 = vmatpush.bf16.msra.mxu0 0
    %1548 = vmatpush.bf16.msra.mxu0 0
    %1549 = vmatpush.bf16.msra.mxu0 0
    %1550 = vmatpush.bf16.msra.mxu0 0
    %1551 = vmatpush.bf16.msra.mxu0 0
    %1552 = vmatpush.bf16.msra.mxu0 0
    %1553 = vmatpush.bf16.msra.mxu0 %v1545
    %1554 = vmatpush.bf16.msra.mxu0 %v1543
    %1555 = vmatmul.bf16.gmra.mxu0 %v243
    %v1556 = vpop.f32.mrf.mxu0
    %v1557 = vadd.f32 0.0, %v1556
    %v1558 = vpop.f32.mrf.mxu0
    %1559 = vdwg.mxu0
    %1560 = vmatpush.bf16.msra.mxu0 0
    %1561 = vmatpush.bf16.msra.mxu0 0
    %1562 = vmatpush.bf16.msra.mxu0 0
    %1563 = vmatpush.bf16.msra.mxu0 0
    %1564 = vmatpush.bf16.msra.mxu0 0
    %1565 = vmatpush.bf16.msra.mxu0 0
    %1566 = vmatpush.bf16.msra.mxu0 %v1546
    %1567 = vmatpush.bf16.msra.mxu0 %v1544
    %1568 = vmatmul.bf16.gmra.mxu0 %v243
    %v1569 = vpop.f32.mrf.mxu0
    %v1570 = vadd.f32 0.0, %v1569
    %v1571 = vpop.f32.mrf.mxu0
    %1572 = vdwg.mxu0
    %v1573 = vadd.f32 %v1557, 0.0
    %v1574 = vadd.f32 %v1573, %v1570
    %v1575 = vmul.f32 %v1574, %v279
    %v1576 = vsub.f32 %v1557, %v1575
    %v1577 = vmul.f32 %v1576, %v1576
    %v1578 = vadd.f32 %v1577, 0.0
    %v1579 = vsub.f32 %v1570, %v1575
    %v1580 = vmul.f32 %v1579, %v1579
    %v1581 = vadd.f32 %v1578, %v1580
    %v1582 = vmul.f32 %v1581, %v279
    %v1583 = vadd.f32 %v1582, 1e-05
    %v1584 = vrsqrt.pop %v1583
    %v1585 = vmul.f32 %v1584, %v1583
    %v1586 = vmul.f32 %v1585, %v1584
    %v1587 = vmul.f32 0.5, %v1586
    %v1588 = vsub.f32 1.5, %v1587
    %v1589 = vmul.f32 %v1584, %v1588
    %vm1590 = vweird.f32 %v1583
    %vm1591 = vweird.f32 %v1584
    %vm1592 = vmor %vm1590, %vm1591
    %v1593 = vsel %vm1592, %v1584, %v1589
    %v1594 = vld [vmem:[%s2 + $0x58] sm:$0xff]
    %v1595 = vld [vmem:[%s3 + $0x58] sm:$0xff]
    %v1596 = vmul.f32 %v1593, %v1594
    %v1597 = vmul.f32 %v1575, %v1596
    %v1598 = vsub.f32 %v1595, %v1597
    %v1599 = vmul.f32 %v1557, %v1596
    %v1600 = vmul.f32 %v1570, %v1596
    %v1601 = vadd.f32 %v1599, %v1598
    %v1602 = vadd.f32 %v1600, %v1598
    %vm1603 = vcmp.ge.f32.partialorder %v1601, 0.0
    %vm1604 = vcmp.ge.f32.partialorder %v1602, 0.0
    %v1605 = vmul.f32 %v310, %v1601
    %v1606 = vmul.f32 %v310, %v1602
    %v1607 = vsel %vm1603, %v1601, %v1605
    %v1608 = vsel %vm1604, %v1602, %v1606
    %1609 = vst [vmem:[#allocation2 + $0xd0] sm:$0xff] %v1607
    %1610 = vst [vmem:[#allocation2 + $0xd8] sm:$0xff] %v1608
    %v1611 = vld [vmem:[%s0 + $0x60] sm:$0xff]
    %v1612 = vld [vmem:[%s0 + $0x68] sm:$0xff]
    %v1613 = vld [vmem:[%s0 + $0x70] sm:$0x3]
    %v1614 = vld [vmem:[%s0 + $0x78] sm:$0x3]
    %1615 = vst [vmem:[#allocation4] sm:$0xff] %v1611
    %1616 = vst [vmem:[#allocation4 + $0x8] sm:$0xff] %v1612
    %1617 = vst [vmem:[#allocation4 + $0x10] sm:$0x3] %v1613
    %1618 = vst [vmem:[#allocation4 + $0x18] sm:$0x3] %v1614
    %v1623 = vrot.slane %v1611, 6
    %v1624 = vrot.slane %v1612, 6
    %v1625 = vrot.slane %v1613, 6
    %v1626 = vsel %vm201, %v1623, %v1625
    %v1627 = vrot.slane %v1614, 6
    %v1628 = vsel %vm201, %v1624, %v1627
    %1629 = vrot.lane.b32.xlu0 %v1623, 127
    %v1630 = vpop.permute.xlu0 %1629
    %1631 = vrot.lane.b32.xlu0 %v1624, 127
    %v1632 = vpop.permute.xlu0 %1631
    %1633 = vrot.lane.b32.xlu0 %v1626, 127
    %v1634 = vpop.permute.xlu0 %1633
    %1635 = vrot.lane.b32.xlu0 %v1628, 127
    %v1636 = vpop.permute.xlu0 %1635
    %v1637 = vsel %vm216, %v1630, %v1632
    %v1638 = vsel %vm216, %v1634, %v1636
    %1643 = vst [vmem:[#allocation4 + $0x10] sm:$0xfc] %v1637
    %1644 = vst.msk [vmem:[#allocation4 + $0x18] sm:$0xfc] %vm224, %v1632
    %1645 = vst [vmem:[#allocation4 + $0x20] sm:$0xf] %v1638
    %1646 = vst.msk [vmem:[#allocation4 + $0x28] sm:$0xf] %vm227, %v1636
    %v1647 = vld [vmem:[#allocation4] sm:$0xff]
    %v1648 = vld [vmem:[#allocation4 + $0x8] sm:$0xff]
    %v1649 = vld [vmem:[#allocation4 + $0x10] sm:$0xff]
    %v1650 = vld [vmem:[#allocation4 + $0x18] sm:$0xff]
    %v1651 = vld [vmem:[#allocation4 + $0x20] sm:$0xff]
    %v1652 = vld [vmem:[#allocation4 + $0x28] sm:$0xff]
    %v1653 = vld [vmem:[#allocation4 + $0x30] sm:$0xff]
    %v1654 = vld [vmem:[#allocation4 + $0x38] sm:$0xff]
    %v1655 = vpack.c.bf16 %v1649, %v1647
    %v1656 = vpack.c.bf16 %v1650, %v1648
    %v1657 = vpack.c.bf16 %v1653, %v1651
    %v1658 = vpack.c.bf16 %v1654, %v1652
    %1659 = vmatpush.bf16.msra.mxu0 0
    %1660 = vmatpush.bf16.msra.mxu0 0
    %1661 = vmatpush.bf16.msra.mxu0 0
    %1662 = vmatpush.bf16.msra.mxu0 0
    %1663 = vmatpush.bf16.msra.mxu0 0
    %1664 = vmatpush.bf16.msra.mxu0 0
    %1665 = vmatpush.bf16.msra.mxu0 %v1657
    %1666 = vmatpush.bf16.msra.mxu0 %v1655
    %1667 = vmatmul.bf16.gmra.mxu0 %v243
    %v1668 = vpop.f32.mrf.mxu0
    %v1669 = vadd.f32 0.0, %v1668
    %v1670 = vpop.f32.mrf.mxu0
    %1671 = vdwg.mxu0
    %1672 = vmatpush.bf16.msra.mxu0 0
    %1673 = vmatpush.bf16.msra.mxu0 0
    %1674 = vmatpush.bf16.msra.mxu0 0
    %1675 = vmatpush.bf16.msra.mxu0 0
    %1676 = vmatpush.bf16.msra.mxu0 0
    %1677 = vmatpush.bf16.msra.mxu0 0
    %1678 = vmatpush.bf16.msra.mxu0 %v1658
    %1679 = vmatpush.bf16.msra.mxu0 %v1656
    %1680 = vmatmul.bf16.gmra.mxu0 %v243
    %v1681 = vpop.f32.mrf.mxu0
    %v1682 = vadd.f32 0.0, %v1681
    %v1683 = vpop.f32.mrf.mxu0
    %1684 = vdwg.mxu0
    %v1685 = vadd.f32 %v1669, 0.0
    %v1686 = vadd.f32 %v1685, %v1682
    %v1687 = vmul.f32 %v1686, %v279
    %v1688 = vsub.f32 %v1669, %v1687
    %v1689 = vmul.f32 %v1688, %v1688
    %v1690 = vadd.f32 %v1689, 0.0
    %v1691 = vsub.f32 %v1682, %v1687
    %v1692 = vmul.f32 %v1691, %v1691
    %v1693 = vadd.f32 %v1690, %v1692
    %v1694 = vmul.f32 %v1693, %v279
    %v1695 = vadd.f32 %v1694, 1e-05
    %v1696 = vrsqrt.pop %v1695
    %v1697 = vmul.f32 %v1696, %v1695
    %v1698 = vmul.f32 %v1697, %v1696
    %v1699 = vmul.f32 0.5, %v1698
    %v1700 = vsub.f32 1.5, %v1699
    %v1701 = vmul.f32 %v1696, %v1700
    %vm1702 = vweird.f32 %v1695
    %vm1703 = vweird.f32 %v1696
    %vm1704 = vmor %vm1702, %vm1703
    %v1705 = vsel %vm1704, %v1696, %v1701
    %v1706 = vld [vmem:[%s2 + $0x60] sm:$0xff]
    %v1707 = vld [vmem:[%s3 + $0x60] sm:$0xff]
    %v1708 = vmul.f32 %v1705, %v1706
    %v1709 = vmul.f32 %v1687, %v1708
    %v1710 = vsub.f32 %v1707, %v1709
    %v1711 = vmul.f32 %v1669, %v1708
    %v1712 = vmul.f32 %v1682, %v1708
    %v1713 = vadd.f32 %v1711, %v1710
    %v1714 = vadd.f32 %v1712, %v1710
    %vm1715 = vcmp.ge.f32.partialorder %v1713, 0.0
    %vm1716 = vcmp.ge.f32.partialorder %v1714, 0.0
    %v1717 = vmul.f32 %v310, %v1713
    %v1718 = vmul.f32 %v310, %v1714
    %v1719 = vsel %vm1715, %v1713, %v1717
    %v1720 = vsel %vm1716, %v1714, %v1718
    %1721 = vst [vmem:[#allocation2 + $0xe0] sm:$0xff] %v1719
    %1722 = vst [vmem:[#allocation2 + $0xe8] sm:$0xff] %v1720
    %v1723 = vld [vmem:[%s0 + $0x60] sm:$0xf0]
    %v1724 = vld [vmem:[%s0 + $0x68] sm:$0xf0]
    %v1725 = vld [vmem:[%s0 + $0x70] sm:$0x3f]
    %v1726 = vld [vmem:[%s0 + $0x78] sm:$0x3f]
    %v1731 = vrot.slane %v1723, 4
    %v1732 = vrot.slane %v1725, 4
    %v1733 = vsel %vm325, %v1731, %v1732
    %v1734 = vrot.slane %v1724, 4
    %v1735 = vrot.slane %v1726, 4
    %v1736 = vsel %vm325, %v1734, %v1735
    %1741 = vst [vmem:[#allocation4] sm:$0xff] %v1733
    %1742 = vst [vmem:[#allocation4 + $0x8] sm:$0xff] %v1736
    %1743 = vst [vmem:[#allocation4 + $0x10] sm:$0x3] %v1732
    %1744 = vst [vmem:[#allocation4 + $0x18] sm:$0x3] %v1735
    %v1745 = vrot.slane %v1723, 2
    %v1746 = vrot.slane %v1725, 2
    %v1747 = vsel %vm340, %v1745, %v1746
    %v1748 = vrot.slane %v1724, 2
    %v1749 = vrot.slane %v1726, 2
    %v1750 = vsel %vm340, %v1748, %v1749
    %1751 = vrot.lane.b32.xlu0 %v1747, 127
    %v1752 = vpop.permute.xlu0 %1751
    %1753 = vrot.lane.b32.xlu0 %v1750, 127
    %v1754 = vpop.permute.xlu0 %1753
    %1755 = vrot.lane.b32.xlu0 %v1746, 127
    %v1756 = vpop.permute.xlu0 %1755
    %1757 = vrot.lane.b32.xlu0 %v1749, 127
    %v1758 = vpop.permute.xlu0 %1757
    %v1759 = vsel %vm216, %v1752, %v1754
    %v1760 = vsel %vm216, %v1756, %v1758
    %1765 = vst [vmem:[#allocation4 + $0x10] sm:$0xfc] %v1759
    %1766 = vst.msk [vmem:[#allocation4 + $0x18] sm:$0xfc] %vm224, %v1754
    %1767 = vst [vmem:[#allocation4 + $0x20] sm:$0xf] %v1760
    %1768 = vst.msk [vmem:[#allocation4 + $0x28] sm:$0xf] %vm227, %v1758
    %v1769 = vld [vmem:[#allocation4] sm:$0xff]
    %v1770 = vld [vmem:[#allocation4 + $0x8] sm:$0xff]
    %v1771 = vld [vmem:[#allocation4 + $0x10] sm:$0xff]
    %v1772 = vld [vmem:[#allocation4 + $0x18] sm:$0xff]
    %v1773 = vld [vmem:[#allocation4 + $0x20] sm:$0xff]
    %v1774 = vld [vmem:[#allocation4 + $0x28] sm:$0xff]
    %v1775 = vld [vmem:[#allocation4 + $0x30] sm:$0xff]
    %v1776 = vld [vmem:[#allocation4 + $0x38] sm:$0xff]
    %v1777 = vpack.c.bf16 %v1771, %v1769
    %v1778 = vpack.c.bf16 %v1772, %v1770
    %v1779 = vpack.c.bf16 %v1775, %v1773
    %v1780 = vpack.c.bf16 %v1776, %v1774
    %1781 = vmatpush.bf16.msra.mxu0 0
    %1782 = vmatpush.bf16.msra.mxu0 0
    %1783 = vmatpush.bf16.msra.mxu0 0
    %1784 = vmatpush.bf16.msra.mxu0 0
    %1785 = vmatpush.bf16.msra.mxu0 0
    %1786 = vmatpush.bf16.msra.mxu0 0
    %1787 = vmatpush.bf16.msra.mxu0 %v1779
    %1788 = vmatpush.bf16.msra.mxu0 %v1777
    %1789 = vmatmul.bf16.gmra.mxu0 %v243
    %v1790 = vpop.f32.mrf.mxu0
    %v1791 = vadd.f32 0.0, %v1790
    %v1792 = vpop.f32.mrf.mxu0
    %1793 = vdwg.mxu0
    %1794 = vmatpush.bf16.msra.mxu0 0
    %1795 = vmatpush.bf16.msra.mxu0 0
    %1796 = vmatpush.bf16.msra.mxu0 0
    %1797 = vmatpush.bf16.msra.mxu0 0
    %1798 = vmatpush.bf16.msra.mxu0 0
    %1799 = vmatpush.bf16.msra.mxu0 0
    %1800 = vmatpush.bf16.msra.mxu0 %v1780
    %1801 = vmatpush.bf16.msra.mxu0 %v1778
    %1802 = vmatmul.bf16.gmra.mxu0 %v243
    %v1803 = vpop.f32.mrf.mxu0
    %v1804 = vadd.f32 0.0, %v1803
    %v1805 = vpop.f32.mrf.mxu0
    %1806 = vdwg.mxu0
    %v1807 = vadd.f32 %v1791, 0.0
    %v1808 = vadd.f32 %v1807, %v1804
    %v1809 = vmul.f32 %v1808, %v279
    %v1810 = vsub.f32 %v1791, %v1809
    %v1811 = vmul.f32 %v1810, %v1810
    %v1812 = vadd.f32 %v1811, 0.0
    %v1813 = vsub.f32 %v1804, %v1809
    %v1814 = vmul.f32 %v1813, %v1813
    %v1815 = vadd.f32 %v1812, %v1814
    %v1816 = vmul.f32 %v1815, %v279
    %v1817 = vadd.f32 %v1816, 1e-05
    %v1818 = vrsqrt.pop %v1817
    %v1819 = vmul.f32 %v1818, %v1817
    %v1820 = vmul.f32 %v1819, %v1818
    %v1821 = vmul.f32 0.5, %v1820
    %v1822 = vsub.f32 1.5, %v1821
    %v1823 = vmul.f32 %v1818, %v1822
    %vm1824 = vweird.f32 %v1817
    %vm1825 = vweird.f32 %v1818
    %vm1826 = vmor %vm1824, %vm1825
    %v1827 = vsel %vm1826, %v1818, %v1823
    %v1828 = vld [vmem:[%s2 + $0x68] sm:$0xff]
    %v1829 = vld [vmem:[%s3 + $0x68] sm:$0xff]
    %v1830 = vmul.f32 %v1827, %v1828
    %v1831 = vmul.f32 %v1809, %v1830
    %v1832 = vsub.f32 %v1829, %v1831
    %v1833 = vmul.f32 %v1791, %v1830
    %v1834 = vmul.f32 %v1804, %v1830
    %v1835 = vadd.f32 %v1833, %v1832
    %v1836 = vadd.f32 %v1834, %v1832
    %vm1837 = vcmp.ge.f32.partialorder %v1835, 0.0
    %vm1838 = vcmp.ge.f32.partialorder %v1836, 0.0
    %v1839 = vmul.f32 %v310, %v1835
    %v1840 = vmul.f32 %v310, %v1836
    %v1841 = vsel %vm1837, %v1835, %v1839
    %v1842 = vsel %vm1838, %v1836, %v1840
    %1843 = vst [vmem:[#allocation2 + $0xf0] sm:$0xff] %v1841
    %1844 = vst [vmem:[#allocation2 + $0xf8] sm:$0xff] %v1842
    %v1845 = vld [vmem:[%s0 + $0x70] sm:$0xff]
    %v1846 = vld [vmem:[%s0 + $0x78] sm:$0xff]
    %v1847 = vld [vmem:[%s0 + $0x80] sm:$0x3]
    %v1848 = vld [vmem:[%s0 + $0x88] sm:$0x3]
    %1849 = vst [vmem:[#allocation4] sm:$0xff] %v1845
    %1850 = vst [vmem:[#allocation4 + $0x8] sm:$0xff] %v1846
    %1851 = vst [vmem:[#allocation4 + $0x10] sm:$0x3] %v1847
    %1852 = vst [vmem:[#allocation4 + $0x18] sm:$0x3] %v1848
    %v1857 = vrot.slane %v1845, 6
    %v1858 = vrot.slane %v1846, 6
    %v1859 = vrot.slane %v1847, 6
    %v1860 = vsel %vm201, %v1857, %v1859
    %v1861 = vrot.slane %v1848, 6
    %v1862 = vsel %vm201, %v1858, %v1861
    %1863 = vrot.lane.b32.xlu0 %v1857, 127
    %v1864 = vpop.permute.xlu0 %1863
    %1865 = vrot.lane.b32.xlu0 %v1858, 127
    %v1866 = vpop.permute.xlu0 %1865
    %1867 = vrot.lane.b32.xlu0 %v1860, 127
    %v1868 = vpop.permute.xlu0 %1867
    %1869 = vrot.lane.b32.xlu0 %v1862, 127
    %v1870 = vpop.permute.xlu0 %1869
    %v1871 = vsel %vm216, %v1864, %v1866
    %v1872 = vsel %vm216, %v1868, %v1870
    %1877 = vst [vmem:[#allocation4 + $0x10] sm:$0xfc] %v1871
    %1878 = vst.msk [vmem:[#allocation4 + $0x18] sm:$0xfc] %vm224, %v1866
    %1879 = vst [vmem:[#allocation4 + $0x20] sm:$0xf] %v1872
    %1880 = vst.msk [vmem:[#allocation4 + $0x28] sm:$0xf] %vm227, %v1870
    %v1881 = vld [vmem:[#allocation4] sm:$0xff]
    %v1882 = vld [vmem:[#allocation4 + $0x8] sm:$0xff]
    %v1883 = vld [vmem:[#allocation4 + $0x10] sm:$0xff]
    %v1884 = vld [vmem:[#allocation4 + $0x18] sm:$0xff]
    %v1885 = vld [vmem:[#allocation4 + $0x20] sm:$0xff]
    %v1886 = vld [vmem:[#allocation4 + $0x28] sm:$0xff]
    %v1887 = vld [vmem:[#allocation4 + $0x30] sm:$0xff]
    %v1888 = vld [vmem:[#allocation4 + $0x38] sm:$0xff]
    %v1889 = vpack.c.bf16 %v1883, %v1881
    %v1890 = vpack.c.bf16 %v1884, %v1882
    %v1891 = vpack.c.bf16 %v1887, %v1885
    %v1892 = vpack.c.bf16 %v1888, %v1886
    %1893 = vmatpush.bf16.msra.mxu0 0
    %1894 = vmatpush.bf16.msra.mxu0 0
    %1895 = vmatpush.bf16.msra.mxu0 0
    %1896 = vmatpush.bf16.msra.mxu0 0
    %1897 = vmatpush.bf16.msra.mxu0 0
    %1898 = vmatpush.bf16.msra.mxu0 0
    %1899 = vmatpush.bf16.msra.mxu0 %v1891
    %1900 = vmatpush.bf16.msra.mxu0 %v1889
    %1901 = vmatmul.bf16.gmra.mxu0 %v243
    %v1902 = vpop.f32.mrf.mxu0
    %v1903 = vadd.f32 0.0, %v1902
    %v1904 = vpop.f32.mrf.mxu0
    %1905 = vdwg.mxu0
    %1906 = vmatpush.bf16.msra.mxu0 0
    %1907 = vmatpush.bf16.msra.mxu0 0
    %1908 = vmatpush.bf16.msra.mxu0 0
    %1909 = vmatpush.bf16.msra.mxu0 0
    %1910 = vmatpush.bf16.msra.mxu0 0
    %1911 = vmatpush.bf16.msra.mxu0 0
    %1912 = vmatpush.bf16.msra.mxu0 %v1892
    %1913 = vmatpush.bf16.msra.mxu0 %v1890
    %1914 = vmatmul.bf16.gmra.mxu0 %v243
    %v1915 = vpop.f32.mrf.mxu0
    %v1916 = vadd.f32 0.0, %v1915
    %v1917 = vpop.f32.mrf.mxu0
    %1918 = vdwg.mxu0
    %v1919 = vadd.f32 %v1903, 0.0
    %v1920 = vadd.f32 %v1919, %v1916
    %v1921 = vmul.f32 %v1920, %v279
    %v1922 = vsub.f32 %v1903, %v1921
    %v1923 = vmul.f32 %v1922, %v1922
    %v1924 = vadd.f32 %v1923, 0.0
    %v1925 = vsub.f32 %v1916, %v1921
    %v1926 = vmul.f32 %v1925, %v1925
    %v1927 = vadd.f32 %v1924, %v1926
    %v1928 = vmul.f32 %v1927, %v279
    %v1929 = vadd.f32 %v1928, 1e-05
    %v1930 = vrsqrt.pop %v1929
    %v1931 = vmul.f32 %v1930, %v1929
    %v1932 = vmul.f32 %v1931, %v1930
    %v1933 = vmul.f32 0.5, %v1932
    %v1934 = vsub.f32 1.5, %v1933
    %v1935 = vmul.f32 %v1930, %v1934
    %vm1936 = vweird.f32 %v1929
    %vm1937 = vweird.f32 %v1930
    %vm1938 = vmor %vm1936, %vm1937
    %v1939 = vsel %vm1938, %v1930, %v1935
    %v1940 = vld [vmem:[%s2 + $0x70] sm:$0xff]
    %v1941 = vld [vmem:[%s3 + $0x70] sm:$0xff]
    %v1942 = vmul.f32 %v1939, %v1940
    %v1943 = vmul.f32 %v1921, %v1942
    %v1944 = vsub.f32 %v1941, %v1943
    %v1945 = vmul.f32 %v1903, %v1942
    %v1946 = vmul.f32 %v1916, %v1942
    %v1947 = vadd.f32 %v1945, %v1944
    %v1948 = vadd.f32 %v1946, %v1944
    %vm1949 = vcmp.ge.f32.partialorder %v1947, 0.0
    %vm1950 = vcmp.ge.f32.partialorder %v1948, 0.0
    %v1951 = vmul.f32 %v310, %v1947
    %v1952 = vmul.f32 %v310, %v1948
    %v1953 = vsel %vm1949, %v1947, %v1951
    %v1954 = vsel %vm1950, %v1948, %v1952
    %1955 = vst [vmem:[#allocation2 + $0x100] sm:$0xff] %v1953
    %1956 = vst [vmem:[#allocation2 + $0x108] sm:$0xff] %v1954
    %v1957 = vld [vmem:[%s0 + $0x70] sm:$0xf0]
    %v1958 = vld [vmem:[%s0 + $0x78] sm:$0xf0]
    %v1959 = vld [vmem:[%s0 + $0x80] sm:$0x3f]
    %v1960 = vld [vmem:[%s0 + $0x88] sm:$0x3f]
    %v1965 = vrot.slane %v1957, 4
    %v1966 = vrot.slane %v1959, 4
    %v1967 = vsel %vm325, %v1965, %v1966
    %v1968 = vrot.slane %v1958, 4
    %v1969 = vrot.slane %v1960, 4
    %v1970 = vsel %vm325, %v1968, %v1969
    %1975 = vst [vmem:[#allocation4] sm:$0xff] %v1967
    %1976 = vst [vmem:[#allocation4 + $0x8] sm:$0xff] %v1970
    %1977 = vst [vmem:[#allocation4 + $0x10] sm:$0x3] %v1966
    %1978 = vst [vmem:[#allocation4 + $0x18] sm:$0x3] %v1969
    %v1979 = vrot.slane %v1957, 2
    %v1980 = vrot.slane %v1959, 2
    %v1981 = vsel %vm340, %v1979, %v1980
    %v1982 = vrot.slane %v1958, 2
    %v1983 = vrot.slane %v1960, 2
    %v1984 = vsel %vm340, %v1982, %v1983
    %1985 = vrot.lane.b32.xlu0 %v1981, 127
    %v1986 = vpop.permute.xlu0 %1985
    %1987 = vrot.lane.b32.xlu0 %v1984, 127
    %v1988 = vpop.permute.xlu0 %1987
    %1989 = vrot.lane.b32.xlu0 %v1980, 127
    %v1990 = vpop.permute.xlu0 %1989
    %1991 = vrot.lane.b32.xlu0 %v1983, 127
    %v1992 = vpop.permute.xlu0 %1991
    %v1993 = vsel %vm216, %v1986, %v1988
    %v1994 = vsel %vm216, %v1990, %v1992
    %1999 = vst [vmem:[#allocation4 + $0x10] sm:$0xfc] %v1993
    %2000 = vst.msk [vmem:[#allocation4 + $0x18] sm:$0xfc] %vm224, %v1988
    %2001 = vst [vmem:[#allocation4 + $0x20] sm:$0xf] %v1994
    %2002 = vst.msk [vmem:[#allocation4 + $0x28] sm:$0xf] %vm227, %v1992
    %v2003 = vld [vmem:[#allocation4] sm:$0xff]
    %v2004 = vld [vmem:[#allocation4 + $0x8] sm:$0xff]
    %v2005 = vld [vmem:[#allocation4 + $0x10] sm:$0xff]
    %v2006 = vld [vmem:[#allocation4 + $0x18] sm:$0xff]
    %v2007 = vld [vmem:[#allocation4 + $0x20] sm:$0xff]
    %v2008 = vld [vmem:[#allocation4 + $0x28] sm:$0xff]
    %v2009 = vld [vmem:[#allocation4 + $0x30] sm:$0xff]
    %v2010 = vld [vmem:[#allocation4 + $0x38] sm:$0xff]
    %v2011 = vpack.c.bf16 %v2005, %v2003
    %v2012 = vpack.c.bf16 %v2006, %v2004
    %v2013 = vpack.c.bf16 %v2009, %v2007
    %v2014 = vpack.c.bf16 %v2010, %v2008
    %2015 = vmatpush.bf16.msra.mxu0 0
    %2016 = vmatpush.bf16.msra.mxu0 0
    %2017 = vmatpush.bf16.msra.mxu0 0
    %2018 = vmatpush.bf16.msra.mxu0 0
    %2019 = vmatpush.bf16.msra.mxu0 0
    %2020 = vmatpush.bf16.msra.mxu0 0
    %2021 = vmatpush.bf16.msra.mxu0 %v2013
    %2022 = vmatpush.bf16.msra.mxu0 %v2011
    %2023 = vmatmul.bf16.gmra.mxu0 %v243
    %v2024 = vpop.f32.mrf.mxu0
    %v2025 = vadd.f32 0.0, %v2024
    %v2026 = vpop.f32.mrf.mxu0
    %2027 = vdwg.mxu0
    %2028 = vmatpush.bf16.msra.mxu0 0
    %2029 = vmatpush.bf16.msra.mxu0 0
    %2030 = vmatpush.bf16.msra.mxu0 0
    %2031 = vmatpush.bf16.msra.mxu0 0
    %2032 = vmatpush.bf16.msra.mxu0 0
    %2033 = vmatpush.bf16.msra.mxu0 0
    %2034 = vmatpush.bf16.msra.mxu0 %v2014
    %2035 = vmatpush.bf16.msra.mxu0 %v2012
    %2036 = vmatmul.bf16.gmra.mxu0 %v243
    %v2037 = vpop.f32.mrf.mxu0
    %v2038 = vadd.f32 0.0, %v2037
    %v2039 = vpop.f32.mrf.mxu0
    %2040 = vdwg.mxu0
    %v2041 = vadd.f32 %v2025, 0.0
    %v2042 = vadd.f32 %v2041, %v2038
    %v2043 = vmul.f32 %v2042, %v279
    %v2044 = vsub.f32 %v2025, %v2043
    %v2045 = vmul.f32 %v2044, %v2044
    %v2046 = vadd.f32 %v2045, 0.0
    %v2047 = vsub.f32 %v2038, %v2043
    %v2048 = vmul.f32 %v2047, %v2047
    %v2049 = vadd.f32 %v2046, %v2048
    %v2050 = vmul.f32 %v2049, %v279
    %v2051 = vadd.f32 %v2050, 1e-05
    %v2052 = vrsqrt.pop %v2051
    %v2053 = vmul.f32 %v2052, %v2051
    %v2054 = vmul.f32 %v2053, %v2052
    %v2055 = vmul.f32 0.5, %v2054
    %v2056 = vsub.f32 1.5, %v2055
    %v2057 = vmul.f32 %v2052, %v2056
    %vm2058 = vweird.f32 %v2051
    %vm2059 = vweird.f32 %v2052
    %vm2060 = vmor %vm2058, %vm2059
    %v2061 = vsel %vm2060, %v2052, %v2057
    %v2062 = vld [vmem:[%s2 + $0x78] sm:$0xff]
    %v2063 = vld [vmem:[%s3 + $0x78] sm:$0xff]
    %v2064 = vmul.f32 %v2061, %v2062
    %v2065 = vmul.f32 %v2043, %v2064
    %v2066 = vsub.f32 %v2063, %v2065
    %v2067 = vmul.f32 %v2025, %v2064
    %v2068 = vmul.f32 %v2038, %v2064
    %v2069 = vadd.f32 %v2067, %v2066
    %v2070 = vadd.f32 %v2068, %v2066
    %vm2071 = vcmp.ge.f32.partialorder %v2069, 0.0
    %vm2072 = vcmp.ge.f32.partialorder %v2070, 0.0
    %v2073 = vmul.f32 %v310, %v2069
    %v2074 = vmul.f32 %v310, %v2070
    %v2075 = vsel %vm2071, %v2069, %v2073
    %v2076 = vsel %vm2072, %v2070, %v2074
    %2077 = vst [vmem:[#allocation2 + $0x110] sm:$0xff] %v2075
    %2078 = vst [vmem:[#allocation2 + $0x118] sm:$0xff] %v2076
    %v2079 = vld [vmem:[%s0 + $0x80] sm:$0xff]
    %v2080 = vld [vmem:[%s0 + $0x88] sm:$0xff]
    %v2081 = vld [vmem:[%s0 + $0x90] sm:$0x3]
    %v2082 = vld [vmem:[%s0 + $0x98] sm:$0x3]
    %2083 = vst [vmem:[#allocation4] sm:$0xff] %v2079
    %2084 = vst [vmem:[#allocation4 + $0x8] sm:$0xff] %v2080
    %2085 = vst [vmem:[#allocation4 + $0x10] sm:$0x3] %v2081
    %2086 = vst [vmem:[#allocation4 + $0x18] sm:$0x3] %v2082
    %v2091 = vrot.slane %v2079, 6
    %v2092 = vrot.slane %v2080, 6
    %v2093 = vrot.slane %v2081, 6
    %v2094 = vsel %vm201, %v2091, %v2093
    %v2095 = vrot.slane %v2082, 6
    %v2096 = vsel %vm201, %v2092, %v2095
    %2097 = vrot.lane.b32.xlu0 %v2091, 127
    %v2098 = vpop.permute.xlu0 %2097
    %2099 = vrot.lane.b32.xlu0 %v2092, 127
    %v2100 = vpop.permute.xlu0 %2099
    %2101 = vrot.lane.b32.xlu0 %v2094, 127
    %v2102 = vpop.permute.xlu0 %2101
    %2103 = vrot.lane.b32.xlu0 %v2096, 127
    %v2104 = vpop.permute.xlu0 %2103
    %v2105 = vsel %vm216, %v2098, %v2100
    %v2106 = vsel %vm216, %v2102, %v2104
    %2111 = vst [vmem:[#allocation4 + $0x10] sm:$0xfc] %v2105
    %2112 = vst.msk [vmem:[#allocation4 + $0x18] sm:$0xfc] %vm224, %v2100
    %2113 = vst [vmem:[#allocation4 + $0x20] sm:$0xf] %v2106
    %2114 = vst.msk [vmem:[#allocation4 + $0x28] sm:$0xf] %vm227, %v2104
    %v2115 = vld [vmem:[#allocation4] sm:$0xff]
    %v2116 = vld [vmem:[#allocation4 + $0x8] sm:$0xff]
    %v2117 = vld [vmem:[#allocation4 + $0x10] sm:$0xff]
    %v2118 = vld [vmem:[#allocation4 + $0x18] sm:$0xff]
    %v2119 = vld [vmem:[#allocation4 + $0x20] sm:$0xff]
    %v2120 = vld [vmem:[#allocation4 + $0x28] sm:$0xff]
    %v2121 = vld [vmem:[#allocation4 + $0x30] sm:$0xff]
    %v2122 = vld [vmem:[#allocation4 + $0x38] sm:$0xff]
    %v2123 = vpack.c.bf16 %v2117, %v2115
    %v2124 = vpack.c.bf16 %v2118, %v2116
    %v2125 = vpack.c.bf16 %v2121, %v2119
    %v2126 = vpack.c.bf16 %v2122, %v2120
    %2127 = vmatpush.bf16.msra.mxu0 0
    %2128 = vmatpush.bf16.msra.mxu0 0
    %2129 = vmatpush.bf16.msra.mxu0 0
    %2130 = vmatpush.bf16.msra.mxu0 0
    %2131 = vmatpush.bf16.msra.mxu0 0
    %2132 = vmatpush.bf16.msra.mxu0 0
    %2133 = vmatpush.bf16.msra.mxu0 %v2125
    %2134 = vmatpush.bf16.msra.mxu0 %v2123
    %2135 = vmatmul.bf16.gmra.mxu0 %v243
    %v2136 = vpop.f32.mrf.mxu0
    %v2137 = vadd.f32 0.0, %v2136
    %v2138 = vpop.f32.mrf.mxu0
    %2139 = vdwg.mxu0
    %2140 = vmatpush.bf16.msra.mxu0 0
    %2141 = vmatpush.bf16.msra.mxu0 0
    %2142 = vmatpush.bf16.msra.mxu0 0
    %2143 = vmatpush.bf16.msra.mxu0 0
    %2144 = vmatpush.bf16.msra.mxu0 0
    %2145 = vmatpush.bf16.msra.mxu0 0
    %2146 = vmatpush.bf16.msra.mxu0 %v2126
    %2147 = vmatpush.bf16.msra.mxu0 %v2124
    %2148 = vmatmul.bf16.gmra.mxu0 %v243
    %v2149 = vpop.f32.mrf.mxu0
    %v2150 = vadd.f32 0.0, %v2149
    %v2151 = vpop.f32.mrf.mxu0
    %2152 = vdwg.mxu0
    %v2153 = vadd.f32 %v2137, 0.0
    %v2154 = vadd.f32 %v2153, %v2150
    %v2155 = vmul.f32 %v2154, %v279
    %v2156 = vsub.f32 %v2137, %v2155
    %v2157 = vmul.f32 %v2156, %v2156
    %v2158 = vadd.f32 %v2157, 0.0
    %v2159 = vsub.f32 %v2150, %v2155
    %v2160 = vmul.f32 %v2159, %v2159
    %v2161 = vadd.f32 %v2158, %v2160
    %v2162 = vmul.f32 %v2161, %v279
    %v2163 = vadd.f32 %v2162, 1e-05
    %v2164 = vrsqrt.pop %v2163
    %v2165 = vmul.f32 %v2164, %v2163
    %v2166 = vmul.f32 %v2165, %v2164
    %v2167 = vmul.f32 0.5, %v2166
    %v2168 = vsub.f32 1.5, %v2167
    %v2169 = vmul.f32 %v2164, %v2168
    %vm2170 = vweird.f32 %v2163
    %vm2171 = vweird.f32 %v2164
    %vm2172 = vmor %vm2170, %vm2171
    %v2173 = vsel %vm2172, %v2164, %v2169
    %v2174 = vld [vmem:[%s2 + $0x80] sm:$0xff]
    %v2175 = vld [vmem:[%s3 + $0x80] sm:$0xff]
    %v2176 = vmul.f32 %v2173, %v2174
    %v2177 = vmul.f32 %v2155, %v2176
    %v2178 = vsub.f32 %v2175, %v2177
    %v2179 = vmul.f32 %v2137, %v2176
    %v2180 = vmul.f32 %v2150, %v2176
    %v2181 = vadd.f32 %v2179, %v2178
    %v2182 = vadd.f32 %v2180, %v2178
    %vm2183 = vcmp.ge.f32.partialorder %v2181, 0.0
    %vm2184 = vcmp.ge.f32.partialorder %v2182, 0.0
    %v2185 = vmul.f32 %v310, %v2181
    %v2186 = vmul.f32 %v310, %v2182
    %v2187 = vsel %vm2183, %v2181, %v2185
    %v2188 = vsel %vm2184, %v2182, %v2186
    %2189 = vst [vmem:[#allocation2 + $0x120] sm:$0xff] %v2187
    %2190 = vst [vmem:[#allocation2 + $0x128] sm:$0xff] %v2188
    %v2191 = vld [vmem:[%s4] sm:$0xff]
    %v2192 = vld [vmem:[%s4 + $0x8] sm:$0xff]
    %v2193 = vpack.c.bf16 %v2192, %v2191
    %s2194 = sld [smem:[#allocation5 + $0x1]]
    %v2195 = vld [vmem:[#allocation2] sm:$0xff]
    %v2196 = vld [vmem:[#allocation2 + $0x8] sm:$0xff]
    %v2197 = vld [vmem:[#allocation2 + $0x10] sm:$0xff]
    %v2198 = vld [vmem:[#allocation2 + $0x18] sm:$0xff]
    %v2199 = vld [vmem:[#allocation2 + $0x20] sm:$0xff]
    %v2200 = vld [vmem:[#allocation2 + $0x28] sm:$0xff]
    %v2201 = vld [vmem:[#allocation2 + $0x30] sm:$0xff]
    %v2202 = vld [vmem:[#allocation2 + $0x38] sm:$0xff]
    %v2203 = vld [vmem:[#allocation2 + $0x40] sm:$0xff]
    %v2204 = vld [vmem:[#allocation2 + $0x48] sm:$0xff]
    %2205 = vst [vmem:[#allocation4] sm:$0xff] %v2195
    %2206 = vst [vmem:[#allocation4 + $0x8] sm:$0xff] %v2196
    %2207 = vst [vmem:[#allocation4 + $0x10] sm:$0xff] %v2197
    %2208 = vst [vmem:[#allocation4 + $0x18] sm:$0xff] %v2198
    %2209 = vst [vmem:[#allocation4 + $0x20] sm:$0xff] %v2199
    %2210 = vst [vmem:[#allocation4 + $0x28] sm:$0xff] %v2200
    %2211 = vst [vmem:[#allocation4 + $0x30] sm:$0xff] %v2201
    %2212 = vst [vmem:[#allocation4 + $0x38] sm:$0xff] %v2202
    %2213 = vst [vmem:[#allocation4 + $0x40] sm:$0xff] %v2203
    %2214 = vst [vmem:[#allocation4 + $0x48] sm:$0xff] %v2204
    %2225 = vrot.lane.b32.xlu0 %v2195, 127
    %v2226 = vpop.permute.xlu0 %2225
    %2227 = vrot.lane.b32.xlu0 %v2196, 127
    %v2228 = vpop.permute.xlu0 %2227
    %2229 = vrot.lane.b32.xlu0 %v2197, 127
    %v2230 = vpop.permute.xlu0 %2229
    %2231 = vrot.lane.b32.xlu0 %v2198, 127
    %v2232 = vpop.permute.xlu0 %2231
    %2233 = vrot.lane.b32.xlu0 %v2199, 127
    %v2234 = vpop.permute.xlu0 %2233
    %2235 = vrot.lane.b32.xlu0 %v2200, 127
    %v2236 = vpop.permute.xlu0 %2235
    %2237 = vrot.lane.b32.xlu0 %v2201, 127
    %v2238 = vpop.permute.xlu0 %2237
    %2239 = vrot.lane.b32.xlu0 %v2202, 127
    %v2240 = vpop.permute.xlu0 %2239
    %2241 = vrot.lane.b32.xlu0 %v2203, 127
    %v2242 = vpop.permute.xlu0 %2241
    %2243 = vrot.lane.b32.xlu0 %v2204, 127
    %v2244 = vpop.permute.xlu0 %2243
    %v2245 = vsel %vm216, %v2226, %v2228
    %v2246 = vsel %vm216, %v2230, %v2232
    %v2247 = vsel %vm216, %v2234, %v2236
    %v2248 = vsel %vm216, %v2238, %v2240
    %v2249 = vsel %vm216, %v2242, %v2244
    %2260 = vst [vmem:[#allocation4 + $0x50] sm:$0xff] %v2245
    %2261 = vst.msk [vmem:[#allocation4 + $0x58] sm:$0xff] %vm216, %v2228
    %2262 = vst [vmem:[#allocation4 + $0x60] sm:$0xff] %v2246
    %2263 = vst.msk [vmem:[#allocation4 + $0x68] sm:$0xff] %vm216, %v2232
    %2264 = vst [vmem:[#allocation4 + $0x70] sm:$0xff] %v2247
    %2265 = vst.msk [vmem:[#allocation4 + $0x78] sm:$0xff] %vm216, %v2236
    %2266 = vst [vmem:[#allocation4 + $0x80] sm:$0xff] %v2248
    %2267 = vst.msk [vmem:[#allocation4 + $0x88] sm:$0xff] %vm216, %v2240
    %2268 = vst [vmem:[#allocation4 + $0x90] sm:$0xff] %v2249
    %2269 = vst.msk [vmem:[#allocation4 + $0x98] sm:$0xff] %vm216, %v2244
    %v2270 = vld [vmem:[#allocation4] sm:$0xff]
    %v2271 = vld [vmem:[#allocation4 + $0x8] sm:$0xff]
    %v2272 = vld [vmem:[#allocation4 + $0x10] sm:$0xff]
    %v2273 = vld [vmem:[#allocation4 + $0x18] sm:$0xff]
    %v2274 = vld [vmem:[#allocation4 + $0x20] sm:$0xff]
    %v2275 = vld [vmem:[#allocation4 + $0x28] sm:$0xff]
    %v2276 = vld [vmem:[#allocation4 + $0x30] sm:$0xff]
    %v2277 = vld [vmem:[#allocation4 + $0x38] sm:$0xff]
    %v2278 = vld [vmem:[#allocation4 + $0x40] sm:$0xff]
    %v2279 = vld [vmem:[#allocation4 + $0x48] sm:$0xff]
    %v2280 = vld [vmem:[#allocation4 + $0x50] sm:$0xff]
    %v2281 = vld [vmem:[#allocation4 + $0x58] sm:$0xff]
    %v2282 = vld [vmem:[#allocation4 + $0x60] sm:$0xff]
    %v2283 = vld [vmem:[#allocation4 + $0x68] sm:$0xff]
    %v2284 = vld [vmem:[#allocation4 + $0x70] sm:$0xff]
    %v2285 = vld [vmem:[#allocation4 + $0x78] sm:$0xff]
    %v2286 = vld [vmem:[#allocation4 + $0x80] sm:$0xff]
    %v2287 = vld [vmem:[#allocation4 + $0x88] sm:$0xff]
    %v2288 = vld [vmem:[#allocation4 + $0x90] sm:$0xff]
    %v2289 = vld [vmem:[#allocation4 + $0x98] sm:$0xff]
    %v2290 = vpack.c.bf16 %v2272, %v2270
    %v2291 = vpack.c.bf16 %v2273, %v2271
    %v2292 = vpack.c.bf16 %v2276, %v2274
    %v2293 = vpack.c.bf16 %v2277, %v2275
    %v2294 = vpack.c.bf16 %v2280, %v2278
    %v2295 = vpack.c.bf16 %v2281, %v2279
    %v2296 = vpack.c.bf16 %v2284, %v2282
    %v2297 = vpack.c.bf16 %v2285, %v2283
    %v2298 = vpack.c.bf16 %v2288, %v2286
    %v2299 = vpack.c.bf16 %v2289, %v2287
    %vm2300 = vcmask 654336
    %v2302 = vsel %vm2300, %v2193, 0
    %2304 = vmatpush.bf16.msra.mxu0 0
    %2305 = vmatpush.bf16.msra.mxu0 0
    %2306 = vmatpush.bf16.msra.mxu0 0
    %2307 = vmatpush.bf16.msra.mxu0 %v2298
    %2308 = vmatpush.bf16.msra.mxu0 %v2296
    %2309 = vmatpush.bf16.msra.mxu0 %v2294
    %2310 = vmatpush.bf16.msra.mxu0 %v2292
    %2311 = vmatpush.bf16.msra.mxu0 %v2290
    %2312 = vmatmul.bf16.gmra.mxu0 %v2302
    %v2313 = vpop.f32.mrf.mxu0
    %v2314 = vadd.f32 0.0, %v2313
    %v2315 = vpop.f32.mrf.mxu0
    %v2316 = vadd.f32 0.0, %v2315
    %2317 = vdwg.mxu0
    %2318 = vmatpush.bf16.msra.mxu0 0
    %2319 = vmatpush.bf16.msra.mxu0 0
    %2320 = vmatpush.bf16.msra.mxu0 0
    %2321 = vmatpush.bf16.msra.mxu0 %v2299
    %2322 = vmatpush.bf16.msra.mxu0 %v2297
    %2323 = vmatpush.bf16.msra.mxu0 %v2295
    %2324 = vmatpush.bf16.msra.mxu0 %v2293
    %2325 = vmatpush.bf16.msra.mxu0 %v2291
    %2326 = vmatmul.bf16.gmra.mxu0 %v2302
    %v2327 = vpop.f32.mrf.mxu0
    %v2328 = vadd.f32 0.0, %v2327
    %v2329 = vpop.f32.mrf.mxu0
    %v2330 = vadd.f32 0.0, %v2329
    %2331 = vdwg.mxu0
    %v2332 = vadd.f32 %v2314, 0.0
    %v2333 = vadd.f32 %v2316, 0.0
    %v2334 = vadd.f32 %v2332, %v2328
    %v2335 = vadd.f32 %v2333, %v2330
    %v2336 = vmul.f32 %v2334, %v279
    %v2337 = vmul.f32 %v2335, %v279
    %v2338 = vsub.f32 %v2314, %v2336
    %v2339 = vsub.f32 %v2316, %v2337
    %v2340 = vmul.f32 %v2338, %v2338
    %v2341 = vmul.f32 %v2339, %v2339
    %v2342 = vadd.f32 %v2340, 0.0
    %v2343 = vadd.f32 %v2341, 0.0
    %v2344 = vsub.f32 %v2328, %v2336
    %v2345 = vsub.f32 %v2330, %v2337
    %v2346 = vmul.f32 %v2344, %v2344
    %v2347 = vmul.f32 %v2345, %v2345
    %v2348 = vadd.f32 %v2342, %v2346
    %v2349 = vadd.f32 %v2343, %v2347
    %v2350 = vmul.f32 %v2348, %v279
    %v2351 = vmul.f32 %v2349, %v279
    %v2352 = vadd.f32 %v2350, 1e-05
    %v2353 = vadd.f32 %v2351, 1e-05
    %v2354 = vrsqrt.pop %v2352
    %v2355 = vmul.f32 %v2354, %v2352
    %v2356 = vmul.f32 %v2355, %v2354
    %v2357 = vmul.f32 0.5, %v2356
    %v2358 = vsub.f32 1.5, %v2357
    %v2359 = vmul.f32 %v2354, %v2358
    %vm2360 = vweird.f32 %v2352
    %vm2361 = vweird.f32 %v2354
    %vm2362 = vmor %vm2360, %vm2361
    %v2363 = vsel %vm2362, %v2354, %v2359
    %v2364 = vrsqrt.pop %v2353
    %v2365 = vmul.f32 %v2364, %v2353
    %v2366 = vmul.f32 %v2365, %v2364
    %v2367 = vmul.f32 0.5, %v2366
    %v2368 = vsub.f32 1.5, %v2367
    %v2369 = vmul.f32 %v2364, %v2368
    %vm2370 = vweird.f32 %v2353
    %vm2371 = vweird.f32 %v2364
    %vm2372 = vmor %vm2370, %vm2371
    %v2373 = vsel %vm2372, %v2364, %v2369
    %v2374 = vld [vmem:[%s5] sm:$0xff]
    %v2375 = vld [vmem:[%s5 + $0x8] sm:$0xff]
    %v2376 = vld [vmem:[%s6] sm:$0xff]
    %v2377 = vld [vmem:[%s6 + $0x8] sm:$0xff]
    %v2378 = vmul.f32 %v2363, %v2374
    %v2379 = vmul.f32 %v2373, %v2375
    %v2380 = vmul.f32 %v2336, %v2378
    %v2381 = vmul.f32 %v2337, %v2379
    %v2382 = vsub.f32 %v2376, %v2380
    %v2383 = vsub.f32 %v2377, %v2381
    %v2384 = vmul.f32 %v2314, %v2378
    %v2385 = vmul.f32 %v2328, %v2378
    %v2386 = vmul.f32 %v2316, %v2379
    %v2387 = vmul.f32 %v2330, %v2379
    %v2388 = vadd.f32 %v2384, %v2382
    %v2389 = vadd.f32 %v2385, %v2382
    %v2390 = vadd.f32 %v2386, %v2383
    %v2391 = vadd.f32 %v2387, %v2383
    %vm2392 = vcmp.ge.f32.partialorder %v2388, 0.0
    %vm2393 = vcmp.ge.f32.partialorder %v2389, 0.0
    %vm2394 = vcmp.ge.f32.partialorder %v2390, 0.0
    %vm2395 = vcmp.ge.f32.partialorder %v2391, 0.0
    %v2396 = vstv %s2194
    %v2397 = vmul.f32 %v2396, %v2388
    %v2398 = vmul.f32 %v2396, %v2389
    %v2399 = vmul.f32 %v2396, %v2390
    %v2400 = vmul.f32 %v2396, %v2391
    %v2401 = vsel %vm2392, %v2388, %v2397
    %v2402 = vsel %vm2393, %v2389, %v2398
    %v2403 = vsel %vm2394, %v2390, %v2399
    %v2404 = vsel %vm2395, %v2391, %v2400
    %2405 = vst [vmem:[#allocation3 + $0x40] sm:$0xff] %v2401
    %2406 = vst [vmem:[#allocation3 + $0x48] sm:$0xff] %v2402
    %2407 = vst [vmem:[#allocation3 + $0x50] sm:$0xff] %v2403
    %2408 = vst [vmem:[#allocation3 + $0x58] sm:$0xff] %v2404
    %v2409 = vld [vmem:[#allocation2 + $0x20] sm:$0xff]
    %v2410 = vld [vmem:[#allocation2 + $0x28] sm:$0xff]
    %v2411 = vld [vmem:[#allocation2 + $0x30] sm:$0xff]
    %v2412 = vld [vmem:[#allocation2 + $0x38] sm:$0xff]
    %v2413 = vld [vmem:[#allocation2 + $0x40] sm:$0xff]
    %v2414 = vld [vmem:[#allocation2 + $0x48] sm:$0xff]
    %v2415 = vld [vmem:[#allocation2 + $0x50] sm:$0xff]
    %v2416 = vld [vmem:[#allocation2 + $0x58] sm:$0xff]
    %v2417 = vld [vmem:[#allocation2 + $0x60] sm:$0xff]
    %v2418 = vld [vmem:[#allocation2 + $0x68] sm:$0xff]
    %2419 = vst [vmem:[#allocation4] sm:$0xff] %v2409
    %2420 = vst [vmem:[#allocation4 + $0x8] sm:$0xff] %v2410
    %2421 = vst [vmem:[#allocation4 + $0x10] sm:$0xff] %v2411
    %2422 = vst [vmem:[#allocation4 + $0x18] sm:$0xff] %v2412
    %2423 = vst [vmem:[#allocation4 + $0x20] sm:$0xff] %v2413
    %2424 = vst [vmem:[#allocation4 + $0x28] sm:$0xff] %v2414
    %2425 = vst [vmem:[#allocation4 + $0x30] sm:$0xff] %v2415
    %2426 = vst [vmem:[#allocation4 + $0x38] sm:$0xff] %v2416
    %2427 = vst [vmem:[#allocation4 + $0x40] sm:$0xff] %v2417
    %2428 = vst [vmem:[#allocation4 + $0x48] sm:$0xff] %v2418
    %2439 = vrot.lane.b32.xlu0 %v2409, 127
    %v2440 = vpop.permute.xlu0 %2439
    %2441 = vrot.lane.b32.xlu0 %v2410, 127
    %v2442 = vpop.permute.xlu0 %2441
    %2443 = vrot.lane.b32.xlu0 %v2411, 127
    %v2444 = vpop.permute.xlu0 %2443
    %2445 = vrot.lane.b32.xlu0 %v2412, 127
    %v2446 = vpop.permute.xlu0 %2445
    %2447 = vrot.lane.b32.xlu0 %v2413, 127
    %v2448 = vpop.permute.xlu0 %2447
    %2449 = vrot.lane.b32.xlu0 %v2414, 127
    %v2450 = vpop.permute.xlu0 %2449
    %2451 = vrot.lane.b32.xlu0 %v2415, 127
    %v2452 = vpop.permute.xlu0 %2451
    %2453 = vrot.lane.b32.xlu0 %v2416, 127
    %v2454 = vpop.permute.xlu0 %2453
    %2455 = vrot.lane.b32.xlu0 %v2417, 127
    %v2456 = vpop.permute.xlu0 %2455
    %2457 = vrot.lane.b32.xlu0 %v2418, 127
    %v2458 = vpop.permute.xlu0 %2457
    %v2459 = vsel %vm216, %v2440, %v2442
    %v2460 = vsel %vm216, %v2444, %v2446
    %v2461 = vsel %vm216, %v2448, %v2450
    %v2462 = vsel %vm216, %v2452, %v2454
    %v2463 = vsel %vm216, %v2456, %v2458
    %2474 = vst [vmem:[#allocation4 + $0x50] sm:$0xff] %v2459
    %2475 = vst.msk [vmem:[#allocation4 + $0x58] sm:$0xff] %vm216, %v2442
    %2476 = vst [vmem:[#allocation4 + $0x60] sm:$0xff] %v2460
    %2477 = vst.msk [vmem:[#allocation4 + $0x68] sm:$0xff] %vm216, %v2446
    %2478 = vst [vmem:[#allocation4 + $0x70] sm:$0xff] %v2461
    %2479 = vst.msk [vmem:[#allocation4 + $0x78] sm:$0xff] %vm216, %v2450
    %2480 = vst [vmem:[#allocation4 + $0x80] sm:$0xff] %v2462
    %2481 = vst.msk [vmem:[#allocation4 + $0x88] sm:$0xff] %vm216, %v2454
    %2482 = vst [vmem:[#allocation4 + $0x90] sm:$0xff] %v2463
    %2483 = vst.msk [vmem:[#allocation4 + $0x98] sm:$0xff] %vm216, %v2458
    %v2484 = vld [vmem:[#allocation4] sm:$0xff]
    %v2485 = vld [vmem:[#allocation4 + $0x8] sm:$0xff]
    %v2486 = vld [vmem:[#allocation4 + $0x10] sm:$0xff]
    %v2487 = vld [vmem:[#allocation4 + $0x18] sm:$0xff]
    %v2488 = vld [vmem:[#allocation4 + $0x20] sm:$0xff]
    %v2489 = vld [vmem:[#allocation4 + $0x28] sm:$0xff]
    %v2490 = vld [vmem:[#allocation4 + $0x30] sm:$0xff]
    %v2491 = vld [vmem:[#allocation4 + $0x38] sm:$0xff]
    %v2492 = vld [vmem:[#allocation4 + $0x40] sm:$0xff]
    %v2493 = vld [vmem:[#allocation4 + $0x48] sm:$0xff]
    %v2494 = vld [vmem:[#allocation4 + $0x50] sm:$0xff]
    %v2495 = vld [vmem:[#allocation4 + $0x58] sm:$0xff]
    %v2496 = vld [vmem:[#allocation4 + $0x60] sm:$0xff]
    %v2497 = vld [vmem:[#allocation4 + $0x68] sm:$0xff]
    %v2498 = vld [vmem:[#allocation4 + $0x70] sm:$0xff]
    %v2499 = vld [vmem:[#allocation4 + $0x78] sm:$0xff]
    %v2500 = vld [vmem:[#allocation4 + $0x80] sm:$0xff]
    %v2501 = vld [vmem:[#allocation4 + $0x88] sm:$0xff]
    %v2502 = vld [vmem:[#allocation4 + $0x90] sm:$0xff]
    %v2503 = vld [vmem:[#allocation4 + $0x98] sm:$0xff]
    %v2504 = vpack.c.bf16 %v2486, %v2484
    %v2505 = vpack.c.bf16 %v2487, %v2485
    %v2506 = vpack.c.bf16 %v2490, %v2488
    %v2507 = vpack.c.bf16 %v2491, %v2489
    %v2508 = vpack.c.bf16 %v2494, %v2492
    %v2509 = vpack.c.bf16 %v2495, %v2493
    %v2510 = vpack.c.bf16 %v2498, %v2496
    %v2511 = vpack.c.bf16 %v2499, %v2497
    %v2512 = vpack.c.bf16 %v2502, %v2500
    %v2513 = vpack.c.bf16 %v2503, %v2501
    %2514 = vmatpush.bf16.msra.mxu0 0
    %2515 = vmatpush.bf16.msra.mxu0 0
    %2516 = vmatpush.bf16.msra.mxu0 0
    %2517 = vmatpush.bf16.msra.mxu0 %v2512
    %2518 = vmatpush.bf16.msra.mxu0 %v2510
    %2519 = vmatpush.bf16.msra.mxu0 %v2508
    %2520 = vmatpush.bf16.msra.mxu0 %v2506
    %2521 = vmatpush.bf16.msra.mxu0 %v2504
    %2522 = vmatmul.bf16.gmra.mxu0 %v2302
    %v2523 = vpop.f32.mrf.mxu0
    %v2524 = vadd.f32 0.0, %v2523
    %v2525 = vpop.f32.mrf.mxu0
    %v2526 = vadd.f32 0.0, %v2525
    %2527 = vdwg.mxu0
    %2528 = vmatpush.bf16.msra.mxu0 0
    %2529 = vmatpush.bf16.msra.mxu0 0
    %2530 = vmatpush.bf16.msra.mxu0 0
    %2531 = vmatpush.bf16.msra.mxu0 %v2513
    %2532 = vmatpush.bf16.msra.mxu0 %v2511
    %2533 = vmatpush.bf16.msra.mxu0 %v2509
    %2534 = vmatpush.bf16.msra.mxu0 %v2507
    %2535 = vmatpush.bf16.msra.mxu0 %v2505
    %2536 = vmatmul.bf16.gmra.mxu0 %v2302
    %v2537 = vpop.f32.mrf.mxu0
    %v2538 = vadd.f32 0.0, %v2537
    %v2539 = vpop.f32.mrf.mxu0
    %v2540 = vadd.f32 0.0, %v2539
    %2541 = vdwg.mxu0
    %v2542 = vadd.f32 %v2524, 0.0
    %v2543 = vadd.f32 %v2526, 0.0
    %v2544 = vadd.f32 %v2542, %v2538
    %v2545 = vadd.f32 %v2543, %v2540
    %v2546 = vmul.f32 %v2544, %v279
    %v2547 = vmul.f32 %v2545, %v279
    %v2548 = vsub.f32 %v2524, %v2546
    %v2549 = vsub.f32 %v2526, %v2547
    %v2550 = vmul.f32 %v2548, %v2548
    %v2551 = vmul.f32 %v2549, %v2549
    %v2552 = vadd.f32 %v2550, 0.0
    %v2553 = vadd.f32 %v2551, 0.0
    %v2554 = vsub.f32 %v2538, %v2546
    %v2555 = vsub.f32 %v2540, %v2547
    %v2556 = vmul.f32 %v2554, %v2554
    %v2557 = vmul.f32 %v2555, %v2555
    %v2558 = vadd.f32 %v2552, %v2556
    %v2559 = vadd.f32 %v2553, %v2557
    %v2560 = vmul.f32 %v2558, %v279
    %v2561 = vmul.f32 %v2559, %v279
    %v2562 = vadd.f32 %v2560, 1e-05
    %v2563 = vadd.f32 %v2561, 1e-05
    %v2564 = vrsqrt.pop %v2562
    %v2565 = vmul.f32 %v2564, %v2562
    %v2566 = vmul.f32 %v2565, %v2564
    %v2567 = vmul.f32 0.5, %v2566
    %v2568 = vsub.f32 1.5, %v2567
    %v2569 = vmul.f32 %v2564, %v2568
    %vm2570 = vweird.f32 %v2562
    %vm2571 = vweird.f32 %v2564
    %vm2572 = vmor %vm2570, %vm2571
    %v2573 = vsel %vm2572, %v2564, %v2569
    %v2574 = vrsqrt.pop %v2563
    %v2575 = vmul.f32 %v2574, %v2563
    %v2576 = vmul.f32 %v2575, %v2574
    %v2577 = vmul.f32 0.5, %v2576
    %v2578 = vsub.f32 1.5, %v2577
    %v2579 = vmul.f32 %v2574, %v2578
    %vm2580 = vweird.f32 %v2563
    %vm2581 = vweird.f32 %v2574
    %vm2582 = vmor %vm2580, %vm2581
    %v2583 = vsel %vm2582, %v2574, %v2579
    %v2584 = vld [vmem:[%s5 + $0x10] sm:$0xff]
    %v2585 = vld [vmem:[%s5 + $0x18] sm:$0xff]
    %v2586 = vld [vmem:[%s6 + $0x10] sm:$0xff]
    %v2587 = vld [vmem:[%s6 + $0x18] sm:$0xff]
    %v2588 = vmul.f32 %v2573, %v2584
    %v2589 = vmul.f32 %v2583, %v2585
    %v2590 = vmul.f32 %v2546, %v2588
    %v2591 = vmul.f32 %v2547, %v2589
    %v2592 = vsub.f32 %v2586, %v2590
    %v2593 = vsub.f32 %v2587, %v2591
    %v2594 = vmul.f32 %v2524, %v2588
    %v2595 = vmul.f32 %v2538, %v2588
    %v2596 = vmul.f32 %v2526, %v2589
    %v2597 = vmul.f32 %v2540, %v2589
    %v2598 = vadd.f32 %v2594, %v2592
    %v2599 = vadd.f32 %v2595, %v2592
    %v2600 = vadd.f32 %v2596, %v2593
    %v2601 = vadd.f32 %v2597, %v2593
    %vm2602 = vcmp.ge.f32.partialorder %v2598, 0.0
    %vm2603 = vcmp.ge.f32.partialorder %v2599, 0.0
    %vm2604 = vcmp.ge.f32.partialorder %v2600, 0.0
    %vm2605 = vcmp.ge.f32.partialorder %v2601, 0.0
    %v2606 = vmul.f32 %v2396, %v2598
    %v2607 = vmul.f32 %v2396, %v2599
    %v2608 = vmul.f32 %v2396, %v2600
    %v2609 = vmul.f32 %v2396, %v2601
    %v2610 = vsel %vm2602, %v2598, %v2606
    %v2611 = vsel %vm2603, %v2599, %v2607
    %v2612 = vsel %vm2604, %v2600, %v2608
    %v2613 = vsel %vm2605, %v2601, %v2609
    %2614 = vst [vmem:[#allocation3 + $0x60] sm:$0xff] %v2610
    %2615 = vst [vmem:[#allocation3 + $0x68] sm:$0xff] %v2611
    %2616 = vst [vmem:[#allocation3 + $0x70] sm:$0xff] %v2612
    %2617 = vst [vmem:[#allocation3 + $0x78] sm:$0xff] %v2613
    %v2618 = vld [vmem:[#allocation2 + $0x40] sm:$0xff]
    %v2619 = vld [vmem:[#allocation2 + $0x48] sm:$0xff]
    %v2620 = vld [vmem:[#allocation2 + $0x50] sm:$0xff]
    %v2621 = vld [vmem:[#allocation2 + $0x58] sm:$0xff]
    %v2622 = vld [vmem:[#allocation2 + $0x60] sm:$0xff]
    %v2623 = vld [vmem:[#allocation2 + $0x68] sm:$0xff]
    %v2624 = vld [vmem:[#allocation2 + $0x70] sm:$0xff]
    %v2625 = vld [vmem:[#allocation2 + $0x78] sm:$0xff]
    %v2626 = vld [vmem:[#allocation2 + $0x80] sm:$0xff]
    %v2627 = vld [vmem:[#allocation2 + $0x88] sm:$0xff]
    %2628 = vst [vmem:[#allocation4] sm:$0xff] %v2618
    %2629 = vst [vmem:[#allocation4 + $0x8] sm:$0xff] %v2619
    %2630 = vst [vmem:[#allocation4 + $0x10] sm:$0xff] %v2620
    %2631 = vst [vmem:[#allocation4 + $0x18] sm:$0xff] %v2621
    %2632 = vst [vmem:[#allocation4 + $0x20] sm:$0xff] %v2622
    %2633 = vst [vmem:[#allocation4 + $0x28] sm:$0xff] %v2623
    %2634 = vst [vmem:[#allocation4 + $0x30] sm:$0xff] %v2624
    %2635 = vst [vmem:[#allocation4 + $0x38] sm:$0xff] %v2625
    %2636 = vst [vmem:[#allocation4 + $0x40] sm:$0xff] %v2626
    %2637 = vst [vmem:[#allocation4 + $0x48] sm:$0xff] %v2627
    %2648 = vrot.lane.b32.xlu0 %v2618, 127
    %v2649 = vpop.permute.xlu0 %2648
    %2650 = vrot.lane.b32.xlu0 %v2619, 127
    %v2651 = vpop.permute.xlu0 %2650
    %2652 = vrot.lane.b32.xlu0 %v2620, 127
    %v2653 = vpop.permute.xlu0 %2652
    %2654 = vrot.lane.b32.xlu0 %v2621, 127
    %v2655 = vpop.permute.xlu0 %2654
    %2656 = vrot.lane.b32.xlu0 %v2622, 127
    %v2657 = vpop.permute.xlu0 %2656
    %2658 = vrot.lane.b32.xlu0 %v2623, 127
    %v2659 = vpop.permute.xlu0 %2658
    %2660 = vrot.lane.b32.xlu0 %v2624, 127
    %v2661 = vpop.permute.xlu0 %2660
    %2662 = vrot.lane.b32.xlu0 %v2625, 127
    %v2663 = vpop.permute.xlu0 %2662
    %2664 = vrot.lane.b32.xlu0 %v2626, 127
    %v2665 = vpop.permute.xlu0 %2664
    %2666 = vrot.lane.b32.xlu0 %v2627, 127
    %v2667 = vpop.permute.xlu0 %2666
    %v2668 = vsel %vm216, %v2649, %v2651
    %v2669 = vsel %vm216, %v2653, %v2655
    %v2670 = vsel %vm216, %v2657, %v2659
    %v2671 = vsel %vm216, %v2661, %v2663
    %v2672 = vsel %vm216, %v2665, %v2667
    %2683 = vst [vmem:[#allocation4 + $0x50] sm:$0xff] %v2668
    %2684 = vst.msk [vmem:[#allocation4 + $0x58] sm:$0xff] %vm216, %v2651
    %2685 = vst [vmem:[#allocation4 + $0x60] sm:$0xff] %v2669
    %2686 = vst.msk [vmem:[#allocation4 + $0x68] sm:$0xff] %vm216, %v2655
    %2687 = vst [vmem:[#allocation4 + $0x70] sm:$0xff] %v2670
    %2688 = vst.msk [vmem:[#allocation4 + $0x78] sm:$0xff] %vm216, %v2659
    %2689 = vst [vmem:[#allocation4 + $0x80] sm:$0xff] %v2671
    %2690 = vst.msk [vmem:[#allocation4 + $0x88] sm:$0xff] %vm216, %v2663
    %2691 = vst [vmem:[#allocation4 + $0x90] sm:$0xff] %v2672
    %2692 = vst.msk [vmem:[#allocation4 + $0x98] sm:$0xff] %vm216, %v2667
    %v2693 = vld [vmem:[#allocation4] sm:$0xff]
    %v2694 = vld [vmem:[#allocation4 + $0x8] sm:$0xff]
    %v2695 = vld [vmem:[#allocation4 + $0x10] sm:$0xff]
    %v2696 = vld [vmem:[#allocation4 + $0x18] sm:$0xff]
    %v2697 = vld [vmem:[#allocation4 + $0x20] sm:$0xff]
    %v2698 = vld [vmem:[#allocation4 + $0x28] sm:$0xff]
    %v2699 = vld [vmem:[#allocation4 + $0x30] sm:$0xff]
    %v2700 = vld [vmem:[#allocation4 + $0x38] sm:$0xff]
    %v2701 = vld [vmem:[#allocation4 + $0x40] sm:$0xff]
    %v2702 = vld [vmem:[#allocation4 + $0x48] sm:$0xff]
    %v2703 = vld [vmem:[#allocation4 + $0x50] sm:$0xff]
    %v2704 = vld [vmem:[#allocation4 + $0x58] sm:$0xff]
    %v2705 = vld [vmem:[#allocation4 + $0x60] sm:$0xff]
    %v2706 = vld [vmem:[#allocation4 + $0x68] sm:$0xff]
    %v2707 = vld [vmem:[#allocation4 + $0x70] sm:$0xff]
    %v2708 = vld [vmem:[#allocation4 + $0x78] sm:$0xff]
    %v2709 = vld [vmem:[#allocation4 + $0x80] sm:$0xff]
    %v2710 = vld [vmem:[#allocation4 + $0x88] sm:$0xff]
    %v2711 = vld [vmem:[#allocation4 + $0x90] sm:$0xff]
    %v2712 = vld [vmem:[#allocation4 + $0x98] sm:$0xff]
    %v2713 = vpack.c.bf16 %v2695, %v2693
    %v2714 = vpack.c.bf16 %v2696, %v2694
    %v2715 = vpack.c.bf16 %v2699, %v2697
    %v2716 = vpack.c.bf16 %v2700, %v2698
    %v2717 = vpack.c.bf16 %v2703, %v2701
    %v2718 = vpack.c.bf16 %v2704, %v2702
    %v2719 = vpack.c.bf16 %v2707, %v2705
    %v2720 = vpack.c.bf16 %v2708, %v2706
    %v2721 = vpack.c.bf16 %v2711, %v2709
    %v2722 = vpack.c.bf16 %v2712, %v2710
    %2723 = vmatpush.bf16.msra.mxu0 0
    %2724 = vmatpush.bf16.msra.mxu0 0
    %2725 = vmatpush.bf16.msra.mxu0 0
    %2726 = vmatpush.bf16.msra.mxu0 %v2721
    %2727 = vmatpush.bf16.msra.mxu0 %v2719
    %2728 = vmatpush.bf16.msra.mxu0 %v2717
    %2729 = vmatpush.bf16.msra.mxu0 %v2715
    %2730 = vmatpush.bf16.msra.mxu0 %v2713
    %2731 = vmatmul.bf16.gmra.mxu0 %v2302
    %v2732 = vpop.f32.mrf.mxu0
    %v2733 = vadd.f32 0.0, %v2732
    %v2734 = vpop.f32.mrf.mxu0
    %v2735 = vadd.f32 0.0, %v2734
    %2736 = vdwg.mxu0
    %2737 = vmatpush.bf16.msra.mxu0 0
    %2738 = vmatpush.bf16.msra.mxu0 0
    %2739 = vmatpush.bf16.msra.mxu0 0
    %2740 = vmatpush.bf16.msra.mxu0 %v2722
    %2741 = vmatpush.bf16.msra.mxu0 %v2720
    %2742 = vmatpush.bf16.msra.mxu0 %v2718
    %2743 = vmatpush.bf16.msra.mxu0 %v2716
    %2744 = vmatpush.bf16.msra.mxu0 %v2714
    %2745 = vmatmul.bf16.gmra.mxu0 %v2302
    %v2746 = vpop.f32.mrf.mxu0
    %v2747 = vadd.f32 0.0, %v2746
    %v2748 = vpop.f32.mrf.mxu0
    %v2749 = vadd.f32 0.0, %v2748
    %2750 = vdwg.mxu0
    %v2751 = vadd.f32 %v2733, 0.0
    %v2752 = vadd.f32 %v2735, 0.0
    %v2753 = vadd.f32 %v2751, %v2747
    %v2754 = vadd.f32 %v2752, %v2749
    %v2755 = vmul.f32 %v2753, %v279
    %v2756 = vmul.f32 %v2754, %v279
    %v2757 = vsub.f32 %v2733, %v2755
    %v2758 = vsub.f32 %v2735, %v2756
    %v2759 = vmul.f32 %v2757, %v2757
    %v2760 = vmul.f32 %v2758, %v2758
    %v2761 = vadd.f32 %v2759, 0.0
    %v2762 = vadd.f32 %v2760, 0.0
    %v2763 = vsub.f32 %v2747, %v2755
    %v2764 = vsub.f32 %v2749, %v2756
    %v2765 = vmul.f32 %v2763, %v2763
    %v2766 = vmul.f32 %v2764, %v2764
    %v2767 = vadd.f32 %v2761, %v2765
    %v2768 = vadd.f32 %v2762, %v2766
    %v2769 = vmul.f32 %v2767, %v279
    %v2770 = vmul.f32 %v2768, %v279
    %v2771 = vadd.f32 %v2769, 1e-05
    %v2772 = vadd.f32 %v2770, 1e-05
    %v2773 = vrsqrt.pop %v2771
    %v2774 = vmul.f32 %v2773, %v2771
    %v2775 = vmul.f32 %v2774, %v2773
    %v2776 = vmul.f32 0.5, %v2775
    %v2777 = vsub.f32 1.5, %v2776
    %v2778 = vmul.f32 %v2773, %v2777
    %vm2779 = vweird.f32 %v2771
    %vm2780 = vweird.f32 %v2773
    %vm2781 = vmor %vm2779, %vm2780
    %v2782 = vsel %vm2781, %v2773, %v2778
    %v2783 = vrsqrt.pop %v2772
    %v2784 = vmul.f32 %v2783, %v2772
    %v2785 = vmul.f32 %v2784, %v2783
    %v2786 = vmul.f32 0.5, %v2785
    %v2787 = vsub.f32 1.5, %v2786
    %v2788 = vmul.f32 %v2783, %v2787
    %vm2789 = vweird.f32 %v2772
    %vm2790 = vweird.f32 %v2783
    %vm2791 = vmor %vm2789, %vm2790
    %v2792 = vsel %vm2791, %v2783, %v2788
    %v2793 = vld [vmem:[%s5 + $0x20] sm:$0xff]
    %v2794 = vld [vmem:[%s5 + $0x28] sm:$0xff]
    %v2795 = vld [vmem:[%s6 + $0x20] sm:$0xff]
    %v2796 = vld [vmem:[%s6 + $0x28] sm:$0xff]
    %v2797 = vmul.f32 %v2782, %v2793
    %v2798 = vmul.f32 %v2792, %v2794
    %v2799 = vmul.f32 %v2755, %v2797
    %v2800 = vmul.f32 %v2756, %v2798
    %v2801 = vsub.f32 %v2795, %v2799
    %v2802 = vsub.f32 %v2796, %v2800
    %v2803 = vmul.f32 %v2733, %v2797
    %v2804 = vmul.f32 %v2747, %v2797
    %v2805 = vmul.f32 %v2735, %v2798
    %v2806 = vmul.f32 %v2749, %v2798
    %v2807 = vadd.f32 %v2803, %v2801
    %v2808 = vadd.f32 %v2804, %v2801
    %v2809 = vadd.f32 %v2805, %v2802
    %v2810 = vadd.f32 %v2806, %v2802
    %vm2811 = vcmp.ge.f32.partialorder %v2807, 0.0
    %vm2812 = vcmp.ge.f32.partialorder %v2808, 0.0
    %vm2813 = vcmp.ge.f32.partialorder %v2809, 0.0
    %vm2814 = vcmp.ge.f32.partialorder %v2810, 0.0
    %v2815 = vmul.f32 %v2396, %v2807
    %v2816 = vmul.f32 %v2396, %v2808
    %v2817 = vmul.f32 %v2396, %v2809
    %v2818 = vmul.f32 %v2396, %v2810
    %v2819 = vsel %vm2811, %v2807, %v2815
    %v2820 = vsel %vm2812, %v2808, %v2816
    %v2821 = vsel %vm2813, %v2809, %v2817
    %v2822 = vsel %vm2814, %v2810, %v2818
    %2823 = vst [vmem:[#allocation3 + $0x80] sm:$0xff] %v2819
    %2824 = vst [vmem:[#allocation3 + $0x88] sm:$0xff] %v2820
    %2825 = vst [vmem:[#allocation3 + $0x90] sm:$0xff] %v2821
    %2826 = vst [vmem:[#allocation3 + $0x98] sm:$0xff] %v2822
    %v2827 = vld [vmem:[#allocation2 + $0x60] sm:$0xff]
    %v2828 = vld [vmem:[#allocation2 + $0x68] sm:$0xff]
    %v2829 = vld [vmem:[#allocation2 + $0x70] sm:$0xff]
    %v2830 = vld [vmem:[#allocation2 + $0x78] sm:$0xff]
    %v2831 = vld [vmem:[#allocation2 + $0x80] sm:$0xff]
    %v2832 = vld [vmem:[#allocation2 + $0x88] sm:$0xff]
    %v2833 = vld [vmem:[#allocation2 + $0x90] sm:$0xff]
    %v2834 = vld [vmem:[#allocation2 + $0x98] sm:$0xff]
    %v2835 = vld [vmem:[#allocation2 + $0xa0] sm:$0xff]
    %v2836 = vld [vmem:[#allocation2 + $0xa8] sm:$0xff]
    %2837 = vst [vmem:[#allocation4] sm:$0xff] %v2827
    %2838 = vst [vmem:[#allocation4 + $0x8] sm:$0xff] %v2828
    %2839 = vst [vmem:[#allocation4 + $0x10] sm:$0xff] %v2829
    %2840 = vst [vmem:[#allocation4 + $0x18] sm:$0xff] %v2830
    %2841 = vst [vmem:[#allocation4 + $0x20] sm:$0xff] %v2831
    %2842 = vst [vmem:[#allocation4 + $0x28] sm:$0xff] %v2832
    %2843 = vst [vmem:[#allocation4 + $0x30] sm:$0xff] %v2833
    %2844 = vst [vmem:[#allocation4 + $0x38] sm:$0xff] %v2834
    %2845 = vst [vmem:[#allocation4 + $0x40] sm:$0xff] %v2835
    %2846 = vst [vmem:[#allocation4 + $0x48] sm:$0xff] %v2836
    %2857 = vrot.lane.b32.xlu0 %v2827, 127
    %v2858 = vpop.permute.xlu0 %2857
    %2859 = vrot.lane.b32.xlu0 %v2828, 127
    %v2860 = vpop.permute.xlu0 %2859
    %2861 = vrot.lane.b32.xlu0 %v2829, 127
    %v2862 = vpop.permute.xlu0 %2861
    %2863 = vrot.lane.b32.xlu0 %v2830, 127
    %v2864 = vpop.permute.xlu0 %2863
    %2865 = vrot.lane.b32.xlu0 %v2831, 127
    %v2866 = vpop.permute.xlu0 %2865
    %2867 = vrot.lane.b32.xlu0 %v2832, 127
    %v2868 = vpop.permute.xlu0 %2867
    %2869 = vrot.lane.b32.xlu0 %v2833, 127
    %v2870 = vpop.permute.xlu0 %2869
    %2871 = vrot.lane.b32.xlu0 %v2834, 127
    %v2872 = vpop.permute.xlu0 %2871
    %2873 = vrot.lane.b32.xlu0 %v2835, 127
    %v2874 = vpop.permute.xlu0 %2873
    %2875 = vrot.lane.b32.xlu0 %v2836, 127
    %v2876 = vpop.permute.xlu0 %2875
    %v2877 = vsel %vm216, %v2858, %v2860
    %v2878 = vsel %vm216, %v2862, %v2864
    %v2879 = vsel %vm216, %v2866, %v2868
    %v2880 = vsel %vm216, %v2870, %v2872
    %v2881 = vsel %vm216, %v2874, %v2876
    %2892 = vst [vmem:[#allocation4 + $0x50] sm:$0xff] %v2877
    %2893 = vst.msk [vmem:[#allocation4 + $0x58] sm:$0xff] %vm216, %v2860
    %2894 = vst [vmem:[#allocation4 + $0x60] sm:$0xff] %v2878
    %2895 = vst.msk [vmem:[#allocation4 + $0x68] sm:$0xff] %vm216, %v2864
    %2896 = vst [vmem:[#allocation4 + $0x70] sm:$0xff] %v2879
    %2897 = vst.msk [vmem:[#allocation4 + $0x78] sm:$0xff] %vm216, %v2868
    %2898 = vst [vmem:[#allocation4 + $0x80] sm:$0xff] %v2880
    %2899 = vst.msk [vmem:[#allocation4 + $0x88] sm:$0xff] %vm216, %v2872
    %2900 = vst [vmem:[#allocation4 + $0x90] sm:$0xff] %v2881
    %2901 = vst.msk [vmem:[#allocation4 + $0x98] sm:$0xff] %vm216, %v2876
    %v2902 = vld [vmem:[#allocation4] sm:$0xff]
    %v2903 = vld [vmem:[#allocation4 + $0x8] sm:$0xff]
    %v2904 = vld [vmem:[#allocation4 + $0x10] sm:$0xff]
    %v2905 = vld [vmem:[#allocation4 + $0x18] sm:$0xff]
    %v2906 = vld [vmem:[#allocation4 + $0x20] sm:$0xff]
    %v2907 = vld [vmem:[#allocation4 + $0x28] sm:$0xff]
    %v2908 = vld [vmem:[#allocation4 + $0x30] sm:$0xff]
    %v2909 = vld [vmem:[#allocation4 + $0x38] sm:$0xff]
    %v2910 = vld [vmem:[#allocation4 + $0x40] sm:$0xff]
    %v2911 = vld [vmem:[#allocation4 + $0x48] sm:$0xff]
    %v2912 = vld [vmem:[#allocation4 + $0x50] sm:$0xff]
    %v2913 = vld [vmem:[#allocation4 + $0x58] sm:$0xff]
    %v2914 = vld [vmem:[#allocation4 + $0x60] sm:$0xff]
    %v2915 = vld [vmem:[#allocation4 + $0x68] sm:$0xff]
    %v2916 = vld [vmem:[#allocation4 + $0x70] sm:$0xff]
    %v2917 = vld [vmem:[#allocation4 + $0x78] sm:$0xff]
    %v2918 = vld [vmem:[#allocation4 + $0x80] sm:$0xff]
    %v2919 = vld [vmem:[#allocation4 + $0x88] sm:$0xff]
    %v2920 = vld [vmem:[#allocation4 + $0x90] sm:$0xff]
    %v2921 = vld [vmem:[#allocation4 + $0x98] sm:$0xff]
    %v2922 = vpack.c.bf16 %v2904, %v2902
    %v2923 = vpack.c.bf16 %v2905, %v2903
    %v2924 = vpack.c.bf16 %v2908, %v2906
    %v2925 = vpack.c.bf16 %v2909, %v2907
    %v2926 = vpack.c.bf16 %v2912, %v2910
    %v2927 = vpack.c.bf16 %v2913, %v2911
    %v2928 = vpack.c.bf16 %v2916, %v2914
    %v2929 = vpack.c.bf16 %v2917, %v2915
    %v2930 = vpack.c.bf16 %v2920, %v2918
    %v2931 = vpack.c.bf16 %v2921, %v2919
    %2932 = vmatpush.bf16.msra.mxu0 0
    %2933 = vmatpush.bf16.msra.mxu0 0
    %2934 = vmatpush.bf16.msra.mxu0 0
    %2935 = vmatpush.bf16.msra.mxu0 %v2930
    %2936 = vmatpush.bf16.msra.mxu0 %v2928
    %2937 = vmatpush.bf16.msra.mxu0 %v2926
    %2938 = vmatpush.bf16.msra.mxu0 %v2924
    %2939 = vmatpush.bf16.msra.mxu0 %v2922
    %2940 = vmatmul.bf16.gmra.mxu0 %v2302
    %v2941 = vpop.f32.mrf.mxu0
    %v2942 = vadd.f32 0.0, %v2941
    %v2943 = vpop.f32.mrf.mxu0
    %v2944 = vadd.f32 0.0, %v2943
    %2945 = vdwg.mxu0
    %2946 = vmatpush.bf16.msra.mxu0 0
    %2947 = vmatpush.bf16.msra.mxu0 0
    %2948 = vmatpush.bf16.msra.mxu0 0
    %2949 = vmatpush.bf16.msra.mxu0 %v2931
    %2950 = vmatpush.bf16.msra.mxu0 %v2929
    %2951 = vmatpush.bf16.msra.mxu0 %v2927
    %2952 = vmatpush.bf16.msra.mxu0 %v2925
    %2953 = vmatpush.bf16.msra.mxu0 %v2923
    %2954 = vmatmul.bf16.gmra.mxu0 %v2302
    %v2955 = vpop.f32.mrf.mxu0
    %v2956 = vadd.f32 0.0, %v2955
    %v2957 = vpop.f32.mrf.mxu0
    %v2958 = vadd.f32 0.0, %v2957
    %2959 = vdwg.mxu0
    %v2960 = vadd.f32 %v2942, 0.0
    %v2961 = vadd.f32 %v2944, 0.0
    %v2962 = vadd.f32 %v2960, %v2956
    %v2963 = vadd.f32 %v2961, %v2958
    %v2964 = vmul.f32 %v2962, %v279
    %v2965 = vmul.f32 %v2963, %v279
    %v2966 = vsub.f32 %v2942, %v2964
    %v2967 = vsub.f32 %v2944, %v2965
    %v2968 = vmul.f32 %v2966, %v2966
    %v2969 = vmul.f32 %v2967, %v2967
    %v2970 = vadd.f32 %v2968, 0.0
    %v2971 = vadd.f32 %v2969, 0.0
    %v2972 = vsub.f32 %v2956, %v2964
    %v2973 = vsub.f32 %v2958, %v2965
    %v2974 = vmul.f32 %v2972, %v2972
    %v2975 = vmul.f32 %v2973, %v2973
    %v2976 = vadd.f32 %v2970, %v2974
    %v2977 = vadd.f32 %v2971, %v2975
    %v2978 = vmul.f32 %v2976, %v279
    %v2979 = vmul.f32 %v2977, %v279
    %v2980 = vadd.f32 %v2978, 1e-05
    %v2981 = vadd.f32 %v2979, 1e-05
    %v2982 = vrsqrt.pop %v2980
    %v2983 = vmul.f32 %v2982, %v2980
    %v2984 = vmul.f32 %v2983, %v2982
    %v2985 = vmul.f32 0.5, %v2984
    %v2986 = vsub.f32 1.5, %v2985
    %v2987 = vmul.f32 %v2982, %v2986
    %vm2988 = vweird.f32 %v2980
    %vm2989 = vweird.f32 %v2982
    %vm2990 = vmor %vm2988, %vm2989
    %v2991 = vsel %vm2990, %v2982, %v2987
    %v2992 = vrsqrt.pop %v2981
    %v2993 = vmul.f32 %v2992, %v2981
    %v2994 = vmul.f32 %v2993, %v2992
    %v2995 = vmul.f32 0.5, %v2994
    %v2996 = vsub.f32 1.5, %v2995
    %v2997 = vmul.f32 %v2992, %v2996
    %vm2998 = vweird.f32 %v2981
    %vm2999 = vweird.f32 %v2992
    %vm3000 = vmor %vm2998, %vm2999
    %v3001 = vsel %vm3000, %v2992, %v2997
    %v3002 = vld [vmem:[%s5 + $0x30] sm:$0xff]
    %v3003 = vld [vmem:[%s5 + $0x38] sm:$0xff]
    %v3004 = vld [vmem:[%s6 + $0x30] sm:$0xff]
    %v3005 = vld [vmem:[%s6 + $0x38] sm:$0xff]
    %v3006 = vmul.f32 %v2991, %v3002
    %v3007 = vmul.f32 %v3001, %v3003
    %v3008 = vmul.f32 %v2964, %v3006
    %v3009 = vmul.f32 %v2965, %v3007
    %v3010 = vsub.f32 %v3004, %v3008
    %v3011 = vsub.f32 %v3005, %v3009
    %v3012 = vmul.f32 %v2942, %v3006
    %v3013 = vmul.f32 %v2956, %v3006
    %v3014 = vmul.f32 %v2944, %v3007
    %v3015 = vmul.f32 %v2958, %v3007
    %v3016 = vadd.f32 %v3012, %v3010
    %v3017 = vadd.f32 %v3013, %v3010
    %v3018 = vadd.f32 %v3014, %v3011
    %v3019 = vadd.f32 %v3015, %v3011
    %vm3020 = vcmp.ge.f32.partialorder %v3016, 0.0
    %vm3021 = vcmp.ge.f32.partialorder %v3017, 0.0
    %vm3022 = vcmp.ge.f32.partialorder %v3018, 0.0
    %vm3023 = vcmp.ge.f32.partialorder %v3019, 0.0
    %v3024 = vmul.f32 %v2396, %v3016
    %v3025 = vmul.f32 %v2396, %v3017
    %v3026 = vmul.f32 %v2396, %v3018
    %v3027 = vmul.f32 %v2396, %v3019
    %v3028 = vsel %vm3020, %v3016, %v3024
    %v3029 = vsel %vm3021, %v3017, %v3025
    %v3030 = vsel %vm3022, %v3018, %v3026
    %v3031 = vsel %vm3023, %v3019, %v3027
    %3032 = vst [vmem:[#allocation3 + $0xa0] sm:$0xff] %v3028
    %3033 = vst [vmem:[#allocation3 + $0xa8] sm:$0xff] %v3029
    %3034 = vst [vmem:[#allocation3 + $0xb0] sm:$0xff] %v3030
    %3035 = vst [vmem:[#allocation3 + $0xb8] sm:$0xff] %v3031
    %v3036 = vld [vmem:[#allocation2 + $0x80] sm:$0xff]
    %v3037 = vld [vmem:[#allocation2 + $0x88] sm:$0xff]
    %v3038 = vld [vmem:[#allocation2 + $0x90] sm:$0xff]
    %v3039 = vld [vmem:[#allocation2 + $0x98] sm:$0xff]
    %v3040 = vld [vmem:[#allocation2 + $0xa0] sm:$0xff]
    %v3041 = vld [vmem:[#allocation2 + $0xa8] sm:$0xff]
    %v3042 = vld [vmem:[#allocation2 + $0xb0] sm:$0xff]
    %v3043 = vld [vmem:[#allocation2 + $0xb8] sm:$0xff]
    %v3044 = vld [vmem:[#allocation2 + $0xc0] sm:$0xff]
    %v3045 = vld [vmem:[#allocation2 + $0xc8] sm:$0xff]
    %3046 = vst [vmem:[#allocation4] sm:$0xff] %v3036
    %3047 = vst [vmem:[#allocation4 + $0x8] sm:$0xff] %v3037
    %3048 = vst [vmem:[#allocation4 + $0x10] sm:$0xff] %v3038
    %3049 = vst [vmem:[#allocation4 + $0x18] sm:$0xff] %v3039
    %3050 = vst [vmem:[#allocation4 + $0x20] sm:$0xff] %v3040
    %3051 = vst [vmem:[#allocation4 + $0x28] sm:$0xff] %v3041
    %3052 = vst [vmem:[#allocation4 + $0x30] sm:$0xff] %v3042
    %3053 = vst [vmem:[#allocation4 + $0x38] sm:$0xff] %v3043
    %3054 = vst [vmem:[#allocation4 + $0x40] sm:$0xff] %v3044
    %3055 = vst [vmem:[#allocation4 + $0x48] sm:$0xff] %v3045
    %3066 = vrot.lane.b32.xlu0 %v3036, 127
    %v3067 = vpop.permute.xlu0 %3066
    %3068 = vrot.lane.b32.xlu0 %v3037, 127
    %v3069 = vpop.permute.xlu0 %3068
    %3070 = vrot.lane.b32.xlu0 %v3038, 127
    %v3071 = vpop.permute.xlu0 %3070
    %3072 = vrot.lane.b32.xlu0 %v3039, 127
    %v3073 = vpop.permute.xlu0 %3072
    %3074 = vrot.lane.b32.xlu0 %v3040, 127
    %v3075 = vpop.permute.xlu0 %3074
    %3076 = vrot.lane.b32.xlu0 %v3041, 127
    %v3077 = vpop.permute.xlu0 %3076
    %3078 = vrot.lane.b32.xlu0 %v3042, 127
    %v3079 = vpop.permute.xlu0 %3078
    %3080 = vrot.lane.b32.xlu0 %v3043, 127
    %v3081 = vpop.permute.xlu0 %3080
    %3082 = vrot.lane.b32.xlu0 %v3044, 127
    %v3083 = vpop.permute.xlu0 %3082
    %3084 = vrot.lane.b32.xlu0 %v3045, 127
    %v3085 = vpop.permute.xlu0 %3084
    %v3086 = vsel %vm216, %v3067, %v3069
    %v3087 = vsel %vm216, %v3071, %v3073
    %v3088 = vsel %vm216, %v3075, %v3077
    %v3089 = vsel %vm216, %v3079, %v3081
    %v3090 = vsel %vm216, %v3083, %v3085
    %3101 = vst [vmem:[#allocation4 + $0x50] sm:$0xff] %v3086
    %3102 = vst.msk [vmem:[#allocation4 + $0x58] sm:$0xff] %vm216, %v3069
    %3103 = vst [vmem:[#allocation4 + $0x60] sm:$0xff] %v3087
    %3104 = vst.msk [vmem:[#allocation4 + $0x68] sm:$0xff] %vm216, %v3073
    %3105 = vst [vmem:[#allocation4 + $0x70] sm:$0xff] %v3088
    %3106 = vst.msk [vmem:[#allocation4 + $0x78] sm:$0xff] %vm216, %v3077
    %3107 = vst [vmem:[#allocation4 + $0x80] sm:$0xff] %v3089
    %3108 = vst.msk [vmem:[#allocation4 + $0x88] sm:$0xff] %vm216, %v3081
    %3109 = vst [vmem:[#allocation4 + $0x90] sm:$0xff] %v3090
    %3110 = vst.msk [vmem:[#allocation4 + $0x98] sm:$0xff] %vm216, %v3085
    %v3111 = vld [vmem:[#allocation4] sm:$0xff]
    %v3112 = vld [vmem:[#allocation4 + $0x8] sm:$0xff]
    %v3113 = vld [vmem:[#allocation4 + $0x10] sm:$0xff]
    %v3114 = vld [vmem:[#allocation4 + $0x18] sm:$0xff]
    %v3115 = vld [vmem:[#allocation4 + $0x20] sm:$0xff]
    %v3116 = vld [vmem:[#allocation4 + $0x28] sm:$0xff]
    %v3117 = vld [vmem:[#allocation4 + $0x30] sm:$0xff]
    %v3118 = vld [vmem:[#allocation4 + $0x38] sm:$0xff]
    %v3119 = vld [vmem:[#allocation4 + $0x40] sm:$0xff]
    %v3120 = vld [vmem:[#allocation4 + $0x48] sm:$0xff]
    %v3121 = vld [vmem:[#allocation4 + $0x50] sm:$0xff]
    %v3122 = vld [vmem:[#allocation4 + $0x58] sm:$0xff]
    %v3123 = vld [vmem:[#allocation4 + $0x60] sm:$0xff]
    %v3124 = vld [vmem:[#allocation4 + $0x68] sm:$0xff]
    %v3125 = vld [vmem:[#allocation4 + $0x70] sm:$0xff]
    %v3126 = vld [vmem:[#allocation4 + $0x78] sm:$0xff]
    %v3127 = vld [vmem:[#allocation4 + $0x80] sm:$0xff]
    %v3128 = vld [vmem:[#allocation4 + $0x88] sm:$0xff]
    %v3129 = vld [vmem:[#allocation4 + $0x90] sm:$0xff]
    %v3130 = vld [vmem:[#allocation4 + $0x98] sm:$0xff]
    %v3131 = vpack.c.bf16 %v3113, %v3111
    %v3132 = vpack.c.bf16 %v3114, %v3112
    %v3133 = vpack.c.bf16 %v3117, %v3115
    %v3134 = vpack.c.bf16 %v3118, %v3116
    %v3135 = vpack.c.bf16 %v3121, %v3119
    %v3136 = vpack.c.bf16 %v3122, %v3120
    %v3137 = vpack.c.bf16 %v3125, %v3123
    %v3138 = vpack.c.bf16 %v3126, %v3124
    %v3139 = vpack.c.bf16 %v3129, %v3127
    %v3140 = vpack.c.bf16 %v3130, %v3128
    %3141 = vmatpush.bf16.msra.mxu0 0
    %3142 = vmatpush.bf16.msra.mxu0 0
    %3143 = vmatpush.bf16.msra.mxu0 0
    %3144 = vmatpush.bf16.msra.mxu0 %v3139
    %3145 = vmatpush.bf16.msra.mxu0 %v3137
    %3146 = vmatpush.bf16.msra.mxu0 %v3135
    %3147 = vmatpush.bf16.msra.mxu0 %v3133
    %3148 = vmatpush.bf16.msra.mxu0 %v3131
    %3149 = vmatmul.bf16.gmra.mxu0 %v2302
    %v3150 = vpop.f32.mrf.mxu0
    %v3151 = vadd.f32 0.0, %v3150
    %v3152 = vpop.f32.mrf.mxu0
    %v3153 = vadd.f32 0.0, %v3152
    %3154 = vdwg.mxu0
    %3155 = vmatpush.bf16.msra.mxu0 0
    %3156 = vmatpush.bf16.msra.mxu0 0
    %3157 = vmatpush.bf16.msra.mxu0 0
    %3158 = vmatpush.bf16.msra.mxu0 %v3140
    %3159 = vmatpush.bf16.msra.mxu0 %v3138
    %3160 = vmatpush.bf16.msra.mxu0 %v3136
    %3161 = vmatpush.bf16.msra.mxu0 %v3134
    %3162 = vmatpush.bf16.msra.mxu0 %v3132
    %3163 = vmatmul.bf16.gmra.mxu0 %v2302
    %v3164 = vpop.f32.mrf.mxu0
    %v3165 = vadd.f32 0.0, %v3164
    %v3166 = vpop.f32.mrf.mxu0
    %v3167 = vadd.f32 0.0, %v3166
    %3168 = vdwg.mxu0
    %v3169 = vadd.f32 %v3151, 0.0
    %v3170 = vadd.f32 %v3153, 0.0
    %v3171 = vadd.f32 %v3169, %v3165
    %v3172 = vadd.f32 %v3170, %v3167
    %v3173 = vmul.f32 %v3171, %v279
    %v3174 = vmul.f32 %v3172, %v279
    %v3175 = vsub.f32 %v3151, %v3173
    %v3176 = vsub.f32 %v3153, %v3174
    %v3177 = vmul.f32 %v3175, %v3175
    %v3178 = vmul.f32 %v3176, %v3176
    %v3179 = vadd.f32 %v3177, 0.0
    %v3180 = vadd.f32 %v3178, 0.0
    %v3181 = vsub.f32 %v3165, %v3173
    %v3182 = vsub.f32 %v3167, %v3174
    %v3183 = vmul.f32 %v3181, %v3181
    %v3184 = vmul.f32 %v3182, %v3182
    %v3185 = vadd.f32 %v3179, %v3183
    %v3186 = vadd.f32 %v3180, %v3184
    %v3187 = vmul.f32 %v3185, %v279
    %v3188 = vmul.f32 %v3186, %v279
    %v3189 = vadd.f32 %v3187, 1e-05
    %v3190 = vadd.f32 %v3188, 1e-05
    %v3191 = vrsqrt.pop %v3189
    %v3192 = vmul.f32 %v3191, %v3189
    %v3193 = vmul.f32 %v3192, %v3191
    %v3194 = vmul.f32 0.5, %v3193
    %v3195 = vsub.f32 1.5, %v3194
    %v3196 = vmul.f32 %v3191, %v3195
    %vm3197 = vweird.f32 %v3189
    %vm3198 = vweird.f32 %v3191
    %vm3199 = vmor %vm3197, %vm3198
    %v3200 = vsel %vm3199, %v3191, %v3196
    %v3201 = vrsqrt.pop %v3190
    %v3202 = vmul.f32 %v3201, %v3190
    %v3203 = vmul.f32 %v3202, %v3201
    %v3204 = vmul.f32 0.5, %v3203
    %v3205 = vsub.f32 1.5, %v3204
    %v3206 = vmul.f32 %v3201, %v3205
    %vm3207 = vweird.f32 %v3190
    %vm3208 = vweird.f32 %v3201
    %vm3209 = vmor %vm3207, %vm3208
    %v3210 = vsel %vm3209, %v3201, %v3206
    %v3211 = vld [vmem:[%s5 + $0x40] sm:$0xff]
    %v3212 = vld [vmem:[%s5 + $0x48] sm:$0xff]
    %v3213 = vld [vmem:[%s6 + $0x40] sm:$0xff]
    %v3214 = vld [vmem:[%s6 + $0x48] sm:$0xff]
    %v3215 = vmul.f32 %v3200, %v3211
    %v3216 = vmul.f32 %v3210, %v3212
    %v3217 = vmul.f32 %v3173, %v3215
    %v3218 = vmul.f32 %v3174, %v3216
    %v3219 = vsub.f32 %v3213, %v3217
    %v3220 = vsub.f32 %v3214, %v3218
    %v3221 = vmul.f32 %v3151, %v3215
    %v3222 = vmul.f32 %v3165, %v3215
    %v3223 = vmul.f32 %v3153, %v3216
    %v3224 = vmul.f32 %v3167, %v3216
    %v3225 = vadd.f32 %v3221, %v3219
    %v3226 = vadd.f32 %v3222, %v3219
    %v3227 = vadd.f32 %v3223, %v3220
    %v3228 = vadd.f32 %v3224, %v3220
    %vm3229 = vcmp.ge.f32.partialorder %v3225, 0.0
    %vm3230 = vcmp.ge.f32.partialorder %v3226, 0.0
    %vm3231 = vcmp.ge.f32.partialorder %v3227, 0.0
    %vm3232 = vcmp.ge.f32.partialorder %v3228, 0.0
    %v3233 = vmul.f32 %v2396, %v3225
    %v3234 = vmul.f32 %v2396, %v3226
    %v3235 = vmul.f32 %v2396, %v3227
    %v3236 = vmul.f32 %v2396, %v3228
    %v3237 = vsel %vm3229, %v3225, %v3233
    %v3238 = vsel %vm3230, %v3226, %v3234
    %v3239 = vsel %vm3231, %v3227, %v3235
    %v3240 = vsel %vm3232, %v3228, %v3236
    %3241 = vst [vmem:[#allocation3 + $0xc0] sm:$0xff] %v3237
    %3242 = vst [vmem:[#allocation3 + $0xc8] sm:$0xff] %v3238
    %3243 = vst [vmem:[#allocation3 + $0xd0] sm:$0xff] %v3239
    %3244 = vst [vmem:[#allocation3 + $0xd8] sm:$0xff] %v3240
    %v3245 = vld [vmem:[#allocation2 + $0xa0] sm:$0xff]
    %v3246 = vld [vmem:[#allocation2 + $0xa8] sm:$0xff]
    %v3247 = vld [vmem:[#allocation2 + $0xb0] sm:$0xff]
    %v3248 = vld [vmem:[#allocation2 + $0xb8] sm:$0xff]
    %v3249 = vld [vmem:[#allocation2 + $0xc0] sm:$0xff]
    %v3250 = vld [vmem:[#allocation2 + $0xc8] sm:$0xff]
    %v3251 = vld [vmem:[#allocation2 + $0xd0] sm:$0xff]
    %v3252 = vld [vmem:[#allocation2 + $0xd8] sm:$0xff]
    %v3253 = vld [vmem:[#allocation2 + $0xe0] sm:$0xff]
    %v3254 = vld [vmem:[#allocation2 + $0xe8] sm:$0xff]
    %3255 = vst [vmem:[#allocation4] sm:$0xff] %v3245
    %3256 = vst [vmem:[#allocation4 + $0x8] sm:$0xff] %v3246
    %3257 = vst [vmem:[#allocation4 + $0x10] sm:$0xff] %v3247
    %3258 = vst [vmem:[#allocation4 + $0x18] sm:$0xff] %v3248
    %3259 = vst [vmem:[#allocation4 + $0x20] sm:$0xff] %v3249
    %3260 = vst [vmem:[#allocation4 + $0x28] sm:$0xff] %v3250
    %3261 = vst [vmem:[#allocation4 + $0x30] sm:$0xff] %v3251
    %3262 = vst [vmem:[#allocation4 + $0x38] sm:$0xff] %v3252
    %3263 = vst [vmem:[#allocation4 + $0x40] sm:$0xff] %v3253
    %3264 = vst [vmem:[#allocation4 + $0x48] sm:$0xff] %v3254
    %3275 = vrot.lane.b32.xlu0 %v3245, 127
    %v3276 = vpop.permute.xlu0 %3275
    %3277 = vrot.lane.b32.xlu0 %v3246, 127
    %v3278 = vpop.permute.xlu0 %3277
    %3279 = vrot.lane.b32.xlu0 %v3247, 127
    %v3280 = vpop.permute.xlu0 %3279
    %3281 = vrot.lane.b32.xlu0 %v3248, 127
    %v3282 = vpop.permute.xlu0 %3281
    %3283 = vrot.lane.b32.xlu0 %v3249, 127
    %v3284 = vpop.permute.xlu0 %3283
    %3285 = vrot.lane.b32.xlu0 %v3250, 127
    %v3286 = vpop.permute.xlu0 %3285
    %3287 = vrot.lane.b32.xlu0 %v3251, 127
    %v3288 = vpop.permute.xlu0 %3287
    %3289 = vrot.lane.b32.xlu0 %v3252, 127
    %v3290 = vpop.permute.xlu0 %3289
    %3291 = vrot.lane.b32.xlu0 %v3253, 127
    %v3292 = vpop.permute.xlu0 %3291
    %3293 = vrot.lane.b32.xlu0 %v3254, 127
    %v3294 = vpop.permute.xlu0 %3293
    %v3295 = vsel %vm216, %v3276, %v3278
    %v3296 = vsel %vm216, %v3280, %v3282
    %v3297 = vsel %vm216, %v3284, %v3286
    %v3298 = vsel %vm216, %v3288, %v3290
    %v3299 = vsel %vm216, %v3292, %v3294
    %3310 = vst [vmem:[#allocation4 + $0x50] sm:$0xff] %v3295
    %3311 = vst.msk [vmem:[#allocation4 + $0x58] sm:$0xff] %vm216, %v3278
    %3312 = vst [vmem:[#allocation4 + $0x60] sm:$0xff] %v3296
    %3313 = vst.msk [vmem:[#allocation4 + $0x68] sm:$0xff] %vm216, %v3282
    %3314 = vst [vmem:[#allocation4 + $0x70] sm:$0xff] %v3297
    %3315 = vst.msk [vmem:[#allocation4 + $0x78] sm:$0xff] %vm216, %v3286
    %3316 = vst [vmem:[#allocation4 + $0x80] sm:$0xff] %v3298
    %3317 = vst.msk [vmem:[#allocation4 + $0x88] sm:$0xff] %vm216, %v3290
    %3318 = vst [vmem:[#allocation4 + $0x90] sm:$0xff] %v3299
    %3319 = vst.msk [vmem:[#allocation4 + $0x98] sm:$0xff] %vm216, %v3294
    %v3320 = vld [vmem:[#allocation4] sm:$0xff]
    %v3321 = vld [vmem:[#allocation4 + $0x8] sm:$0xff]
    %v3322 = vld [vmem:[#allocation4 + $0x10] sm:$0xff]
    %v3323 = vld [vmem:[#allocation4 + $0x18] sm:$0xff]
    %v3324 = vld [vmem:[#allocation4 + $0x20] sm:$0xff]
    %v3325 = vld [vmem:[#allocation4 + $0x28] sm:$0xff]
    %v3326 = vld [vmem:[#allocation4 + $0x30] sm:$0xff]
    %v3327 = vld [vmem:[#allocation4 + $0x38] sm:$0xff]
    %v3328 = vld [vmem:[#allocation4 + $0x40] sm:$0xff]
    %v3329 = vld [vmem:[#allocation4 + $0x48] sm:$0xff]
    %v3330 = vld [vmem:[#allocation4 + $0x50] sm:$0xff]
    %v3331 = vld [vmem:[#allocation4 + $0x58] sm:$0xff]
    %v3332 = vld [vmem:[#allocation4 + $0x60] sm:$0xff]
    %v3333 = vld [vmem:[#allocation4 + $0x68] sm:$0xff]
    %v3334 = vld [vmem:[#allocation4 + $0x70] sm:$0xff]
    %v3335 = vld [vmem:[#allocation4 + $0x78] sm:$0xff]
    %v3336 = vld [vmem:[#allocation4 + $0x80] sm:$0xff]
    %v3337 = vld [vmem:[#allocation4 + $0x88] sm:$0xff]
    %v3338 = vld [vmem:[#allocation4 + $0x90] sm:$0xff]
    %v3339 = vld [vmem:[#allocation4 + $0x98] sm:$0xff]
    %v3340 = vpack.c.bf16 %v3322, %v3320
    %v3341 = vpack.c.bf16 %v3323, %v3321
    %v3342 = vpack.c.bf16 %v3326, %v3324
    %v3343 = vpack.c.bf16 %v3327, %v3325
    %v3344 = vpack.c.bf16 %v3330, %v3328
    %v3345 = vpack.c.bf16 %v3331, %v3329
    %v3346 = vpack.c.bf16 %v3334, %v3332
    %v3347 = vpack.c.bf16 %v3335, %v3333
    %v3348 = vpack.c.bf16 %v3338, %v3336
    %v3349 = vpack.c.bf16 %v3339, %v3337
    %3350 = vmatpush.bf16.msra.mxu0 0
    %3351 = vmatpush.bf16.msra.mxu0 0
    %3352 = vmatpush.bf16.msra.mxu0 0
    %3353 = vmatpush.bf16.msra.mxu0 %v3348
    %3354 = vmatpush.bf16.msra.mxu0 %v3346
    %3355 = vmatpush.bf16.msra.mxu0 %v3344
    %3356 = vmatpush.bf16.msra.mxu0 %v3342
    %3357 = vmatpush.bf16.msra.mxu0 %v3340
    %3358 = vmatmul.bf16.gmra.mxu0 %v2302
    %v3359 = vpop.f32.mrf.mxu0
    %v3360 = vadd.f32 0.0, %v3359
    %v3361 = vpop.f32.mrf.mxu0
    %v3362 = vadd.f32 0.0, %v3361
    %3363 = vdwg.mxu0
    %3364 = vmatpush.bf16.msra.mxu0 0
    %3365 = vmatpush.bf16.msra.mxu0 0
    %3366 = vmatpush.bf16.msra.mxu0 0
    %3367 = vmatpush.bf16.msra.mxu0 %v3349
    %3368 = vmatpush.bf16.msra.mxu0 %v3347
    %3369 = vmatpush.bf16.msra.mxu0 %v3345
    %3370 = vmatpush.bf16.msra.mxu0 %v3343
    %3371 = vmatpush.bf16.msra.mxu0 %v3341
    %3372 = vmatmul.bf16.gmra.mxu0 %v2302
    %v3373 = vpop.f32.mrf.mxu0
    %v3374 = vadd.f32 0.0, %v3373
    %v3375 = vpop.f32.mrf.mxu0
    %v3376 = vadd.f32 0.0, %v3375
    %3377 = vdwg.mxu0
    %v3378 = vadd.f32 %v3360, 0.0
    %v3379 = vadd.f32 %v3362, 0.0
    %v3380 = vadd.f32 %v3378, %v3374
    %v3381 = vadd.f32 %v3379, %v3376
    %v3382 = vmul.f32 %v3380, %v279
    %v3383 = vmul.f32 %v3381, %v279
    %v3384 = vsub.f32 %v3360, %v3382
    %v3385 = vsub.f32 %v3362, %v3383
    %v3386 = vmul.f32 %v3384, %v3384
    %v3387 = vmul.f32 %v3385, %v3385
    %v3388 = vadd.f32 %v3386, 0.0
    %v3389 = vadd.f32 %v3387, 0.0
    %v3390 = vsub.f32 %v3374, %v3382
    %v3391 = vsub.f32 %v3376, %v3383
    %v3392 = vmul.f32 %v3390, %v3390
    %v3393 = vmul.f32 %v3391, %v3391
    %v3394 = vadd.f32 %v3388, %v3392
    %v3395 = vadd.f32 %v3389, %v3393
    %v3396 = vmul.f32 %v3394, %v279
    %v3397 = vmul.f32 %v3395, %v279
    %v3398 = vadd.f32 %v3396, 1e-05
    %v3399 = vadd.f32 %v3397, 1e-05
    %v3400 = vrsqrt.pop %v3398
    %v3401 = vmul.f32 %v3400, %v3398
    %v3402 = vmul.f32 %v3401, %v3400
    %v3403 = vmul.f32 0.5, %v3402
    %v3404 = vsub.f32 1.5, %v3403
    %v3405 = vmul.f32 %v3400, %v3404
    %vm3406 = vweird.f32 %v3398
    %vm3407 = vweird.f32 %v3400
    %vm3408 = vmor %vm3406, %vm3407
    %v3409 = vsel %vm3408, %v3400, %v3405
    %v3410 = vrsqrt.pop %v3399
    %v3411 = vmul.f32 %v3410, %v3399
    %v3412 = vmul.f32 %v3411, %v3410
    %v3413 = vmul.f32 0.5, %v3412
    %v3414 = vsub.f32 1.5, %v3413
    %v3415 = vmul.f32 %v3410, %v3414
    %vm3416 = vweird.f32 %v3399
    %vm3417 = vweird.f32 %v3410
    %vm3418 = vmor %vm3416, %vm3417
    %v3419 = vsel %vm3418, %v3410, %v3415
    %v3420 = vld [vmem:[%s5 + $0x50] sm:$0xff]
    %v3421 = vld [vmem:[%s5 + $0x58] sm:$0xff]
    %v3422 = vld [vmem:[%s6 + $0x50] sm:$0xff]
    %v3423 = vld [vmem:[%s6 + $0x58] sm:$0xff]
    %v3424 = vmul.f32 %v3409, %v3420
    %v3425 = vmul.f32 %v3419, %v3421
    %v3426 = vmul.f32 %v3382, %v3424
    %v3427 = vmul.f32 %v3383, %v3425
    %v3428 = vsub.f32 %v3422, %v3426
    %v3429 = vsub.f32 %v3423, %v3427
    %v3430 = vmul.f32 %v3360, %v3424
    %v3431 = vmul.f32 %v3374, %v3424
    %v3432 = vmul.f32 %v3362, %v3425
    %v3433 = vmul.f32 %v3376, %v3425
    %v3434 = vadd.f32 %v3430, %v3428
    %v3435 = vadd.f32 %v3431, %v3428
    %v3436 = vadd.f32 %v3432, %v3429
    %v3437 = vadd.f32 %v3433, %v3429
    %vm3438 = vcmp.ge.f32.partialorder %v3434, 0.0
    %vm3439 = vcmp.ge.f32.partialorder %v3435, 0.0
    %vm3440 = vcmp.ge.f32.partialorder %v3436, 0.0
    %vm3441 = vcmp.ge.f32.partialorder %v3437, 0.0
    %v3442 = vmul.f32 %v2396, %v3434
    %v3443 = vmul.f32 %v2396, %v3435
    %v3444 = vmul.f32 %v2396, %v3436
    %v3445 = vmul.f32 %v2396, %v3437
    %v3446 = vsel %vm3438, %v3434, %v3442
    %v3447 = vsel %vm3439, %v3435, %v3443
    %v3448 = vsel %vm3440, %v3436, %v3444
    %v3449 = vsel %vm3441, %v3437, %v3445
    %3450 = vst [vmem:[#allocation3 + $0xe0] sm:$0xff] %v3446
    %3451 = vst [vmem:[#allocation3 + $0xe8] sm:$0xff] %v3447
    %3452 = vst [vmem:[#allocation3 + $0xf0] sm:$0xff] %v3448
    %3453 = vst [vmem:[#allocation3 + $0xf8] sm:$0xff] %v3449
    %v3454 = vld [vmem:[#allocation2 + $0xc0] sm:$0xff]
    %v3455 = vld [vmem:[#allocation2 + $0xc8] sm:$0xff]
    %v3456 = vld [vmem:[#allocation2 + $0xd0] sm:$0xff]
    %v3457 = vld [vmem:[#allocation2 + $0xd8] sm:$0xff]
    %v3458 = vld [vmem:[#allocation2 + $0xe0] sm:$0xff]
    %v3459 = vld [vmem:[#allocation2 + $0xe8] sm:$0xff]
    %v3460 = vld [vmem:[#allocation2 + $0xf0] sm:$0xff]
    %v3461 = vld [vmem:[#allocation2 + $0xf8] sm:$0xff]
    %v3462 = vld [vmem:[#allocation2 + $0x100] sm:$0xff]
    %v3463 = vld [vmem:[#allocation2 + $0x108] sm:$0xff]
    %3464 = vst [vmem:[#allocation4] sm:$0xff] %v3454
    %3465 = vst [vmem:[#allocation4 + $0x8] sm:$0xff] %v3455
    %3466 = vst [vmem:[#allocation4 + $0x10] sm:$0xff] %v3456
    %3467 = vst [vmem:[#allocation4 + $0x18] sm:$0xff] %v3457
    %3468 = vst [vmem:[#allocation4 + $0x20] sm:$0xff] %v3458
    %3469 = vst [vmem:[#allocation4 + $0x28] sm:$0xff] %v3459
    %3470 = vst [vmem:[#allocation4 + $0x30] sm:$0xff] %v3460
    %3471 = vst [vmem:[#allocation4 + $0x38] sm:$0xff] %v3461
    %3472 = vst [vmem:[#allocation4 + $0x40] sm:$0xff] %v3462
    %3473 = vst [vmem:[#allocation4 + $0x48] sm:$0xff] %v3463
    %3484 = vrot.lane.b32.xlu0 %v3454, 127
    %v3485 = vpop.permute.xlu0 %3484
    %3486 = vrot.lane.b32.xlu0 %v3455, 127
    %v3487 = vpop.permute.xlu0 %3486
    %3488 = vrot.lane.b32.xlu0 %v3456, 127
    %v3489 = vpop.permute.xlu0 %3488
    %3490 = vrot.lane.b32.xlu0 %v3457, 127
    %v3491 = vpop.permute.xlu0 %3490
    %3492 = vrot.lane.b32.xlu0 %v3458, 127
    %v3493 = vpop.permute.xlu0 %3492
    %3494 = vrot.lane.b32.xlu0 %v3459, 127
    %v3495 = vpop.permute.xlu0 %3494
    %3496 = vrot.lane.b32.xlu0 %v3460, 127
    %v3497 = vpop.permute.xlu0 %3496
    %3498 = vrot.lane.b32.xlu0 %v3461, 127
    %v3499 = vpop.permute.xlu0 %3498
    %3500 = vrot.lane.b32.xlu0 %v3462, 127
    %v3501 = vpop.permute.xlu0 %3500
    %3502 = vrot.lane.b32.xlu0 %v3463, 127
    %v3503 = vpop.permute.xlu0 %3502
    %v3504 = vsel %vm216, %v3485, %v3487
    %v3505 = vsel %vm216, %v3489, %v3491
    %v3506 = vsel %vm216, %v3493, %v3495
    %v3507 = vsel %vm216, %v3497, %v3499
    %v3508 = vsel %vm216, %v3501, %v3503
    %3519 = vst [vmem:[#allocation4 + $0x50] sm:$0xff] %v3504
    %3520 = vst.msk [vmem:[#allocation4 + $0x58] sm:$0xff] %vm216, %v3487
    %3521 = vst [vmem:[#allocation4 + $0x60] sm:$0xff] %v3505
    %3522 = vst.msk [vmem:[#allocation4 + $0x68] sm:$0xff] %vm216, %v3491
    %3523 = vst [vmem:[#allocation4 + $0x70] sm:$0xff] %v3506
    %3524 = vst.msk [vmem:[#allocation4 + $0x78] sm:$0xff] %vm216, %v3495
    %3525 = vst [vmem:[#allocation4 + $0x80] sm:$0xff] %v3507
    %3526 = vst.msk [vmem:[#allocation4 + $0x88] sm:$0xff] %vm216, %v3499
    %3527 = vst [vmem:[#allocation4 + $0x90] sm:$0xff] %v3508
    %3528 = vst.msk [vmem:[#allocation4 + $0x98] sm:$0xff] %vm216, %v3503
    %v3529 = vld [vmem:[#allocation4] sm:$0xff]
    %v3530 = vld [vmem:[#allocation4 + $0x8] sm:$0xff]
    %v3531 = vld [vmem:[#allocation4 + $0x10] sm:$0xff]
    %v3532 = vld [vmem:[#allocation4 + $0x18] sm:$0xff]
    %v3533 = vld [vmem:[#allocation4 + $0x20] sm:$0xff]
    %v3534 = vld [vmem:[#allocation4 + $0x28] sm:$0xff]
    %v3535 = vld [vmem:[#allocation4 + $0x30] sm:$0xff]
    %v3536 = vld [vmem:[#allocation4 + $0x38] sm:$0xff]
    %v3537 = vld [vmem:[#allocation4 + $0x40] sm:$0xff]
    %v3538 = vld [vmem:[#allocation4 + $0x48] sm:$0xff]
    %v3539 = vld [vmem:[#allocation4 + $0x50] sm:$0xff]
    %v3540 = vld [vmem:[#allocation4 + $0x58] sm:$0xff]
    %v3541 = vld [vmem:[#allocation4 + $0x60] sm:$0xff]
    %v3542 = vld [vmem:[#allocation4 + $0x68] sm:$0xff]
    %v3543 = vld [vmem:[#allocation4 + $0x70] sm:$0xff]
    %v3544 = vld [vmem:[#allocation4 + $0x78] sm:$0xff]
    %v3545 = vld [vmem:[#allocation4 + $0x80] sm:$0xff]
    %v3546 = vld [vmem:[#allocation4 + $0x88] sm:$0xff]
    %v3547 = vld [vmem:[#allocation4 + $0x90] sm:$0xff]
    %v3548 = vld [vmem:[#allocation4 + $0x98] sm:$0xff]
    %v3549 = vpack.c.bf16 %v3531, %v3529
    %v3550 = vpack.c.bf16 %v3532, %v3530
    %v3551 = vpack.c.bf16 %v3535, %v3533
    %v3552 = vpack.c.bf16 %v3536, %v3534
    %v3553 = vpack.c.bf16 %v3539, %v3537
    %v3554 = vpack.c.bf16 %v3540, %v3538
    %v3555 = vpack.c.bf16 %v3543, %v3541
    %v3556 = vpack.c.bf16 %v3544, %v3542
    %v3557 = vpack.c.bf16 %v3547, %v3545
    %v3558 = vpack.c.bf16 %v3548, %v3546
    %3559 = vmatpush.bf16.msra.mxu0 0
    %3560 = vmatpush.bf16.msra.mxu0 0
    %3561 = vmatpush.bf16.msra.mxu0 0
    %3562 = vmatpush.bf16.msra.mxu0 %v3557
    %3563 = vmatpush.bf16.msra.mxu0 %v3555
    %3564 = vmatpush.bf16.msra.mxu0 %v3553
    %3565 = vmatpush.bf16.msra.mxu0 %v3551
    %3566 = vmatpush.bf16.msra.mxu0 %v3549
    %3567 = vmatmul.bf16.gmra.mxu0 %v2302
    %v3568 = vpop.f32.mrf.mxu0
    %v3569 = vadd.f32 0.0, %v3568
    %v3570 = vpop.f32.mrf.mxu0
    %v3571 = vadd.f32 0.0, %v3570
    %3572 = vdwg.mxu0
    %3573 = vmatpush.bf16.msra.mxu0 0
    %3574 = vmatpush.bf16.msra.mxu0 0
    %3575 = vmatpush.bf16.msra.mxu0 0
    %3576 = vmatpush.bf16.msra.mxu0 %v3558
    %3577 = vmatpush.bf16.msra.mxu0 %v3556
    %3578 = vmatpush.bf16.msra.mxu0 %v3554
    %3579 = vmatpush.bf16.msra.mxu0 %v3552
    %3580 = vmatpush.bf16.msra.mxu0 %v3550
    %3581 = vmatmul.bf16.gmra.mxu0 %v2302
    %v3582 = vpop.f32.mrf.mxu0
    %v3583 = vadd.f32 0.0, %v3582
    %v3584 = vpop.f32.mrf.mxu0
    %v3585 = vadd.f32 0.0, %v3584
    %3586 = vdwg.mxu0
    %v3587 = vadd.f32 %v3569, 0.0
    %v3588 = vadd.f32 %v3571, 0.0
    %v3589 = vadd.f32 %v3587, %v3583
    %v3590 = vadd.f32 %v3588, %v3585
    %v3591 = vmul.f32 %v3589, %v279
    %v3592 = vmul.f32 %v3590, %v279
    %v3593 = vsub.f32 %v3569, %v3591
    %v3594 = vsub.f32 %v3571, %v3592
    %v3595 = vmul.f32 %v3593, %v3593
    %v3596 = vmul.f32 %v3594, %v3594
    %v3597 = vadd.f32 %v3595, 0.0
    %v3598 = vadd.f32 %v3596, 0.0
    %v3599 = vsub.f32 %v3583, %v3591
    %v3600 = vsub.f32 %v3585, %v3592
    %v3601 = vmul.f32 %v3599, %v3599
    %v3602 = vmul.f32 %v3600, %v3600
    %v3603 = vadd.f32 %v3597, %v3601
    %v3604 = vadd.f32 %v3598, %v3602
    %v3605 = vmul.f32 %v3603, %v279
    %v3606 = vmul.f32 %v3604, %v279
    %v3607 = vadd.f32 %v3605, 1e-05
    %v3608 = vadd.f32 %v3606, 1e-05
    %v3609 = vrsqrt.pop %v3607
    %v3610 = vmul.f32 %v3609, %v3607
    %v3611 = vmul.f32 %v3610, %v3609
    %v3612 = vmul.f32 0.5, %v3611
    %v3613 = vsub.f32 1.5, %v3612
    %v3614 = vmul.f32 %v3609, %v3613
    %vm3615 = vweird.f32 %v3607
    %vm3616 = vweird.f32 %v3609
    %vm3617 = vmor %vm3615, %vm3616
    %v3618 = vsel %vm3617, %v3609, %v3614
    %v3619 = vrsqrt.pop %v3608
    %v3620 = vmul.f32 %v3619, %v3608
    %v3621 = vmul.f32 %v3620, %v3619
    %v3622 = vmul.f32 0.5, %v3621
    %v3623 = vsub.f32 1.5, %v3622
    %v3624 = vmul.f32 %v3619, %v3623
    %vm3625 = vweird.f32 %v3608
    %vm3626 = vweird.f32 %v3619
    %vm3627 = vmor %vm3625, %vm3626
    %v3628 = vsel %vm3627, %v3619, %v3624
    %v3629 = vld [vmem:[%s5 + $0x60] sm:$0xff]
    %v3630 = vld [vmem:[%s5 + $0x68] sm:$0xff]
    %v3631 = vld [vmem:[%s6 + $0x60] sm:$0xff]
    %v3632 = vld [vmem:[%s6 + $0x68] sm:$0xff]
    %v3633 = vmul.f32 %v3618, %v3629
    %v3634 = vmul.f32 %v3628, %v3630
    %v3635 = vmul.f32 %v3591, %v3633
    %v3636 = vmul.f32 %v3592, %v3634
    %v3637 = vsub.f32 %v3631, %v3635
    %v3638 = vsub.f32 %v3632, %v3636
    %v3639 = vmul.f32 %v3569, %v3633
    %v3640 = vmul.f32 %v3583, %v3633
    %v3641 = vmul.f32 %v3571, %v3634
    %v3642 = vmul.f32 %v3585, %v3634
    %v3643 = vadd.f32 %v3639, %v3637
    %v3644 = vadd.f32 %v3640, %v3637
    %v3645 = vadd.f32 %v3641, %v3638
    %v3646 = vadd.f32 %v3642, %v3638
    %vm3647 = vcmp.ge.f32.partialorder %v3643, 0.0
    %vm3648 = vcmp.ge.f32.partialorder %v3644, 0.0
    %vm3649 = vcmp.ge.f32.partialorder %v3645, 0.0
    %vm3650 = vcmp.ge.f32.partialorder %v3646, 0.0
    %v3651 = vmul.f32 %v2396, %v3643
    %v3652 = vmul.f32 %v2396, %v3644
    %v3653 = vmul.f32 %v2396, %v3645
    %v3654 = vmul.f32 %v2396, %v3646
    %v3655 = vsel %vm3647, %v3643, %v3651
    %v3656 = vsel %vm3648, %v3644, %v3652
    %v3657 = vsel %vm3649, %v3645, %v3653
    %v3658 = vsel %vm3650, %v3646, %v3654
    %3659 = vst [vmem:[#allocation3 + $0x100] sm:$0xff] %v3655
    %3660 = vst [vmem:[#allocation3 + $0x108] sm:$0xff] %v3656
    %3661 = vst [vmem:[#allocation3 + $0x110] sm:$0xff] %v3657
    %3662 = vst [vmem:[#allocation3 + $0x118] sm:$0xff] %v3658
    %v3663 = vld [vmem:[#allocation2 + $0xe0] sm:$0xff]
    %v3664 = vld [vmem:[#allocation2 + $0xe8] sm:$0xff]
    %v3665 = vld [vmem:[#allocation2 + $0xf0] sm:$0xff]
    %v3666 = vld [vmem:[#allocation2 + $0xf8] sm:$0xff]
    %v3667 = vld [vmem:[#allocation2 + $0x100] sm:$0xff]
    %v3668 = vld [vmem:[#allocation2 + $0x108] sm:$0xff]
    %v3669 = vld [vmem:[#allocation2 + $0x110] sm:$0xff]
    %v3670 = vld [vmem:[#allocation2 + $0x118] sm:$0xff]
    %v3671 = vld [vmem:[#allocation2 + $0x120] sm:$0xff]
    %v3672 = vld [vmem:[#allocation2 + $0x128] sm:$0xff]
    %3673 = vst [vmem:[#allocation4] sm:$0xff] %v3663
    %3674 = vst [vmem:[#allocation4 + $0x8] sm:$0xff] %v3664
    %3675 = vst [vmem:[#allocation4 + $0x10] sm:$0xff] %v3665
    %3676 = vst [vmem:[#allocation4 + $0x18] sm:$0xff] %v3666
    %3677 = vst [vmem:[#allocation4 + $0x20] sm:$0xff] %v3667
    %3678 = vst [vmem:[#allocation4 + $0x28] sm:$0xff] %v3668
    %3679 = vst [vmem:[#allocation4 + $0x30] sm:$0xff] %v3669
    %3680 = vst [vmem:[#allocation4 + $0x38] sm:$0xff] %v3670
    %3681 = vst [vmem:[#allocation4 + $0x40] sm:$0xff] %v3671
    %3682 = vst [vmem:[#allocation4 + $0x48] sm:$0xff] %v3672
    %3693 = vrot.lane.b32.xlu0 %v3663, 127
    %v3694 = vpop.permute.xlu0 %3693
    %3695 = vrot.lane.b32.xlu0 %v3664, 127
    %v3696 = vpop.permute.xlu0 %3695
    %3697 = vrot.lane.b32.xlu0 %v3665, 127
    %v3698 = vpop.permute.xlu0 %3697
    %3699 = vrot.lane.b32.xlu0 %v3666, 127
    %v3700 = vpop.permute.xlu0 %3699
    %3701 = vrot.lane.b32.xlu0 %v3667, 127
    %v3702 = vpop.permute.xlu0 %3701
    %3703 = vrot.lane.b32.xlu0 %v3668, 127
    %v3704 = vpop.permute.xlu0 %3703
    %3705 = vrot.lane.b32.xlu0 %v3669, 127
    %v3706 = vpop.permute.xlu0 %3705
    %3707 = vrot.lane.b32.xlu0 %v3670, 127
    %v3708 = vpop.permute.xlu0 %3707
    %3709 = vrot.lane.b32.xlu0 %v3671, 127
    %v3710 = vpop.permute.xlu0 %3709
    %3711 = vrot.lane.b32.xlu0 %v3672, 127
    %v3712 = vpop.permute.xlu0 %3711
    %v3713 = vsel %vm216, %v3694, %v3696
    %v3714 = vsel %vm216, %v3698, %v3700
    %v3715 = vsel %vm216, %v3702, %v3704
    %v3716 = vsel %vm216, %v3706, %v3708
    %v3717 = vsel %vm216, %v3710, %v3712
    %3728 = vst [vmem:[#allocation4 + $0x50] sm:$0xff] %v3713
    %3729 = vst.msk [vmem:[#allocation4 + $0x58] sm:$0xff] %vm216, %v3696
    %3730 = vst [vmem:[#allocation4 + $0x60] sm:$0xff] %v3714
    %3731 = vst.msk [vmem:[#allocation4 + $0x68] sm:$0xff] %vm216, %v3700
    %3732 = vst [vmem:[#allocation4 + $0x70] sm:$0xff] %v3715
    %3733 = vst.msk [vmem:[#allocation4 + $0x78] sm:$0xff] %vm216, %v3704
    %3734 = vst [vmem:[#allocation4 + $0x80] sm:$0xff] %v3716
    %3735 = vst.msk [vmem:[#allocation4 + $0x88] sm:$0xff] %vm216, %v3708
    %3736 = vst [vmem:[#allocation4 + $0x90] sm:$0xff] %v3717
    %3737 = vst.msk [vmem:[#allocation4 + $0x98] sm:$0xff] %vm216, %v3712
    %v3738 = vld [vmem:[#allocation4] sm:$0xff]
    %v3739 = vld [vmem:[#allocation4 + $0x8] sm:$0xff]
    %v3740 = vld [vmem:[#allocation4 + $0x10] sm:$0xff]
    %v3741 = vld [vmem:[#allocation4 + $0x18] sm:$0xff]
    %v3742 = vld [vmem:[#allocation4 + $0x20] sm:$0xff]
    %v3743 = vld [vmem:[#allocation4 + $0x28] sm:$0xff]
    %v3744 = vld [vmem:[#allocation4 + $0x30] sm:$0xff]
    %v3745 = vld [vmem:[#allocation4 + $0x38] sm:$0xff]
    %v3746 = vld [vmem:[#allocation4 + $0x40] sm:$0xff]
    %v3747 = vld [vmem:[#allocation4 + $0x48] sm:$0xff]
    %v3748 = vld [vmem:[#allocation4 + $0x50] sm:$0xff]
    %v3749 = vld [vmem:[#allocation4 + $0x58] sm:$0xff]
    %v3750 = vld [vmem:[#allocation4 + $0x60] sm:$0xff]
    %v3751 = vld [vmem:[#allocation4 + $0x68] sm:$0xff]
    %v3752 = vld [vmem:[#allocation4 + $0x70] sm:$0xff]
    %v3753 = vld [vmem:[#allocation4 + $0x78] sm:$0xff]
    %v3754 = vld [vmem:[#allocation4 + $0x80] sm:$0xff]
    %v3755 = vld [vmem:[#allocation4 + $0x88] sm:$0xff]
    %v3756 = vld [vmem:[#allocation4 + $0x90] sm:$0xff]
    %v3757 = vld [vmem:[#allocation4 + $0x98] sm:$0xff]
    %v3758 = vpack.c.bf16 %v3740, %v3738
    %v3759 = vpack.c.bf16 %v3741, %v3739
    %v3760 = vpack.c.bf16 %v3744, %v3742
    %v3761 = vpack.c.bf16 %v3745, %v3743
    %v3762 = vpack.c.bf16 %v3748, %v3746
    %v3763 = vpack.c.bf16 %v3749, %v3747
    %v3764 = vpack.c.bf16 %v3752, %v3750
    %v3765 = vpack.c.bf16 %v3753, %v3751
    %v3766 = vpack.c.bf16 %v3756, %v3754
    %v3767 = vpack.c.bf16 %v3757, %v3755
    %3768 = vmatpush.bf16.msra.mxu0 0
    %3769 = vmatpush.bf16.msra.mxu0 0
    %3770 = vmatpush.bf16.msra.mxu0 0
    %3771 = vmatpush.bf16.msra.mxu0 %v3766
    %3772 = vmatpush.bf16.msra.mxu0 %v3764
    %3773 = vmatpush.bf16.msra.mxu0 %v3762
    %3774 = vmatpush.bf16.msra.mxu0 %v3760
    %3775 = vmatpush.bf16.msra.mxu0 %v3758
    %3776 = vmatmul.bf16.gmra.mxu0 %v2302
    %v3777 = vpop.f32.mrf.mxu0
    %v3778 = vadd.f32 0.0, %v3777
    %v3779 = vpop.f32.mrf.mxu0
    %v3780 = vadd.f32 0.0, %v3779
    %3781 = vdwg.mxu0
    %3782 = vmatpush.bf16.msra.mxu0 0
    %3783 = vmatpush.bf16.msra.mxu0 0
    %3784 = vmatpush.bf16.msra.mxu0 0
    %3785 = vmatpush.bf16.msra.mxu0 %v3767
    %3786 = vmatpush.bf16.msra.mxu0 %v3765
    %3787 = vmatpush.bf16.msra.mxu0 %v3763
    %3788 = vmatpush.bf16.msra.mxu0 %v3761
    %3789 = vmatpush.bf16.msra.mxu0 %v3759
    %3790 = vmatmul.bf16.gmra.mxu0 %v2302
    %v3791 = vpop.f32.mrf.mxu0
    %v3792 = vadd.f32 0.0, %v3791
    %v3793 = vpop.f32.mrf.mxu0
    %v3794 = vadd.f32 0.0, %v3793
    %3795 = vdwg.mxu0
    %v3796 = vadd.f32 %v3778, 0.0
    %v3797 = vadd.f32 %v3780, 0.0
    %v3798 = vadd.f32 %v3796, %v3792
    %v3799 = vadd.f32 %v3797, %v3794
    %v3800 = vmul.f32 %v3798, %v279
    %v3801 = vmul.f32 %v3799, %v279
    %v3802 = vsub.f32 %v3778, %v3800
    %v3803 = vsub.f32 %v3780, %v3801
    %v3804 = vmul.f32 %v3802, %v3802
    %v3805 = vmul.f32 %v3803, %v3803
    %v3806 = vadd.f32 %v3804, 0.0
    %v3807 = vadd.f32 %v3805, 0.0
    %v3808 = vsub.f32 %v3792, %v3800
    %v3809 = vsub.f32 %v3794, %v3801
    %v3810 = vmul.f32 %v3808, %v3808
    %v3811 = vmul.f32 %v3809, %v3809
    %v3812 = vadd.f32 %v3806, %v3810
    %v3813 = vadd.f32 %v3807, %v3811
    %v3814 = vmul.f32 %v3812, %v279
    %v3815 = vmul.f32 %v3813, %v279
    %v3816 = vadd.f32 %v3814, 1e-05
    %v3817 = vadd.f32 %v3815, 1e-05
    %v3818 = vrsqrt.pop %v3816
    %v3819 = vmul.f32 %v3818, %v3816
    %v3820 = vmul.f32 %v3819, %v3818
    %v3821 = vmul.f32 0.5, %v3820
    %v3822 = vsub.f32 1.5, %v3821
    %v3823 = vmul.f32 %v3818, %v3822
    %vm3824 = vweird.f32 %v3816
    %vm3825 = vweird.f32 %v3818
    %vm3826 = vmor %vm3824, %vm3825
    %v3827 = vsel %vm3826, %v3818, %v3823
    %v3828 = vrsqrt.pop %v3817
    %v3829 = vmul.f32 %v3828, %v3817
    %v3830 = vmul.f32 %v3829, %v3828
    %v3831 = vmul.f32 0.5, %v3830
    %v3832 = vsub.f32 1.5, %v3831
    %v3833 = vmul.f32 %v3828, %v3832
    %vm3834 = vweird.f32 %v3817
    %vm3835 = vweird.f32 %v3828
    %vm3836 = vmor %vm3834, %vm3835
    %v3837 = vsel %vm3836, %v3828, %v3833
    %v3838 = vld [vmem:[%s5 + $0x70] sm:$0xff]
    %v3839 = vld [vmem:[%s5 + $0x78] sm:$0xff]
    %v3840 = vld [vmem:[%s6 + $0x70] sm:$0xff]
    %v3841 = vld [vmem:[%s6 + $0x78] sm:$0xff]
    %v3842 = vmul.f32 %v3827, %v3838
    %v3843 = vmul.f32 %v3837, %v3839
    %v3844 = vmul.f32 %v3800, %v3842
    %v3845 = vmul.f32 %v3801, %v3843
    %v3846 = vsub.f32 %v3840, %v3844
    %v3847 = vsub.f32 %v3841, %v3845
    %v3848 = vmul.f32 %v3778, %v3842
    %v3849 = vmul.f32 %v3792, %v3842
    %v3850 = vmul.f32 %v3780, %v3843
    %v3851 = vmul.f32 %v3794, %v3843
    %v3852 = vadd.f32 %v3848, %v3846
    %v3853 = vadd.f32 %v3849, %v3846
    %v3854 = vadd.f32 %v3850, %v3847
    %v3855 = vadd.f32 %v3851, %v3847
    %vm3856 = vcmp.ge.f32.partialorder %v3852, 0.0
    %vm3857 = vcmp.ge.f32.partialorder %v3853, 0.0
    %vm3858 = vcmp.ge.f32.partialorder %v3854, 0.0
    %vm3859 = vcmp.ge.f32.partialorder %v3855, 0.0
    %v3860 = vmul.f32 %v2396, %v3852
    %v3861 = vmul.f32 %v2396, %v3853
    %v3862 = vmul.f32 %v2396, %v3854
    %v3863 = vmul.f32 %v2396, %v3855
    %v3864 = vsel %vm3856, %v3852, %v3860
    %v3865 = vsel %vm3857, %v3853, %v3861
    %v3866 = vsel %vm3858, %v3854, %v3862
    %v3867 = vsel %vm3859, %v3855, %v3863
    %3868 = vst [vmem:[#allocation3 + $0x120] sm:$0xff] %v3864
    %3869 = vst [vmem:[#allocation3 + $0x128] sm:$0xff] %v3865
    %3870 = vst [vmem:[#allocation3 + $0x130] sm:$0xff] %v3866
    %3871 = vst [vmem:[#allocation3 + $0x138] sm:$0xff] %v3867
    %v3872 = vld [vmem:[#allocation2 + $0x100] sm:$0xff]
    %v3873 = vld [vmem:[#allocation2 + $0x108] sm:$0xff]
    %v3874 = vld [vmem:[#allocation2 + $0x110] sm:$0xff]
    %v3875 = vld [vmem:[#allocation2 + $0x118] sm:$0xff]
    %v3876 = vld [vmem:[#allocation2 + $0x120] sm:$0xff]
    %v3877 = vld [vmem:[#allocation2 + $0x128] sm:$0xff]
    %v3878 = vld [vmem:[#allocation2 + $0x130] sm:$0xff]
    %v3879 = vld [vmem:[#allocation2 + $0x138] sm:$0xff]
    %v3880 = vld [vmem:[#allocation2 + $0x140] sm:$0xff]
    %v3881 = vld [vmem:[#allocation2 + $0x148] sm:$0xff]
    %3882 = vst [vmem:[#allocation4] sm:$0xff] %v3872
    %3883 = vst [vmem:[#allocation4 + $0x8] sm:$0xff] %v3873
    %3884 = vst [vmem:[#allocation4 + $0x10] sm:$0xff] %v3874
    %3885 = vst [vmem:[#allocation4 + $0x18] sm:$0xff] %v3875
    %3886 = vst [vmem:[#allocation4 + $0x20] sm:$0xff] %v3876
    %3887 = vst [vmem:[#allocation4 + $0x28] sm:$0xff] %v3877
    %3888 = vst [vmem:[#allocation4 + $0x30] sm:$0xff] %v3878
    %3889 = vst [vmem:[#allocation4 + $0x38] sm:$0xff] %v3879
    %3890 = vst [vmem:[#allocation4 + $0x40] sm:$0xff] %v3880
    %3891 = vst [vmem:[#allocation4 + $0x48] sm:$0xff] %v3881
    %3902 = vrot.lane.b32.xlu0 %v3872, 127
    %v3903 = vpop.permute.xlu0 %3902
    %3904 = vrot.lane.b32.xlu0 %v3873, 127
    %v3905 = vpop.permute.xlu0 %3904
    %3906 = vrot.lane.b32.xlu0 %v3874, 127
    %v3907 = vpop.permute.xlu0 %3906
    %3908 = vrot.lane.b32.xlu0 %v3875, 127
    %v3909 = vpop.permute.xlu0 %3908
    %3910 = vrot.lane.b32.xlu0 %v3876, 127
    %v3911 = vpop.permute.xlu0 %3910
    %3912 = vrot.lane.b32.xlu0 %v3877, 127
    %v3913 = vpop.permute.xlu0 %3912
    %3914 = vrot.lane.b32.xlu0 %v3878, 127
    %v3915 = vpop.permute.xlu0 %3914
    %3916 = vrot.lane.b32.xlu0 %v3879, 127
    %v3917 = vpop.permute.xlu0 %3916
    %3918 = vrot.lane.b32.xlu0 %v3880, 127
    %v3919 = vpop.permute.xlu0 %3918
    %3920 = vrot.lane.b32.xlu0 %v3881, 127
    %v3921 = vpop.permute.xlu0 %3920
    %v3922 = vsel %vm216, %v3903, %v3905
    %v3923 = vsel %vm216, %v3907, %v3909
    %v3924 = vsel %vm216, %v3911, %v3913
    %v3925 = vsel %vm216, %v3915, %v3917
    %v3926 = vsel %vm216, %v3919, %v3921
    %3937 = vst [vmem:[#allocation4 + $0x50] sm:$0xff] %v3922
    %3938 = vst.msk [vmem:[#allocation4 + $0x58] sm:$0xff] %vm216, %v3905
    %3939 = vst [vmem:[#allocation4 + $0x60] sm:$0xff] %v3923
    %3940 = vst.msk [vmem:[#allocation4 + $0x68] sm:$0xff] %vm216, %v3909
    %3941 = vst [vmem:[#allocation4 + $0x70] sm:$0xff] %v3924
    %3942 = vst.msk [vmem:[#allocation4 + $0x78] sm:$0xff] %vm216, %v3913
    %3943 = vst [vmem:[#allocation4 + $0x80] sm:$0xff] %v3925
    %3944 = vst.msk [vmem:[#allocation4 + $0x88] sm:$0xff] %vm216, %v3917
    %3945 = vst [vmem:[#allocation4 + $0x90] sm:$0xff] %v3926
    %3946 = vst.msk [vmem:[#allocation4 + $0x98] sm:$0xff] %vm216, %v3921
    %v3947 = vld [vmem:[#allocation4] sm:$0xff]
    %v3948 = vld [vmem:[#allocation4 + $0x8] sm:$0xff]
    %v3949 = vld [vmem:[#allocation4 + $0x10] sm:$0xff]
    %v3950 = vld [vmem:[#allocation4 + $0x18] sm:$0xff]
    %v3951 = vld [vmem:[#allocation4 + $0x20] sm:$0xff]
    %v3952 = vld [vmem:[#allocation4 + $0x28] sm:$0xff]
    %v3953 = vld [vmem:[#allocation4 + $0x30] sm:$0xff]
    %v3954 = vld [vmem:[#allocation4 + $0x38] sm:$0xff]
    %v3955 = vld [vmem:[#allocation4 + $0x40] sm:$0xff]
    %v3956 = vld [vmem:[#allocation4 + $0x48] sm:$0xff]
    %v3957 = vld [vmem:[#allocation4 + $0x50] sm:$0xff]
    %v3958 = vld [vmem:[#allocation4 + $0x58] sm:$0xff]
    %v3959 = vld [vmem:[#allocation4 + $0x60] sm:$0xff]
    %v3960 = vld [vmem:[#allocation4 + $0x68] sm:$0xff]
    %v3961 = vld [vmem:[#allocation4 + $0x70] sm:$0xff]
    %v3962 = vld [vmem:[#allocation4 + $0x78] sm:$0xff]
    %v3963 = vld [vmem:[#allocation4 + $0x80] sm:$0xff]
    %v3964 = vld [vmem:[#allocation4 + $0x88] sm:$0xff]
    %v3965 = vld [vmem:[#allocation4 + $0x90] sm:$0xff]
    %v3966 = vld [vmem:[#allocation4 + $0x98] sm:$0xff]
    %v3967 = vpack.c.bf16 %v3949, %v3947
    %v3968 = vpack.c.bf16 %v3950, %v3948
    %v3969 = vpack.c.bf16 %v3953, %v3951
    %v3970 = vpack.c.bf16 %v3954, %v3952
    %v3971 = vpack.c.bf16 %v3957, %v3955
    %v3972 = vpack.c.bf16 %v3958, %v3956
    %v3973 = vpack.c.bf16 %v3961, %v3959
    %v3974 = vpack.c.bf16 %v3962, %v3960
    %v3975 = vpack.c.bf16 %v3965, %v3963
    %v3976 = vpack.c.bf16 %v3966, %v3964
    %3977 = vmatpush.bf16.msra.mxu0 0
    %3978 = vmatpush.bf16.msra.mxu0 0
    %3979 = vmatpush.bf16.msra.mxu0 0
    %3980 = vmatpush.bf16.msra.mxu0 %v3975
    %3981 = vmatpush.bf16.msra.mxu0 %v3973
    %3982 = vmatpush.bf16.msra.mxu0 %v3971
    %3983 = vmatpush.bf16.msra.mxu0 %v3969
    %3984 = vmatpush.bf16.msra.mxu0 %v3967
    %3985 = vmatmul.bf16.gmra.mxu0 %v2302
    %v3986 = vpop.f32.mrf.mxu0
    %v3987 = vadd.f32 0.0, %v3986
    %v3988 = vpop.f32.mrf.mxu0
    %v3989 = vadd.f32 0.0, %v3988
    %3990 = vdwg.mxu0
    %3991 = vmatpush.bf16.msra.mxu0 0
    %3992 = vmatpush.bf16.msra.mxu0 0
    %3993 = vmatpush.bf16.msra.mxu0 0
    %3994 = vmatpush.bf16.msra.mxu0 %v3976
    %3995 = vmatpush.bf16.msra.mxu0 %v3974
    %3996 = vmatpush.bf16.msra.mxu0 %v3972
    %3997 = vmatpush.bf16.msra.mxu0 %v3970
    %3998 = vmatpush.bf16.msra.mxu0 %v3968
    %3999 = vmatmul.bf16.gmra.mxu0 %v2302
    %v4000 = vpop.f32.mrf.mxu0
    %v4001 = vadd.f32 0.0, %v4000
    %v4002 = vpop.f32.mrf.mxu0
    %v4003 = vadd.f32 0.0, %v4002
    %4004 = vdwg.mxu0
    %v4005 = vadd.f32 %v3987, 0.0
    %v4006 = vadd.f32 %v3989, 0.0
    %v4007 = vadd.f32 %v4005, %v4001
    %v4008 = vadd.f32 %v4006, %v4003
    %v4009 = vmul.f32 %v4007, %v279
    %v4010 = vmul.f32 %v4008, %v279
    %v4011 = vsub.f32 %v3987, %v4009
    %v4012 = vsub.f32 %v3989, %v4010
    %v4013 = vmul.f32 %v4011, %v4011
    %v4014 = vmul.f32 %v4012, %v4012
    %v4015 = vadd.f32 %v4013, 0.0
    %v4016 = vadd.f32 %v4014, 0.0
    %v4017 = vsub.f32 %v4001, %v4009
    %v4018 = vsub.f32 %v4003, %v4010
    %v4019 = vmul.f32 %v4017, %v4017
    %v4020 = vmul.f32 %v4018, %v4018
    %v4021 = vadd.f32 %v4015, %v4019
    %v4022 = vadd.f32 %v4016, %v4020
    %v4023 = vmul.f32 %v4021, %v279
    %v4024 = vmul.f32 %v4022, %v279
    %v4025 = vadd.f32 %v4023, 1e-05
    %v4026 = vadd.f32 %v4024, 1e-05
    %v4027 = vrsqrt.pop %v4025
    %v4028 = vmul.f32 %v4027, %v4025
    %v4029 = vmul.f32 %v4028, %v4027
    %v4030 = vmul.f32 0.5, %v4029
    %v4031 = vsub.f32 1.5, %v4030
    %v4032 = vmul.f32 %v4027, %v4031
    %vm4033 = vweird.f32 %v4025
    %vm4034 = vweird.f32 %v4027
    %vm4035 = vmor %vm4033, %vm4034
    %v4036 = vsel %vm4035, %v4027, %v4032
    %v4037 = vrsqrt.pop %v4026
    %v4038 = vmul.f32 %v4037, %v4026
    %v4039 = vmul.f32 %v4038, %v4037
    %v4040 = vmul.f32 0.5, %v4039
    %v4041 = vsub.f32 1.5, %v4040
    %v4042 = vmul.f32 %v4037, %v4041
    %vm4043 = vweird.f32 %v4026
    %vm4044 = vweird.f32 %v4037
    %vm4045 = vmor %vm4043, %vm4044
    %v4046 = vsel %vm4045, %v4037, %v4042
    %v4047 = vld [vmem:[%s5 + $0x80] sm:$0xff]
    %v4048 = vld [vmem:[%s5 + $0x88] sm:$0xff]
    %v4049 = vld [vmem:[%s6 + $0x80] sm:$0xff]
    %v4050 = vld [vmem:[%s6 + $0x88] sm:$0xff]
    %v4051 = vmul.f32 %v4036, %v4047
    %v4052 = vmul.f32 %v4046, %v4048
    %v4053 = vmul.f32 %v4009, %v4051
    %v4054 = vmul.f32 %v4010, %v4052
    %v4055 = vsub.f32 %v4049, %v4053
    %v4056 = vsub.f32 %v4050, %v4054
    %v4057 = vmul.f32 %v3987, %v4051
    %v4058 = vmul.f32 %v4001, %v4051
    %v4059 = vmul.f32 %v3989, %v4052
    %v4060 = vmul.f32 %v4003, %v4052
    %v4061 = vadd.f32 %v4057, %v4055
    %v4062 = vadd.f32 %v4058, %v4055
    %v4063 = vadd.f32 %v4059, %v4056
    %v4064 = vadd.f32 %v4060, %v4056
    %vm4065 = vcmp.ge.f32.partialorder %v4061, 0.0
    %vm4066 = vcmp.ge.f32.partialorder %v4062, 0.0
    %vm4067 = vcmp.ge.f32.partialorder %v4063, 0.0
    %vm4068 = vcmp.ge.f32.partialorder %v4064, 0.0
    %v4069 = vmul.f32 %v2396, %v4061
    %v4070 = vmul.f32 %v2396, %v4062
    %v4071 = vmul.f32 %v2396, %v4063
    %v4072 = vmul.f32 %v2396, %v4064
    %v4073 = vsel %vm4065, %v4061, %v4069
    %v4074 = vsel %vm4066, %v4062, %v4070
    %v4075 = vsel %vm4067, %v4063, %v4071
    %v4076 = vsel %vm4068, %v4064, %v4072
    %4077 = vst [vmem:[#allocation3 + $0x140] sm:$0xff] %v4073
    %4078 = vst [vmem:[#allocation3 + $0x148] sm:$0xff] %v4074
    %4079 = vst [vmem:[#allocation3 + $0x150] sm:$0xff] %v4075
    %4080 = vst [vmem:[#allocation3 + $0x158] sm:$0xff] %v4076
    %v4081 = vld [vmem:[%s7] sm:$0xff]
    %v4082 = vld [vmem:[%s7 + $0x8] sm:$0xff]
    %v4083 = vld [vmem:[%s7 + $0x10] sm:$0xff]
    %v4084 = vld [vmem:[%s7 + $0x18] sm:$0xff]
    %v4085 = vld [vmem:[%s7 + $0x20] sm:$0xff]
    %v4086 = vld [vmem:[%s7 + $0x28] sm:$0xff]
    %v4087 = vld [vmem:[%s7 + $0x30] sm:$0xff]
    %v4088 = vld [vmem:[%s7 + $0x38] sm:$0xff]
    %v4089 = vpack.c.bf16 %v4083, %v4081
    %v4090 = vpack.c.bf16 %v4084, %v4082
    %v4091 = vpack.c.bf16 %v4087, %v4085
    %v4092 = vpack.c.bf16 %v4088, %v4086
    %s4093 = sld [smem:[#allocation5 + $0x2]]
    %v4094 = vld [vmem:[#allocation3] sm:$0xff]
    %v4095 = vld [vmem:[#allocation3 + $0x8] sm:$0xff]
    %v4096 = vld [vmem:[#allocation3 + $0x10] sm:$0xff]
    %v4097 = vld [vmem:[#allocation3 + $0x18] sm:$0xff]
    %v4098 = vld [vmem:[#allocation3 + $0x20] sm:$0xff]
    %v4099 = vld [vmem:[#allocation3 + $0x28] sm:$0xff]
    %v4100 = vld [vmem:[#allocation3 + $0x30] sm:$0xff]
    %v4101 = vld [vmem:[#allocation3 + $0x38] sm:$0xff]
    %v4102 = vld [vmem:[#allocation3 + $0x40] sm:$0xff]
    %v4103 = vld [vmem:[#allocation3 + $0x48] sm:$0xff]
    %v4104 = vld [vmem:[#allocation3 + $0x50] sm:$0xff]
    %v4105 = vld [vmem:[#allocation3 + $0x58] sm:$0xff]
    %v4106 = vld [vmem:[#allocation3 + $0x60] sm:$0xff]
    %v4107 = vld [vmem:[#allocation3 + $0x68] sm:$0xff]
    %v4108 = vld [vmem:[#allocation3 + $0x70] sm:$0xff]
    %v4109 = vld [vmem:[#allocation3 + $0x78] sm:$0xff]
    %v4110 = vld [vmem:[#allocation3 + $0x80] sm:$0xff]
    %v4111 = vld [vmem:[#allocation3 + $0x88] sm:$0xff]
    %v4112 = vld [vmem:[#allocation3 + $0x90] sm:$0xff]
    %v4113 = vld [vmem:[#allocation3 + $0x98] sm:$0xff]
    %4114 = vst [vmem:[#allocation4] sm:$0xff] %v4094
    %4115 = vst [vmem:[#allocation4 + $0x8] sm:$0xff] %v4095
    %4116 = vst [vmem:[#allocation4 + $0x10] sm:$0xff] %v4096
    %4117 = vst [vmem:[#allocation4 + $0x18] sm:$0xff] %v4097
    %4118 = vst [vmem:[#allocation4 + $0x20] sm:$0xff] %v4098
    %4119 = vst [vmem:[#allocation4 + $0x28] sm:$0xff] %v4099
    %4120 = vst [vmem:[#allocation4 + $0x30] sm:$0xff] %v4100
    %4121 = vst [vmem:[#allocation4 + $0x38] sm:$0xff] %v4101
    %4122 = vst [vmem:[#allocation4 + $0x40] sm:$0xff] %v4102
    %4123 = vst [vmem:[#allocation4 + $0x48] sm:$0xff] %v4103
    %4124 = vst [vmem:[#allocation4 + $0x50] sm:$0xff] %v4104
    %4125 = vst [vmem:[#allocation4 + $0x58] sm:$0xff] %v4105
    %4126 = vst [vmem:[#allocation4 + $0x60] sm:$0xff] %v4106
    %4127 = vst [vmem:[#allocation4 + $0x68] sm:$0xff] %v4107
    %4128 = vst [vmem:[#allocation4 + $0x70] sm:$0xff] %v4108
    %4129 = vst [vmem:[#allocation4 + $0x78] sm:$0xff] %v4109
    %4130 = vst [vmem:[#allocation4 + $0x80] sm:$0xff] %v4110
    %4131 = vst [vmem:[#allocation4 + $0x88] sm:$0xff] %v4111
    %4132 = vst [vmem:[#allocation4 + $0x90] sm:$0xff] %v4112
    %4133 = vst [vmem:[#allocation4 + $0x98] sm:$0xff] %v4113
    %4154 = vrot.lane.b32.xlu0 %v4094, 127
    %v4155 = vpop.permute.xlu0 %4154
    %4156 = vrot.lane.b32.xlu0 %v4095, 127
    %v4157 = vpop.permute.xlu0 %4156
    %4158 = vrot.lane.b32.xlu0 %v4096, 127
    %v4159 = vpop.permute.xlu0 %4158
    %4160 = vrot.lane.b32.xlu0 %v4097, 127
    %v4161 = vpop.permute.xlu0 %4160
    %4162 = vrot.lane.b32.xlu0 %v4098, 127
    %v4163 = vpop.permute.xlu0 %4162
    %4164 = vrot.lane.b32.xlu0 %v4099, 127
    %v4165 = vpop.permute.xlu0 %4164
    %4166 = vrot.lane.b32.xlu0 %v4100, 127
    %v4167 = vpop.permute.xlu0 %4166
    %4168 = vrot.lane.b32.xlu0 %v4101, 127
    %v4169 = vpop.permute.xlu0 %4168
    %4170 = vrot.lane.b32.xlu0 %v4102, 127
    %v4171 = vpop.permute.xlu0 %4170
    %4172 = vrot.lane.b32.xlu0 %v4103, 127
    %v4173 = vpop.permute.xlu0 %4172
    %4174 = vrot.lane.b32.xlu0 %v4104, 127
    %v4175 = vpop.permute.xlu0 %4174
    %4176 = vrot.lane.b32.xlu0 %v4105, 127
    %v4177 = vpop.permute.xlu0 %4176
    %4178 = vrot.lane.b32.xlu0 %v4106, 127
    %v4179 = vpop.permute.xlu0 %4178
    %4180 = vrot.lane.b32.xlu0 %v4107, 127
    %v4181 = vpop.permute.xlu0 %4180
    %4182 = vrot.lane.b32.xlu0 %v4108, 127
    %v4183 = vpop.permute.xlu0 %4182
    %4184 = vrot.lane.b32.xlu0 %v4109, 127
    %v4185 = vpop.permute.xlu0 %4184
    %4186 = vrot.lane.b32.xlu0 %v4110, 127
    %v4187 = vpop.permute.xlu0 %4186
    %4188 = vrot.lane.b32.xlu0 %v4111, 127
    %v4189 = vpop.permute.xlu0 %4188
    %4190 = vrot.lane.b32.xlu0 %v4112, 127
    %v4191 = vpop.permute.xlu0 %4190
    %4192 = vrot.lane.b32.xlu0 %v4113, 127
    %v4193 = vpop.permute.xlu0 %4192
    %v4194 = vsel %vm216, %v4155, %v4157
    %v4195 = vsel %vm216, %v4159, %v4161
    %v4196 = vsel %vm216, %v4163, %v4165
    %v4197 = vsel %vm216, %v4167, %v4169
    %v4198 = vsel %vm216, %v4171, %v4173
    %v4199 = vsel %vm216, %v4175, %v4177
    %v4200 = vsel %vm216, %v4179, %v4181
    %v4201 = vsel %vm216, %v4183, %v4185
    %v4202 = vsel %vm216, %v4187, %v4189
    %v4203 = vsel %vm216, %v4191, %v4193
    %4224 = vst [vmem:[#allocation4 + $0xa0] sm:$0xff] %v4194
    %4225 = vst.msk [vmem:[#allocation4 + $0xa8] sm:$0xff] %vm216, %v4157
    %4226 = vst [vmem:[#allocation4 + $0xb0] sm:$0xff] %v4195
    %4227 = vst.msk [vmem:[#allocation4 + $0xb8] sm:$0xff] %vm216, %v4161
    %4228 = vst [vmem:[#allocation4 + $0xc0] sm:$0xff] %v4196
    %4229 = vst.msk [vmem:[#allocation4 + $0xc8] sm:$0xff] %vm216, %v4165
    %4230 = vst [vmem:[#allocation4 + $0xd0] sm:$0xff] %v4197
    %4231 = vst.msk [vmem:[#allocation4 + $0xd8] sm:$0xff] %vm216, %v4169
    %4232 = vst [vmem:[#allocation4 + $0xe0] sm:$0xff] %v4198
    %4233 = vst.msk [vmem:[#allocation4 + $0xe8] sm:$0xff] %vm216, %v4173
    %4234 = vst [vmem:[#allocation4 + $0xf0] sm:$0xff] %v4199
    %4235 = vst.msk [vmem:[#allocation4 + $0xf8] sm:$0xff] %vm216, %v4177
    %4236 = vst [vmem:[#allocation4 + $0x100] sm:$0xff] %v4200
    %4237 = vst.msk [vmem:[#allocation4 + $0x108] sm:$0xff] %vm216, %v4181
    %4238 = vst [vmem:[#allocation4 + $0x110] sm:$0xff] %v4201
    %4239 = vst.msk [vmem:[#allocation4 + $0x118] sm:$0xff] %vm216, %v4185
    %4240 = vst [vmem:[#allocation4 + $0x120] sm:$0xff] %v4202
    %4241 = vst.msk [vmem:[#allocation4 + $0x128] sm:$0xff] %vm216, %v4189
    %4242 = vst [vmem:[#allocation4 + $0x130] sm:$0xff] %v4203
    %4243 = vst.msk [vmem:[#allocation4 + $0x138] sm:$0xff] %vm216, %v4193
    %v4244 = vld [vmem:[#allocation4] sm:$0xff]
    %v4245 = vld [vmem:[#allocation4 + $0x8] sm:$0xff]
    %v4246 = vld [vmem:[#allocation4 + $0x10] sm:$0xff]
    %v4247 = vld [vmem:[#allocation4 + $0x18] sm:$0xff]
    %v4248 = vld [vmem:[#allocation4 + $0x20] sm:$0xff]
    %v4249 = vld [vmem:[#allocation4 + $0x28] sm:$0xff]
    %v4250 = vld [vmem:[#allocation4 + $0x30] sm:$0xff]
    %v4251 = vld [vmem:[#allocation4 + $0x38] sm:$0xff]
    %v4252 = vld [vmem:[#allocation4 + $0x40] sm:$0xff]
    %v4253 = vld [vmem:[#allocation4 + $0x48] sm:$0xff]
    %v4254 = vld [vmem:[#allocation4 + $0x50] sm:$0xff]
    %v4255 = vld [vmem:[#allocation4 + $0x58] sm:$0xff]
    %v4256 = vld [vmem:[#allocation4 + $0x60] sm:$0xff]
    %v4257 = vld [vmem:[#allocation4 + $0x68] sm:$0xff]
    %v4258 = vld [vmem:[#allocation4 + $0x70] sm:$0xff]
    %v4259 = vld [vmem:[#allocation4 + $0x78] sm:$0xff]
    %v4260 = vld [vmem:[#allocation4 + $0x80] sm:$0xff]
    %v4261 = vld [vmem:[#allocation4 + $0x88] sm:$0xff]
    %v4262 = vld [vmem:[#allocation4 + $0x90] sm:$0xff]
    %v4263 = vld [vmem:[#allocation4 + $0x98] sm:$0xff]
    %v4264 = vld [vmem:[#allocation4 + $0xa0] sm:$0xff]
    %v4265 = vld [vmem:[#allocation4 + $0xa8] sm:$0xff]
    %v4266 = vld [vmem:[#allocation4 + $0xb0] sm:$0xff]
    %v4267 = vld [vmem:[#allocation4 + $0xb8] sm:$0xff]
    %v4268 = vld [vmem:[#allocation4 + $0xc0] sm:$0xff]
    %v4269 = vld [vmem:[#allocation4 + $0xc8] sm:$0xff]
    %v4270 = vld [vmem:[#allocation4 + $0xd0] sm:$0xff]
    %v4271 = vld [vmem:[#allocation4 + $0xd8] sm:$0xff]
    %v4272 = vld [vmem:[#allocation4 + $0xe0] sm:$0xff]
    %v4273 = vld [vmem:[#allocation4 + $0xe8] sm:$0xff]
    %v4274 = vld [vmem:[#allocation4 + $0xf0] sm:$0xff]
    %v4275 = vld [vmem:[#allocation4 + $0xf8] sm:$0xff]
    %v4276 = vld [vmem:[#allocation4 + $0x100] sm:$0xff]
    %v4277 = vld [vmem:[#allocation4 + $0x108] sm:$0xff]
    %v4278 = vld [vmem:[#allocation4 + $0x110] sm:$0xff]
    %v4279 = vld [vmem:[#allocation4 + $0x118] sm:$0xff]
    %v4280 = vld [vmem:[#allocation4 + $0x120] sm:$0xff]
    %v4281 = vld [vmem:[#allocation4 + $0x128] sm:$0xff]
    %v4282 = vld [vmem:[#allocation4 + $0x130] sm:$0xff]
    %v4283 = vld [vmem:[#allocation4 + $0x138] sm:$0xff]
    %v4284 = vpack.c.bf16 %v4246, %v4244
    %v4285 = vpack.c.bf16 %v4247, %v4245
    %v4286 = vpack.c.bf16 %v4250, %v4248
    %v4287 = vpack.c.bf16 %v4251, %v4249
    %v4288 = vpack.c.bf16 %v4254, %v4252
    %v4289 = vpack.c.bf16 %v4255, %v4253
    %v4290 = vpack.c.bf16 %v4258, %v4256
    %v4291 = vpack.c.bf16 %v4259, %v4257
    %v4292 = vpack.c.bf16 %v4262, %v4260
    %v4293 = vpack.c.bf16 %v4263, %v4261
    %v4294 = vpack.c.bf16 %v4266, %v4264
    %v4295 = vpack.c.bf16 %v4267, %v4265
    %v4296 = vpack.c.bf16 %v4270, %v4268
    %v4297 = vpack.c.bf16 %v4271, %v4269
    %v4298 = vpack.c.bf16 %v4274, %v4272
    %v4299 = vpack.c.bf16 %v4275, %v4273
    %v4300 = vpack.c.bf16 %v4278, %v4276
    %v4301 = vpack.c.bf16 %v4279, %v4277
    %v4302 = vpack.c.bf16 %v4282, %v4280
    %v4303 = vpack.c.bf16 %v4283, %v4281
    %v4305 = vsel %vm241, %v4090, 0
    %v4308 = vsel %vm241, %v4092, 0
    %4310 = vmatpush.bf16.msra.mxu0 %v4298
    %4311 = vmatpush.bf16.msra.mxu0 %v4296
    %4312 = vmatpush.bf16.msra.mxu0 %v4294
    %4313 = vmatpush.bf16.msra.mxu0 %v4292
    %4314 = vmatpush.bf16.msra.mxu0 %v4290
    %4315 = vmatpush.bf16.msra.mxu0 %v4288
    %4316 = vmatpush.bf16.msra.mxu0 %v4286
    %4317 = vmatpush.bf16.msra.mxu0 %v4284
    %4318 = vmatmul.bf16.gmra.mxu0 %v4089
    %v4319 = vpop.f32.mrf.mxu0
    %v4320 = vadd.f32 0.0, %v4319
    %v4321 = vpop.f32.mrf.mxu0
    %v4322 = vadd.f32 0.0, %v4321
    %4323 = vmatmul.bf16.gmra.mxu0 %v4091
    %v4324 = vpop.f32.mrf.mxu0
    %v4325 = vadd.f32 0.0, %v4324
    %v4326 = vpop.f32.mrf.mxu0
    %v4327 = vadd.f32 0.0, %v4326
    %4328 = vdwg.mxu0
    %4329 = vmatpush.bf16.msra.mxu0 0
    %4330 = vmatpush.bf16.msra.mxu0 0
    %4331 = vmatpush.bf16.msra.mxu0 0
    %4332 = vmatpush.bf16.msra.mxu0 0
    %4333 = vmatpush.bf16.msra.mxu0 0
    %4334 = vmatpush.bf16.msra.mxu0 0
    %4335 = vmatpush.bf16.msra.mxu0 %v4302
    %4336 = vmatpush.bf16.msra.mxu0 %v4300
    %4337 = vmatmul.bf16.gmra.mxu0 %v4305
    %v4338 = vpop.f32.mrf.mxu0
    %v4339 = vadd.f32 %v4320, %v4338
    %v4340 = vpop.f32.mrf.mxu0
    %v4341 = vadd.f32 %v4322, %v4340
    %4342 = vmatmul.bf16.gmra.mxu0 %v4308
    %v4343 = vpop.f32.mrf.mxu0
    %v4344 = vadd.f32 %v4325, %v4343
    %v4345 = vpop.f32.mrf.mxu0
    %v4346 = vadd.f32 %v4327, %v4345
    %4347 = vdwg.mxu0
    %4348 = vmatpush.bf16.msra.mxu0 %v4299
    %4349 = vmatpush.bf16.msra.mxu0 %v4297
    %4350 = vmatpush.bf16.msra.mxu0 %v4295
    %4351 = vmatpush.bf16.msra.mxu0 %v4293
    %4352 = vmatpush.bf16.msra.mxu0 %v4291
    %4353 = vmatpush.bf16.msra.mxu0 %v4289
    %4354 = vmatpush.bf16.msra.mxu0 %v4287
    %4355 = vmatpush.bf16.msra.mxu0 %v4285
    %4356 = vmatmul.bf16.gmra.mxu0 %v4089
    %v4357 = vpop.f32.mrf.mxu0
    %v4358 = vadd.f32 0.0, %v4357
    %v4359 = vpop.f32.mrf.mxu0
    %v4360 = vadd.f32 0.0, %v4359
    %4361 = vmatmul.bf16.gmra.mxu0 %v4091
    %v4362 = vpop.f32.mrf.mxu0
    %v4363 = vadd.f32 0.0, %v4362
    %v4364 = vpop.f32.mrf.mxu0
    %v4365 = vadd.f32 0.0, %v4364
    %4366 = vdwg.mxu0
    %4367 = vmatpush.bf16.msra.mxu0 0
    %4368 = vmatpush.bf16.msra.mxu0 0
    %4369 = vmatpush.bf16.msra.mxu0 0
    %4370 = vmatpush.bf16.msra.mxu0 0
    %4371 = vmatpush.bf16.msra.mxu0 0
    %4372 = vmatpush.bf16.msra.mxu0 0
    %4373 = vmatpush.bf16.msra.mxu0 %v4303
    %4374 = vmatpush.bf16.msra.mxu0 %v4301
    %4375 = vmatmul.bf16.gmra.mxu0 %v4305
    %v4376 = vpop.f32.mrf.mxu0
    %v4377 = vadd.f32 %v4358, %v4376
    %v4378 = vpop.f32.mrf.mxu0
    %v4379 = vadd.f32 %v4360, %v4378
    %4380 = vmatmul.bf16.gmra.mxu0 %v4308
    %v4381 = vpop.f32.mrf.mxu0
    %v4382 = vadd.f32 %v4363, %v4381
    %v4383 = vpop.f32.mrf.mxu0
    %v4384 = vadd.f32 %v4365, %v4383
    %4385 = vdwg.mxu0
    %v4386 = vadd.f32 %v4339, 0.0
    %v4387 = vadd.f32 %v4341, 0.0
    %v4388 = vadd.f32 %v4344, 0.0
    %v4389 = vadd.f32 %v4346, 0.0
    %v4390 = vadd.f32 %v4386, %v4377
    %v4391 = vadd.f32 %v4387, %v4379
    %v4392 = vadd.f32 %v4388, %v4382
    %v4393 = vadd.f32 %v4389, %v4384
    %v4394 = vmul.f32 %v4390, %v279
    %v4395 = vmul.f32 %v4391, %v279
    %v4396 = vmul.f32 %v4392, %v279
    %v4397 = vmul.f32 %v4393, %v279
    %v4398 = vsub.f32 %v4339, %v4394
    %v4399 = vsub.f32 %v4341, %v4395
    %v4400 = vsub.f32 %v4344, %v4396
    %v4401 = vsub.f32 %v4346, %v4397
    %v4402 = vmul.f32 %v4398, %v4398
    %v4403 = vmul.f32 %v4399, %v4399
    %v4404 = vmul.f32 %v4400, %v4400
    %v4405 = vmul.f32 %v4401, %v4401
    %v4406 = vadd.f32 %v4402, 0.0
    %v4407 = vadd.f32 %v4403, 0.0
    %v4408 = vadd.f32 %v4404, 0.0
    %v4409 = vadd.f32 %v4405, 0.0
    %v4410 = vsub.f32 %v4377, %v4394
    %v4411 = vsub.f32 %v4379, %v4395
    %v4412 = vsub.f32 %v4382, %v4396
    %v4413 = vsub.f32 %v4384, %v4397
    %v4414 = vmul.f32 %v4410, %v4410
    %v4415 = vmul.f32 %v4411, %v4411
    %v4416 = vmul.f32 %v4412, %v4412
    %v4417 = vmul.f32 %v4413, %v4413
    %v4418 = vadd.f32 %v4406, %v4414
    %v4419 = vadd.f32 %v4407, %v4415
    %v4420 = vadd.f32 %v4408, %v4416
    %v4421 = vadd.f32 %v4409, %v4417
    %v4422 = vmul.f32 %v4418, %v279
    %v4423 = vmul.f32 %v4419, %v279
    %v4424 = vmul.f32 %v4420, %v279
    %v4425 = vmul.f32 %v4421, %v279
    %v4426 = vadd.f32 %v4422, 1e-05
    %v4427 = vadd.f32 %v4423, 1e-05
    %v4428 = vadd.f32 %v4424, 1e-05
    %v4429 = vadd.f32 %v4425, 1e-05
    %v4430 = vrsqrt.pop %v4426
    %v4431 = vmul.f32 %v4430, %v4426
    %v4432 = vmul.f32 %v4431, %v4430
    %v4433 = vmul.f32 0.5, %v4432
    %v4434 = vsub.f32 1.5, %v4433
    %v4435 = vmul.f32 %v4430, %v4434
    %vm4436 = vweird.f32 %v4426
    %vm4437 = vweird.f32 %v4430
    %vm4438 = vmor %vm4436, %vm4437
    %v4439 = vsel %vm4438, %v4430, %v4435
    %v4440 = vrsqrt.pop %v4427
    %v4441 = vmul.f32 %v4440, %v4427
    %v4442 = vmul.f32 %v4441, %v4440
    %v4443 = vmul.f32 0.5, %v4442
    %v4444 = vsub.f32 1.5, %v4443
    %v4445 = vmul.f32 %v4440, %v4444
    %vm4446 = vweird.f32 %v4427
    %vm4447 = vweird.f32 %v4440
    %vm4448 = vmor %vm4446, %vm4447
    %v4449 = vsel %vm4448, %v4440, %v4445
    %v4450 = vrsqrt.pop %v4428
    %v4451 = vmul.f32 %v4450, %v4428
    %v4452 = vmul.f32 %v4451, %v4450
    %v4453 = vmul.f32 0.5, %v4452
    %v4454 = vsub.f32 1.5, %v4453
    %v4455 = vmul.f32 %v4450, %v4454
    %vm4456 = vweird.f32 %v4428
    %vm4457 = vweird.f32 %v4450
    %vm4458 = vmor %vm4456, %vm4457
    %v4459 = vsel %vm4458, %v4450, %v4455
    %v4460 = vrsqrt.pop %v4429
    %v4461 = vmul.f32 %v4460, %v4429
    %v4462 = vmul.f32 %v4461, %v4460
    %v4463 = vmul.f32 0.5, %v4462
    %v4464 = vsub.f32 1.5, %v4463
    %v4465 = vmul.f32 %v4460, %v4464
    %vm4466 = vweird.f32 %v4429
    %vm4467 = vweird.f32 %v4460
    %vm4468 = vmor %vm4466, %vm4467
    %v4469 = vsel %vm4468, %v4460, %v4465
    %v4470 = vld [vmem:[%s8] sm:$0xff]
    %v4471 = vld [vmem:[%s8 + $0x8] sm:$0xff]
    %v4472 = vld [vmem:[%s8 + $0x10] sm:$0xff]
    %v4473 = vld [vmem:[%s8 + $0x18] sm:$0xff]
    %v4474 = vld [vmem:[%s9] sm:$0xff]
    %v4475 = vld [vmem:[%s9 + $0x8] sm:$0xff]
    %v4476 = vld [vmem:[%s9 + $0x10] sm:$0xff]
    %v4477 = vld [vmem:[%s9 + $0x18] sm:$0xff]
    %v4478 = vmul.f32 %v4439, %v4470
    %v4479 = vmul.f32 %v4449, %v4471
    %v4480 = vmul.f32 %v4459, %v4472
    %v4481 = vmul.f32 %v4469, %v4473
    %v4482 = vmul.f32 %v4394, %v4478
    %v4483 = vmul.f32 %v4395, %v4479
    %v4484 = vmul.f32 %v4396, %v4480
    %v4485 = vmul.f32 %v4397, %v4481
    %v4486 = vsub.f32 %v4474, %v4482
    %v4487 = vsub.f32 %v4475, %v4483
    %v4488 = vsub.f32 %v4476, %v4484
    %v4489 = vsub.f32 %v4477, %v4485
    %v4490 = vmul.f32 %v4339, %v4478
    %v4491 = vmul.f32 %v4377, %v4478
    %v4492 = vmul.f32 %v4341, %v4479
    %v4493 = vmul.f32 %v4379, %v4479
    %v4494 = vmul.f32 %v4344, %v4480
    %v4495 = vmul.f32 %v4382, %v4480
    %v4496 = vmul.f32 %v4346, %v4481
    %v4497 = vmul.f32 %v4384, %v4481
    %v4498 = vadd.f32 %v4490, %v4486
    %v4499 = vadd.f32 %v4491, %v4486
    %v4500 = vadd.f32 %v4492, %v4487
    %v4501 = vadd.f32 %v4493, %v4487
    %v4502 = vadd.f32 %v4494, %v4488
    %v4503 = vadd.f32 %v4495, %v4488
    %v4504 = vadd.f32 %v4496, %v4489
    %v4505 = vadd.f32 %v4497, %v4489
    %vm4506 = vcmp.ge.f32.partialorder %v4498, 0.0
    %vm4507 = vcmp.ge.f32.partialorder %v4499, 0.0
    %vm4508 = vcmp.ge.f32.partialorder %v4500, 0.0
    %vm4509 = vcmp.ge.f32.partialorder %v4501, 0.0
    %vm4510 = vcmp.ge.f32.partialorder %v4502, 0.0
    %vm4511 = vcmp.ge.f32.partialorder %v4503, 0.0
    %vm4512 = vcmp.ge.f32.partialorder %v4504, 0.0
    %vm4513 = vcmp.ge.f32.partialorder %v4505, 0.0
    %v4514 = vstv %s4093
    %v4515 = vmul.f32 %v4514, %v4498
    %v4516 = vmul.f32 %v4514, %v4499
    %v4517 = vmul.f32 %v4514, %v4500
    %v4518 = vmul.f32 %v4514, %v4501
    %v4519 = vmul.f32 %v4514, %v4502
    %v4520 = vmul.f32 %v4514, %v4503
    %v4521 = vmul.f32 %v4514, %v4504
    %v4522 = vmul.f32 %v4514, %v4505
    %v4523 = vsel %vm4506, %v4498, %v4515
    %v4524 = vsel %vm4507, %v4499, %v4516
    %v4525 = vsel %vm4508, %v4500, %v4517
    %v4526 = vsel %vm4509, %v4501, %v4518
    %v4527 = vsel %vm4510, %v4502, %v4519
    %v4528 = vsel %vm4511, %v4503, %v4520
    %v4529 = vsel %vm4512, %v4504, %v4521
    %v4530 = vsel %vm4513, %v4505, %v4522
    %4531 = vst [vmem:[%s11] sm:$0xff] %v4523
    %4532 = vst [vmem:[%s11 + $0x8] sm:$0xff] %v4524
    %4533 = vst [vmem:[%s11 + $0x10] sm:$0xff] %v4525
    %4534 = vst [vmem:[%s11 + $0x18] sm:$0xff] %v4526
    %4535 = vst [vmem:[%s11 + $0x20] sm:$0xff] %v4527
    %4536 = vst [vmem:[%s11 + $0x28] sm:$0xff] %v4528
    %4537 = vst [vmem:[%s11 + $0x30] sm:$0xff] %v4529
    %4538 = vst [vmem:[%s11 + $0x38] sm:$0xff] %v4530
    %v4539 = vld [vmem:[#allocation3 + $0x40] sm:$0xff]
    %v4540 = vld [vmem:[#allocation3 + $0x48] sm:$0xff]
    %v4541 = vld [vmem:[#allocation3 + $0x50] sm:$0xff]
    %v4542 = vld [vmem:[#allocation3 + $0x58] sm:$0xff]
    %v4543 = vld [vmem:[#allocation3 + $0x60] sm:$0xff]
    %v4544 = vld [vmem:[#allocation3 + $0x68] sm:$0xff]
    %v4545 = vld [vmem:[#allocation3 + $0x70] sm:$0xff]
    %v4546 = vld [vmem:[#allocation3 + $0x78] sm:$0xff]
    %v4547 = vld [vmem:[#allocation3 + $0x80] sm:$0xff]
    %v4548 = vld [vmem:[#allocation3 + $0x88] sm:$0xff]
    %v4549 = vld [vmem:[#allocation3 + $0x90] sm:$0xff]
    %v4550 = vld [vmem:[#allocation3 + $0x98] sm:$0xff]
    %v4551 = vld [vmem:[#allocation3 + $0xa0] sm:$0xff]
    %v4552 = vld [vmem:[#allocation3 + $0xa8] sm:$0xff]
    %v4553 = vld [vmem:[#allocation3 + $0xb0] sm:$0xff]
    %v4554 = vld [vmem:[#allocation3 + $0xb8] sm:$0xff]
    %v4555 = vld [vmem:[#allocation3 + $0xc0] sm:$0xff]
    %v4556 = vld [vmem:[#allocation3 + $0xc8] sm:$0xff]
    %v4557 = vld [vmem:[#allocation3 + $0xd0] sm:$0xff]
    %v4558 = vld [vmem:[#allocation3 + $0xd8] sm:$0xff]
    %4559 = vst [vmem:[#allocation4] sm:$0xff] %v4539
    %4560 = vst [vmem:[#allocation4 + $0x8] sm:$0xff] %v4540
    %4561 = vst [vmem:[#allocation4 + $0x10] sm:$0xff] %v4541
    %4562 = vst [vmem:[#allocation4 + $0x18] sm:$0xff] %v4542
    %4563 = vst [vmem:[#allocation4 + $0x20] sm:$0xff] %v4543
    %4564 = vst [vmem:[#allocation4 + $0x28] sm:$0xff] %v4544
    %4565 = vst [vmem:[#allocation4 + $0x30] sm:$0xff] %v4545
    %4566 = vst [vmem:[#allocation4 + $0x38] sm:$0xff] %v4546
    %4567 = vst [vmem:[#allocation4 + $0x40] sm:$0xff] %v4547
    %4568 = vst [vmem:[#allocation4 + $0x48] sm:$0xff] %v4548
    %4569 = vst [vmem:[#allocation4 + $0x50] sm:$0xff] %v4549
    %4570 = vst [vmem:[#allocation4 + $0x58] sm:$0xff] %v4550
    %4571 = vst [vmem:[#allocation4 + $0x60] sm:$0xff] %v4551
    %4572 = vst [vmem:[#allocation4 + $0x68] sm:$0xff] %v4552
    %4573 = vst [vmem:[#allocation4 + $0x70] sm:$0xff] %v4553
    %4574 = vst [vmem:[#allocation4 + $0x78] sm:$0xff] %v4554
    %4575 = vst [vmem:[#allocation4 + $0x80] sm:$0xff] %v4555
    %4576 = vst [vmem:[#allocation4 + $0x88] sm:$0xff] %v4556
    %4577 = vst [vmem:[#allocation4 + $0x90] sm:$0xff] %v4557
    %4578 = vst [vmem:[#allocation4 + $0x98] sm:$0xff] %v4558
    %4599 = vrot.lane.b32.xlu0 %v4539, 127
    %v4600 = vpop.permute.xlu0 %4599
    %4601 = vrot.lane.b32.xlu0 %v4540, 127
    %v4602 = vpop.permute.xlu0 %4601
    %4603 = vrot.lane.b32.xlu0 %v4541, 127
    %v4604 = vpop.permute.xlu0 %4603
    %4605 = vrot.lane.b32.xlu0 %v4542, 127
    %v4606 = vpop.permute.xlu0 %4605
    %4607 = vrot.lane.b32.xlu0 %v4543, 127
    %v4608 = vpop.permute.xlu0 %4607
    %4609 = vrot.lane.b32.xlu0 %v4544, 127
    %v4610 = vpop.permute.xlu0 %4609
    %4611 = vrot.lane.b32.xlu0 %v4545, 127
    %v4612 = vpop.permute.xlu0 %4611
    %4613 = vrot.lane.b32.xlu0 %v4546, 127
    %v4614 = vpop.permute.xlu0 %4613
    %4615 = vrot.lane.b32.xlu0 %v4547, 127
    %v4616 = vpop.permute.xlu0 %4615
    %4617 = vrot.lane.b32.xlu0 %v4548, 127
    %v4618 = vpop.permute.xlu0 %4617
    %4619 = vrot.lane.b32.xlu0 %v4549, 127
    %v4620 = vpop.permute.xlu0 %4619
    %4621 = vrot.lane.b32.xlu0 %v4550, 127
    %v4622 = vpop.permute.xlu0 %4621
    %4623 = vrot.lane.b32.xlu0 %v4551, 127
    %v4624 = vpop.permute.xlu0 %4623
    %4625 = vrot.lane.b32.xlu0 %v4552, 127
    %v4626 = vpop.permute.xlu0 %4625
    %4627 = vrot.lane.b32.xlu0 %v4553, 127
    %v4628 = vpop.permute.xlu0 %4627
    %4629 = vrot.lane.b32.xlu0 %v4554, 127
    %v4630 = vpop.permute.xlu0 %4629
    %4631 = vrot.lane.b32.xlu0 %v4555, 127
    %v4632 = vpop.permute.xlu0 %4631
    %4633 = vrot.lane.b32.xlu0 %v4556, 127
    %v4634 = vpop.permute.xlu0 %4633
    %4635 = vrot.lane.b32.xlu0 %v4557, 127
    %v4636 = vpop.permute.xlu0 %4635
    %4637 = vrot.lane.b32.xlu0 %v4558, 127
    %v4638 = vpop.permute.xlu0 %4637
    %v4639 = vsel %vm216, %v4600, %v4602
    %v4640 = vsel %vm216, %v4604, %v4606
    %v4641 = vsel %vm216, %v4608, %v4610
    %v4642 = vsel %vm216, %v4612, %v4614
    %v4643 = vsel %vm216, %v4616, %v4618
    %v4644 = vsel %vm216, %v4620, %v4622
    %v4645 = vsel %vm216, %v4624, %v4626
    %v4646 = vsel %vm216, %v4628, %v4630
    %v4647 = vsel %vm216, %v4632, %v4634
    %v4648 = vsel %vm216, %v4636, %v4638
    %4669 = vst [vmem:[#allocation4 + $0xa0] sm:$0xff] %v4639
    %4670 = vst.msk [vmem:[#allocation4 + $0xa8] sm:$0xff] %vm216, %v4602
    %4671 = vst [vmem:[#allocation4 + $0xb0] sm:$0xff] %v4640
    %4672 = vst.msk [vmem:[#allocation4 + $0xb8] sm:$0xff] %vm216, %v4606
    %4673 = vst [vmem:[#allocation4 + $0xc0] sm:$0xff] %v4641
    %4674 = vst.msk [vmem:[#allocation4 + $0xc8] sm:$0xff] %vm216, %v4610
    %4675 = vst [vmem:[#allocation4 + $0xd0] sm:$0xff] %v4642
    %4676 = vst.msk [vmem:[#allocation4 + $0xd8] sm:$0xff] %vm216, %v4614
    %4677 = vst [vmem:[#allocation4 + $0xe0] sm:$0xff] %v4643
    %4678 = vst.msk [vmem:[#allocation4 + $0xe8] sm:$0xff] %vm216, %v4618
    %4679 = vst [vmem:[#allocation4 + $0xf0] sm:$0xff] %v4644
    %4680 = vst.msk [vmem:[#allocation4 + $0xf8] sm:$0xff] %vm216, %v4622
    %4681 = vst [vmem:[#allocation4 + $0x100] sm:$0xff] %v4645
    %4682 = vst.msk [vmem:[#allocation4 + $0x108] sm:$0xff] %vm216, %v4626
    %4683 = vst [vmem:[#allocation4 + $0x110] sm:$0xff] %v4646
    %4684 = vst.msk [vmem:[#allocation4 + $0x118] sm:$0xff] %vm216, %v4630
    %4685 = vst [vmem:[#allocation4 + $0x120] sm:$0xff] %v4647
    %4686 = vst.msk [vmem:[#allocation4 + $0x128] sm:$0xff] %vm216, %v4634
    %4687 = vst [vmem:[#allocation4 + $0x130] sm:$0xff] %v4648
    %4688 = vst.msk [vmem:[#allocation4 + $0x138] sm:$0xff] %vm216, %v4638
    %v4689 = vld [vmem:[#allocation4] sm:$0xff]
    %v4690 = vld [vmem:[#allocation4 + $0x8] sm:$0xff]
    %v4691 = vld [vmem:[#allocation4 + $0x10] sm:$0xff]
    %v4692 = vld [vmem:[#allocation4 + $0x18] sm:$0xff]
    %v4693 = vld [vmem:[#allocation4 + $0x20] sm:$0xff]
    %v4694 = vld [vmem:[#allocation4 + $0x28] sm:$0xff]
    %v4695 = vld [vmem:[#allocation4 + $0x30] sm:$0xff]
    %v4696 = vld [vmem:[#allocation4 + $0x38] sm:$0xff]
    %v4697 = vld [vmem:[#allocation4 + $0x40] sm:$0xff]
    %v4698 = vld [vmem:[#allocation4 + $0x48] sm:$0xff]
    %v4699 = vld [vmem:[#allocation4 + $0x50] sm:$0xff]
    %v4700 = vld [vmem:[#allocation4 + $0x58] sm:$0xff]
    %v4701 = vld [vmem:[#allocation4 + $0x60] sm:$0xff]
    %v4702 = vld [vmem:[#allocation4 + $0x68] sm:$0xff]
    %v4703 = vld [vmem:[#allocation4 + $0x70] sm:$0xff]
    %v4704 = vld [vmem:[#allocation4 + $0x78] sm:$0xff]
    %v4705 = vld [vmem:[#allocation4 + $0x80] sm:$0xff]
    %v4706 = vld [vmem:[#allocation4 + $0x88] sm:$0xff]
    %v4707 = vld [vmem:[#allocation4 + $0x90] sm:$0xff]
    %v4708 = vld [vmem:[#allocation4 + $0x98] sm:$0xff]
    %v4709 = vld [vmem:[#allocation4 + $0xa0] sm:$0xff]
    %v4710 = vld [vmem:[#allocation4 + $0xa8] sm:$0xff]
    %v4711 = vld [vmem:[#allocation4 + $0xb0] sm:$0xff]
    %v4712 = vld [vmem:[#allocation4 + $0xb8] sm:$0xff]
    %v4713 = vld [vmem:[#allocation4 + $0xc0] sm:$0xff]
    %v4714 = vld [vmem:[#allocation4 + $0xc8] sm:$0xff]
    %v4715 = vld [vmem:[#allocation4 + $0xd0] sm:$0xff]
    %v4716 = vld [vmem:[#allocation4 + $0xd8] sm:$0xff]
    %v4717 = vld [vmem:[#allocation4 + $0xe0] sm:$0xff]
    %v4718 = vld [vmem:[#allocation4 + $0xe8] sm:$0xff]
    %v4719 = vld [vmem:[#allocation4 + $0xf0] sm:$0xff]
    %v4720 = vld [vmem:[#allocation4 + $0xf8] sm:$0xff]
    %v4721 = vld [vmem:[#allocation4 + $0x100] sm:$0xff]
    %v4722 = vld [vmem:[#allocation4 + $0x108] sm:$0xff]
    %v4723 = vld [vmem:[#allocation4 + $0x110] sm:$0xff]
    %v4724 = vld [vmem:[#allocation4 + $0x118] sm:$0xff]
    %v4725 = vld [vmem:[#allocation4 + $0x120] sm:$0xff]
    %v4726 = vld [vmem:[#allocation4 + $0x128] sm:$0xff]
    %v4727 = vld [vmem:[#allocation4 + $0x130] sm:$0xff]
    %v4728 = vld [vmem:[#allocation4 + $0x138] sm:$0xff]
    %v4729 = vpack.c.bf16 %v4691, %v4689
    %v4730 = vpack.c.bf16 %v4692, %v4690
    %v4731 = vpack.c.bf16 %v4695, %v4693
    %v4732 = vpack.c.bf16 %v4696, %v4694
    %v4733 = vpack.c.bf16 %v4699, %v4697
    %v4734 = vpack.c.bf16 %v4700, %v4698
    %v4735 = vpack.c.bf16 %v4703, %v4701
    %v4736 = vpack.c.bf16 %v4704, %v4702
    %v4737 = vpack.c.bf16 %v4707, %v4705
    %v4738 = vpack.c.bf16 %v4708, %v4706
    %v4739 = vpack.c.bf16 %v4711, %v4709
    %v4740 = vpack.c.bf16 %v4712, %v4710
    %v4741 = vpack.c.bf16 %v4715, %v4713
    %v4742 = vpack.c.bf16 %v4716, %v4714
    %v4743 = vpack.c.bf16 %v4719, %v4717
    %v4744 = vpack.c.bf16 %v4720, %v4718
    %v4745 = vpack.c.bf16 %v4723, %v4721
    %v4746 = vpack.c.bf16 %v4724, %v4722
    %v4747 = vpack.c.bf16 %v4727, %v4725
    %v4748 = vpack.c.bf16 %v4728, %v4726
    %4749 = vmatpush.bf16.msra.mxu0 %v4743
    %4750 = vmatpush.bf16.msra.mxu0 %v4741
    %4751 = vmatpush.bf16.msra.mxu0 %v4739
    %4752 = vmatpush.bf16.msra.mxu0 %v4737
    %4753 = vmatpush.bf16.msra.mxu0 %v4735
    %4754 = vmatpush.bf16.msra.mxu0 %v4733
    %4755 = vmatpush.bf16.msra.mxu0 %v4731
    %4756 = vmatpush.bf16.msra.mxu0 %v4729
    %4757 = vmatmul.bf16.gmra.mxu0 %v4089
    %v4758 = vpop.f32.mrf.mxu0
    %v4759 = vadd.f32 0.0, %v4758
    %v4760 = vpop.f32.mrf.mxu0
    %v4761 = vadd.f32 0.0, %v4760
    %4762 = vmatmul.bf16.gmra.mxu0 %v4091
    %v4763 = vpop.f32.mrf.mxu0
    %v4764 = vadd.f32 0.0, %v4763
    %v4765 = vpop.f32.mrf.mxu0
    %v4766 = vadd.f32 0.0, %v4765
    %4767 = vdwg.mxu0
    %4768 = vmatpush.bf16.msra.mxu0 0
    %4769 = vmatpush.bf16.msra.mxu0 0
    %4770 = vmatpush.bf16.msra.mxu0 0
    %4771 = vmatpush.bf16.msra.mxu0 0
    %4772 = vmatpush.bf16.msra.mxu0 0
    %4773 = vmatpush.bf16.msra.mxu0 0
    %4774 = vmatpush.bf16.msra.mxu0 %v4747
    %4775 = vmatpush.bf16.msra.mxu0 %v4745
    %4776 = vmatmul.bf16.gmra.mxu0 %v4305
    %v4777 = vpop.f32.mrf.mxu0
    %v4778 = vadd.f32 %v4759, %v4777
    %v4779 = vpop.f32.mrf.mxu0
    %v4780 = vadd.f32 %v4761, %v4779
    %4781 = vmatmul.bf16.gmra.mxu0 %v4308
    %v4782 = vpop.f32.mrf.mxu0
    %v4783 = vadd.f32 %v4764, %v4782
    %v4784 = vpop.f32.mrf.mxu0
    %v4785 = vadd.f32 %v4766, %v4784
    %4786 = vdwg.mxu0
    %4787 = vmatpush.bf16.msra.mxu0 %v4744
    %4788 = vmatpush.bf16.msra.mxu0 %v4742
    %4789 = vmatpush.bf16.msra.mxu0 %v4740
    %4790 = vmatpush.bf16.msra.mxu0 %v4738
    %4791 = vmatpush.bf16.msra.mxu0 %v4736
    %4792 = vmatpush.bf16.msra.mxu0 %v4734
    %4793 = vmatpush.bf16.msra.mxu0 %v4732
    %4794 = vmatpush.bf16.msra.mxu0 %v4730
    %4795 = vmatmul.bf16.gmra.mxu0 %v4089
    %v4796 = vpop.f32.mrf.mxu0
    %v4797 = vadd.f32 0.0, %v4796
    %v4798 = vpop.f32.mrf.mxu0
    %v4799 = vadd.f32 0.0, %v4798
    %4800 = vmatmul.bf16.gmra.mxu0 %v4091
    %v4801 = vpop.f32.mrf.mxu0
    %v4802 = vadd.f32 0.0, %v4801
    %v4803 = vpop.f32.mrf.mxu0
    %v4804 = vadd.f32 0.0, %v4803
    %4805 = vdwg.mxu0
    %4806 = vmatpush.bf16.msra.mxu0 0
    %4807 = vmatpush.bf16.msra.mxu0 0
    %4808 = vmatpush.bf16.msra.mxu0 0
    %4809 = vmatpush.bf16.msra.mxu0 0
    %4810 = vmatpush.bf16.msra.mxu0 0
    %4811 = vmatpush.bf16.msra.mxu0 0
    %4812 = vmatpush.bf16.msra.mxu0 %v4748
    %4813 = vmatpush.bf16.msra.mxu0 %v4746
    %4814 = vmatmul.bf16.gmra.mxu0 %v4305
    %v4815 = vpop.f32.mrf.mxu0
    %v4816 = vadd.f32 %v4797, %v4815
    %v4817 = vpop.f32.mrf.mxu0
    %v4818 = vadd.f32 %v4799, %v4817
    %4819 = vmatmul.bf16.gmra.mxu0 %v4308
    %v4820 = vpop.f32.mrf.mxu0
    %v4821 = vadd.f32 %v4802, %v4820
    %v4822 = vpop.f32.mrf.mxu0
    %v4823 = vadd.f32 %v4804, %v4822
    %4824 = vdwg.mxu0
    %v4825 = vadd.f32 %v4778, 0.0
    %v4826 = vadd.f32 %v4780, 0.0
    %v4827 = vadd.f32 %v4783, 0.0
    %v4828 = vadd.f32 %v4785, 0.0
    %v4829 = vadd.f32 %v4825, %v4816
    %v4830 = vadd.f32 %v4826, %v4818
    %v4831 = vadd.f32 %v4827, %v4821
    %v4832 = vadd.f32 %v4828, %v4823
    %v4833 = vmul.f32 %v4829, %v279
    %v4834 = vmul.f32 %v4830, %v279
    %v4835 = vmul.f32 %v4831, %v279
    %v4836 = vmul.f32 %v4832, %v279
    %v4837 = vsub.f32 %v4778, %v4833
    %v4838 = vsub.f32 %v4780, %v4834
    %v4839 = vsub.f32 %v4783, %v4835
    %v4840 = vsub.f32 %v4785, %v4836
    %v4841 = vmul.f32 %v4837, %v4837
    %v4842 = vmul.f32 %v4838, %v4838
    %v4843 = vmul.f32 %v4839, %v4839
    %v4844 = vmul.f32 %v4840, %v4840
    %v4845 = vadd.f32 %v4841, 0.0
    %v4846 = vadd.f32 %v4842, 0.0
    %v4847 = vadd.f32 %v4843, 0.0
    %v4848 = vadd.f32 %v4844, 0.0
    %v4849 = vsub.f32 %v4816, %v4833
    %v4850 = vsub.f32 %v4818, %v4834
    %v4851 = vsub.f32 %v4821, %v4835
    %v4852 = vsub.f32 %v4823, %v4836
    %v4853 = vmul.f32 %v4849, %v4849
    %v4854 = vmul.f32 %v4850, %v4850
    %v4855 = vmul.f32 %v4851, %v4851
    %v4856 = vmul.f32 %v4852, %v4852
    %v4857 = vadd.f32 %v4845, %v4853
    %v4858 = vadd.f32 %v4846, %v4854
    %v4859 = vadd.f32 %v4847, %v4855
    %v4860 = vadd.f32 %v4848, %v4856
    %v4861 = vmul.f32 %v4857, %v279
    %v4862 = vmul.f32 %v4858, %v279
    %v4863 = vmul.f32 %v4859, %v279
    %v4864 = vmul.f32 %v4860, %v279
    %v4865 = vadd.f32 %v4861, 1e-05
    %v4866 = vadd.f32 %v4862, 1e-05
    %v4867 = vadd.f32 %v4863, 1e-05
    %v4868 = vadd.f32 %v4864, 1e-05
    %v4869 = vrsqrt.pop %v4865
    %v4870 = vmul.f32 %v4869, %v4865
    %v4871 = vmul.f32 %v4870, %v4869
    %v4872 = vmul.f32 0.5, %v4871
    %v4873 = vsub.f32 1.5, %v4872
    %v4874 = vmul.f32 %v4869, %v4873
    %vm4875 = vweird.f32 %v4865
    %vm4876 = vweird.f32 %v4869
    %vm4877 = vmor %vm4875, %vm4876
    %v4878 = vsel %vm4877, %v4869, %v4874
    %v4879 = vrsqrt.pop %v4866
    %v4880 = vmul.f32 %v4879, %v4866
    %v4881 = vmul.f32 %v4880, %v4879
    %v4882 = vmul.f32 0.5, %v4881
    %v4883 = vsub.f32 1.5, %v4882
    %v4884 = vmul.f32 %v4879, %v4883
    %vm4885 = vweird.f32 %v4866
    %vm4886 = vweird.f32 %v4879
    %vm4887 = vmor %vm4885, %vm4886
    %v4888 = vsel %vm4887, %v4879, %v4884
    %v4889 = vrsqrt.pop %v4867
    %v4890 = vmul.f32 %v4889, %v4867
    %v4891 = vmul.f32 %v4890, %v4889
    %v4892 = vmul.f32 0.5, %v4891
    %v4893 = vsub.f32 1.5, %v4892
    %v4894 = vmul.f32 %v4889, %v4893
    %vm4895 = vweird.f32 %v4867
    %vm4896 = vweird.f32 %v4889
    %vm4897 = vmor %vm4895, %vm4896
    %v4898 = vsel %vm4897, %v4889, %v4894
    %v4899 = vrsqrt.pop %v4868
    %v4900 = vmul.f32 %v4899, %v4868
    %v4901 = vmul.f32 %v4900, %v4899
    %v4902 = vmul.f32 0.5, %v4901
    %v4903 = vsub.f32 1.5, %v4902
    %v4904 = vmul.f32 %v4899, %v4903
    %vm4905 = vweird.f32 %v4868
    %vm4906 = vweird.f32 %v4899
    %vm4907 = vmor %vm4905, %vm4906
    %v4908 = vsel %vm4907, %v4899, %v4904
    %v4909 = vld [vmem:[%s8 + $0x20] sm:$0xff]
    %v4910 = vld [vmem:[%s8 + $0x28] sm:$0xff]
    %v4911 = vld [vmem:[%s8 + $0x30] sm:$0xff]
    %v4912 = vld [vmem:[%s8 + $0x38] sm:$0xff]
    %v4913 = vld [vmem:[%s9 + $0x20] sm:$0xff]
    %v4914 = vld [vmem:[%s9 + $0x28] sm:$0xff]
    %v4915 = vld [vmem:[%s9 + $0x30] sm:$0xff]
    %v4916 = vld [vmem:[%s9 + $0x38] sm:$0xff]
    %v4917 = vmul.f32 %v4878, %v4909
    %v4918 = vmul.f32 %v4888, %v4910
    %v4919 = vmul.f32 %v4898, %v4911
    %v4920 = vmul.f32 %v4908, %v4912
    %v4921 = vmul.f32 %v4833, %v4917
    %v4922 = vmul.f32 %v4834, %v4918
    %v4923 = vmul.f32 %v4835, %v4919
    %v4924 = vmul.f32 %v4836, %v4920
    %v4925 = vsub.f32 %v4913, %v4921
    %v4926 = vsub.f32 %v4914, %v4922
    %v4927 = vsub.f32 %v4915, %v4923
    %v4928 = vsub.f32 %v4916, %v4924
    %v4929 = vmul.f32 %v4778, %v4917
    %v4930 = vmul.f32 %v4816, %v4917
    %v4931 = vmul.f32 %v4780, %v4918
    %v4932 = vmul.f32 %v4818, %v4918
    %v4933 = vmul.f32 %v4783, %v4919
    %v4934 = vmul.f32 %v4821, %v4919
    %v4935 = vmul.f32 %v4785, %v4920
    %v4936 = vmul.f32 %v4823, %v4920
    %v4937 = vadd.f32 %v4929, %v4925
    %v4938 = vadd.f32 %v4930, %v4925
    %v4939 = vadd.f32 %v4931, %v4926
    %v4940 = vadd.f32 %v4932, %v4926
    %v4941 = vadd.f32 %v4933, %v4927
    %v4942 = vadd.f32 %v4934, %v4927
    %v4943 = vadd.f32 %v4935, %v4928
    %v4944 = vadd.f32 %v4936, %v4928
    %vm4945 = vcmp.ge.f32.partialorder %v4937, 0.0
    %vm4946 = vcmp.ge.f32.partialorder %v4938, 0.0
    %vm4947 = vcmp.ge.f32.partialorder %v4939, 0.0
    %vm4948 = vcmp.ge.f32.partialorder %v4940, 0.0
    %vm4949 = vcmp.ge.f32.partialorder %v4941, 0.0
    %vm4950 = vcmp.ge.f32.partialorder %v4942, 0.0
    %vm4951 = vcmp.ge.f32.partialorder %v4943, 0.0
    %vm4952 = vcmp.ge.f32.partialorder %v4944, 0.0
    %v4953 = vmul.f32 %v4514, %v4937
    %v4954 = vmul.f32 %v4514, %v4938
    %v4955 = vmul.f32 %v4514, %v4939
    %v4956 = vmul.f32 %v4514, %v4940
    %v4957 = vmul.f32 %v4514, %v4941
    %v4958 = vmul.f32 %v4514, %v4942
    %v4959 = vmul.f32 %v4514, %v4943
    %v4960 = vmul.f32 %v4514, %v4944
    %v4961 = vsel %vm4945, %v4937, %v4953
    %v4962 = vsel %vm4946, %v4938, %v4954
    %v4963 = vsel %vm4947, %v4939, %v4955
    %v4964 = vsel %vm4948, %v4940, %v4956
    %v4965 = vsel %vm4949, %v4941, %v4957
    %v4966 = vsel %vm4950, %v4942, %v4958
    %v4967 = vsel %vm4951, %v4943, %v4959
    %v4968 = vsel %vm4952, %v4944, %v4960
    %4969 = vst [vmem:[%s11 + $0x40] sm:$0xff] %v4961
    %4970 = vst [vmem:[%s11 + $0x48] sm:$0xff] %v4962
    %4971 = vst [vmem:[%s11 + $0x50] sm:$0xff] %v4963
    %4972 = vst [vmem:[%s11 + $0x58] sm:$0xff] %v4964
    %4973 = vst [vmem:[%s11 + $0x60] sm:$0xff] %v4965
    %4974 = vst [vmem:[%s11 + $0x68] sm:$0xff] %v4966
    %4975 = vst [vmem:[%s11 + $0x70] sm:$0xff] %v4967
    %4976 = vst [vmem:[%s11 + $0x78] sm:$0xff] %v4968
    %v4977 = vld [vmem:[#allocation3 + $0x80] sm:$0xff]
    %v4978 = vld [vmem:[#allocation3 + $0x88] sm:$0xff]
    %v4979 = vld [vmem:[#allocation3 + $0x90] sm:$0xff]
    %v4980 = vld [vmem:[#allocation3 + $0x98] sm:$0xff]
    %v4981 = vld [vmem:[#allocation3 + $0xa0] sm:$0xff]
    %v4982 = vld [vmem:[#allocation3 + $0xa8] sm:$0xff]
    %v4983 = vld [vmem:[#allocation3 + $0xb0] sm:$0xff]
    %v4984 = vld [vmem:[#allocation3 + $0xb8] sm:$0xff]
    %v4985 = vld [vmem:[#allocation3 + $0xc0] sm:$0xff]
    %v4986 = vld [vmem:[#allocation3 + $0xc8] sm:$0xff]
    %v4987 = vld [vmem:[#allocation3 + $0xd0] sm:$0xff]
    %v4988 = vld [vmem:[#allocation3 + $0xd8] sm:$0xff]
    %v4989 = vld [vmem:[#allocation3 + $0xe0] sm:$0xff]
    %v4990 = vld [vmem:[#allocation3 + $0xe8] sm:$0xff]
    %v4991 = vld [vmem:[#allocation3 + $0xf0] sm:$0xff]
    %v4992 = vld [vmem:[#allocation3 + $0xf8] sm:$0xff]
    %v4993 = vld [vmem:[#allocation3 + $0x100] sm:$0xff]
    %v4994 = vld [vmem:[#allocation3 + $0x108] sm:$0xff]
    %v4995 = vld [vmem:[#allocation3 + $0x110] sm:$0xff]
    %v4996 = vld [vmem:[#allocation3 + $0x118] sm:$0xff]
    %4997 = vst [vmem:[#allocation4] sm:$0xff] %v4977
    %4998 = vst [vmem:[#allocation4 + $0x8] sm:$0xff] %v4978
    %4999 = vst [vmem:[#allocation4 + $0x10] sm:$0xff] %v4979
    %5000 = vst [vmem:[#allocation4 + $0x18] sm:$0xff] %v4980
    %5001 = vst [vmem:[#allocation4 + $0x20] sm:$0xff] %v4981
    %5002 = vst [vmem:[#allocation4 + $0x28] sm:$0xff] %v4982
    %5003 = vst [vmem:[#allocation4 + $0x30] sm:$0xff] %v4983
    %5004 = vst [vmem:[#allocation4 + $0x38] sm:$0xff] %v4984
    %5005 = vst [vmem:[#allocation4 + $0x40] sm:$0xff] %v4985
    %5006 = vst [vmem:[#allocation4 + $0x48] sm:$0xff] %v4986
    %5007 = vst [vmem:[#allocation4 + $0x50] sm:$0xff] %v4987
    %5008 = vst [vmem:[#allocation4 + $0x58] sm:$0xff] %v4988
    %5009 = vst [vmem:[#allocation4 + $0x60] sm:$0xff] %v4989
    %5010 = vst [vmem:[#allocation4 + $0x68] sm:$0xff] %v4990
    %5011 = vst [vmem:[#allocation4 + $0x70] sm:$0xff] %v4991
    %5012 = vst [vmem:[#allocation4 + $0x78] sm:$0xff] %v4992
    %5013 = vst [vmem:[#allocation4 + $0x80] sm:$0xff] %v4993
    %5014 = vst [vmem:[#allocation4 + $0x88] sm:$0xff] %v4994
    %5015 = vst [vmem:[#allocation4 + $0x90] sm:$0xff] %v4995
    %5016 = vst [vmem:[#allocation4 + $0x98] sm:$0xff] %v4996
    %5037 = vrot.lane.b32.xlu0 %v4977, 127
    %v5038 = vpop.permute.xlu0 %5037
    %5039 = vrot.lane.b32.xlu0 %v4978, 127
    %v5040 = vpop.permute.xlu0 %5039
    %5041 = vrot.lane.b32.xlu0 %v4979, 127
    %v5042 = vpop.permute.xlu0 %5041
    %5043 = vrot.lane.b32.xlu0 %v4980, 127
    %v5044 = vpop.permute.xlu0 %5043
    %5045 = vrot.lane.b32.xlu0 %v4981, 127
    %v5046 = vpop.permute.xlu0 %5045
    %5047 = vrot.lane.b32.xlu0 %v4982, 127
    %v5048 = vpop.permute.xlu0 %5047
    %5049 = vrot.lane.b32.xlu0 %v4983, 127
    %v5050 = vpop.permute.xlu0 %5049
    %5051 = vrot.lane.b32.xlu0 %v4984, 127
    %v5052 = vpop.permute.xlu0 %5051
    %5053 = vrot.lane.b32.xlu0 %v4985, 127
    %v5054 = vpop.permute.xlu0 %5053
    %5055 = vrot.lane.b32.xlu0 %v4986, 127
    %v5056 = vpop.permute.xlu0 %5055
    %5057 = vrot.lane.b32.xlu0 %v4987, 127
    %v5058 = vpop.permute.xlu0 %5057
    %5059 = vrot.lane.b32.xlu0 %v4988, 127
    %v5060 = vpop.permute.xlu0 %5059
    %5061 = vrot.lane.b32.xlu0 %v4989, 127
    %v5062 = vpop.permute.xlu0 %5061
    %5063 = vrot.lane.b32.xlu0 %v4990, 127
    %v5064 = vpop.permute.xlu0 %5063
    %5065 = vrot.lane.b32.xlu0 %v4991, 127
    %v5066 = vpop.permute.xlu0 %5065
    %5067 = vrot.lane.b32.xlu0 %v4992, 127
    %v5068 = vpop.permute.xlu0 %5067
    %5069 = vrot.lane.b32.xlu0 %v4993, 127
    %v5070 = vpop.permute.xlu0 %5069
    %5071 = vrot.lane.b32.xlu0 %v4994, 127
    %v5072 = vpop.permute.xlu0 %5071
    %5073 = vrot.lane.b32.xlu0 %v4995, 127
    %v5074 = vpop.permute.xlu0 %5073
    %5075 = vrot.lane.b32.xlu0 %v4996, 127
    %v5076 = vpop.permute.xlu0 %5075
    %v5077 = vsel %vm216, %v5038, %v5040
    %v5078 = vsel %vm216, %v5042, %v5044
    %v5079 = vsel %vm216, %v5046, %v5048
    %v5080 = vsel %vm216, %v5050, %v5052
    %v5081 = vsel %vm216, %v5054, %v5056
    %v5082 = vsel %vm216, %v5058, %v5060
    %v5083 = vsel %vm216, %v5062, %v5064
    %v5084 = vsel %vm216, %v5066, %v5068
    %v5085 = vsel %vm216, %v5070, %v5072
    %v5086 = vsel %vm216, %v5074, %v5076
    %5107 = vst [vmem:[#allocation4 + $0xa0] sm:$0xff] %v5077
    %5108 = vst.msk [vmem:[#allocation4 + $0xa8] sm:$0xff] %vm216, %v5040
    %5109 = vst [vmem:[#allocation4 + $0xb0] sm:$0xff] %v5078
    %5110 = vst.msk [vmem:[#allocation4 + $0xb8] sm:$0xff] %vm216, %v5044
    %5111 = vst [vmem:[#allocation4 + $0xc0] sm:$0xff] %v5079
    %5112 = vst.msk [vmem:[#allocation4 + $0xc8] sm:$0xff] %vm216, %v5048
    %5113 = vst [vmem:[#allocation4 + $0xd0] sm:$0xff] %v5080
    %5114 = vst.msk [vmem:[#allocation4 + $0xd8] sm:$0xff] %vm216, %v5052
    %5115 = vst [vmem:[#allocation4 + $0xe0] sm:$0xff] %v5081
    %5116 = vst.msk [vmem:[#allocation4 + $0xe8] sm:$0xff] %vm216, %v5056
    %5117 = vst [vmem:[#allocation4 + $0xf0] sm:$0xff] %v5082
    %5118 = vst.msk [vmem:[#allocation4 + $0xf8] sm:$0xff] %vm216, %v5060
    %5119 = vst [vmem:[#allocation4 + $0x100] sm:$0xff] %v5083
    %5120 = vst.msk [vmem:[#allocation4 + $0x108] sm:$0xff] %vm216, %v5064
    %5121 = vst [vmem:[#allocation4 + $0x110] sm:$0xff] %v5084
    %5122 = vst.msk [vmem:[#allocation4 + $0x118] sm:$0xff] %vm216, %v5068
    %5123 = vst [vmem:[#allocation4 + $0x120] sm:$0xff] %v5085
    %5124 = vst.msk [vmem:[#allocation4 + $0x128] sm:$0xff] %vm216, %v5072
    %5125 = vst [vmem:[#allocation4 + $0x130] sm:$0xff] %v5086
    %5126 = vst.msk [vmem:[#allocation4 + $0x138] sm:$0xff] %vm216, %v5076
    %v5127 = vld [vmem:[#allocation4] sm:$0xff]
    %v5128 = vld [vmem:[#allocation4 + $0x8] sm:$0xff]
    %v5129 = vld [vmem:[#allocation4 + $0x10] sm:$0xff]
    %v5130 = vld [vmem:[#allocation4 + $0x18] sm:$0xff]
    %v5131 = vld [vmem:[#allocation4 + $0x20] sm:$0xff]
    %v5132 = vld [vmem:[#allocation4 + $0x28] sm:$0xff]
    %v5133 = vld [vmem:[#allocation4 + $0x30] sm:$0xff]
    %v5134 = vld [vmem:[#allocation4 + $0x38] sm:$0xff]
    %v5135 = vld [vmem:[#allocation4 + $0x40] sm:$0xff]
    %v5136 = vld [vmem:[#allocation4 + $0x48] sm:$0xff]
    %v5137 = vld [vmem:[#allocation4 + $0x50] sm:$0xff]
    %v5138 = vld [vmem:[#allocation4 + $0x58] sm:$0xff]
    %v5139 = vld [vmem:[#allocation4 + $0x60] sm:$0xff]
    %v5140 = vld [vmem:[#allocation4 + $0x68] sm:$0xff]
    %v5141 = vld [vmem:[#allocation4 + $0x70] sm:$0xff]
    %v5142 = vld [vmem:[#allocation4 + $0x78] sm:$0xff]
    %v5143 = vld [vmem:[#allocation4 + $0x80] sm:$0xff]
    %v5144 = vld [vmem:[#allocation4 + $0x88] sm:$0xff]
    %v5145 = vld [vmem:[#allocation4 + $0x90] sm:$0xff]
    %v5146 = vld [vmem:[#allocation4 + $0x98] sm:$0xff]
    %v5147 = vld [vmem:[#allocation4 + $0xa0] sm:$0xff]
    %v5148 = vld [vmem:[#allocation4 + $0xa8] sm:$0xff]
    %v5149 = vld [vmem:[#allocation4 + $0xb0] sm:$0xff]
    %v5150 = vld [vmem:[#allocation4 + $0xb8] sm:$0xff]
    %v5151 = vld [vmem:[#allocation4 + $0xc0] sm:$0xff]
    %v5152 = vld [vmem:[#allocation4 + $0xc8] sm:$0xff]
    %v5153 = vld [vmem:[#allocation4 + $0xd0] sm:$0xff]
    %v5154 = vld [vmem:[#allocation4 + $0xd8] sm:$0xff]
    %v5155 = vld [vmem:[#allocation4 + $0xe0] sm:$0xff]
    %v5156 = vld [vmem:[#allocation4 + $0xe8] sm:$0xff]
    %v5157 = vld [vmem:[#allocation4 + $0xf0] sm:$0xff]
    %v5158 = vld [vmem:[#allocation4 + $0xf8] sm:$0xff]
    %v5159 = vld [vmem:[#allocation4 + $0x100] sm:$0xff]
    %v5160 = vld [vmem:[#allocation4 + $0x108] sm:$0xff]
    %v5161 = vld [vmem:[#allocation4 + $0x110] sm:$0xff]
    %v5162 = vld [vmem:[#allocation4 + $0x118] sm:$0xff]
    %v5163 = vld [vmem:[#allocation4 + $0x120] sm:$0xff]
    %v5164 = vld [vmem:[#allocation4 + $0x128] sm:$0xff]
    %v5165 = vld [vmem:[#allocation4 + $0x130] sm:$0xff]
    %v5166 = vld [vmem:[#allocation4 + $0x138] sm:$0xff]
    %v5167 = vpack.c.bf16 %v5129, %v5127
    %v5168 = vpack.c.bf16 %v5130, %v5128
    %v5169 = vpack.c.bf16 %v5133, %v5131
    %v5170 = vpack.c.bf16 %v5134, %v5132
    %v5171 = vpack.c.bf16 %v5137, %v5135
    %v5172 = vpack.c.bf16 %v5138, %v5136
    %v5173 = vpack.c.bf16 %v5141, %v5139
    %v5174 = vpack.c.bf16 %v5142, %v5140
    %v5175 = vpack.c.bf16 %v5145, %v5143
    %v5176 = vpack.c.bf16 %v5146, %v5144
    %v5177 = vpack.c.bf16 %v5149, %v5147
    %v5178 = vpack.c.bf16 %v5150, %v5148
    %v5179 = vpack.c.bf16 %v5153, %v5151
    %v5180 = vpack.c.bf16 %v5154, %v5152
    %v5181 = vpack.c.bf16 %v5157, %v5155
    %v5182 = vpack.c.bf16 %v5158, %v5156
    %v5183 = vpack.c.bf16 %v5161, %v5159
    %v5184 = vpack.c.bf16 %v5162, %v5160
    %v5185 = vpack.c.bf16 %v5165, %v5163
    %v5186 = vpack.c.bf16 %v5166, %v5164
    %5187 = vmatpush.bf16.msra.mxu0 %v5181
    %5188 = vmatpush.bf16.msra.mxu0 %v5179
    %5189 = vmatpush.bf16.msra.mxu0 %v5177
    %5190 = vmatpush.bf16.msra.mxu0 %v5175
    %5191 = vmatpush.bf16.msra.mxu0 %v5173
    %5192 = vmatpush.bf16.msra.mxu0 %v5171
    %5193 = vmatpush.bf16.msra.mxu0 %v5169
    %5194 = vmatpush.bf16.msra.mxu0 %v5167
    %5195 = vmatmul.bf16.gmra.mxu0 %v4089
    %v5196 = vpop.f32.mrf.mxu0
    %v5197 = vadd.f32 0.0, %v5196
    %v5198 = vpop.f32.mrf.mxu0
    %v5199 = vadd.f32 0.0, %v5198
    %5200 = vmatmul.bf16.gmra.mxu0 %v4091
    %v5201 = vpop.f32.mrf.mxu0
    %v5202 = vadd.f32 0.0, %v5201
    %v5203 = vpop.f32.mrf.mxu0
    %v5204 = vadd.f32 0.0, %v5203
    %5205 = vdwg.mxu0
    %5206 = vmatpush.bf16.msra.mxu0 0
    %5207 = vmatpush.bf16.msra.mxu0 0
    %5208 = vmatpush.bf16.msra.mxu0 0
    %5209 = vmatpush.bf16.msra.mxu0 0
    %5210 = vmatpush.bf16.msra.mxu0 0
    %5211 = vmatpush.bf16.msra.mxu0 0
    %5212 = vmatpush.bf16.msra.mxu0 %v5185
    %5213 = vmatpush.bf16.msra.mxu0 %v5183
    %5214 = vmatmul.bf16.gmra.mxu0 %v4305
    %v5215 = vpop.f32.mrf.mxu0
    %v5216 = vadd.f32 %v5197, %v5215
    %v5217 = vpop.f32.mrf.mxu0
    %v5218 = vadd.f32 %v5199, %v5217
    %5219 = vmatmul.bf16.gmra.mxu0 %v4308
    %v5220 = vpop.f32.mrf.mxu0
    %v5221 = vadd.f32 %v5202, %v5220
    %v5222 = vpop.f32.mrf.mxu0
    %v5223 = vadd.f32 %v5204, %v5222
    %5224 = vdwg.mxu0
    %5225 = vmatpush.bf16.msra.mxu0 %v5182
    %5226 = vmatpush.bf16.msra.mxu0 %v5180
    %5227 = vmatpush.bf16.msra.mxu0 %v5178
    %5228 = vmatpush.bf16.msra.mxu0 %v5176
    %5229 = vmatpush.bf16.msra.mxu0 %v5174
    %5230 = vmatpush.bf16.msra.mxu0 %v5172
    %5231 = vmatpush.bf16.msra.mxu0 %v5170
    %5232 = vmatpush.bf16.msra.mxu0 %v5168
    %5233 = vmatmul.bf16.gmra.mxu0 %v4089
    %v5234 = vpop.f32.mrf.mxu0
    %v5235 = vadd.f32 0.0, %v5234
    %v5236 = vpop.f32.mrf.mxu0
    %v5237 = vadd.f32 0.0, %v5236
    %5238 = vmatmul.bf16.gmra.mxu0 %v4091
    %v5239 = vpop.f32.mrf.mxu0
    %v5240 = vadd.f32 0.0, %v5239
    %v5241 = vpop.f32.mrf.mxu0
    %v5242 = vadd.f32 0.0, %v5241
    %5243 = vdwg.mxu0
    %5244 = vmatpush.bf16.msra.mxu0 0
    %5245 = vmatpush.bf16.msra.mxu0 0
    %5246 = vmatpush.bf16.msra.mxu0 0
    %5247 = vmatpush.bf16.msra.mxu0 0
    %5248 = vmatpush.bf16.msra.mxu0 0
    %5249 = vmatpush.bf16.msra.mxu0 0
    %5250 = vmatpush.bf16.msra.mxu0 %v5186
    %5251 = vmatpush.bf16.msra.mxu0 %v5184
    %5252 = vmatmul.bf16.gmra.mxu0 %v4305
    %v5253 = vpop.f32.mrf.mxu0
    %v5254 = vadd.f32 %v5235, %v5253
    %v5255 = vpop.f32.mrf.mxu0
    %v5256 = vadd.f32 %v5237, %v5255
    %5257 = vmatmul.bf16.gmra.mxu0 %v4308
    %v5258 = vpop.f32.mrf.mxu0
    %v5259 = vadd.f32 %v5240, %v5258
    %v5260 = vpop.f32.mrf.mxu0
    %v5261 = vadd.f32 %v5242, %v5260
    %5262 = vdwg.mxu0
    %v5263 = vadd.f32 %v5216, 0.0
    %v5264 = vadd.f32 %v5218, 0.0
    %v5265 = vadd.f32 %v5221, 0.0
    %v5266 = vadd.f32 %v5223, 0.0
    %v5267 = vadd.f32 %v5263, %v5254
    %v5268 = vadd.f32 %v5264, %v5256
    %v5269 = vadd.f32 %v5265, %v5259
    %v5270 = vadd.f32 %v5266, %v5261
    %v5271 = vmul.f32 %v5267, %v279
    %v5272 = vmul.f32 %v5268, %v279
    %v5273 = vmul.f32 %v5269, %v279
    %v5274 = vmul.f32 %v5270, %v279
    %v5275 = vsub.f32 %v5216, %v5271
    %v5276 = vsub.f32 %v5218, %v5272
    %v5277 = vsub.f32 %v5221, %v5273
    %v5278 = vsub.f32 %v5223, %v5274
    %v5279 = vmul.f32 %v5275, %v5275
    %v5280 = vmul.f32 %v5276, %v5276
    %v5281 = vmul.f32 %v5277, %v5277
    %v5282 = vmul.f32 %v5278, %v5278
    %v5283 = vadd.f32 %v5279, 0.0
    %v5284 = vadd.f32 %v5280, 0.0
    %v5285 = vadd.f32 %v5281, 0.0
    %v5286 = vadd.f32 %v5282, 0.0
    %v5287 = vsub.f32 %v5254, %v5271
    %v5288 = vsub.f32 %v5256, %v5272
    %v5289 = vsub.f32 %v5259, %v5273
    %v5290 = vsub.f32 %v5261, %v5274
    %v5291 = vmul.f32 %v5287, %v5287
    %v5292 = vmul.f32 %v5288, %v5288
    %v5293 = vmul.f32 %v5289, %v5289
    %v5294 = vmul.f32 %v5290, %v5290
    %v5295 = vadd.f32 %v5283, %v5291
    %v5296 = vadd.f32 %v5284, %v5292
    %v5297 = vadd.f32 %v5285, %v5293
    %v5298 = vadd.f32 %v5286, %v5294
    %v5299 = vmul.f32 %v5295, %v279
    %v5300 = vmul.f32 %v5296, %v279
    %v5301 = vmul.f32 %v5297, %v279
    %v5302 = vmul.f32 %v5298, %v279
    %v5303 = vadd.f32 %v5299, 1e-05
    %v5304 = vadd.f32 %v5300, 1e-05
    %v5305 = vadd.f32 %v5301, 1e-05
    %v5306 = vadd.f32 %v5302, 1e-05
    %v5307 = vrsqrt.pop %v5303
    %v5308 = vmul.f32 %v5307, %v5303
    %v5309 = vmul.f32 %v5308, %v5307
    %v5310 = vmul.f32 0.5, %v5309
    %v5311 = vsub.f32 1.5, %v5310
    %v5312 = vmul.f32 %v5307, %v5311
    %vm5313 = vweird.f32 %v5303
    %vm5314 = vweird.f32 %v5307
    %vm5315 = vmor %vm5313, %vm5314
    %v5316 = vsel %vm5315, %v5307, %v5312
    %v5317 = vrsqrt.pop %v5304
    %v5318 = vmul.f32 %v5317, %v5304
    %v5319 = vmul.f32 %v5318, %v5317
    %v5320 = vmul.f32 0.5, %v5319
    %v5321 = vsub.f32 1.5, %v5320
    %v5322 = vmul.f32 %v5317, %v5321
    %vm5323 = vweird.f32 %v5304
    %vm5324 = vweird.f32 %v5317
    %vm5325 = vmor %vm5323, %vm5324
    %v5326 = vsel %vm5325, %v5317, %v5322
    %v5327 = vrsqrt.pop %v5305
    %v5328 = vmul.f32 %v5327, %v5305
    %v5329 = vmul.f32 %v5328, %v5327
    %v5330 = vmul.f32 0.5, %v5329
    %v5331 = vsub.f32 1.5, %v5330
    %v5332 = vmul.f32 %v5327, %v5331
    %vm5333 = vweird.f32 %v5305
    %vm5334 = vweird.f32 %v5327
    %vm5335 = vmor %vm5333, %vm5334
    %v5336 = vsel %vm5335, %v5327, %v5332
    %v5337 = vrsqrt.pop %v5306
    %v5338 = vmul.f32 %v5337, %v5306
    %v5339 = vmul.f32 %v5338, %v5337
    %v5340 = vmul.f32 0.5, %v5339
    %v5341 = vsub.f32 1.5, %v5340
    %v5342 = vmul.f32 %v5337, %v5341
    %vm5343 = vweird.f32 %v5306
    %vm5344 = vweird.f32 %v5337
    %vm5345 = vmor %vm5343, %vm5344
    %v5346 = vsel %vm5345, %v5337, %v5342
    %v5347 = vld [vmem:[%s8 + $0x40] sm:$0xff]
    %v5348 = vld [vmem:[%s8 + $0x48] sm:$0xff]
    %v5349 = vld [vmem:[%s8 + $0x50] sm:$0xff]
    %v5350 = vld [vmem:[%s8 + $0x58] sm:$0xff]
    %v5351 = vld [vmem:[%s9 + $0x40] sm:$0xff]
    %v5352 = vld [vmem:[%s9 + $0x48] sm:$0xff]
    %v5353 = vld [vmem:[%s9 + $0x50] sm:$0xff]
    %v5354 = vld [vmem:[%s9 + $0x58] sm:$0xff]
    %v5355 = vmul.f32 %v5316, %v5347
    %v5356 = vmul.f32 %v5326, %v5348
    %v5357 = vmul.f32 %v5336, %v5349
    %v5358 = vmul.f32 %v5346, %v5350
    %v5359 = vmul.f32 %v5271, %v5355
    %v5360 = vmul.f32 %v5272, %v5356
    %v5361 = vmul.f32 %v5273, %v5357
    %v5362 = vmul.f32 %v5274, %v5358
    %v5363 = vsub.f32 %v5351, %v5359
    %v5364 = vsub.f32 %v5352, %v5360
    %v5365 = vsub.f32 %v5353, %v5361
    %v5366 = vsub.f32 %v5354, %v5362
    %v5367 = vmul.f32 %v5216, %v5355
    %v5368 = vmul.f32 %v5254, %v5355
    %v5369 = vmul.f32 %v5218, %v5356
    %v5370 = vmul.f32 %v5256, %v5356
    %v5371 = vmul.f32 %v5221, %v5357
    %v5372 = vmul.f32 %v5259, %v5357
    %v5373 = vmul.f32 %v5223, %v5358
    %v5374 = vmul.f32 %v5261, %v5358
    %v5375 = vadd.f32 %v5367, %v5363
    %v5376 = vadd.f32 %v5368, %v5363
    %v5377 = vadd.f32 %v5369, %v5364
    %v5378 = vadd.f32 %v5370, %v5364
    %v5379 = vadd.f32 %v5371, %v5365
    %v5380 = vadd.f32 %v5372, %v5365
    %v5381 = vadd.f32 %v5373, %v5366
    %v5382 = vadd.f32 %v5374, %v5366
    %vm5383 = vcmp.ge.f32.partialorder %v5375, 0.0
    %vm5384 = vcmp.ge.f32.partialorder %v5376, 0.0
    %vm5385 = vcmp.ge.f32.partialorder %v5377, 0.0
    %vm5386 = vcmp.ge.f32.partialorder %v5378, 0.0
    %vm5387 = vcmp.ge.f32.partialorder %v5379, 0.0
    %vm5388 = vcmp.ge.f32.partialorder %v5380, 0.0
    %vm5389 = vcmp.ge.f32.partialorder %v5381, 0.0
    %vm5390 = vcmp.ge.f32.partialorder %v5382, 0.0
    %v5391 = vmul.f32 %v4514, %v5375
    %v5392 = vmul.f32 %v4514, %v5376
    %v5393 = vmul.f32 %v4514, %v5377
    %v5394 = vmul.f32 %v4514, %v5378
    %v5395 = vmul.f32 %v4514, %v5379
    %v5396 = vmul.f32 %v4514, %v5380
    %v5397 = vmul.f32 %v4514, %v5381
    %v5398 = vmul.f32 %v4514, %v5382
    %v5399 = vsel %vm5383, %v5375, %v5391
    %v5400 = vsel %vm5384, %v5376, %v5392
    %v5401 = vsel %vm5385, %v5377, %v5393
    %v5402 = vsel %vm5386, %v5378, %v5394
    %v5403 = vsel %vm5387, %v5379, %v5395
    %v5404 = vsel %vm5388, %v5380, %v5396
    %v5405 = vsel %vm5389, %v5381, %v5397
    %v5406 = vsel %vm5390, %v5382, %v5398
    %5407 = vst [vmem:[%s11 + $0x80] sm:$0xff] %v5399
    %5408 = vst [vmem:[%s11 + $0x88] sm:$0xff] %v5400
    %5409 = vst [vmem:[%s11 + $0x90] sm:$0xff] %v5401
    %5410 = vst [vmem:[%s11 + $0x98] sm:$0xff] %v5402
    %5411 = vst [vmem:[%s11 + $0xa0] sm:$0xff] %v5403
    %5412 = vst [vmem:[%s11 + $0xa8] sm:$0xff] %v5404
    %5413 = vst [vmem:[%s11 + $0xb0] sm:$0xff] %v5405
    %5414 = vst [vmem:[%s11 + $0xb8] sm:$0xff] %v5406
    %v5415 = vld [vmem:[#allocation3 + $0xc0] sm:$0xff]
    %v5416 = vld [vmem:[#allocation3 + $0xc8] sm:$0xff]
    %v5417 = vld [vmem:[#allocation3 + $0xd0] sm:$0xff]
    %v5418 = vld [vmem:[#allocation3 + $0xd8] sm:$0xff]
    %v5419 = vld [vmem:[#allocation3 + $0xe0] sm:$0xff]
    %v5420 = vld [vmem:[#allocation3 + $0xe8] sm:$0xff]
    %v5421 = vld [vmem:[#allocation3 + $0xf0] sm:$0xff]
    %v5422 = vld [vmem:[#allocation3 + $0xf8] sm:$0xff]
    %v5423 = vld [vmem:[#allocation3 + $0x100] sm:$0xff]
    %v5424 = vld [vmem:[#allocation3 + $0x108] sm:$0xff]
    %v5425 = vld [vmem:[#allocation3 + $0x110] sm:$0xff]
    %v5426 = vld [vmem:[#allocation3 + $0x118] sm:$0xff]
    %v5427 = vld [vmem:[#allocation3 + $0x120] sm:$0xff]
    %v5428 = vld [vmem:[#allocation3 + $0x128] sm:$0xff]
    %v5429 = vld [vmem:[#allocation3 + $0x130] sm:$0xff]
    %v5430 = vld [vmem:[#allocation3 + $0x138] sm:$0xff]
    %v5431 = vld [vmem:[#allocation3 + $0x140] sm:$0xff]
    %v5432 = vld [vmem:[#allocation3 + $0x148] sm:$0xff]
    %v5433 = vld [vmem:[#allocation3 + $0x150] sm:$0xff]
    %v5434 = vld [vmem:[#allocation3 + $0x158] sm:$0xff]
    %5435 = vst [vmem:[#allocation4] sm:$0xff] %v5415
    %5436 = vst [vmem:[#allocation4 + $0x8] sm:$0xff] %v5416
    %5437 = vst [vmem:[#allocation4 + $0x10] sm:$0xff] %v5417
    %5438 = vst [vmem:[#allocation4 + $0x18] sm:$0xff] %v5418
    %5439 = vst [vmem:[#allocation4 + $0x20] sm:$0xff] %v5419
    %5440 = vst [vmem:[#allocation4 + $0x28] sm:$0xff] %v5420
    %5441 = vst [vmem:[#allocation4 + $0x30] sm:$0xff] %v5421
    %5442 = vst [vmem:[#allocation4 + $0x38] sm:$0xff] %v5422
    %5443 = vst [vmem:[#allocation4 + $0x40] sm:$0xff] %v5423
    %5444 = vst [vmem:[#allocation4 + $0x48] sm:$0xff] %v5424
    %5445 = vst [vmem:[#allocation4 + $0x50] sm:$0xff] %v5425
    %5446 = vst [vmem:[#allocation4 + $0x58] sm:$0xff] %v5426
    %5447 = vst [vmem:[#allocation4 + $0x60] sm:$0xff] %v5427
    %5448 = vst [vmem:[#allocation4 + $0x68] sm:$0xff] %v5428
    %5449 = vst [vmem:[#allocation4 + $0x70] sm:$0xff] %v5429
    %5450 = vst [vmem:[#allocation4 + $0x78] sm:$0xff] %v5430
    %5451 = vst [vmem:[#allocation4 + $0x80] sm:$0xff] %v5431
    %5452 = vst [vmem:[#allocation4 + $0x88] sm:$0xff] %v5432
    %5453 = vst [vmem:[#allocation4 + $0x90] sm:$0xff] %v5433
    %5454 = vst [vmem:[#allocation4 + $0x98] sm:$0xff] %v5434
    %5475 = vrot.lane.b32.xlu0 %v5415, 127
    %v5476 = vpop.permute.xlu0 %5475
    %5477 = vrot.lane.b32.xlu0 %v5416, 127
    %v5478 = vpop.permute.xlu0 %5477
    %5479 = vrot.lane.b32.xlu0 %v5417, 127
    %v5480 = vpop.permute.xlu0 %5479
    %5481 = vrot.lane.b32.xlu0 %v5418, 127
    %v5482 = vpop.permute.xlu0 %5481
    %5483 = vrot.lane.b32.xlu0 %v5419, 127
    %v5484 = vpop.permute.xlu0 %5483
    %5485 = vrot.lane.b32.xlu0 %v5420, 127
    %v5486 = vpop.permute.xlu0 %5485
    %5487 = vrot.lane.b32.xlu0 %v5421, 127
    %v5488 = vpop.permute.xlu0 %5487
    %5489 = vrot.lane.b32.xlu0 %v5422, 127
    %v5490 = vpop.permute.xlu0 %5489
    %5491 = vrot.lane.b32.xlu0 %v5423, 127
    %v5492 = vpop.permute.xlu0 %5491
    %5493 = vrot.lane.b32.xlu0 %v5424, 127
    %v5494 = vpop.permute.xlu0 %5493
    %5495 = vrot.lane.b32.xlu0 %v5425, 127
    %v5496 = vpop.permute.xlu0 %5495
    %5497 = vrot.lane.b32.xlu0 %v5426, 127
    %v5498 = vpop.permute.xlu0 %5497
    %5499 = vrot.lane.b32.xlu0 %v5427, 127
    %v5500 = vpop.permute.xlu0 %5499
    %5501 = vrot.lane.b32.xlu0 %v5428, 127
    %v5502 = vpop.permute.xlu0 %5501
    %5503 = vrot.lane.b32.xlu0 %v5429, 127
    %v5504 = vpop.permute.xlu0 %5503
    %5505 = vrot.lane.b32.xlu0 %v5430, 127
    %v5506 = vpop.permute.xlu0 %5505
    %5507 = vrot.lane.b32.xlu0 %v5431, 127
    %v5508 = vpop.permute.xlu0 %5507
    %5509 = vrot.lane.b32.xlu0 %v5432, 127
    %v5510 = vpop.permute.xlu0 %5509
    %5511 = vrot.lane.b32.xlu0 %v5433, 127
    %v5512 = vpop.permute.xlu0 %5511
    %5513 = vrot.lane.b32.xlu0 %v5434, 127
    %v5514 = vpop.permute.xlu0 %5513
    %v5515 = vsel %vm216, %v5476, %v5478
    %v5516 = vsel %vm216, %v5480, %v5482
    %v5517 = vsel %vm216, %v5484, %v5486
    %v5518 = vsel %vm216, %v5488, %v5490
    %v5519 = vsel %vm216, %v5492, %v5494
    %v5520 = vsel %vm216, %v5496, %v5498
    %v5521 = vsel %vm216, %v5500, %v5502
    %v5522 = vsel %vm216, %v5504, %v5506
    %v5523 = vsel %vm216, %v5508, %v5510
    %v5524 = vsel %vm216, %v5512, %v5514
    %5545 = vst [vmem:[#allocation4 + $0xa0] sm:$0xff] %v5515
    %5546 = vst.msk [vmem:[#allocation4 + $0xa8] sm:$0xff] %vm216, %v5478
    %5547 = vst [vmem:[#allocation4 + $0xb0] sm:$0xff] %v5516
    %5548 = vst.msk [vmem:[#allocation4 + $0xb8] sm:$0xff] %vm216, %v5482
    %5549 = vst [vmem:[#allocation4 + $0xc0] sm:$0xff] %v5517
    %5550 = vst.msk [vmem:[#allocation4 + $0xc8] sm:$0xff] %vm216, %v5486
    %5551 = vst [vmem:[#allocation4 + $0xd0] sm:$0xff] %v5518
    %5552 = vst.msk [vmem:[#allocation4 + $0xd8] sm:$0xff] %vm216, %v5490
    %5553 = vst [vmem:[#allocation4 + $0xe0] sm:$0xff] %v5519
    %5554 = vst.msk [vmem:[#allocation4 + $0xe8] sm:$0xff] %vm216, %v5494
    %5555 = vst [vmem:[#allocation4 + $0xf0] sm:$0xff] %v5520
    %5556 = vst.msk [vmem:[#allocation4 + $0xf8] sm:$0xff] %vm216, %v5498
    %5557 = vst [vmem:[#allocation4 + $0x100] sm:$0xff] %v5521
    %5558 = vst.msk [vmem:[#allocation4 + $0x108] sm:$0xff] %vm216, %v5502
    %5559 = vst [vmem:[#allocation4 + $0x110] sm:$0xff] %v5522
    %5560 = vst.msk [vmem:[#allocation4 + $0x118] sm:$0xff] %vm216, %v5506
    %5561 = vst [vmem:[#allocation4 + $0x120] sm:$0xff] %v5523
    %5562 = vst.msk [vmem:[#allocation4 + $0x128] sm:$0xff] %vm216, %v5510
    %5563 = vst [vmem:[#allocation4 + $0x130] sm:$0xff] %v5524
    %5564 = vst.msk [vmem:[#allocation4 + $0x138] sm:$0xff] %vm216, %v5514
    %v5565 = vld [vmem:[#allocation4] sm:$0xff]
    %v5566 = vld [vmem:[#allocation4 + $0x8] sm:$0xff]
    %v5567 = vld [vmem:[#allocation4 + $0x10] sm:$0xff]
    %v5568 = vld [vmem:[#allocation4 + $0x18] sm:$0xff]
    %v5569 = vld [vmem:[#allocation4 + $0x20] sm:$0xff]
    %v5570 = vld [vmem:[#allocation4 + $0x28] sm:$0xff]
    %v5571 = vld [vmem:[#allocation4 + $0x30] sm:$0xff]
    %v5572 = vld [vmem:[#allocation4 + $0x38] sm:$0xff]
    %v5573 = vld [vmem:[#allocation4 + $0x40] sm:$0xff]
    %v5574 = vld [vmem:[#allocation4 + $0x48] sm:$0xff]
    %v5575 = vld [vmem:[#allocation4 + $0x50] sm:$0xff]
    %v5576 = vld [vmem:[#allocation4 + $0x58] sm:$0xff]
    %v5577 = vld [vmem:[#allocation4 + $0x60] sm:$0xff]
    %v5578 = vld [vmem:[#allocation4 + $0x68] sm:$0xff]
    %v5579 = vld [vmem:[#allocation4 + $0x70] sm:$0xff]
    %v5580 = vld [vmem:[#allocation4 + $0x78] sm:$0xff]
    %v5581 = vld [vmem:[#allocation4 + $0x80] sm:$0xff]
    %v5582 = vld [vmem:[#allocation4 + $0x88] sm:$0xff]
    %v5583 = vld [vmem:[#allocation4 + $0x90] sm:$0xff]
    %v5584 = vld [vmem:[#allocation4 + $0x98] sm:$0xff]
    %v5585 = vld [vmem:[#allocation4 + $0xa0] sm:$0xff]
    %v5586 = vld [vmem:[#allocation4 + $0xa8] sm:$0xff]
    %v5587 = vld [vmem:[#allocation4 + $0xb0] sm:$0xff]
    %v5588 = vld [vmem:[#allocation4 + $0xb8] sm:$0xff]
    %v5589 = vld [vmem:[#allocation4 + $0xc0] sm:$0xff]
    %v5590 = vld [vmem:[#allocation4 + $0xc8] sm:$0xff]
    %v5591 = vld [vmem:[#allocation4 + $0xd0] sm:$0xff]
    %v5592 = vld [vmem:[#allocation4 + $0xd8] sm:$0xff]
    %v5593 = vld [vmem:[#allocation4 + $0xe0] sm:$0xff]
    %v5594 = vld [vmem:[#allocation4 + $0xe8] sm:$0xff]
    %v5595 = vld [vmem:[#allocation4 + $0xf0] sm:$0xff]
    %v5596 = vld [vmem:[#allocation4 + $0xf8] sm:$0xff]
    %v5597 = vld [vmem:[#allocation4 + $0x100] sm:$0xff]
    %v5598 = vld [vmem:[#allocation4 + $0x108] sm:$0xff]
    %v5599 = vld [vmem:[#allocation4 + $0x110] sm:$0xff]
    %v5600 = vld [vmem:[#allocation4 + $0x118] sm:$0xff]
    %v5601 = vld [vmem:[#allocation4 + $0x120] sm:$0xff]
    %v5602 = vld [vmem:[#allocation4 + $0x128] sm:$0xff]
    %v5603 = vld [vmem:[#allocation4 + $0x130] sm:$0xff]
    %v5604 = vld [vmem:[#allocation4 + $0x138] sm:$0xff]
    %v5605 = vpack.c.bf16 %v5567, %v5565
    %v5606 = vpack.c.bf16 %v5568, %v5566
    %v5607 = vpack.c.bf16 %v5571, %v5569
    %v5608 = vpack.c.bf16 %v5572, %v5570
    %v5609 = vpack.c.bf16 %v5575, %v5573
    %v5610 = vpack.c.bf16 %v5576, %v5574
    %v5611 = vpack.c.bf16 %v5579, %v5577
    %v5612 = vpack.c.bf16 %v5580, %v5578
    %v5613 = vpack.c.bf16 %v5583, %v5581
    %v5614 = vpack.c.bf16 %v5584, %v5582
    %v5615 = vpack.c.bf16 %v5587, %v5585
    %v5616 = vpack.c.bf16 %v5588, %v5586
    %v5617 = vpack.c.bf16 %v5591, %v5589
    %v5618 = vpack.c.bf16 %v5592, %v5590
    %v5619 = vpack.c.bf16 %v5595, %v5593
    %v5620 = vpack.c.bf16 %v5596, %v5594
    %v5621 = vpack.c.bf16 %v5599, %v5597
    %v5622 = vpack.c.bf16 %v5600, %v5598
    %v5623 = vpack.c.bf16 %v5603, %v5601
    %v5624 = vpack.c.bf16 %v5604, %v5602
    %5625 = vmatpush.bf16.msra.mxu0 %v5619
    %5626 = vmatpush.bf16.msra.mxu0 %v5617
    %5627 = vmatpush.bf16.msra.mxu0 %v5615
    %5628 = vmatpush.bf16.msra.mxu0 %v5613
    %5629 = vmatpush.bf16.msra.mxu0 %v5611
    %5630 = vmatpush.bf16.msra.mxu0 %v5609
    %5631 = vmatpush.bf16.msra.mxu0 %v5607
    %5632 = vmatpush.bf16.msra.mxu0 %v5605
    %5633 = vmatmul.bf16.gmra.mxu0 %v4089
    %v5634 = vpop.f32.mrf.mxu0
    %v5635 = vadd.f32 0.0, %v5634
    %v5636 = vpop.f32.mrf.mxu0
    %v5637 = vadd.f32 0.0, %v5636
    %5638 = vmatmul.bf16.gmra.mxu0 %v4091
    %v5639 = vpop.f32.mrf.mxu0
    %v5640 = vadd.f32 0.0, %v5639
    %v5641 = vpop.f32.mrf.mxu0
    %v5642 = vadd.f32 0.0, %v5641
    %5643 = vdwg.mxu0
    %5644 = vmatpush.bf16.msra.mxu0 0
    %5645 = vmatpush.bf16.msra.mxu0 0
    %5646 = vmatpush.bf16.msra.mxu0 0
    %5647 = vmatpush.bf16.msra.mxu0 0
    %5648 = vmatpush.bf16.msra.mxu0 0
    %5649 = vmatpush.bf16.msra.mxu0 0
    %5650 = vmatpush.bf16.msra.mxu0 %v5623
    %5651 = vmatpush.bf16.msra.mxu0 %v5621
    %5652 = vmatmul.bf16.gmra.mxu0 %v4305
    %v5653 = vpop.f32.mrf.mxu0
    %v5654 = vadd.f32 %v5635, %v5653
    %v5655 = vpop.f32.mrf.mxu0
    %v5656 = vadd.f32 %v5637, %v5655
    %5657 = vmatmul.bf16.gmra.mxu0 %v4308
    %v5658 = vpop.f32.mrf.mxu0
    %v5659 = vadd.f32 %v5640, %v5658
    %v5660 = vpop.f32.mrf.mxu0
    %v5661 = vadd.f32 %v5642, %v5660
    %5662 = vdwg.mxu0
    %5663 = vmatpush.bf16.msra.mxu0 %v5620
    %5664 = vmatpush.bf16.msra.mxu0 %v5618
    %5665 = vmatpush.bf16.msra.mxu0 %v5616
    %5666 = vmatpush.bf16.msra.mxu0 %v5614
    %5667 = vmatpush.bf16.msra.mxu0 %v5612
    %5668 = vmatpush.bf16.msra.mxu0 %v5610
    %5669 = vmatpush.bf16.msra.mxu0 %v5608
    %5670 = vmatpush.bf16.msra.mxu0 %v5606
    %5671 = vmatmul.bf16.gmra.mxu0 %v4089
    %v5672 = vpop.f32.mrf.mxu0
    %v5673 = vadd.f32 0.0, %v5672
    %v5674 = vpop.f32.mrf.mxu0
    %v5675 = vadd.f32 0.0, %v5674
    %5676 = vmatmul.bf16.gmra.mxu0 %v4091
    %v5677 = vpop.f32.mrf.mxu0
    %v5678 = vadd.f32 0.0, %v5677
    %v5679 = vpop.f32.mrf.mxu0
    %v5680 = vadd.f32 0.0, %v5679
    %5681 = vdwg.mxu0
    %5682 = vmatpush.bf16.msra.mxu0 0
    %5683 = vmatpush.bf16.msra.mxu0 0
    %5684 = vmatpush.bf16.msra.mxu0 0
    %5685 = vmatpush.bf16.msra.mxu0 0
    %5686 = vmatpush.bf16.msra.mxu0 0
    %5687 = vmatpush.bf16.msra.mxu0 0
    %5688 = vmatpush.bf16.msra.mxu0 %v5624
    %5689 = vmatpush.bf16.msra.mxu0 %v5622
    %5690 = vmatmul.bf16.gmra.mxu0 %v4305
    %v5691 = vpop.f32.mrf.mxu0
    %v5692 = vadd.f32 %v5673, %v5691
    %v5693 = vpop.f32.mrf.mxu0
    %v5694 = vadd.f32 %v5675, %v5693
    %5695 = vmatmul.bf16.gmra.mxu0 %v4308
    %v5696 = vpop.f32.mrf.mxu0
    %v5697 = vadd.f32 %v5678, %v5696
    %v5698 = vpop.f32.mrf.mxu0
    %v5699 = vadd.f32 %v5680, %v5698
    %5700 = vdwg.mxu0
    %v5701 = vadd.f32 %v5654, 0.0
    %v5702 = vadd.f32 %v5656, 0.0
    %v5703 = vadd.f32 %v5659, 0.0
    %v5704 = vadd.f32 %v5661, 0.0
    %v5705 = vadd.f32 %v5701, %v5692
    %v5706 = vadd.f32 %v5702, %v5694
    %v5707 = vadd.f32 %v5703, %v5697
    %v5708 = vadd.f32 %v5704, %v5699
    %v5709 = vmul.f32 %v5705, %v279
    %v5710 = vmul.f32 %v5706, %v279
    %v5711 = vmul.f32 %v5707, %v279
    %v5712 = vmul.f32 %v5708, %v279
    %v5713 = vsub.f32 %v5654, %v5709
    %v5714 = vsub.f32 %v5656, %v5710
    %v5715 = vsub.f32 %v5659, %v5711
    %v5716 = vsub.f32 %v5661, %v5712
    %v5717 = vmul.f32 %v5713, %v5713
    %v5718 = vmul.f32 %v5714, %v5714
    %v5719 = vmul.f32 %v5715, %v5715
    %v5720 = vmul.f32 %v5716, %v5716
    %v5721 = vadd.f32 %v5717, 0.0
    %v5722 = vadd.f32 %v5718, 0.0
    %v5723 = vadd.f32 %v5719, 0.0
    %v5724 = vadd.f32 %v5720, 0.0
    %v5725 = vsub.f32 %v5692, %v5709
    %v5726 = vsub.f32 %v5694, %v5710
    %v5727 = vsub.f32 %v5697, %v5711
    %v5728 = vsub.f32 %v5699, %v5712
    %v5729 = vmul.f32 %v5725, %v5725
    %v5730 = vmul.f32 %v5726, %v5726
    %v5731 = vmul.f32 %v5727, %v5727
    %v5732 = vmul.f32 %v5728, %v5728
    %v5733 = vadd.f32 %v5721, %v5729
    %v5734 = vadd.f32 %v5722, %v5730
    %v5735 = vadd.f32 %v5723, %v5731
    %v5736 = vadd.f32 %v5724, %v5732
    %v5737 = vmul.f32 %v5733, %v279
    %v5738 = vmul.f32 %v5734, %v279
    %v5739 = vmul.f32 %v5735, %v279
    %v5740 = vmul.f32 %v5736, %v279
    %v5741 = vadd.f32 %v5737, 1e-05
    %v5742 = vadd.f32 %v5738, 1e-05
    %v5743 = vadd.f32 %v5739, 1e-05
    %v5744 = vadd.f32 %v5740, 1e-05
    %v5745 = vrsqrt.pop %v5741
    %v5746 = vmul.f32 %v5745, %v5741
    %v5747 = vmul.f32 %v5746, %v5745
    %v5748 = vmul.f32 0.5, %v5747
    %v5749 = vsub.f32 1.5, %v5748
    %v5750 = vmul.f32 %v5745, %v5749
    %vm5751 = vweird.f32 %v5741
    %vm5752 = vweird.f32 %v5745
    %vm5753 = vmor %vm5751, %vm5752
    %v5754 = vsel %vm5753, %v5745, %v5750
    %v5755 = vrsqrt.pop %v5742
    %v5756 = vmul.f32 %v5755, %v5742
    %v5757 = vmul.f32 %v5756, %v5755
    %v5758 = vmul.f32 0.5, %v5757
    %v5759 = vsub.f32 1.5, %v5758
    %v5760 = vmul.f32 %v5755, %v5759
    %vm5761 = vweird.f32 %v5742
    %vm5762 = vweird.f32 %v5755
    %vm5763 = vmor %vm5761, %vm5762
    %v5764 = vsel %vm5763, %v5755, %v5760
    %v5765 = vrsqrt.pop %v5743
    %v5766 = vmul.f32 %v5765, %v5743
    %v5767 = vmul.f32 %v5766, %v5765
    %v5768 = vmul.f32 0.5, %v5767
    %v5769 = vsub.f32 1.5, %v5768
    %v5770 = vmul.f32 %v5765, %v5769
    %vm5771 = vweird.f32 %v5743
    %vm5772 = vweird.f32 %v5765
    %vm5773 = vmor %vm5771, %vm5772
    %v5774 = vsel %vm5773, %v5765, %v5770
    %v5775 = vrsqrt.pop %v5744
    %v5776 = vmul.f32 %v5775, %v5744
    %v5777 = vmul.f32 %v5776, %v5775
    %v5778 = vmul.f32 0.5, %v5777
    %v5779 = vsub.f32 1.5, %v5778
    %v5780 = vmul.f32 %v5775, %v5779
    %vm5781 = vweird.f32 %v5744
    %vm5782 = vweird.f32 %v5775
    %vm5783 = vmor %vm5781, %vm5782
    %v5784 = vsel %vm5783, %v5775, %v5780
    %v5785 = vld [vmem:[%s8 + $0x60] sm:$0xff]
    %v5786 = vld [vmem:[%s8 + $0x68] sm:$0xff]
    %v5787 = vld [vmem:[%s8 + $0x70] sm:$0xff]
    %v5788 = vld [vmem:[%s8 + $0x78] sm:$0xff]
    %v5789 = vld [vmem:[%s9 + $0x60] sm:$0xff]
    %v5790 = vld [vmem:[%s9 + $0x68] sm:$0xff]
    %v5791 = vld [vmem:[%s9 + $0x70] sm:$0xff]
    %v5792 = vld [vmem:[%s9 + $0x78] sm:$0xff]
    %v5793 = vmul.f32 %v5754, %v5785
    %v5794 = vmul.f32 %v5764, %v5786
    %v5795 = vmul.f32 %v5774, %v5787
    %v5796 = vmul.f32 %v5784, %v5788
    %v5797 = vmul.f32 %v5709, %v5793
    %v5798 = vmul.f32 %v5710, %v5794
    %v5799 = vmul.f32 %v5711, %v5795
    %v5800 = vmul.f32 %v5712, %v5796
    %v5801 = vsub.f32 %v5789, %v5797
    %v5802 = vsub.f32 %v5790, %v5798
    %v5803 = vsub.f32 %v5791, %v5799
    %v5804 = vsub.f32 %v5792, %v5800
    %v5805 = vmul.f32 %v5654, %v5793
    %v5806 = vmul.f32 %v5692, %v5793
    %v5807 = vmul.f32 %v5656, %v5794
    %v5808 = vmul.f32 %v5694, %v5794
    %v5809 = vmul.f32 %v5659, %v5795
    %v5810 = vmul.f32 %v5697, %v5795
    %v5811 = vmul.f32 %v5661, %v5796
    %v5812 = vmul.f32 %v5699, %v5796
    %v5813 = vadd.f32 %v5805, %v5801
    %v5814 = vadd.f32 %v5806, %v5801
    %v5815 = vadd.f32 %v5807, %v5802
    %v5816 = vadd.f32 %v5808, %v5802
    %v5817 = vadd.f32 %v5809, %v5803
    %v5818 = vadd.f32 %v5810, %v5803
    %v5819 = vadd.f32 %v5811, %v5804
    %v5820 = vadd.f32 %v5812, %v5804
    %vm5821 = vcmp.ge.f32.partialorder %v5813, 0.0
    %vm5822 = vcmp.ge.f32.partialorder %v5814, 0.0
    %vm5823 = vcmp.ge.f32.partialorder %v5815, 0.0
    %vm5824 = vcmp.ge.f32.partialorder %v5816, 0.0
    %vm5825 = vcmp.ge.f32.partialorder %v5817, 0.0
    %vm5826 = vcmp.ge.f32.partialorder %v5818, 0.0
    %vm5827 = vcmp.ge.f32.partialorder %v5819, 0.0
    %vm5828 = vcmp.ge.f32.partialorder %v5820, 0.0
    %v5829 = vmul.f32 %v4514, %v5813
    %v5830 = vmul.f32 %v4514, %v5814
    %v5831 = vmul.f32 %v4514, %v5815
    %v5832 = vmul.f32 %v4514, %v5816
    %v5833 = vmul.f32 %v4514, %v5817
    %v5834 = vmul.f32 %v4514, %v5818
    %v5835 = vmul.f32 %v4514, %v5819
    %v5836 = vmul.f32 %v4514, %v5820
    %v5837 = vsel %vm5821, %v5813, %v5829
    %v5838 = vsel %vm5822, %v5814, %v5830
    %v5839 = vsel %vm5823, %v5815, %v5831
    %v5840 = vsel %vm5824, %v5816, %v5832
    %v5841 = vsel %vm5825, %v5817, %v5833
    %v5842 = vsel %vm5826, %v5818, %v5834
    %v5843 = vsel %vm5827, %v5819, %v5835
    %v5844 = vsel %vm5828, %v5820, %v5836
    %5845 = vst [vmem:[%s11 + $0xc0] sm:$0xff] %v5837
    %5846 = vst [vmem:[%s11 + $0xc8] sm:$0xff] %v5838
    %5847 = vst [vmem:[%s11 + $0xd0] sm:$0xff] %v5839
    %5848 = vst [vmem:[%s11 + $0xd8] sm:$0xff] %v5840
    %5849 = vst [vmem:[%s11 + $0xe0] sm:$0xff] %v5841
    %5850 = vst [vmem:[%s11 + $0xe8] sm:$0xff] %v5842
    %5851 = vst [vmem:[%s11 + $0xf0] sm:$0xff] %v5843
    %5852 = vst [vmem:[%s11 + $0xf8] sm:$0xff] %v5844
    %v5853 = vld [vmem:[#allocation3 + $0x100] sm:$0xff]
    %v5854 = vld [vmem:[#allocation3 + $0x108] sm:$0xff]
    %v5855 = vld [vmem:[#allocation3 + $0x110] sm:$0xff]
    %v5856 = vld [vmem:[#allocation3 + $0x118] sm:$0xff]
    %v5857 = vld [vmem:[#allocation3 + $0x120] sm:$0xff]
    %v5858 = vld [vmem:[#allocation3 + $0x128] sm:$0xff]
    %v5859 = vld [vmem:[#allocation3 + $0x130] sm:$0xff]
    %v5860 = vld [vmem:[#allocation3 + $0x138] sm:$0xff]
    %v5861 = vld [vmem:[#allocation3 + $0x140] sm:$0xff]
    %v5862 = vld [vmem:[#allocation3 + $0x148] sm:$0xff]
    %v5863 = vld [vmem:[#allocation3 + $0x150] sm:$0xff]
    %v5864 = vld [vmem:[#allocation3 + $0x158] sm:$0xff]
    %v5865 = vld [vmem:[#allocation3 + $0x160] sm:$0xff]
    %v5866 = vld [vmem:[#allocation3 + $0x168] sm:$0xff]
    %v5867 = vld [vmem:[#allocation3 + $0x170] sm:$0xff]
    %v5868 = vld [vmem:[#allocation3 + $0x178] sm:$0xff]
    %v5869 = vld [vmem:[#allocation3 + $0x180] sm:$0xff]
    %v5870 = vld [vmem:[#allocation3 + $0x188] sm:$0xff]
    %v5871 = vld [vmem:[#allocation3 + $0x190] sm:$0xff]
    %v5872 = vld [vmem:[#allocation3 + $0x198] sm:$0xff]
    %5873 = vst [vmem:[#allocation4] sm:$0xff] %v5853
    %5874 = vst [vmem:[#allocation4 + $0x8] sm:$0xff] %v5854
    %5875 = vst [vmem:[#allocation4 + $0x10] sm:$0xff] %v5855
    %5876 = vst [vmem:[#allocation4 + $0x18] sm:$0xff] %v5856
    %5877 = vst [vmem:[#allocation4 + $0x20] sm:$0xff] %v5857
    %5878 = vst [vmem:[#allocation4 + $0x28] sm:$0xff] %v5858
    %5879 = vst [vmem:[#allocation4 + $0x30] sm:$0xff] %v5859
    %5880 = vst [vmem:[#allocation4 + $0x38] sm:$0xff] %v5860
    %5881 = vst [vmem:[#allocation4 + $0x40] sm:$0xff] %v5861
    %5882 = vst [vmem:[#allocation4 + $0x48] sm:$0xff] %v5862
    %5883 = vst [vmem:[#allocation4 + $0x50] sm:$0xff] %v5863
    %5884 = vst [vmem:[#allocation4 + $0x58] sm:$0xff] %v5864
    %5885 = vst [vmem:[#allocation4 + $0x60] sm:$0xff] %v5865
    %5886 = vst [vmem:[#allocation4 + $0x68] sm:$0xff] %v5866
    %5887 = vst [vmem:[#allocation4 + $0x70] sm:$0xff] %v5867
    %5888 = vst [vmem:[#allocation4 + $0x78] sm:$0xff] %v5868
    %5889 = vst [vmem:[#allocation4 + $0x80] sm:$0xff] %v5869
    %5890 = vst [vmem:[#allocation4 + $0x88] sm:$0xff] %v5870
    %5891 = vst [vmem:[#allocation4 + $0x90] sm:$0xff] %v5871
    %5892 = vst [vmem:[#allocation4 + $0x98] sm:$0xff] %v5872
    %5913 = vrot.lane.b32.xlu0 %v5853, 127
    %v5914 = vpop.permute.xlu0 %5913
    %5915 = vrot.lane.b32.xlu0 %v5854, 127
    %v5916 = vpop.permute.xlu0 %5915
    %5917 = vrot.lane.b32.xlu0 %v5855, 127
    %v5918 = vpop.permute.xlu0 %5917
    %5919 = vrot.lane.b32.xlu0 %v5856, 127
    %v5920 = vpop.permute.xlu0 %5919
    %5921 = vrot.lane.b32.xlu0 %v5857, 127
    %v5922 = vpop.permute.xlu0 %5921
    %5923 = vrot.lane.b32.xlu0 %v5858, 127
    %v5924 = vpop.permute.xlu0 %5923
    %5925 = vrot.lane.b32.xlu0 %v5859, 127
    %v5926 = vpop.permute.xlu0 %5925
    %5927 = vrot.lane.b32.xlu0 %v5860, 127
    %v5928 = vpop.permute.xlu0 %5927
    %5929 = vrot.lane.b32.xlu0 %v5861, 127
    %v5930 = vpop.permute.xlu0 %5929
    %5931 = vrot.lane.b32.xlu0 %v5862, 127
    %v5932 = vpop.permute.xlu0 %5931
    %5933 = vrot.lane.b32.xlu0 %v5863, 127
    %v5934 = vpop.permute.xlu0 %5933
    %5935 = vrot.lane.b32.xlu0 %v5864, 127
    %v5936 = vpop.permute.xlu0 %5935
    %5937 = vrot.lane.b32.xlu0 %v5865, 127
    %v5938 = vpop.permute.xlu0 %5937
    %5939 = vrot.lane.b32.xlu0 %v5866, 127
    %v5940 = vpop.permute.xlu0 %5939
    %5941 = vrot.lane.b32.xlu0 %v5867, 127
    %v5942 = vpop.permute.xlu0 %5941
    %5943 = vrot.lane.b32.xlu0 %v5868, 127
    %v5944 = vpop.permute.xlu0 %5943
    %5945 = vrot.lane.b32.xlu0 %v5869, 127
    %v5946 = vpop.permute.xlu0 %5945
    %5947 = vrot.lane.b32.xlu0 %v5870, 127
    %v5948 = vpop.permute.xlu0 %5947
    %5949 = vrot.lane.b32.xlu0 %v5871, 127
    %v5950 = vpop.permute.xlu0 %5949
    %5951 = vrot.lane.b32.xlu0 %v5872, 127
    %v5952 = vpop.permute.xlu0 %5951
    %v5953 = vsel %vm216, %v5914, %v5916
    %v5954 = vsel %vm216, %v5918, %v5920
    %v5955 = vsel %vm216, %v5922, %v5924
    %v5956 = vsel %vm216, %v5926, %v5928
    %v5957 = vsel %vm216, %v5930, %v5932
    %v5958 = vsel %vm216, %v5934, %v5936
    %v5959 = vsel %vm216, %v5938, %v5940
    %v5960 = vsel %vm216, %v5942, %v5944
    %v5961 = vsel %vm216, %v5946, %v5948
    %v5962 = vsel %vm216, %v5950, %v5952
    %5983 = vst [vmem:[#allocation4 + $0xa0] sm:$0xff] %v5953
    %5984 = vst.msk [vmem:[#allocation4 + $0xa8] sm:$0xff] %vm216, %v5916
    %5985 = vst [vmem:[#allocation4 + $0xb0] sm:$0xff] %v5954
    %5986 = vst.msk [vmem:[#allocation4 + $0xb8] sm:$0xff] %vm216, %v5920
    %5987 = vst [vmem:[#allocation4 + $0xc0] sm:$0xff] %v5955
    %5988 = vst.msk [vmem:[#allocation4 + $0xc8] sm:$0xff] %vm216, %v5924
    %5989 = vst [vmem:[#allocation4 + $0xd0] sm:$0xff] %v5956
    %5990 = vst.msk [vmem:[#allocation4 + $0xd8] sm:$0xff] %vm216, %v5928
    %5991 = vst [vmem:[#allocation4 + $0xe0] sm:$0xff] %v5957
    %5992 = vst.msk [vmem:[#allocation4 + $0xe8] sm:$0xff] %vm216, %v5932
    %5993 = vst [vmem:[#allocation4 + $0xf0] sm:$0xff] %v5958
    %5994 = vst.msk [vmem:[#allocation4 + $0xf8] sm:$0xff] %vm216, %v5936
    %5995 = vst [vmem:[#allocation4 + $0x100] sm:$0xff] %v5959
    %5996 = vst.msk [vmem:[#allocation4 + $0x108] sm:$0xff] %vm216, %v5940
    %5997 = vst [vmem:[#allocation4 + $0x110] sm:$0xff] %v5960
    %5998 = vst.msk [vmem:[#allocation4 + $0x118] sm:$0xff] %vm216, %v5944
    %5999 = vst [vmem:[#allocation4 + $0x120] sm:$0xff] %v5961
    %6000 = vst.msk [vmem:[#allocation4 + $0x128] sm:$0xff] %vm216, %v5948
    %6001 = vst [vmem:[#allocation4 + $0x130] sm:$0xff] %v5962
    %6002 = vst.msk [vmem:[#allocation4 + $0x138] sm:$0xff] %vm216, %v5952
    %v6003 = vld [vmem:[#allocation4] sm:$0xff]
    %v6004 = vld [vmem:[#allocation4 + $0x8] sm:$0xff]
    %v6005 = vld [vmem:[#allocation4 + $0x10] sm:$0xff]
    %v6006 = vld [vmem:[#allocation4 + $0x18] sm:$0xff]
    %v6007 = vld [vmem:[#allocation4 + $0x20] sm:$0xff]
    %v6008 = vld [vmem:[#allocation4 + $0x28] sm:$0xff]
    %v6009 = vld [vmem:[#allocation4 + $0x30] sm:$0xff]
    %v6010 = vld [vmem:[#allocation4 + $0x38] sm:$0xff]
    %v6011 = vld [vmem:[#allocation4 + $0x40] sm:$0xff]
    %v6012 = vld [vmem:[#allocation4 + $0x48] sm:$0xff]
    %v6013 = vld [vmem:[#allocation4 + $0x50] sm:$0xff]
    %v6014 = vld [vmem:[#allocation4 + $0x58] sm:$0xff]
    %v6015 = vld [vmem:[#allocation4 + $0x60] sm:$0xff]
    %v6016 = vld [vmem:[#allocation4 + $0x68] sm:$0xff]
    %v6017 = vld [vmem:[#allocation4 + $0x70] sm:$0xff]
    %v6018 = vld [vmem:[#allocation4 + $0x78] sm:$0xff]
    %v6019 = vld [vmem:[#allocation4 + $0x80] sm:$0xff]
    %v6020 = vld [vmem:[#allocation4 + $0x88] sm:$0xff]
    %v6021 = vld [vmem:[#allocation4 + $0x90] sm:$0xff]
    %v6022 = vld [vmem:[#allocation4 + $0x98] sm:$0xff]
    %v6023 = vld [vmem:[#allocation4 + $0xa0] sm:$0xff]
    %v6024 = vld [vmem:[#allocation4 + $0xa8] sm:$0xff]
    %v6025 = vld [vmem:[#allocation4 + $0xb0] sm:$0xff]
    %v6026 = vld [vmem:[#allocation4 + $0xb8] sm:$0xff]
    %v6027 = vld [vmem:[#allocation4 + $0xc0] sm:$0xff]
    %v6028 = vld [vmem:[#allocation4 + $0xc8] sm:$0xff]
    %v6029 = vld [vmem:[#allocation4 + $0xd0] sm:$0xff]
    %v6030 = vld [vmem:[#allocation4 + $0xd8] sm:$0xff]
    %v6031 = vld [vmem:[#allocation4 + $0xe0] sm:$0xff]
    %v6032 = vld [vmem:[#allocation4 + $0xe8] sm:$0xff]
    %v6033 = vld [vmem:[#allocation4 + $0xf0] sm:$0xff]
    %v6034 = vld [vmem:[#allocation4 + $0xf8] sm:$0xff]
    %v6035 = vld [vmem:[#allocation4 + $0x100] sm:$0xff]
    %v6036 = vld [vmem:[#allocation4 + $0x108] sm:$0xff]
    %v6037 = vld [vmem:[#allocation4 + $0x110] sm:$0xff]
    %v6038 = vld [vmem:[#allocation4 + $0x118] sm:$0xff]
    %v6039 = vld [vmem:[#allocation4 + $0x120] sm:$0xff]
    %v6040 = vld [vmem:[#allocation4 + $0x128] sm:$0xff]
    %v6041 = vld [vmem:[#allocation4 + $0x130] sm:$0xff]
    %v6042 = vld [vmem:[#allocation4 + $0x138] sm:$0xff]
    %v6043 = vpack.c.bf16 %v6005, %v6003
    %v6044 = vpack.c.bf16 %v6006, %v6004
    %v6045 = vpack.c.bf16 %v6009, %v6007
    %v6046 = vpack.c.bf16 %v6010, %v6008
    %v6047 = vpack.c.bf16 %v6013, %v6011
    %v6048 = vpack.c.bf16 %v6014, %v6012
    %v6049 = vpack.c.bf16 %v6017, %v6015
    %v6050 = vpack.c.bf16 %v6018, %v6016
    %v6051 = vpack.c.bf16 %v6021, %v6019
    %v6052 = vpack.c.bf16 %v6022, %v6020
    %v6053 = vpack.c.bf16 %v6025, %v6023
    %v6054 = vpack.c.bf16 %v6026, %v6024
    %v6055 = vpack.c.bf16 %v6029, %v6027
    %v6056 = vpack.c.bf16 %v6030, %v6028
    %v6057 = vpack.c.bf16 %v6033, %v6031
    %v6058 = vpack.c.bf16 %v6034, %v6032
    %v6059 = vpack.c.bf16 %v6037, %v6035
    %v6060 = vpack.c.bf16 %v6038, %v6036
    %v6061 = vpack.c.bf16 %v6041, %v6039
    %v6062 = vpack.c.bf16 %v6042, %v6040
    %6063 = vmatpush.bf16.msra.mxu0 %v6057
    %6064 = vmatpush.bf16.msra.mxu0 %v6055
    %6065 = vmatpush.bf16.msra.mxu0 %v6053
    %6066 = vmatpush.bf16.msra.mxu0 %v6051
    %6067 = vmatpush.bf16.msra.mxu0 %v6049
    %6068 = vmatpush.bf16.msra.mxu0 %v6047
    %6069 = vmatpush.bf16.msra.mxu0 %v6045
    %6070 = vmatpush.bf16.msra.mxu0 %v6043
    %6071 = vmatmul.bf16.gmra.mxu0 %v4089
    %v6072 = vpop.f32.mrf.mxu0
    %v6073 = vadd.f32 0.0, %v6072
    %v6074 = vpop.f32.mrf.mxu0
    %v6075 = vadd.f32 0.0, %v6074
    %6076 = vmatmul.bf16.gmra.mxu0 %v4091
    %v6077 = vpop.f32.mrf.mxu0
    %v6078 = vadd.f32 0.0, %v6077
    %v6079 = vpop.f32.mrf.mxu0
    %v6080 = vadd.f32 0.0, %v6079
    %6081 = vdwg.mxu0
    %6082 = vmatpush.bf16.msra.mxu0 0
    %6083 = vmatpush.bf16.msra.mxu0 0
    %6084 = vmatpush.bf16.msra.mxu0 0
    %6085 = vmatpush.bf16.msra.mxu0 0
    %6086 = vmatpush.bf16.msra.mxu0 0
    %6087 = vmatpush.bf16.msra.mxu0 0
    %6088 = vmatpush.bf16.msra.mxu0 %v6061
    %6089 = vmatpush.bf16.msra.mxu0 %v6059
    %6090 = vmatmul.bf16.gmra.mxu0 %v4305
    %v6091 = vpop.f32.mrf.mxu0
    %v6092 = vadd.f32 %v6073, %v6091
    %v6093 = vpop.f32.mrf.mxu0
    %v6094 = vadd.f32 %v6075, %v6093
    %6095 = vmatmul.bf16.gmra.mxu0 %v4308
    %v6096 = vpop.f32.mrf.mxu0
    %v6097 = vadd.f32 %v6078, %v6096
    %v6098 = vpop.f32.mrf.mxu0
    %v6099 = vadd.f32 %v6080, %v6098
    %6100 = vdwg.mxu0
    %6101 = vmatpush.bf16.msra.mxu0 %v6058
    %6102 = vmatpush.bf16.msra.mxu0 %v6056
    %6103 = vmatpush.bf16.msra.mxu0 %v6054
    %6104 = vmatpush.bf16.msra.mxu0 %v6052
    %6105 = vmatpush.bf16.msra.mxu0 %v6050
    %6106 = vmatpush.bf16.msra.mxu0 %v6048
    %6107 = vmatpush.bf16.msra.mxu0 %v6046
    %6108 = vmatpush.bf16.msra.mxu0 %v6044
    %6109 = vmatmul.bf16.gmra.mxu0 %v4089
    %v6110 = vpop.f32.mrf.mxu0
    %v6111 = vadd.f32 0.0, %v6110
    %v6112 = vpop.f32.mrf.mxu0
    %v6113 = vadd.f32 0.0, %v6112
    %6114 = vmatmul.bf16.gmra.mxu0 %v4091
    %v6115 = vpop.f32.mrf.mxu0
    %v6116 = vadd.f32 0.0, %v6115
    %v6117 = vpop.f32.mrf.mxu0
    %v6118 = vadd.f32 0.0, %v6117
    %6119 = vdwg.mxu0
    %6120 = vmatpush.bf16.msra.mxu0 0
    %6121 = vmatpush.bf16.msra.mxu0 0
    %6122 = vmatpush.bf16.msra.mxu0 0
    %6123 = vmatpush.bf16.msra.mxu0 0
    %6124 = vmatpush.bf16.msra.mxu0 0
    %6125 = vmatpush.bf16.msra.mxu0 0
    %6126 = vmatpush.bf16.msra.mxu0 %v6062
    %6127 = vmatpush.bf16.msra.mxu0 %v6060
    %6128 = vmatmul.bf16.gmra.mxu0 %v4305
    %v6129 = vpop.f32.mrf.mxu0
    %v6130 = vadd.f32 %v6111, %v6129
    %v6131 = vpop.f32.mrf.mxu0
    %v6132 = vadd.f32 %v6113, %v6131
    %6133 = vmatmul.bf16.gmra.mxu0 %v4308
    %v6134 = vpop.f32.mrf.mxu0
    %v6135 = vadd.f32 %v6116, %v6134
    %v6136 = vpop.f32.mrf.mxu0
    %v6137 = vadd.f32 %v6118, %v6136
    %6138 = vdwg.mxu0
    %v6139 = vadd.f32 %v6092, 0.0
    %v6140 = vadd.f32 %v6094, 0.0
    %v6141 = vadd.f32 %v6097, 0.0
    %v6142 = vadd.f32 %v6099, 0.0
    %v6143 = vadd.f32 %v6139, %v6130
    %v6144 = vadd.f32 %v6140, %v6132
    %v6145 = vadd.f32 %v6141, %v6135
    %v6146 = vadd.f32 %v6142, %v6137
    %v6147 = vmul.f32 %v6143, %v279
    %v6148 = vmul.f32 %v6144, %v279
    %v6149 = vmul.f32 %v6145, %v279
    %v6150 = vmul.f32 %v6146, %v279
    %v6151 = vsub.f32 %v6092, %v6147
    %v6152 = vsub.f32 %v6094, %v6148
    %v6153 = vsub.f32 %v6097, %v6149
    %v6154 = vsub.f32 %v6099, %v6150
    %v6155 = vmul.f32 %v6151, %v6151
    %v6156 = vmul.f32 %v6152, %v6152
    %v6157 = vmul.f32 %v6153, %v6153
    %v6158 = vmul.f32 %v6154, %v6154
    %v6159 = vadd.f32 %v6155, 0.0
    %v6160 = vadd.f32 %v6156, 0.0
    %v6161 = vadd.f32 %v6157, 0.0
    %v6162 = vadd.f32 %v6158, 0.0
    %v6163 = vsub.f32 %v6130, %v6147
    %v6164 = vsub.f32 %v6132, %v6148
    %v6165 = vsub.f32 %v6135, %v6149
    %v6166 = vsub.f32 %v6137, %v6150
    %v6167 = vmul.f32 %v6163, %v6163
    %v6168 = vmul.f32 %v6164, %v6164
    %v6169 = vmul.f32 %v6165, %v6165
    %v6170 = vmul.f32 %v6166, %v6166
    %v6171 = vadd.f32 %v6159, %v6167
    %v6172 = vadd.f32 %v6160, %v6168
    %v6173 = vadd.f32 %v6161, %v6169
    %v6174 = vadd.f32 %v6162, %v6170
    %v6175 = vmul.f32 %v6171, %v279
    %v6176 = vmul.f32 %v6172, %v279
    %v6177 = vmul.f32 %v6173, %v279
    %v6178 = vmul.f32 %v6174, %v279
    %v6179 = vadd.f32 %v6175, 1e-05
    %v6180 = vadd.f32 %v6176, 1e-05
    %v6181 = vadd.f32 %v6177, 1e-05
    %v6182 = vadd.f32 %v6178, 1e-05
    %v6183 = vrsqrt.pop %v6179
    %v6184 = vmul.f32 %v6183, %v6179
    %v6185 = vmul.f32 %v6184, %v6183
    %v6186 = vmul.f32 0.5, %v6185
    %v6187 = vsub.f32 1.5, %v6186
    %v6188 = vmul.f32 %v6183, %v6187
    %vm6189 = vweird.f32 %v6179
    %vm6190 = vweird.f32 %v6183
    %vm6191 = vmor %vm6189, %vm6190
    %v6192 = vsel %vm6191, %v6183, %v6188
    %v6193 = vrsqrt.pop %v6180
    %v6194 = vmul.f32 %v6193, %v6180
    %v6195 = vmul.f32 %v6194, %v6193
    %v6196 = vmul.f32 0.5, %v6195
    %v6197 = vsub.f32 1.5, %v6196
    %v6198 = vmul.f32 %v6193, %v6197
    %vm6199 = vweird.f32 %v6180
    %vm6200 = vweird.f32 %v6193
    %vm6201 = vmor %vm6199, %vm6200
    %v6202 = vsel %vm6201, %v6193, %v6198
    %v6203 = vrsqrt.pop %v6181
    %v6204 = vmul.f32 %v6203, %v6181
    %v6205 = vmul.f32 %v6204, %v6203
    %v6206 = vmul.f32 0.5, %v6205
    %v6207 = vsub.f32 1.5, %v6206
    %v6208 = vmul.f32 %v6203, %v6207
    %vm6209 = vweird.f32 %v6181
    %vm6210 = vweird.f32 %v6203
    %vm6211 = vmor %vm6209, %vm6210
    %v6212 = vsel %vm6211, %v6203, %v6208
    %v6213 = vrsqrt.pop %v6182
    %v6214 = vmul.f32 %v6213, %v6182
    %v6215 = vmul.f32 %v6214, %v6213
    %v6216 = vmul.f32 0.5, %v6215
    %v6217 = vsub.f32 1.5, %v6216
    %v6218 = vmul.f32 %v6213, %v6217
    %vm6219 = vweird.f32 %v6182
    %vm6220 = vweird.f32 %v6213
    %vm6221 = vmor %vm6219, %vm6220
    %v6222 = vsel %vm6221, %v6213, %v6218
    %v6223 = vld [vmem:[%s8 + $0x80] sm:$0xff]
    %v6224 = vld [vmem:[%s8 + $0x88] sm:$0xff]
    %v6225 = vld [vmem:[%s8 + $0x90] sm:$0xff]
    %v6226 = vld [vmem:[%s8 + $0x98] sm:$0xff]
    %v6227 = vld [vmem:[%s9 + $0x80] sm:$0xff]
    %v6228 = vld [vmem:[%s9 + $0x88] sm:$0xff]
    %v6229 = vld [vmem:[%s9 + $0x90] sm:$0xff]
    %v6230 = vld [vmem:[%s9 + $0x98] sm:$0xff]
    %v6231 = vmul.f32 %v6192, %v6223
    %v6232 = vmul.f32 %v6202, %v6224
    %v6233 = vmul.f32 %v6212, %v6225
    %v6234 = vmul.f32 %v6222, %v6226
    %v6235 = vmul.f32 %v6147, %v6231
    %v6236 = vmul.f32 %v6148, %v6232
    %v6237 = vmul.f32 %v6149, %v6233
    %v6238 = vmul.f32 %v6150, %v6234
    %v6239 = vsub.f32 %v6227, %v6235
    %v6240 = vsub.f32 %v6228, %v6236
    %v6241 = vsub.f32 %v6229, %v6237
    %v6242 = vsub.f32 %v6230, %v6238
    %v6243 = vmul.f32 %v6092, %v6231
    %v6244 = vmul.f32 %v6130, %v6231
    %v6245 = vmul.f32 %v6094, %v6232
    %v6246 = vmul.f32 %v6132, %v6232
    %v6247 = vmul.f32 %v6097, %v6233
    %v6248 = vmul.f32 %v6135, %v6233
    %v6249 = vmul.f32 %v6099, %v6234
    %v6250 = vmul.f32 %v6137, %v6234
    %v6251 = vadd.f32 %v6243, %v6239
    %v6252 = vadd.f32 %v6244, %v6239
    %v6253 = vadd.f32 %v6245, %v6240
    %v6254 = vadd.f32 %v6246, %v6240
    %v6255 = vadd.f32 %v6247, %v6241
    %v6256 = vadd.f32 %v6248, %v6241
    %v6257 = vadd.f32 %v6249, %v6242
    %v6258 = vadd.f32 %v6250, %v6242
    %vm6259 = vcmp.ge.f32.partialorder %v6251, 0.0
    %vm6260 = vcmp.ge.f32.partialorder %v6252, 0.0
    %vm6261 = vcmp.ge.f32.partialorder %v6253, 0.0
    %vm6262 = vcmp.ge.f32.partialorder %v6254, 0.0
    %vm6263 = vcmp.ge.f32.partialorder %v6255, 0.0
    %vm6264 = vcmp.ge.f32.partialorder %v6256, 0.0
    %vm6265 = vcmp.ge.f32.partialorder %v6257, 0.0
    %vm6266 = vcmp.ge.f32.partialorder %v6258, 0.0
    %v6267 = vmul.f32 %v4514, %v6251
    %v6268 = vmul.f32 %v4514, %v6252
    %v6269 = vmul.f32 %v4514, %v6253
    %v6270 = vmul.f32 %v4514, %v6254
    %v6271 = vmul.f32 %v4514, %v6255
    %v6272 = vmul.f32 %v4514, %v6256
    %v6273 = vmul.f32 %v4514, %v6257
    %v6274 = vmul.f32 %v4514, %v6258
    %v6275 = vsel %vm6259, %v6251, %v6267
    %v6276 = vsel %vm6260, %v6252, %v6268
    %v6277 = vsel %vm6261, %v6253, %v6269
    %v6278 = vsel %vm6262, %v6254, %v6270
    %v6279 = vsel %vm6263, %v6255, %v6271
    %v6280 = vsel %vm6264, %v6256, %v6272
    %v6281 = vsel %vm6265, %v6257, %v6273
    %v6282 = vsel %vm6266, %v6258, %v6274
    %6283 = vst [vmem:[%s11 + $0x100] sm:$0xff] %v6275
    %6284 = vst [vmem:[%s11 + $0x108] sm:$0xff] %v6276
    %6285 = vst [vmem:[%s11 + $0x110] sm:$0xff] %v6277
    %6286 = vst [vmem:[%s11 + $0x118] sm:$0xff] %v6278
    %6287 = vst [vmem:[%s11 + $0x120] sm:$0xff] %v6279
    %6288 = vst [vmem:[%s11 + $0x128] sm:$0xff] %v6280
    %6289 = vst [vmem:[%s11 + $0x130] sm:$0xff] %v6281
    %6290 = vst [vmem:[%s11 + $0x138] sm:$0xff] %v6282
    // Predicated region
    $region50: #{dccrn_forward.1} parent=1 // pred_check
      _
    $region51: #{dccrn_forward.1} parent=1 // pred_check_branch
      %6292 = sbr.rel (0) target = $region53
    $region52: #{dccrn_forward.1} parent=1 // pred_region
      _
    $region53: #{dccrn_forward.1} parent=1 // pred_fallthru
      _
    // Predicated region
    $region54: #{dccrn_forward.1} parent=1 // pred_check
      _
    $region55: #{dccrn_forward.1} parent=1 // pred_check_branch
      %6294 = sbr.rel (0) target = $region57
    $region56: #{dccrn_forward.1} parent=1 // pred_region
      _
    $region57: #{dccrn_forward.1} parent=1 // pred_fallthru
      _
    %6295 = vsyncpa [#allocation6], 1

</llo_original>
